<compile_context>
chip_gen: v5e
topology: v5e:2x2
jax: 0.10.0
libtpu: 0.0.40
codegen_flags: <defaults>
</compile_context>

<pallas_src>
import functools
import math

import jax
import jax.numpy as jnp
from jax import lax
from jax.experimental import pallas as pl
from jax.experimental.pallas import tpu as pltpu  # noqa: F401  (TPU backend assumed)


# --------------------------------------------------------------------------- #
# shared math helpers (identical policy in the kernel and the pure-JAX reference)
# --------------------------------------------------------------------------- #
def _layer_norm(y, w, b, eps=1e-5):
    mu = jnp.mean(y, axis=-1, keepdims=True)
    var = jnp.mean(jnp.square(y - mu), axis=-1, keepdims=True)
    return (y - mu) * lax.rsqrt(var + eps) * w + b


def _mm_bf16(a, b):
    # MXU-native bf16 x bf16 -> f32 matmul.
    return jnp.dot(a.astype(jnp.bfloat16), b.astype(jnp.bfloat16),
                   preferred_element_type=jnp.float32)


def _bmm_bf16(eq, a, b):
    # Single-batch-dim batched matmul, bf16 x bf16 -> f32 (no HIGHEST precision).
    return jnp.einsum(eq, a.astype(jnp.bfloat16), b.astype(jnp.bfloat16),
                      preferred_element_type=jnp.float32)


# --------------------------------------------------------------------------- #
# the single fused Pallas kernel (all layers, VMEM-resident, grid-less)
# --------------------------------------------------------------------------- #
def _fused_net_kernel(x_ref, sp_ref, w_in_ref, w_out_ref, w1_ref, w2_ref,
                      wc_ref, bc_ref, o_ref, *, nhead, batch, num_layers):
    R, D = x_ref.shape                  # R = S * B, row index = s*B + b
    FF = w1_ref.shape[-1]
    B = batch
    S = R // B
    H = nhead
    hd = D // H
    att_scale = 1.0 / math.sqrt(hd)

    # Offsets into the packed per-layer small-param row; all widths are multiples
    # of 128 for this config, so every slice below is lane-aligned.
    offs = {
        'b_in': (0, 3 * D), 'b_out': (3 * D, D), 'b1': (4 * D, FF),
        'b2': (4 * D + FF, D), 'ln1_w': (5 * D + FF, D), 'ln1_b': (6 * D + FF, D),
        'ln2_w': (7 * D + FF, D), 'ln2_b': (8 * D + FF, D),
    }

    x = x_ref[...]                                              # (R, D) f32 residual

    for li in range(num_layers):
        def param(name, li=li):
            off, width = offs[name]
            return sp_ref[li:li + 1, off:off + width]           # (1, width) f32

        # --- multi-head self-attention: one (R, D) @ (D, 3D) in-projection ---
        qkv = _mm_bf16(x, w_in_ref[li]) + param('b_in')         # (R, 3D) f32
        q = (qkv[:, :D] * att_scale).astype(jnp.bfloat16).reshape(S, B, D)
        k = qkv[:, D:2 * D].astype(jnp.bfloat16).reshape(S, B, D)
        v = qkv[:, 2 * D:].astype(jnp.bfloat16).reshape(S, B, D)

        attn = jnp.zeros((R, D), jnp.float32)
        # TODO(synk): the reviewer's head-batched ('sihd,sjhd->shij') einsum needs a
        # two-batch-dim dot_general (a Mosaic lowering risk at these shapes); the
        # sanctioned fallback is used instead: per-head out-projection accumulation
        # (no concat, no HIGHEST precision), which keeps the proven single-batch-dim
        # einsum form and trades XLU concat traffic for slack MXU work.
        for h in range(H):                                      # static unroll
            sl = slice(h * hd, (h + 1) * hd)
            s_att = _bmm_bf16('nid,njd->nij', q[:, :, sl], k[:, :, sl])   # (S, B, B)
            s_att = s_att - jnp.max(s_att, axis=-1, keepdims=True)
            p_att = jnp.exp(s_att)
            p_att = p_att / jnp.sum(p_att, axis=-1, keepdims=True)        # drop = id
            ctx_h = _bmm_bf16('nij,njd->nid', p_att, v[:, :, sl])         # (S, B, hd)
            attn = attn + _mm_bf16(ctx_h.reshape(R, hd),
                                   w_out_ref[li, h * hd:(h + 1) * hd, :])
        attn = attn + param('b_out')

        # --- residual + LayerNorm1, FFN(ReLU) + residual + LayerNorm2 (post-norm) ---
        y = _layer_norm(x + attn, param('ln1_w'), param('ln1_b'))
        ff = jnp.maximum(_mm_bf16(y, w1_ref[li]) + param('b1'), 0.0)
        ff = _mm_bf16(ff, w2_ref[li]) + param('b2')
        x = _layer_norm(y + ff, param('ln2_w'), param('ln2_b'))

    # ---- mean over S (== x.mean(dim=1) of the (B, S, D) view) + classifier ----
    pooled = jnp.mean(x.reshape(S, B, D), axis=0)               # (B, D)
    o_ref[...] = _mm_bf16(pooled, wc_ref[...]) + bc_ref[...]    # (B, 128) lane-dense


# --------------------------------------------------------------------------- #
# wrapper: host-side weight packing (once) + embedding/PE hoist + one pallas_call
# --------------------------------------------------------------------------- #
def make_pallas_forward(params, nhead):
    layers = params['layers']
    num_layers = len(layers)
    D = params['emb_table'].shape[1]
    n_classes = params['wc'].shape[0]
    bf = lambda t: jnp.asarray(t, jnp.bfloat16)

    # big matmul weights: pre-transposed, bf16, stacked over layers (4 DMAs total)
    w_in_all = jnp.stack([bf(lp['w_in'].T) for lp in layers])    # (L, D, 3D)
    w_out_all = jnp.stack([bf(lp['w_out'].T) for lp in layers])  # (L, D, D)
    w1_all = jnp.stack([bf(lp['w1'].T) for lp in layers])        # (L, D, FF)
    w2_all = jnp.stack([bf(lp['w2'].T) for lp in layers])        # (L, FF, D)

    # all per-layer small params packed into ONE (L, 9D+FF) f32 array (1 DMA)
    sp_all = jnp.stack([jnp.concatenate([
        lp['b_in'].reshape(-1), lp['b_out'].reshape(-1), lp['b1'].reshape(-1),
        lp['b2'].reshape(-1), lp['ln1_w'].reshape(-1), lp['ln1_b'].reshape(-1),
        lp['ln2_w'].reshape(-1), lp['ln2_b'].reshape(-1)]) for lp in layers])

    # classifier padded to 128 output lanes -> unmasked epilogue store; slice outside
    wc_pad = jnp.zeros((D, 128), jnp.bfloat16).at[:, :n_classes].set(bf(params['wc'].T))
    bc_pad = jnp.zeros((1, 128), jnp.float32).at[:, :n_classes].set(params['bc'])

    emb = params['emb_table']
    pe_full = params['pe']
    sqrt_d = math.sqrt(D)
    kernel = functools.partial(_fused_net_kernel, nhead=nhead, num_layers=num_layers)

    @jax.jit
    def forward(tokens):
        B, S = tokens.shape
        # embedding gather + sqrt(D) scale + positional encoding hoisted to XLA
        x0 = emb[tokens] * sqrt_d + pe_full[:S][None]            # (B, S, D) f32
        # batch_first=False quirk: encoder's seq axis = B, batch axis = S.
        # Activation rows are ordered s*B + b (keep this invariant!).
        x0 = jnp.transpose(x0, (1, 0, 2)).reshape(S * B, D)
        out = pl.pallas_call(
            functools.partial(kernel, batch=B),
            out_shape=jax.ShapeDtypeStruct((B, 128), jnp.float32),
        )(x0, sp_all, w_in_all, w_out_all, w1_all, w2_all, wc_pad, bc_pad)
        return out[:, :n_classes]

    return forward


# --------------------------------------------------------------------------- #
# pure-JAX reference (mirrors PyTorch semantics, incl. batch_first=False quirk;
# identical bf16/f32 precision policy as the kernel so the tolerance is meaningful)
# --------------------------------------------------------------------------- #
def _ref_layer(x, p, nhead):
    # x: (L=B, N=S, D) — exactly how PyTorch's encoder sees an (B, S, D) input.
    L, N, D = x.shape
    hd = D // nhead
    att_scale = 1.0 / math.sqrt(hd)
    x2 = x.reshape(L * N, D)
    qkv = _mm_bf16(x2, p['w_in'].T) + p['b_in']
    q = (qkv[:, :D] * att_scale).reshape(L, N, D)
    k = qkv[:, D:2 * D].reshape(L, N, D)
    v = qkv[:, 2 * D:].reshape(L, N, D)
    heads = []
    for h in range(nhead):
        sl = slice(h * hd, (h + 1) * hd)
        s = _bmm_bf16('ind,jnd->nij', q[..., sl], k[..., sl])
        s = s - jnp.max(s, axis=-1, keepdims=True)
        pw = jnp.exp(s)
        pw = pw / jnp.sum(pw, axis=-1, keepdims=True)
        heads.append(_bmm_bf16('nij,jnd->ind', pw, v[..., sl]))
    attn = jnp.concatenate(heads, axis=-1).reshape(L * N, D)
    y = _layer_norm(x2 + _mm_bf16(attn, p['w_out'].T) + p['b_out'],
                    p['ln1_w'], p['ln1_b'])
    ff = _mm_bf16(jnp.maximum(_mm_bf16(y, p['w1'].T) + p['b1'], 0.0),
                  p['w2'].T) + p['b2']
    z = _layer_norm(y + ff, p['ln2_w'], p['ln2_b'])
    return z.reshape(L, N, D)


def ref_forward(tokens, params, d_model, nhead):
    B, S = tokens.shape
    x = params['emb_table'][tokens] * math.sqrt(d_model) + params['pe'][:S][None]
    for lp in params['layers']:
        x = _ref_layer(x, lp, nhead)     # PyTorch treats this as (seq=B, batch=S, D)
    pooled = jnp.mean(x, axis=1)         # x.mean(dim=1); dropout = identity
    return _mm_bf16(pooled, params['wc'].T) + params['bc']


# --------------------------------------------------------------------------- #
# deterministic parameter init (synthetic; shapes match the nn.Module)
# --------------------------------------------------------------------------- #
def init_params(key, vocab_size, d_model, nhead, dim_ff, num_layers, max_len=256):
    keys = jax.random.split(key, 3 + num_layers)
    emb_table = jax.random.normal(keys[0], (vocab_size, d_model), jnp.float32)

    # PositionalEncoding buffer (same formula as the PyTorch module)
    position = jnp.arange(max_len, dtype=jnp.float32)[:, None]
    div_term = jnp.exp(jnp.arange(0, d_model, 2, dtype=jnp.float32)
                       * (-math.log(10000.0) / d_model))
    pe = jnp.zeros((max_len, d_model), jnp.float32)
    pe = pe.at[:, 0::2].set(jnp.sin(position * div_term))
    pe = pe.at[:, 1::2].set(jnp.cos(position * div_term))

    layers = []
    for li in range(num_layers):
        lk = jax.random.split(keys[3 + li], 8)
        layers.append(dict(
            w_in=0.05 * jax.random.normal(lk[0], (3 * d_model, d_model), jnp.float32),
            b_in=0.01 * jax.random.normal(lk[1], (1, 3 * d_model), jnp.float32),
            w_out=0.05 * jax.random.normal(lk[2], (d_model, d_model), jnp.float32),
            b_out=0.01 * jax.random.normal(lk[3], (1, d_model), jnp.float32),
            w1=0.05 * jax.random.normal(lk[4], (dim_ff, d_model), jnp.float32),
            b1=0.01 * jax.random.normal(lk[5], (1, dim_ff), jnp.float32),
            w2=0.05 * jax.random.normal(lk[6], (d_model, dim_ff), jnp.float32),
            b2=0.01 * jax.random.normal(lk[7], (1, d_model), jnp.float32),
            ln1_w=jnp.ones((1, d_model), jnp.float32),
            ln1_b=jnp.zeros((1, d_model), jnp.float32),
            ln2_w=jnp.ones((1, d_model), jnp.float32),
            ln2_b=jnp.zeros((1, d_model), jnp.float32),
        ))
    wc = 0.05 * jax.random.normal(keys[1], (2, d_model), jnp.float32)
    bc = 0.01 * jax.random.normal(keys[2], (1, 2), jnp.float32)
    return dict(emb_table=emb_table, pe=pe, layers=layers, wc=wc, bc=bc)


# --------------------------------------------------------------------------- #
if __name__ == "__main__":
    VOCAB, D_MODEL, NHEAD, DIM_FF, NUM_LAYERS = 64, 128, 8, 256, 2
    B, S = 2, 8  # token ids x: (batch, seq)

    key = jax.random.PRNGKey(0)
    kp, kt = jax.random.split(key)
    params = init_params(kp, VOCAB, D_MODEL, NHEAD, DIM_FF, NUM_LAYERS)
    tokens = jax.random.randint(kt, (B, S), 0, VOCAB, dtype=jnp.int32)

    fwd = make_pallas_forward(params, NHEAD)
    out = jax.block_until_ready(fwd(tokens))
    ref = jax.block_until_ready(ref_forward(tokens, params, D_MODEL, NHEAD))

    assert out.shape == (B, 2), out.shape
    assert jnp.allclose(out, ref, atol=2e-3, rtol=2e-3), (out, ref)
    print("KERNEL_OK")
</pallas_src>

<mosaic_0001>
module attributes {stable_mosaic.version = 11 : i64} {
  func.func @_fused_net_kernel(%arg0: memref<16x128xf32, #tpu.memory_space<vmem>>, %arg1: memref<2x1408xf32, #tpu.memory_space<vmem>>, %arg2: memref<2x128x384xbf16, #tpu.memory_space<vmem>>, %arg3: memref<2x128x128xbf16, #tpu.memory_space<vmem>>, %arg4: memref<2x128x256xbf16, #tpu.memory_space<vmem>>, %arg5: memref<2x256x128xbf16, #tpu.memory_space<vmem>>, %arg6: memref<128x128xbf16, #tpu.memory_space<vmem>>, %arg7: memref<1x128xf32, #tpu.memory_space<vmem>>, %arg8: memref<2x128xf32, #tpu.memory_space<vmem>>) attributes {dimension_semantics = [], scalar_prefetch = 0 : i64, scratch_operands = 0 : i64, tpu.core_type = #tpu.core_type<tc>} {
    %c0 = arith.constant 0 : index
    %c0_0 = arith.constant 0 : index
    %0 = vector.load %arg0[%c0, %c0_0] : memref<16x128xf32, #tpu.memory_space<vmem>>, vector<16x128xf32>
    %c0_1 = arith.constant 0 : index
    %c0_2 = arith.constant 0 : index
    %c0_3 = arith.constant 0 : index
    %1 = vector.load %arg2[%c0_1, %c0_2, %c0_3] : memref<2x128x384xbf16, #tpu.memory_space<vmem>>, vector<1x128x384xbf16>
    %2 = vector.shape_cast %1 : vector<1x128x384xbf16> to vector<128x384xbf16>
    %3 = arith.truncf %0 : vector<16x128xf32> to vector<16x128xbf16>
    %cst = arith.constant dense<0.000000e+00> : vector<16x384xf32>
    %4 = tpu.matmul %3, %2, %cst {dimension_numbers = #tpu.dot_dimension_numbers<[1], [0], [0], [1], [0, 0, 1, 1], [], []>} : vector<16x128xbf16>, vector<128x384xbf16>, vector<16x384xf32> -> vector<16x384xf32>
    %c0_4 = arith.constant 0 : index
    %c0_5 = arith.constant 0 : index
    %5 = vector.load %arg1[%c0_4, %c0_5] : memref<2x1408xf32, #tpu.memory_space<vmem>>, vector<1x384xf32>
    %6 = vector.broadcast %5 : vector<1x384xf32> to vector<16x384xf32>
    %7 = arith.addf %4, %6 : vector<16x384xf32>
    %8 = vector.extract_strided_slice %7 {offsets = [0, 0], sizes = [16, 128], strides = [1, 1]} : vector<16x384xf32> to vector<16x128xf32>
    %cst_6 = arith.constant 2.500000e-01 : f32
    %9 = vector.broadcast %cst_6 : f32 to vector<16x128xf32>
    %10 = arith.mulf %8, %9 : vector<16x128xf32>
    %11 = arith.truncf %10 : vector<16x128xf32> to vector<16x128xbf16>
    %12 = vector.shape_cast %11 : vector<16x128xbf16> to vector<8x2x128xbf16>
    %13 = vector.extract_strided_slice %7 {offsets = [0, 128], sizes = [16, 128], strides = [1, 1]} : vector<16x384xf32> to vector<16x128xf32>
    %14 = arith.truncf %13 : vector<16x128xf32> to vector<16x128xbf16>
    %15 = vector.shape_cast %14 : vector<16x128xbf16> to vector<8x2x128xbf16>
    %16 = vector.extract_strided_slice %7 {offsets = [0, 256], sizes = [16, 128], strides = [1, 1]} : vector<16x384xf32> to vector<16x128xf32>
    %17 = arith.truncf %16 : vector<16x128xf32> to vector<16x128xbf16>
    %18 = vector.shape_cast %17 : vector<16x128xbf16> to vector<8x2x128xbf16>
    %cst_7 = arith.constant 0.000000e+00 : f32
    %19 = vector.broadcast %cst_7 : f32 to vector<16x128xf32>
    %20 = vector.extract_strided_slice %12 {offsets = [0, 0, 0], sizes = [8, 2, 16], strides = [1, 1, 1]} : vector<8x2x128xbf16> to vector<8x2x16xbf16>
    %21 = vector.extract_strided_slice %15 {offsets = [0, 0, 0], sizes = [8, 2, 16], strides = [1, 1, 1]} : vector<8x2x128xbf16> to vector<8x2x16xbf16>
    "tpu.trace_start"() <{level = 10 : i32, message = "nid,njd->nij"}> : () -> ()
    %cst_8 = arith.constant dense<0.000000e+00> : vector<8x2x2xf32>
    %22 = tpu.matmul %20, %21, %cst_8 {dimension_numbers = #tpu.dot_dimension_numbers<[2], [2], [1], [1], [0, 0, 0, 1, 1, 1], [0], [0]>} : vector<8x2x16xbf16>, vector<8x2x16xbf16>, vector<8x2x2xf32> -> vector<8x2x2xf32>
    "tpu.trace_stop"() : () -> ()
    %cst_9 = arith.constant dense<0xFF800000> : vector<8x2xf32>
    %23 = vector.multi_reduction <maximumf>, %22, %cst_9 [2] : vector<8x2x2xf32> to vector<8x2xf32>
    %24 = vector.shape_cast %23 : vector<8x2xf32> to vector<8x2x1xf32>
    %25 = vector.broadcast %24 : vector<8x2x1xf32> to vector<8x2x2xf32>
    %26 = arith.subf %22, %25 : vector<8x2x2xf32>
    %27 = math.exp %26 : vector<8x2x2xf32>
    %cst_10 = arith.constant dense<0.000000e+00> : vector<8x2xf32>
    %28 = vector.multi_reduction <add>, %27, %cst_10 [2] : vector<8x2x2xf32> to vector<8x2xf32>
    %29 = vector.shape_cast %28 : vector<8x2xf32> to vector<8x2x1xf32>
    %30 = vector.broadcast %29 : vector<8x2x1xf32> to vector<8x2x2xf32>
    %31 = arith.divf %27, %30 : vector<8x2x2xf32>
    %32 = vector.extract_strided_slice %18 {offsets = [0, 0, 0], sizes = [8, 2, 16], strides = [1, 1, 1]} : vector<8x2x128xbf16> to vector<8x2x16xbf16>
    %33 = arith.truncf %31 : vector<8x2x2xf32> to vector<8x2x2xbf16>
    "tpu.trace_start"() <{level = 10 : i32, message = "nij,njd->nid"}> : () -> ()
    %cst_11 = arith.constant dense<0.000000e+00> : vector<8x2x16xf32>
    %34 = tpu.matmul %33, %32, %cst_11 {dimension_numbers = #tpu.dot_dimension_numbers<[2], [1], [1], [2], [0, 0, 0, 1, 1, 2], [0], [0]>} : vector<8x2x2xbf16>, vector<8x2x16xbf16>, vector<8x2x16xf32> -> vector<8x2x16xf32>
    "tpu.trace_stop"() : () -> ()
    %35 = vector.shape_cast %34 : vector<8x2x16xf32> to vector<16x16xf32>
    %c0_12 = arith.constant 0 : index
    %c0_13 = arith.constant 0 : index
    %c0_14 = arith.constant 0 : index
    %36 = vector.load %arg3[%c0_12, %c0_13, %c0_14] : memref<2x128x128xbf16, #tpu.memory_space<vmem>>, vector<1x16x128xbf16>
    %37 = vector.shape_cast %36 : vector<1x16x128xbf16> to vector<16x128xbf16>
    %38 = arith.truncf %35 : vector<16x16xf32> to vector<16x16xbf16>
    %cst_15 = arith.constant dense<0.000000e+00> : vector<16x128xf32>
    %39 = tpu.matmul %38, %37, %cst_15 {dimension_numbers = #tpu.dot_dimension_numbers<[1], [0], [0], [1], [0, 0, 1, 1], [], []>} : vector<16x16xbf16>, vector<16x128xbf16>, vector<16x128xf32> -> vector<16x128xf32>
    %40 = arith.addf %19, %39 : vector<16x128xf32>
    %41 = vector.extract_strided_slice %12 {offsets = [0, 0, 16], sizes = [8, 2, 16], strides = [1, 1, 1]} : vector<8x2x128xbf16> to vector<8x2x16xbf16>
    %42 = vector.extract_strided_slice %15 {offsets = [0, 0, 16], sizes = [8, 2, 16], strides = [1, 1, 1]} : vector<8x2x128xbf16> to vector<8x2x16xbf16>
    "tpu.trace_start"() <{level = 10 : i32, message = "nid,njd->nij"}> : () -> ()
    %cst_16 = arith.constant dense<0.000000e+00> : vector<8x2x2xf32>
    %43 = tpu.matmul %41, %42, %cst_16 {dimension_numbers = #tpu.dot_dimension_numbers<[2], [2], [1], [1], [0, 0, 0, 1, 1, 1], [0], [0]>} : vector<8x2x16xbf16>, vector<8x2x16xbf16>, vector<8x2x2xf32> -> vector<8x2x2xf32>
    "tpu.trace_stop"() : () -> ()
    %cst_17 = arith.constant dense<0xFF800000> : vector<8x2xf32>
    %44 = vector.multi_reduction <maximumf>, %43, %cst_17 [2] : vector<8x2x2xf32> to vector<8x2xf32>
    %45 = vector.shape_cast %44 : vector<8x2xf32> to vector<8x2x1xf32>
    %46 = vector.broadcast %45 : vector<8x2x1xf32> to vector<8x2x2xf32>
    %47 = arith.subf %43, %46 : vector<8x2x2xf32>
    %48 = math.exp %47 : vector<8x2x2xf32>
    %cst_18 = arith.constant dense<0.000000e+00> : vector<8x2xf32>
    %49 = vector.multi_reduction <add>, %48, %cst_18 [2] : vector<8x2x2xf32> to vector<8x2xf32>
    %50 = vector.shape_cast %49 : vector<8x2xf32> to vector<8x2x1xf32>
    %51 = vector.broadcast %50 : vector<8x2x1xf32> to vector<8x2x2xf32>
    %52 = arith.divf %48, %51 : vector<8x2x2xf32>
    %53 = vector.extract_strided_slice %18 {offsets = [0, 0, 16], sizes = [8, 2, 16], strides = [1, 1, 1]} : vector<8x2x128xbf16> to vector<8x2x16xbf16>
    %54 = arith.truncf %52 : vector<8x2x2xf32> to vector<8x2x2xbf16>
    "tpu.trace_start"() <{level = 10 : i32, message = "nij,njd->nid"}> : () -> ()
    %cst_19 = arith.constant dense<0.000000e+00> : vector<8x2x16xf32>
    %55 = tpu.matmul %54, %53, %cst_19 {dimension_numbers = #tpu.dot_dimension_numbers<[2], [1], [1], [2], [0, 0, 0, 1, 1, 2], [0], [0]>} : vector<8x2x2xbf16>, vector<8x2x16xbf16>, vector<8x2x16xf32> -> vector<8x2x16xf32>
    "tpu.trace_stop"() : () -> ()
    %56 = vector.shape_cast %55 : vector<8x2x16xf32> to vector<16x16xf32>
    %c0_20 = arith.constant 0 : index
    %c16 = arith.constant 16 : index
    %c0_21 = arith.constant 0 : index
    %57 = vector.load %arg3[%c0_20, %c16, %c0_21] : memref<2x128x128xbf16, #tpu.memory_space<vmem>>, vector<1x16x128xbf16>
    %58 = vector.shape_cast %57 : vector<1x16x128xbf16> to vector<16x128xbf16>
    %59 = arith.truncf %56 : vector<16x16xf32> to vector<16x16xbf16>
    %cst_22 = arith.constant dense<0.000000e+00> : vector<16x128xf32>
    %60 = tpu.matmul %59, %58, %cst_22 {dimension_numbers = #tpu.dot_dimension_numbers<[1], [0], [0], [1], [0, 0, 1, 1], [], []>} : vector<16x16xbf16>, vector<16x128xbf16>, vector<16x128xf32> -> vector<16x128xf32>
    %61 = arith.addf %40, %60 : vector<16x128xf32>
    %62 = vector.extract_strided_slice %12 {offsets = [0, 0, 32], sizes = [8, 2, 16], strides = [1, 1, 1]} : vector<8x2x128xbf16> to vector<8x2x16xbf16>
    %63 = vector.extract_strided_slice %15 {offsets = [0, 0, 32], sizes = [8, 2, 16], strides = [1, 1, 1]} : vector<8x2x128xbf16> to vector<8x2x16xbf16>
    "tpu.trace_start"() <{level = 10 : i32, message = "nid,njd->nij"}> : () -> ()
    %cst_23 = arith.constant dense<0.000000e+00> : vector<8x2x2xf32>
    %64 = tpu.matmul %62, %63, %cst_23 {dimension_numbers = #tpu.dot_dimension_numbers<[2], [2], [1], [1], [0, 0, 0, 1, 1, 1], [0], [0]>} : vector<8x2x16xbf16>, vector<8x2x16xbf16>, vector<8x2x2xf32> -> vector<8x2x2xf32>
    "tpu.trace_stop"() : () -> ()
    %cst_24 = arith.constant dense<0xFF800000> : vector<8x2xf32>
    %65 = vector.multi_reduction <maximumf>, %64, %cst_24 [2] : vector<8x2x2xf32> to vector<8x2xf32>
    %66 = vector.shape_cast %65 : vector<8x2xf32> to vector<8x2x1xf32>
    %67 = vector.broadcast %66 : vector<8x2x1xf32> to vector<8x2x2xf32>
    %68 = arith.subf %64, %67 : vector<8x2x2xf32>
    %69 = math.exp %68 : vector<8x2x2xf32>
    %cst_25 = arith.constant dense<0.000000e+00> : vector<8x2xf32>
    %70 = vector.multi_reduction <add>, %69, %cst_25 [2] : vector<8x2x2xf32> to vector<8x2xf32>
    %71 = vector.shape_cast %70 : vector<8x2xf32> to vector<8x2x1xf32>
    %72 = vector.broadcast %71 : vector<8x2x1xf32> to vector<8x2x2xf32>
    %73 = arith.divf %69, %72 : vector<8x2x2xf32>
    %74 = vector.extract_strided_slice %18 {offsets = [0, 0, 32], sizes = [8, 2, 16], strides = [1, 1, 1]} : vector<8x2x128xbf16> to vector<8x2x16xbf16>
    %75 = arith.truncf %73 : vector<8x2x2xf32> to vector<8x2x2xbf16>
    "tpu.trace_start"() <{level = 10 : i32, message = "nij,njd->nid"}> : () -> ()
    %cst_26 = arith.constant dense<0.000000e+00> : vector<8x2x16xf32>
    %76 = tpu.matmul %75, %74, %cst_26 {dimension_numbers = #tpu.dot_dimension_numbers<[2], [1], [1], [2], [0, 0, 0, 1, 1, 2], [0], [0]>} : vector<8x2x2xbf16>, vector<8x2x16xbf16>, vector<8x2x16xf32> -> vector<8x2x16xf32>
    "tpu.trace_stop"() : () -> ()
    %77 = vector.shape_cast %76 : vector<8x2x16xf32> to vector<16x16xf32>
    %c0_27 = arith.constant 0 : index
    %c32 = arith.constant 32 : index
    %c0_28 = arith.constant 0 : index
    %78 = vector.load %arg3[%c0_27, %c32, %c0_28] : memref<2x128x128xbf16, #tpu.memory_space<vmem>>, vector<1x16x128xbf16>
    %79 = vector.shape_cast %78 : vector<1x16x128xbf16> to vector<16x128xbf16>
    %80 = arith.truncf %77 : vector<16x16xf32> to vector<16x16xbf16>
    %cst_29 = arith.constant dense<0.000000e+00> : vector<16x128xf32>
    %81 = tpu.matmul %80, %79, %cst_29 {dimension_numbers = #tpu.dot_dimension_numbers<[1], [0], [0], [1], [0, 0, 1, 1], [], []>} : vector<16x16xbf16>, vector<16x128xbf16>, vector<16x128xf32> -> vector<16x128xf32>
    %82 = arith.addf %61, %81 : vector<16x128xf32>
    %83 = vector.extract_strided_slice %12 {offsets = [0, 0, 48], sizes = [8, 2, 16], strides = [1, 1, 1]} : vector<8x2x128xbf16> to vector<8x2x16xbf16>
    %84 = vector.extract_strided_slice %15 {offsets = [0, 0, 48], sizes = [8, 2, 16], strides = [1, 1, 1]} : vector<8x2x128xbf16> to vector<8x2x16xbf16>
    "tpu.trace_start"() <{level = 10 : i32, message = "nid,njd->nij"}> : () -> ()
    %cst_30 = arith.constant dense<0.000000e+00> : vector<8x2x2xf32>
    %85 = tpu.matmul %83, %84, %cst_30 {dimension_numbers = #tpu.dot_dimension_numbers<[2], [2], [1], [1], [0, 0, 0, 1, 1, 1], [0], [0]>} : vector<8x2x16xbf16>, vector<8x2x16xbf16>, vector<8x2x2xf32> -> vector<8x2x2xf32>
    "tpu.trace_stop"() : () -> ()
    %cst_31 = arith.constant dense<0xFF800000> : vector<8x2xf32>
    %86 = vector.multi_reduction <maximumf>, %85, %cst_31 [2] : vector<8x2x2xf32> to vector<8x2xf32>
    %87 = vector.shape_cast %86 : vector<8x2xf32> to vector<8x2x1xf32>
    %88 = vector.broadcast %87 : vector<8x2x1xf32> to vector<8x2x2xf32>
    %89 = arith.subf %85, %88 : vector<8x2x2xf32>
    %90 = math.exp %89 : vector<8x2x2xf32>
    %cst_32 = arith.constant dense<0.000000e+00> : vector<8x2xf32>
    %91 = vector.multi_reduction <add>, %90, %cst_32 [2] : vector<8x2x2xf32> to vector<8x2xf32>
    %92 = vector.shape_cast %91 : vector<8x2xf32> to vector<8x2x1xf32>
    %93 = vector.broadcast %92 : vector<8x2x1xf32> to vector<8x2x2xf32>
    %94 = arith.divf %90, %93 : vector<8x2x2xf32>
    %95 = vector.extract_strided_slice %18 {offsets = [0, 0, 48], sizes = [8, 2, 16], strides = [1, 1, 1]} : vector<8x2x128xbf16> to vector<8x2x16xbf16>
    %96 = arith.truncf %94 : vector<8x2x2xf32> to vector<8x2x2xbf16>
    "tpu.trace_start"() <{level = 10 : i32, message = "nij,njd->nid"}> : () -> ()
    %cst_33 = arith.constant dense<0.000000e+00> : vector<8x2x16xf32>
    %97 = tpu.matmul %96, %95, %cst_33 {dimension_numbers = #tpu.dot_dimension_numbers<[2], [1], [1], [2], [0, 0, 0, 1, 1, 2], [0], [0]>} : vector<8x2x2xbf16>, vector<8x2x16xbf16>, vector<8x2x16xf32> -> vector<8x2x16xf32>
    "tpu.trace_stop"() : () -> ()
    %98 = vector.shape_cast %97 : vector<8x2x16xf32> to vector<16x16xf32>
    %c0_34 = arith.constant 0 : index
    %c48 = arith.constant 48 : index
    %c0_35 = arith.constant 0 : index
    %99 = vector.load %arg3[%c0_34, %c48, %c0_35] : memref<2x128x128xbf16, #tpu.memory_space<vmem>>, vector<1x16x128xbf16>
    %100 = vector.shape_cast %99 : vector<1x16x128xbf16> to vector<16x128xbf16>
    %101 = arith.truncf %98 : vector<16x16xf32> to vector<16x16xbf16>
    %cst_36 = arith.constant dense<0.000000e+00> : vector<16x128xf32>
    %102 = tpu.matmul %101, %100, %cst_36 {dimension_numbers = #tpu.dot_dimension_numbers<[1], [0], [0], [1], [0, 0, 1, 1], [], []>} : vector<16x16xbf16>, vector<16x128xbf16>, vector<16x128xf32> -> vector<16x128xf32>
    %103 = arith.addf %82, %102 : vector<16x128xf32>
    %104 = vector.extract_strided_slice %12 {offsets = [0, 0, 64], sizes = [8, 2, 16], strides = [1, 1, 1]} : vector<8x2x128xbf16> to vector<8x2x16xbf16>
    %105 = vector.extract_strided_slice %15 {offsets = [0, 0, 64], sizes = [8, 2, 16], strides = [1, 1, 1]} : vector<8x2x128xbf16> to vector<8x2x16xbf16>
    "tpu.trace_start"() <{level = 10 : i32, message = "nid,njd->nij"}> : () -> ()
    %cst_37 = arith.constant dense<0.000000e+00> : vector<8x2x2xf32>
    %106 = tpu.matmul %104, %105, %cst_37 {dimension_numbers = #tpu.dot_dimension_numbers<[2], [2], [1], [1], [0, 0, 0, 1, 1, 1], [0], [0]>} : vector<8x2x16xbf16>, vector<8x2x16xbf16>, vector<8x2x2xf32> -> vector<8x2x2xf32>
    "tpu.trace_stop"() : () -> ()
    %cst_38 = arith.constant dense<0xFF800000> : vector<8x2xf32>
    %107 = vector.multi_reduction <maximumf>, %106, %cst_38 [2] : vector<8x2x2xf32> to vector<8x2xf32>
    %108 = vector.shape_cast %107 : vector<8x2xf32> to vector<8x2x1xf32>
    %109 = vector.broadcast %108 : vector<8x2x1xf32> to vector<8x2x2xf32>
    %110 = arith.subf %106, %109 : vector<8x2x2xf32>
    %111 = math.exp %110 : vector<8x2x2xf32>
    %cst_39 = arith.constant dense<0.000000e+00> : vector<8x2xf32>
    %112 = vector.multi_reduction <add>, %111, %cst_39 [2] : vector<8x2x2xf32> to vector<8x2xf32>
    %113 = vector.shape_cast %112 : vector<8x2xf32> to vector<8x2x1xf32>
    %114 = vector.broadcast %113 : vector<8x2x1xf32> to vector<8x2x2xf32>
    %115 = arith.divf %111, %114 : vector<8x2x2xf32>
    %116 = vector.extract_strided_slice %18 {offsets = [0, 0, 64], sizes = [8, 2, 16], strides = [1, 1, 1]} : vector<8x2x128xbf16> to vector<8x2x16xbf16>
    %117 = arith.truncf %115 : vector<8x2x2xf32> to vector<8x2x2xbf16>
    "tpu.trace_start"() <{level = 10 : i32, message = "nij,njd->nid"}> : () -> ()
    %cst_40 = arith.constant dense<0.000000e+00> : vector<8x2x16xf32>
    %118 = tpu.matmul %117, %116, %cst_40 {dimension_numbers = #tpu.dot_dimension_numbers<[2], [1], [1], [2], [0, 0, 0, 1, 1, 2], [0], [0]>} : vector<8x2x2xbf16>, vector<8x2x16xbf16>, vector<8x2x16xf32> -> vector<8x2x16xf32>
    "tpu.trace_stop"() : () -> ()
    %119 = vector.shape_cast %118 : vector<8x2x16xf32> to vector<16x16xf32>
    %c0_41 = arith.constant 0 : index
    %c64 = arith.constant 64 : index
    %c0_42 = arith.constant 0 : index
    %120 = vector.load %arg3[%c0_41, %c64, %c0_42] : memref<2x128x128xbf16, #tpu.memory_space<vmem>>, vector<1x16x128xbf16>
    %121 = vector.shape_cast %120 : vector<1x16x128xbf16> to vector<16x128xbf16>
    %122 = arith.truncf %119 : vector<16x16xf32> to vector<16x16xbf16>
    %cst_43 = arith.constant dense<0.000000e+00> : vector<16x128xf32>
    %123 = tpu.matmul %122, %121, %cst_43 {dimension_numbers = #tpu.dot_dimension_numbers<[1], [0], [0], [1], [0, 0, 1, 1], [], []>} : vector<16x16xbf16>, vector<16x128xbf16>, vector<16x128xf32> -> vector<16x128xf32>
    %124 = arith.addf %103, %123 : vector<16x128xf32>
    %125 = vector.extract_strided_slice %12 {offsets = [0, 0, 80], sizes = [8, 2, 16], strides = [1, 1, 1]} : vector<8x2x128xbf16> to vector<8x2x16xbf16>
    %126 = vector.extract_strided_slice %15 {offsets = [0, 0, 80], sizes = [8, 2, 16], strides = [1, 1, 1]} : vector<8x2x128xbf16> to vector<8x2x16xbf16>
    "tpu.trace_start"() <{level = 10 : i32, message = "nid,njd->nij"}> : () -> ()
    %cst_44 = arith.constant dense<0.000000e+00> : vector<8x2x2xf32>
    %127 = tpu.matmul %125, %126, %cst_44 {dimension_numbers = #tpu.dot_dimension_numbers<[2], [2], [1], [1], [0, 0, 0, 1, 1, 1], [0], [0]>} : vector<8x2x16xbf16>, vector<8x2x16xbf16>, vector<8x2x2xf32> -> vector<8x2x2xf32>
    "tpu.trace_stop"() : () -> ()
    %cst_45 = arith.constant dense<0xFF800000> : vector<8x2xf32>
    %128 = vector.multi_reduction <maximumf>, %127, %cst_45 [2] : vector<8x2x2xf32> to vector<8x2xf32>
    %129 = vector.shape_cast %128 : vector<8x2xf32> to vector<8x2x1xf32>
    %130 = vector.broadcast %129 : vector<8x2x1xf32> to vector<8x2x2xf32>
    %131 = arith.subf %127, %130 : vector<8x2x2xf32>
    %132 = math.exp %131 : vector<8x2x2xf32>
    %cst_46 = arith.constant dense<0.000000e+00> : vector<8x2xf32>
    %133 = vector.multi_reduction <add>, %132, %cst_46 [2] : vector<8x2x2xf32> to vector<8x2xf32>
    %134 = vector.shape_cast %133 : vector<8x2xf32> to vector<8x2x1xf32>
    %135 = vector.broadcast %134 : vector<8x2x1xf32> to vector<8x2x2xf32>
    %136 = arith.divf %132, %135 : vector<8x2x2xf32>
    %137 = vector.extract_strided_slice %18 {offsets = [0, 0, 80], sizes = [8, 2, 16], strides = [1, 1, 1]} : vector<8x2x128xbf16> to vector<8x2x16xbf16>
    %138 = arith.truncf %136 : vector<8x2x2xf32> to vector<8x2x2xbf16>
    "tpu.trace_start"() <{level = 10 : i32, message = "nij,njd->nid"}> : () -> ()
    %cst_47 = arith.constant dense<0.000000e+00> : vector<8x2x16xf32>
    %139 = tpu.matmul %138, %137, %cst_47 {dimension_numbers = #tpu.dot_dimension_numbers<[2], [1], [1], [2], [0, 0, 0, 1, 1, 2], [0], [0]>} : vector<8x2x2xbf16>, vector<8x2x16xbf16>, vector<8x2x16xf32> -> vector<8x2x16xf32>
    "tpu.trace_stop"() : () -> ()
    %140 = vector.shape_cast %139 : vector<8x2x16xf32> to vector<16x16xf32>
    %c0_48 = arith.constant 0 : index
    %c80 = arith.constant 80 : index
    %c0_49 = arith.constant 0 : index
    %141 = vector.load %arg3[%c0_48, %c80, %c0_49] : memref<2x128x128xbf16, #tpu.memory_space<vmem>>, vector<1x16x128xbf16>
    %142 = vector.shape_cast %141 : vector<1x16x128xbf16> to vector<16x128xbf16>
    %143 = arith.truncf %140 : vector<16x16xf32> to vector<16x16xbf16>
    %cst_50 = arith.constant dense<0.000000e+00> : vector<16x128xf32>
    %144 = tpu.matmul %143, %142, %cst_50 {dimension_numbers = #tpu.dot_dimension_numbers<[1], [0], [0], [1], [0, 0, 1, 1], [], []>} : vector<16x16xbf16>, vector<16x128xbf16>, vector<16x128xf32> -> vector<16x128xf32>
    %145 = arith.addf %124, %144 : vector<16x128xf32>
    %146 = vector.extract_strided_slice %12 {offsets = [0, 0, 96], sizes = [8, 2, 16], strides = [1, 1, 1]} : vector<8x2x128xbf16> to vector<8x2x16xbf16>
    %147 = vector.extract_strided_slice %15 {offsets = [0, 0, 96], sizes = [8, 2, 16], strides = [1, 1, 1]} : vector<8x2x128xbf16> to vector<8x2x16xbf16>
    "tpu.trace_start"() <{level = 10 : i32, message = "nid,njd->nij"}> : () -> ()
    %cst_51 = arith.constant dense<0.000000e+00> : vector<8x2x2xf32>
    %148 = tpu.matmul %146, %147, %cst_51 {dimension_numbers = #tpu.dot_dimension_numbers<[2], [2], [1], [1], [0, 0, 0, 1, 1, 1], [0], [0]>} : vector<8x2x16xbf16>, vector<8x2x16xbf16>, vector<8x2x2xf32> -> vector<8x2x2xf32>
    "tpu.trace_stop"() : () -> ()
    %cst_52 = arith.constant dense<0xFF800000> : vector<8x2xf32>
    %149 = vector.multi_reduction <maximumf>, %148, %cst_52 [2] : vector<8x2x2xf32> to vector<8x2xf32>
    %150 = vector.shape_cast %149 : vector<8x2xf32> to vector<8x2x1xf32>
    %151 = vector.broadcast %150 : vector<8x2x1xf32> to vector<8x2x2xf32>
    %152 = arith.subf %148, %151 : vector<8x2x2xf32>
    %153 = math.exp %152 : vector<8x2x2xf32>
    %cst_53 = arith.constant dense<0.000000e+00> : vector<8x2xf32>
    %154 = vector.multi_reduction <add>, %153, %cst_53 [2] : vector<8x2x2xf32> to vector<8x2xf32>
    %155 = vector.shape_cast %154 : vector<8x2xf32> to vector<8x2x1xf32>
    %156 = vector.broadcast %155 : vector<8x2x1xf32> to vector<8x2x2xf32>
    %157 = arith.divf %153, %156 : vector<8x2x2xf32>
    %158 = vector.extract_strided_slice %18 {offsets = [0, 0, 96], sizes = [8, 2, 16], strides = [1, 1, 1]} : vector<8x2x128xbf16> to vector<8x2x16xbf16>
    %159 = arith.truncf %157 : vector<8x2x2xf32> to vector<8x2x2xbf16>
    "tpu.trace_start"() <{level = 10 : i32, message = "nij,njd->nid"}> : () -> ()
    %cst_54 = arith.constant dense<0.000000e+00> : vector<8x2x16xf32>
    %160 = tpu.matmul %159, %158, %cst_54 {dimension_numbers = #tpu.dot_dimension_numbers<[2], [1], [1], [2], [0, 0, 0, 1, 1, 2], [0], [0]>} : vector<8x2x2xbf16>, vector<8x2x16xbf16>, vector<8x2x16xf32> -> vector<8x2x16xf32>
    "tpu.trace_stop"() : () -> ()
    %161 = vector.shape_cast %160 : vector<8x2x16xf32> to vector<16x16xf32>
    %c0_55 = arith.constant 0 : index
    %c96 = arith.constant 96 : index
    %c0_56 = arith.constant 0 : index
    %162 = vector.load %arg3[%c0_55, %c96, %c0_56] : memref<2x128x128xbf16, #tpu.memory_space<vmem>>, vector<1x16x128xbf16>
    %163 = vector.shape_cast %162 : vector<1x16x128xbf16> to vector<16x128xbf16>
    %164 = arith.truncf %161 : vector<16x16xf32> to vector<16x16xbf16>
    %cst_57 = arith.constant dense<0.000000e+00> : vector<16x128xf32>
    %165 = tpu.matmul %164, %163, %cst_57 {dimension_numbers = #tpu.dot_dimension_numbers<[1], [0], [0], [1], [0, 0, 1, 1], [], []>} : vector<16x16xbf16>, vector<16x128xbf16>, vector<16x128xf32> -> vector<16x128xf32>
    %166 = arith.addf %145, %165 : vector<16x128xf32>
    %167 = vector.extract_strided_slice %12 {offsets = [0, 0, 112], sizes = [8, 2, 16], strides = [1, 1, 1]} : vector<8x2x128xbf16> to vector<8x2x16xbf16>
    %168 = vector.extract_strided_slice %15 {offsets = [0, 0, 112], sizes = [8, 2, 16], strides = [1, 1, 1]} : vector<8x2x128xbf16> to vector<8x2x16xbf16>
    "tpu.trace_start"() <{level = 10 : i32, message = "nid,njd->nij"}> : () -> ()
    %cst_58 = arith.constant dense<0.000000e+00> : vector<8x2x2xf32>
    %169 = tpu.matmul %167, %168, %cst_58 {dimension_numbers = #tpu.dot_dimension_numbers<[2], [2], [1], [1], [0, 0, 0, 1, 1, 1], [0], [0]>} : vector<8x2x16xbf16>, vector<8x2x16xbf16>, vector<8x2x2xf32> -> vector<8x2x2xf32>
    "tpu.trace_stop"() : () -> ()
    %cst_59 = arith.constant dense<0xFF800000> : vector<8x2xf32>
    %170 = vector.multi_reduction <maximumf>, %169, %cst_59 [2] : vector<8x2x2xf32> to vector<8x2xf32>
    %171 = vector.shape_cast %170 : vector<8x2xf32> to vector<8x2x1xf32>
    %172 = vector.broadcast %171 : vector<8x2x1xf32> to vector<8x2x2xf32>
    %173 = arith.subf %169, %172 : vector<8x2x2xf32>
    %174 = math.exp %173 : vector<8x2x2xf32>
    %cst_60 = arith.constant dense<0.000000e+00> : vector<8x2xf32>
    %175 = vector.multi_reduction <add>, %174, %cst_60 [2] : vector<8x2x2xf32> to vector<8x2xf32>
    %176 = vector.shape_cast %175 : vector<8x2xf32> to vector<8x2x1xf32>
    %177 = vector.broadcast %176 : vector<8x2x1xf32> to vector<8x2x2xf32>
    %178 = arith.divf %174, %177 : vector<8x2x2xf32>
    %179 = vector.extract_strided_slice %18 {offsets = [0, 0, 112], sizes = [8, 2, 16], strides = [1, 1, 1]} : vector<8x2x128xbf16> to vector<8x2x16xbf16>
    %180 = arith.truncf %178 : vector<8x2x2xf32> to vector<8x2x2xbf16>
    "tpu.trace_start"() <{level = 10 : i32, message = "nij,njd->nid"}> : () -> ()
    %cst_61 = arith.constant dense<0.000000e+00> : vector<8x2x16xf32>
    %181 = tpu.matmul %180, %179, %cst_61 {dimension_numbers = #tpu.dot_dimension_numbers<[2], [1], [1], [2], [0, 0, 0, 1, 1, 2], [0], [0]>} : vector<8x2x2xbf16>, vector<8x2x16xbf16>, vector<8x2x16xf32> -> vector<8x2x16xf32>
    "tpu.trace_stop"() : () -> ()
    %182 = vector.shape_cast %181 : vector<8x2x16xf32> to vector<16x16xf32>
    %c0_62 = arith.constant 0 : index
    %c112 = arith.constant 112 : index
    %c0_63 = arith.constant 0 : index
    %183 = vector.load %arg3[%c0_62, %c112, %c0_63] : memref<2x128x128xbf16, #tpu.memory_space<vmem>>, vector<1x16x128xbf16>
    %184 = vector.shape_cast %183 : vector<1x16x128xbf16> to vector<16x128xbf16>
    %185 = arith.truncf %182 : vector<16x16xf32> to vector<16x16xbf16>
    %cst_64 = arith.constant dense<0.000000e+00> : vector<16x128xf32>
    %186 = tpu.matmul %185, %184, %cst_64 {dimension_numbers = #tpu.dot_dimension_numbers<[1], [0], [0], [1], [0, 0, 1, 1], [], []>} : vector<16x16xbf16>, vector<16x128xbf16>, vector<16x128xf32> -> vector<16x128xf32>
    %187 = arith.addf %166, %186 : vector<16x128xf32>
    %c0_65 = arith.constant 0 : index
    %c384 = arith.constant 384 : index
    %188 = vector.load %arg1[%c0_65, %c384] : memref<2x1408xf32, #tpu.memory_space<vmem>>, vector<1x128xf32>
    %189 = vector.broadcast %188 : vector<1x128xf32> to vector<16x128xf32>
    %190 = arith.addf %187, %189 : vector<16x128xf32>
    %191 = arith.addf %0, %190 : vector<16x128xf32>
    %c0_66 = arith.constant 0 : index
    %c896 = arith.constant 896 : index
    %192 = vector.load %arg1[%c0_66, %c896] : memref<2x1408xf32, #tpu.memory_space<vmem>>, vector<1x128xf32>
    %c0_67 = arith.constant 0 : index
    %c1024 = arith.constant 1024 : index
    %193 = vector.load %arg1[%c0_67, %c1024] : memref<2x1408xf32, #tpu.memory_space<vmem>>, vector<1x128xf32>
    %cst_68 = arith.constant dense<0.000000e+00> : vector<16xf32>
    %194 = vector.multi_reduction <add>, %191, %cst_68 [1] : vector<16x128xf32> to vector<16xf32>
    %195 = vector.shape_cast %194 : vector<16xf32> to vector<16x1xf32>
    %cst_69 = arith.constant 1.280000e+02 : f32
    %196 = vector.broadcast %cst_69 : f32 to vector<16x1xf32>
    %197 = arith.divf %195, %196 : vector<16x1xf32>
    %198 = vector.broadcast %197 : vector<16x1xf32> to vector<16x128xf32>
    %199 = arith.subf %191, %198 : vector<16x128xf32>
    %200 = arith.mulf %199, %199 : vector<16x128xf32>
    %cst_70 = arith.constant dense<0.000000e+00> : vector<16xf32>
    %201 = vector.multi_reduction <add>, %200, %cst_70 [1] : vector<16x128xf32> to vector<16xf32>
    %202 = vector.shape_cast %201 : vector<16xf32> to vector<16x1xf32>
    %cst_71 = arith.constant 1.280000e+02 : f32
    %203 = vector.broadcast %cst_71 : f32 to vector<16x1xf32>
    %204 = arith.divf %202, %203 : vector<16x1xf32>
    %205 = vector.broadcast %197 : vector<16x1xf32> to vector<16x128xf32>
    %206 = arith.subf %191, %205 : vector<16x128xf32>
    %cst_72 = arith.constant 9.99999974E-6 : f32
    %207 = vector.broadcast %cst_72 : f32 to vector<16x1xf32>
    %208 = arith.addf %204, %207 : vector<16x1xf32>
    %209 = math.rsqrt %208 : vector<16x1xf32>
    %210 = vector.broadcast %209 : vector<16x1xf32> to vector<16x128xf32>
    %211 = arith.mulf %206, %210 : vector<16x128xf32>
    %212 = vector.broadcast %192 : vector<1x128xf32> to vector<16x128xf32>
    %213 = arith.mulf %211, %212 : vector<16x128xf32>
    %214 = vector.broadcast %193 : vector<1x128xf32> to vector<16x128xf32>
    %215 = arith.addf %213, %214 : vector<16x128xf32>
    %c0_73 = arith.constant 0 : index
    %c0_74 = arith.constant 0 : index
    %c0_75 = arith.constant 0 : index
    %216 = vector.load %arg4[%c0_73, %c0_74, %c0_75] : memref<2x128x256xbf16, #tpu.memory_space<vmem>>, vector<1x128x256xbf16>
    %217 = vector.shape_cast %216 : vector<1x128x256xbf16> to vector<128x256xbf16>
    %218 = arith.truncf %215 : vector<16x128xf32> to vector<16x128xbf16>
    %cst_76 = arith.constant dense<0.000000e+00> : vector<16x256xf32>
    %219 = tpu.matmul %218, %217, %cst_76 {dimension_numbers = #tpu.dot_dimension_numbers<[1], [0], [0], [1], [0, 0, 1, 1], [], []>} : vector<16x128xbf16>, vector<128x256xbf16>, vector<16x256xf32> -> vector<16x256xf32>
    %c0_77 = arith.constant 0 : index
    %c512 = arith.constant 512 : index
    %220 = vector.load %arg1[%c0_77, %c512] : memref<2x1408xf32, #tpu.memory_space<vmem>>, vector<1x256xf32>
    %221 = vector.broadcast %220 : vector<1x256xf32> to vector<16x256xf32>
    %222 = arith.addf %219, %221 : vector<16x256xf32>
    %cst_78 = arith.constant 0.000000e+00 : f32
    %223 = vector.broadcast %cst_78 : f32 to vector<16x256xf32>
    %224 = arith.maximumf %222, %223 : vector<16x256xf32>
    %c0_79 = arith.constant 0 : index
    %c0_80 = arith.constant 0 : index
    %c0_81 = arith.constant 0 : index
    %225 = vector.load %arg5[%c0_79, %c0_80, %c0_81] : memref<2x256x128xbf16, #tpu.memory_space<vmem>>, vector<1x256x128xbf16>
    %226 = vector.shape_cast %225 : vector<1x256x128xbf16> to vector<256x128xbf16>
    %227 = arith.truncf %224 : vector<16x256xf32> to vector<16x256xbf16>
    %cst_82 = arith.constant dense<0.000000e+00> : vector<16x128xf32>
    %228 = tpu.matmul %227, %226, %cst_82 {dimension_numbers = #tpu.dot_dimension_numbers<[1], [0], [0], [1], [0, 0, 1, 1], [], []>} : vector<16x256xbf16>, vector<256x128xbf16>, vector<16x128xf32> -> vector<16x128xf32>
    %c0_83 = arith.constant 0 : index
    %c768 = arith.constant 768 : index
    %229 = vector.load %arg1[%c0_83, %c768] : memref<2x1408xf32, #tpu.memory_space<vmem>>, vector<1x128xf32>
    %230 = vector.broadcast %229 : vector<1x128xf32> to vector<16x128xf32>
    %231 = arith.addf %228, %230 : vector<16x128xf32>
    %232 = arith.addf %215, %231 : vector<16x128xf32>
    %c0_84 = arith.constant 0 : index
    %c1152 = arith.constant 1152 : index
    %233 = vector.load %arg1[%c0_84, %c1152] : memref<2x1408xf32, #tpu.memory_space<vmem>>, vector<1x128xf32>
    %c0_85 = arith.constant 0 : index
    %c1280 = arith.constant 1280 : index
    %234 = vector.load %arg1[%c0_85, %c1280] : memref<2x1408xf32, #tpu.memory_space<vmem>>, vector<1x128xf32>
    %cst_86 = arith.constant dense<0.000000e+00> : vector<16xf32>
    %235 = vector.multi_reduction <add>, %232, %cst_86 [1] : vector<16x128xf32> to vector<16xf32>
    %236 = vector.shape_cast %235 : vector<16xf32> to vector<16x1xf32>
    %cst_87 = arith.constant 1.280000e+02 : f32
    %237 = vector.broadcast %cst_87 : f32 to vector<16x1xf32>
    %238 = arith.divf %236, %237 : vector<16x1xf32>
    %239 = vector.broadcast %238 : vector<16x1xf32> to vector<16x128xf32>
    %240 = arith.subf %232, %239 : vector<16x128xf32>
    %241 = arith.mulf %240, %240 : vector<16x128xf32>
    %cst_88 = arith.constant dense<0.000000e+00> : vector<16xf32>
    %242 = vector.multi_reduction <add>, %241, %cst_88 [1] : vector<16x128xf32> to vector<16xf32>
    %243 = vector.shape_cast %242 : vector<16xf32> to vector<16x1xf32>
    %cst_89 = arith.constant 1.280000e+02 : f32
    %244 = vector.broadcast %cst_89 : f32 to vector<16x1xf32>
    %245 = arith.divf %243, %244 : vector<16x1xf32>
    %246 = vector.broadcast %238 : vector<16x1xf32> to vector<16x128xf32>
    %247 = arith.subf %232, %246 : vector<16x128xf32>
    %cst_90 = arith.constant 9.99999974E-6 : f32
    %248 = vector.broadcast %cst_90 : f32 to vector<16x1xf32>
    %249 = arith.addf %245, %248 : vector<16x1xf32>
    %250 = math.rsqrt %249 : vector<16x1xf32>
    %251 = vector.broadcast %250 : vector<16x1xf32> to vector<16x128xf32>
    %252 = arith.mulf %247, %251 : vector<16x128xf32>
    %253 = vector.broadcast %233 : vector<1x128xf32> to vector<16x128xf32>
    %254 = arith.mulf %252, %253 : vector<16x128xf32>
    %255 = vector.broadcast %234 : vector<1x128xf32> to vector<16x128xf32>
    %256 = arith.addf %254, %255 : vector<16x128xf32>
    %c1 = arith.constant 1 : index
    %c0_91 = arith.constant 0 : index
    %c0_92 = arith.constant 0 : index
    %257 = vector.load %arg2[%c1, %c0_91, %c0_92] : memref<2x128x384xbf16, #tpu.memory_space<vmem>>, vector<1x128x384xbf16>
    %258 = vector.shape_cast %257 : vector<1x128x384xbf16> to vector<128x384xbf16>
    %259 = arith.truncf %256 : vector<16x128xf32> to vector<16x128xbf16>
    %cst_93 = arith.constant dense<0.000000e+00> : vector<16x384xf32>
    %260 = tpu.matmul %259, %258, %cst_93 {dimension_numbers = #tpu.dot_dimension_numbers<[1], [0], [0], [1], [0, 0, 1, 1], [], []>} : vector<16x128xbf16>, vector<128x384xbf16>, vector<16x384xf32> -> vector<16x384xf32>
    %c1_94 = arith.constant 1 : index
    %c0_95 = arith.constant 0 : index
    %261 = vector.load %arg1[%c1_94, %c0_95] : memref<2x1408xf32, #tpu.memory_space<vmem>>, vector<1x384xf32>
    %262 = vector.broadcast %261 : vector<1x384xf32> to vector<16x384xf32>
    %263 = arith.addf %260, %262 : vector<16x384xf32>
    %264 = vector.extract_strided_slice %263 {offsets = [0, 0], sizes = [16, 128], strides = [1, 1]} : vector<16x384xf32> to vector<16x128xf32>
    %cst_96 = arith.constant 2.500000e-01 : f32
    %265 = vector.broadcast %cst_96 : f32 to vector<16x128xf32>
    %266 = arith.mulf %264, %265 : vector<16x128xf32>
    %267 = arith.truncf %266 : vector<16x128xf32> to vector<16x128xbf16>
    %268 = vector.shape_cast %267 : vector<16x128xbf16> to vector<8x2x128xbf16>
    %269 = vector.extract_strided_slice %263 {offsets = [0, 128], sizes = [16, 128], strides = [1, 1]} : vector<16x384xf32> to vector<16x128xf32>
    %270 = arith.truncf %269 : vector<16x128xf32> to vector<16x128xbf16>
    %271 = vector.shape_cast %270 : vector<16x128xbf16> to vector<8x2x128xbf16>
    %272 = vector.extract_strided_slice %263 {offsets = [0, 256], sizes = [16, 128], strides = [1, 1]} : vector<16x384xf32> to vector<16x128xf32>
    %273 = arith.truncf %272 : vector<16x128xf32> to vector<16x128xbf16>
    %274 = vector.shape_cast %273 : vector<16x128xbf16> to vector<8x2x128xbf16>
    %cst_97 = arith.constant 0.000000e+00 : f32
    %275 = vector.broadcast %cst_97 : f32 to vector<16x128xf32>
    %276 = vector.extract_strided_slice %268 {offsets = [0, 0, 0], sizes = [8, 2, 16], strides = [1, 1, 1]} : vector<8x2x128xbf16> to vector<8x2x16xbf16>
    %277 = vector.extract_strided_slice %271 {offsets = [0, 0, 0], sizes = [8, 2, 16], strides = [1, 1, 1]} : vector<8x2x128xbf16> to vector<8x2x16xbf16>
    "tpu.trace_start"() <{level = 10 : i32, message = "nid,njd->nij"}> : () -> ()
    %cst_98 = arith.constant dense<0.000000e+00> : vector<8x2x2xf32>
    %278 = tpu.matmul %276, %277, %cst_98 {dimension_numbers = #tpu.dot_dimension_numbers<[2], [2], [1], [1], [0, 0, 0, 1, 1, 1], [0], [0]>} : vector<8x2x16xbf16>, vector<8x2x16xbf16>, vector<8x2x2xf32> -> vector<8x2x2xf32>
    "tpu.trace_stop"() : () -> ()
    %cst_99 = arith.constant dense<0xFF800000> : vector<8x2xf32>
    %279 = vector.multi_reduction <maximumf>, %278, %cst_99 [2] : vector<8x2x2xf32> to vector<8x2xf32>
    %280 = vector.shape_cast %279 : vector<8x2xf32> to vector<8x2x1xf32>
    %281 = vector.broadcast %280 : vector<8x2x1xf32> to vector<8x2x2xf32>
    %282 = arith.subf %278, %281 : vector<8x2x2xf32>
    %283 = math.exp %282 : vector<8x2x2xf32>
    %cst_100 = arith.constant dense<0.000000e+00> : vector<8x2xf32>
    %284 = vector.multi_reduction <add>, %283, %cst_100 [2] : vector<8x2x2xf32> to vector<8x2xf32>
    %285 = vector.shape_cast %284 : vector<8x2xf32> to vector<8x2x1xf32>
    %286 = vector.broadcast %285 : vector<8x2x1xf32> to vector<8x2x2xf32>
    %287 = arith.divf %283, %286 : vector<8x2x2xf32>
    %288 = vector.extract_strided_slice %274 {offsets = [0, 0, 0], sizes = [8, 2, 16], strides = [1, 1, 1]} : vector<8x2x128xbf16> to vector<8x2x16xbf16>
    %289 = arith.truncf %287 : vector<8x2x2xf32> to vector<8x2x2xbf16>
    "tpu.trace_start"() <{level = 10 : i32, message = "nij,njd->nid"}> : () -> ()
    %cst_101 = arith.constant dense<0.000000e+00> : vector<8x2x16xf32>
    %290 = tpu.matmul %289, %288, %cst_101 {dimension_numbers = #tpu.dot_dimension_numbers<[2], [1], [1], [2], [0, 0, 0, 1, 1, 2], [0], [0]>} : vector<8x2x2xbf16>, vector<8x2x16xbf16>, vector<8x2x16xf32> -> vector<8x2x16xf32>
    "tpu.trace_stop"() : () -> ()
    %291 = vector.shape_cast %290 : vector<8x2x16xf32> to vector<16x16xf32>
    %c1_102 = arith.constant 1 : index
    %c0_103 = arith.constant 0 : index
    %c0_104 = arith.constant 0 : index
    %292 = vector.load %arg3[%c1_102, %c0_103, %c0_104] : memref<2x128x128xbf16, #tpu.memory_space<vmem>>, vector<1x16x128xbf16>
    %293 = vector.shape_cast %292 : vector<1x16x128xbf16> to vector<16x128xbf16>
    %294 = arith.truncf %291 : vector<16x16xf32> to vector<16x16xbf16>
    %cst_105 = arith.constant dense<0.000000e+00> : vector<16x128xf32>
    %295 = tpu.matmul %294, %293, %cst_105 {dimension_numbers = #tpu.dot_dimension_numbers<[1], [0], [0], [1], [0, 0, 1, 1], [], []>} : vector<16x16xbf16>, vector<16x128xbf16>, vector<16x128xf32> -> vector<16x128xf32>
    %296 = arith.addf %275, %295 : vector<16x128xf32>
    %297 = vector.extract_strided_slice %268 {offsets = [0, 0, 16], sizes = [8, 2, 16], strides = [1, 1, 1]} : vector<8x2x128xbf16> to vector<8x2x16xbf16>
    %298 = vector.extract_strided_slice %271 {offsets = [0, 0, 16], sizes = [8, 2, 16], strides = [1, 1, 1]} : vector<8x2x128xbf16> to vector<8x2x16xbf16>
    "tpu.trace_start"() <{level = 10 : i32, message = "nid,njd->nij"}> : () -> ()
    %cst_106 = arith.constant dense<0.000000e+00> : vector<8x2x2xf32>
    %299 = tpu.matmul %297, %298, %cst_106 {dimension_numbers = #tpu.dot_dimension_numbers<[2], [2], [1], [1], [0, 0, 0, 1, 1, 1], [0], [0]>} : vector<8x2x16xbf16>, vector<8x2x16xbf16>, vector<8x2x2xf32> -> vector<8x2x2xf32>
    "tpu.trace_stop"() : () -> ()
    %cst_107 = arith.constant dense<0xFF800000> : vector<8x2xf32>
    %300 = vector.multi_reduction <maximumf>, %299, %cst_107 [2] : vector<8x2x2xf32> to vector<8x2xf32>
    %301 = vector.shape_cast %300 : vector<8x2xf32> to vector<8x2x1xf32>
    %302 = vector.broadcast %301 : vector<8x2x1xf32> to vector<8x2x2xf32>
    %303 = arith.subf %299, %302 : vector<8x2x2xf32>
    %304 = math.exp %303 : vector<8x2x2xf32>
    %cst_108 = arith.constant dense<0.000000e+00> : vector<8x2xf32>
    %305 = vector.multi_reduction <add>, %304, %cst_108 [2] : vector<8x2x2xf32> to vector<8x2xf32>
    %306 = vector.shape_cast %305 : vector<8x2xf32> to vector<8x2x1xf32>
    %307 = vector.broadcast %306 : vector<8x2x1xf32> to vector<8x2x2xf32>
    %308 = arith.divf %304, %307 : vector<8x2x2xf32>
    %309 = vector.extract_strided_slice %274 {offsets = [0, 0, 16], sizes = [8, 2, 16], strides = [1, 1, 1]} : vector<8x2x128xbf16> to vector<8x2x16xbf16>
    %310 = arith.truncf %308 : vector<8x2x2xf32> to vector<8x2x2xbf16>
    "tpu.trace_start"() <{level = 10 : i32, message = "nij,njd->nid"}> : () -> ()
    %cst_109 = arith.constant dense<0.000000e+00> : vector<8x2x16xf32>
    %311 = tpu.matmul %310, %309, %cst_109 {dimension_numbers = #tpu.dot_dimension_numbers<[2], [1], [1], [2], [0, 0, 0, 1, 1, 2], [0], [0]>} : vector<8x2x2xbf16>, vector<8x2x16xbf16>, vector<8x2x16xf32> -> vector<8x2x16xf32>
    "tpu.trace_stop"() : () -> ()
    %312 = vector.shape_cast %311 : vector<8x2x16xf32> to vector<16x16xf32>
    %c1_110 = arith.constant 1 : index
    %c16_111 = arith.constant 16 : index
    %c0_112 = arith.constant 0 : index
    %313 = vector.load %arg3[%c1_110, %c16_111, %c0_112] : memref<2x128x128xbf16, #tpu.memory_space<vmem>>, vector<1x16x128xbf16>
    %314 = vector.shape_cast %313 : vector<1x16x128xbf16> to vector<16x128xbf16>
    %315 = arith.truncf %312 : vector<16x16xf32> to vector<16x16xbf16>
    %cst_113 = arith.constant dense<0.000000e+00> : vector<16x128xf32>
    %316 = tpu.matmul %315, %314, %cst_113 {dimension_numbers = #tpu.dot_dimension_numbers<[1], [0], [0], [1], [0, 0, 1, 1], [], []>} : vector<16x16xbf16>, vector<16x128xbf16>, vector<16x128xf32> -> vector<16x128xf32>
    %317 = arith.addf %296, %316 : vector<16x128xf32>
    %318 = vector.extract_strided_slice %268 {offsets = [0, 0, 32], sizes = [8, 2, 16], strides = [1, 1, 1]} : vector<8x2x128xbf16> to vector<8x2x16xbf16>
    %319 = vector.extract_strided_slice %271 {offsets = [0, 0, 32], sizes = [8, 2, 16], strides = [1, 1, 1]} : vector<8x2x128xbf16> to vector<8x2x16xbf16>
    "tpu.trace_start"() <{level = 10 : i32, message = "nid,njd->nij"}> : () -> ()
    %cst_114 = arith.constant dense<0.000000e+00> : vector<8x2x2xf32>
    %320 = tpu.matmul %318, %319, %cst_114 {dimension_numbers = #tpu.dot_dimension_numbers<[2], [2], [1], [1], [0, 0, 0, 1, 1, 1], [0], [0]>} : vector<8x2x16xbf16>, vector<8x2x16xbf16>, vector<8x2x2xf32> -> vector<8x2x2xf32>
    "tpu.trace_stop"() : () -> ()
    %cst_115 = arith.constant dense<0xFF800000> : vector<8x2xf32>
    %321 = vector.multi_reduction <maximumf>, %320, %cst_115 [2] : vector<8x2x2xf32> to vector<8x2xf32>
    %322 = vector.shape_cast %321 : vector<8x2xf32> to vector<8x2x1xf32>
    %323 = vector.broadcast %322 : vector<8x2x1xf32> to vector<8x2x2xf32>
    %324 = arith.subf %320, %323 : vector<8x2x2xf32>
    %325 = math.exp %324 : vector<8x2x2xf32>
    %cst_116 = arith.constant dense<0.000000e+00> : vector<8x2xf32>
    %326 = vector.multi_reduction <add>, %325, %cst_116 [2] : vector<8x2x2xf32> to vector<8x2xf32>
    %327 = vector.shape_cast %326 : vector<8x2xf32> to vector<8x2x1xf32>
    %328 = vector.broadcast %327 : vector<8x2x1xf32> to vector<8x2x2xf32>
    %329 = arith.divf %325, %328 : vector<8x2x2xf32>
    %330 = vector.extract_strided_slice %274 {offsets = [0, 0, 32], sizes = [8, 2, 16], strides = [1, 1, 1]} : vector<8x2x128xbf16> to vector<8x2x16xbf16>
    %331 = arith.truncf %329 : vector<8x2x2xf32> to vector<8x2x2xbf16>
    "tpu.trace_start"() <{level = 10 : i32, message = "nij,njd->nid"}> : () -> ()
    %cst_117 = arith.constant dense<0.000000e+00> : vector<8x2x16xf32>
    %332 = tpu.matmul %331, %330, %cst_117 {dimension_numbers = #tpu.dot_dimension_numbers<[2], [1], [1], [2], [0, 0, 0, 1, 1, 2], [0], [0]>} : vector<8x2x2xbf16>, vector<8x2x16xbf16>, vector<8x2x16xf32> -> vector<8x2x16xf32>
    "tpu.trace_stop"() : () -> ()
    %333 = vector.shape_cast %332 : vector<8x2x16xf32> to vector<16x16xf32>
    %c1_118 = arith.constant 1 : index
    %c32_119 = arith.constant 32 : index
    %c0_120 = arith.constant 0 : index
    %334 = vector.load %arg3[%c1_118, %c32_119, %c0_120] : memref<2x128x128xbf16, #tpu.memory_space<vmem>>, vector<1x16x128xbf16>
    %335 = vector.shape_cast %334 : vector<1x16x128xbf16> to vector<16x128xbf16>
    %336 = arith.truncf %333 : vector<16x16xf32> to vector<16x16xbf16>
    %cst_121 = arith.constant dense<0.000000e+00> : vector<16x128xf32>
    %337 = tpu.matmul %336, %335, %cst_121 {dimension_numbers = #tpu.dot_dimension_numbers<[1], [0], [0], [1], [0, 0, 1, 1], [], []>} : vector<16x16xbf16>, vector<16x128xbf16>, vector<16x128xf32> -> vector<16x128xf32>
    %338 = arith.addf %317, %337 : vector<16x128xf32>
    %339 = vector.extract_strided_slice %268 {offsets = [0, 0, 48], sizes = [8, 2, 16], strides = [1, 1, 1]} : vector<8x2x128xbf16> to vector<8x2x16xbf16>
    %340 = vector.extract_strided_slice %271 {offsets = [0, 0, 48], sizes = [8, 2, 16], strides = [1, 1, 1]} : vector<8x2x128xbf16> to vector<8x2x16xbf16>
    "tpu.trace_start"() <{level = 10 : i32, message = "nid,njd->nij"}> : () -> ()
    %cst_122 = arith.constant dense<0.000000e+00> : vector<8x2x2xf32>
    %341 = tpu.matmul %339, %340, %cst_122 {dimension_numbers = #tpu.dot_dimension_numbers<[2], [2], [1], [1], [0, 0, 0, 1, 1, 1], [0], [0]>} : vector<8x2x16xbf16>, vector<8x2x16xbf16>, vector<8x2x2xf32> -> vector<8x2x2xf32>
    "tpu.trace_stop"() : () -> ()
    %cst_123 = arith.constant dense<0xFF800000> : vector<8x2xf32>
    %342 = vector.multi_reduction <maximumf>, %341, %cst_123 [2] : vector<8x2x2xf32> to vector<8x2xf32>
    %343 = vector.shape_cast %342 : vector<8x2xf32> to vector<8x2x1xf32>
    %344 = vector.broadcast %343 : vector<8x2x1xf32> to vector<8x2x2xf32>
    %345 = arith.subf %341, %344 : vector<8x2x2xf32>
    %346 = math.exp %345 : vector<8x2x2xf32>
    %cst_124 = arith.constant dense<0.000000e+00> : vector<8x2xf32>
    %347 = vector.multi_reduction <add>, %346, %cst_124 [2] : vector<8x2x2xf32> to vector<8x2xf32>
    %348 = vector.shape_cast %347 : vector<8x2xf32> to vector<8x2x1xf32>
    %349 = vector.broadcast %348 : vector<8x2x1xf32> to vector<8x2x2xf32>
    %350 = arith.divf %346, %349 : vector<8x2x2xf32>
    %351 = vector.extract_strided_slice %274 {offsets = [0, 0, 48], sizes = [8, 2, 16], strides = [1, 1, 1]} : vector<8x2x128xbf16> to vector<8x2x16xbf16>
    %352 = arith.truncf %350 : vector<8x2x2xf32> to vector<8x2x2xbf16>
    "tpu.trace_start"() <{level = 10 : i32, message = "nij,njd->nid"}> : () -> ()
    %cst_125 = arith.constant dense<0.000000e+00> : vector<8x2x16xf32>
    %353 = tpu.matmul %352, %351, %cst_125 {dimension_numbers = #tpu.dot_dimension_numbers<[2], [1], [1], [2], [0, 0, 0, 1, 1, 2], [0], [0]>} : vector<8x2x2xbf16>, vector<8x2x16xbf16>, vector<8x2x16xf32> -> vector<8x2x16xf32>
    "tpu.trace_stop"() : () -> ()
    %354 = vector.shape_cast %353 : vector<8x2x16xf32> to vector<16x16xf32>
    %c1_126 = arith.constant 1 : index
    %c48_127 = arith.constant 48 : index
    %c0_128 = arith.constant 0 : index
    %355 = vector.load %arg3[%c1_126, %c48_127, %c0_128] : memref<2x128x128xbf16, #tpu.memory_space<vmem>>, vector<1x16x128xbf16>
    %356 = vector.shape_cast %355 : vector<1x16x128xbf16> to vector<16x128xbf16>
    %357 = arith.truncf %354 : vector<16x16xf32> to vector<16x16xbf16>
    %cst_129 = arith.constant dense<0.000000e+00> : vector<16x128xf32>
    %358 = tpu.matmul %357, %356, %cst_129 {dimension_numbers = #tpu.dot_dimension_numbers<[1], [0], [0], [1], [0, 0, 1, 1], [], []>} : vector<16x16xbf16>, vector<16x128xbf16>, vector<16x128xf32> -> vector<16x128xf32>
    %359 = arith.addf %338, %358 : vector<16x128xf32>
    %360 = vector.extract_strided_slice %268 {offsets = [0, 0, 64], sizes = [8, 2, 16], strides = [1, 1, 1]} : vector<8x2x128xbf16> to vector<8x2x16xbf16>
    %361 = vector.extract_strided_slice %271 {offsets = [0, 0, 64], sizes = [8, 2, 16], strides = [1, 1, 1]} : vector<8x2x128xbf16> to vector<8x2x16xbf16>
    "tpu.trace_start"() <{level = 10 : i32, message = "nid,njd->nij"}> : () -> ()
    %cst_130 = arith.constant dense<0.000000e+00> : vector<8x2x2xf32>
    %362 = tpu.matmul %360, %361, %cst_130 {dimension_numbers = #tpu.dot_dimension_numbers<[2], [2], [1], [1], [0, 0, 0, 1, 1, 1], [0], [0]>} : vector<8x2x16xbf16>, vector<8x2x16xbf16>, vector<8x2x2xf32> -> vector<8x2x2xf32>
    "tpu.trace_stop"() : () -> ()
    %cst_131 = arith.constant dense<0xFF800000> : vector<8x2xf32>
    %363 = vector.multi_reduction <maximumf>, %362, %cst_131 [2] : vector<8x2x2xf32> to vector<8x2xf32>
    %364 = vector.shape_cast %363 : vector<8x2xf32> to vector<8x2x1xf32>
    %365 = vector.broadcast %364 : vector<8x2x1xf32> to vector<8x2x2xf32>
    %366 = arith.subf %362, %365 : vector<8x2x2xf32>
    %367 = math.exp %366 : vector<8x2x2xf32>
    %cst_132 = arith.constant dense<0.000000e+00> : vector<8x2xf32>
    %368 = vector.multi_reduction <add>, %367, %cst_132 [2] : vector<8x2x2xf32> to vector<8x2xf32>
    %369 = vector.shape_cast %368 : vector<8x2xf32> to vector<8x2x1xf32>
    %370 = vector.broadcast %369 : vector<8x2x1xf32> to vector<8x2x2xf32>
    %371 = arith.divf %367, %370 : vector<8x2x2xf32>
    %372 = vector.extract_strided_slice %274 {offsets = [0, 0, 64], sizes = [8, 2, 16], strides = [1, 1, 1]} : vector<8x2x128xbf16> to vector<8x2x16xbf16>
    %373 = arith.truncf %371 : vector<8x2x2xf32> to vector<8x2x2xbf16>
    "tpu.trace_start"() <{level = 10 : i32, message = "nij,njd->nid"}> : () -> ()
    %cst_133 = arith.constant dense<0.000000e+00> : vector<8x2x16xf32>
    %374 = tpu.matmul %373, %372, %cst_133 {dimension_numbers = #tpu.dot_dimension_numbers<[2], [1], [1], [2], [0, 0, 0, 1, 1, 2], [0], [0]>} : vector<8x2x2xbf16>, vector<8x2x16xbf16>, vector<8x2x16xf32> -> vector<8x2x16xf32>
    "tpu.trace_stop"() : () -> ()
    %375 = vector.shape_cast %374 : vector<8x2x16xf32> to vector<16x16xf32>
    %c1_134 = arith.constant 1 : index
    %c64_135 = arith.constant 64 : index
    %c0_136 = arith.constant 0 : index
    %376 = vector.load %arg3[%c1_134, %c64_135, %c0_136] : memref<2x128x128xbf16, #tpu.memory_space<vmem>>, vector<1x16x128xbf16>
    %377 = vector.shape_cast %376 : vector<1x16x128xbf16> to vector<16x128xbf16>
    %378 = arith.truncf %375 : vector<16x16xf32> to vector<16x16xbf16>
    %cst_137 = arith.constant dense<0.000000e+00> : vector<16x128xf32>
    %379 = tpu.matmul %378, %377, %cst_137 {dimension_numbers = #tpu.dot_dimension_numbers<[1], [0], [0], [1], [0, 0, 1, 1], [], []>} : vector<16x16xbf16>, vector<16x128xbf16>, vector<16x128xf32> -> vector<16x128xf32>
    %380 = arith.addf %359, %379 : vector<16x128xf32>
    %381 = vector.extract_strided_slice %268 {offsets = [0, 0, 80], sizes = [8, 2, 16], strides = [1, 1, 1]} : vector<8x2x128xbf16> to vector<8x2x16xbf16>
    %382 = vector.extract_strided_slice %271 {offsets = [0, 0, 80], sizes = [8, 2, 16], strides = [1, 1, 1]} : vector<8x2x128xbf16> to vector<8x2x16xbf16>
    "tpu.trace_start"() <{level = 10 : i32, message = "nid,njd->nij"}> : () -> ()
    %cst_138 = arith.constant dense<0.000000e+00> : vector<8x2x2xf32>
    %383 = tpu.matmul %381, %382, %cst_138 {dimension_numbers = #tpu.dot_dimension_numbers<[2], [2], [1], [1], [0, 0, 0, 1, 1, 1], [0], [0]>} : vector<8x2x16xbf16>, vector<8x2x16xbf16>, vector<8x2x2xf32> -> vector<8x2x2xf32>
    "tpu.trace_stop"() : () -> ()
    %cst_139 = arith.constant dense<0xFF800000> : vector<8x2xf32>
    %384 = vector.multi_reduction <maximumf>, %383, %cst_139 [2] : vector<8x2x2xf32> to vector<8x2xf32>
    %385 = vector.shape_cast %384 : vector<8x2xf32> to vector<8x2x1xf32>
    %386 = vector.broadcast %385 : vector<8x2x1xf32> to vector<8x2x2xf32>
    %387 = arith.subf %383, %386 : vector<8x2x2xf32>
    %388 = math.exp %387 : vector<8x2x2xf32>
    %cst_140 = arith.constant dense<0.000000e+00> : vector<8x2xf32>
    %389 = vector.multi_reduction <add>, %388, %cst_140 [2] : vector<8x2x2xf32> to vector<8x2xf32>
    %390 = vector.shape_cast %389 : vector<8x2xf32> to vector<8x2x1xf32>
    %391 = vector.broadcast %390 : vector<8x2x1xf32> to vector<8x2x2xf32>
    %392 = arith.divf %388, %391 : vector<8x2x2xf32>
    %393 = vector.extract_strided_slice %274 {offsets = [0, 0, 80], sizes = [8, 2, 16], strides = [1, 1, 1]} : vector<8x2x128xbf16> to vector<8x2x16xbf16>
    %394 = arith.truncf %392 : vector<8x2x2xf32> to vector<8x2x2xbf16>
    "tpu.trace_start"() <{level = 10 : i32, message = "nij,njd->nid"}> : () -> ()
    %cst_141 = arith.constant dense<0.000000e+00> : vector<8x2x16xf32>
    %395 = tpu.matmul %394, %393, %cst_141 {dimension_numbers = #tpu.dot_dimension_numbers<[2], [1], [1], [2], [0, 0, 0, 1, 1, 2], [0], [0]>} : vector<8x2x2xbf16>, vector<8x2x16xbf16>, vector<8x2x16xf32> -> vector<8x2x16xf32>
    "tpu.trace_stop"() : () -> ()
    %396 = vector.shape_cast %395 : vector<8x2x16xf32> to vector<16x16xf32>
    %c1_142 = arith.constant 1 : index
    %c80_143 = arith.constant 80 : index
    %c0_144 = arith.constant 0 : index
    %397 = vector.load %arg3[%c1_142, %c80_143, %c0_144] : memref<2x128x128xbf16, #tpu.memory_space<vmem>>, vector<1x16x128xbf16>
    %398 = vector.shape_cast %397 : vector<1x16x128xbf16> to vector<16x128xbf16>
    %399 = arith.truncf %396 : vector<16x16xf32> to vector<16x16xbf16>
    %cst_145 = arith.constant dense<0.000000e+00> : vector<16x128xf32>
    %400 = tpu.matmul %399, %398, %cst_145 {dimension_numbers = #tpu.dot_dimension_numbers<[1], [0], [0], [1], [0, 0, 1, 1], [], []>} : vector<16x16xbf16>, vector<16x128xbf16>, vector<16x128xf32> -> vector<16x128xf32>
    %401 = arith.addf %380, %400 : vector<16x128xf32>
    %402 = vector.extract_strided_slice %268 {offsets = [0, 0, 96], sizes = [8, 2, 16], strides = [1, 1, 1]} : vector<8x2x128xbf16> to vector<8x2x16xbf16>
    %403 = vector.extract_strided_slice %271 {offsets = [0, 0, 96], sizes = [8, 2, 16], strides = [1, 1, 1]} : vector<8x2x128xbf16> to vector<8x2x16xbf16>
    "tpu.trace_start"() <{level = 10 : i32, message = "nid,njd->nij"}> : () -> ()
    %cst_146 = arith.constant dense<0.000000e+00> : vector<8x2x2xf32>
    %404 = tpu.matmul %402, %403, %cst_146 {dimension_numbers = #tpu.dot_dimension_numbers<[2], [2], [1], [1], [0, 0, 0, 1, 1, 1], [0], [0]>} : vector<8x2x16xbf16>, vector<8x2x16xbf16>, vector<8x2x2xf32> -> vector<8x2x2xf32>
    "tpu.trace_stop"() : () -> ()
    %cst_147 = arith.constant dense<0xFF800000> : vector<8x2xf32>
    %405 = vector.multi_reduction <maximumf>, %404, %cst_147 [2] : vector<8x2x2xf32> to vector<8x2xf32>
    %406 = vector.shape_cast %405 : vector<8x2xf32> to vector<8x2x1xf32>
    %407 = vector.broadcast %406 : vector<8x2x1xf32> to vector<8x2x2xf32>
    %408 = arith.subf %404, %407 : vector<8x2x2xf32>
    %409 = math.exp %408 : vector<8x2x2xf32>
    %cst_148 = arith.constant dense<0.000000e+00> : vector<8x2xf32>
    %410 = vector.multi_reduction <add>, %409, %cst_148 [2] : vector<8x2x2xf32> to vector<8x2xf32>
    %411 = vector.shape_cast %410 : vector<8x2xf32> to vector<8x2x1xf32>
    %412 = vector.broadcast %411 : vector<8x2x1xf32> to vector<8x2x2xf32>
    %413 = arith.divf %409, %412 : vector<8x2x2xf32>
    %414 = vector.extract_strided_slice %274 {offsets = [0, 0, 96], sizes = [8, 2, 16], strides = [1, 1, 1]} : vector<8x2x128xbf16> to vector<8x2x16xbf16>
    %415 = arith.truncf %413 : vector<8x2x2xf32> to vector<8x2x2xbf16>
    "tpu.trace_start"() <{level = 10 : i32, message = "nij,njd->nid"}> : () -> ()
    %cst_149 = arith.constant dense<0.000000e+00> : vector<8x2x16xf32>
    %416 = tpu.matmul %415, %414, %cst_149 {dimension_numbers = #tpu.dot_dimension_numbers<[2], [1], [1], [2], [0, 0, 0, 1, 1, 2], [0], [0]>} : vector<8x2x2xbf16>, vector<8x2x16xbf16>, vector<8x2x16xf32> -> vector<8x2x16xf32>
    "tpu.trace_stop"() : () -> ()
    %417 = vector.shape_cast %416 : vector<8x2x16xf32> to vector<16x16xf32>
    %c1_150 = arith.constant 1 : index
    %c96_151 = arith.constant 96 : index
    %c0_152 = arith.constant 0 : index
    %418 = vector.load %arg3[%c1_150, %c96_151, %c0_152] : memref<2x128x128xbf16, #tpu.memory_space<vmem>>, vector<1x16x128xbf16>
    %419 = vector.shape_cast %418 : vector<1x16x128xbf16> to vector<16x128xbf16>
    %420 = arith.truncf %417 : vector<16x16xf32> to vector<16x16xbf16>
    %cst_153 = arith.constant dense<0.000000e+00> : vector<16x128xf32>
    %421 = tpu.matmul %420, %419, %cst_153 {dimension_numbers = #tpu.dot_dimension_numbers<[1], [0], [0], [1], [0, 0, 1, 1], [], []>} : vector<16x16xbf16>, vector<16x128xbf16>, vector<16x128xf32> -> vector<16x128xf32>
    %422 = arith.addf %401, %421 : vector<16x128xf32>
    %423 = vector.extract_strided_slice %268 {offsets = [0, 0, 112], sizes = [8, 2, 16], strides = [1, 1, 1]} : vector<8x2x128xbf16> to vector<8x2x16xbf16>
    %424 = vector.extract_strided_slice %271 {offsets = [0, 0, 112], sizes = [8, 2, 16], strides = [1, 1, 1]} : vector<8x2x128xbf16> to vector<8x2x16xbf16>
    "tpu.trace_start"() <{level = 10 : i32, message = "nid,njd->nij"}> : () -> ()
    %cst_154 = arith.constant dense<0.000000e+00> : vector<8x2x2xf32>
    %425 = tpu.matmul %423, %424, %cst_154 {dimension_numbers = #tpu.dot_dimension_numbers<[2], [2], [1], [1], [0, 0, 0, 1, 1, 1], [0], [0]>} : vector<8x2x16xbf16>, vector<8x2x16xbf16>, vector<8x2x2xf32> -> vector<8x2x2xf32>
    "tpu.trace_stop"() : () -> ()
    %cst_155 = arith.constant dense<0xFF800000> : vector<8x2xf32>
    %426 = vector.multi_reduction <maximumf>, %425, %cst_155 [2] : vector<8x2x2xf32> to vector<8x2xf32>
    %427 = vector.shape_cast %426 : vector<8x2xf32> to vector<8x2x1xf32>
    %428 = vector.broadcast %427 : vector<8x2x1xf32> to vector<8x2x2xf32>
    %429 = arith.subf %425, %428 : vector<8x2x2xf32>
    %430 = math.exp %429 : vector<8x2x2xf32>
    %cst_156 = arith.constant dense<0.000000e+00> : vector<8x2xf32>
    %431 = vector.multi_reduction <add>, %430, %cst_156 [2] : vector<8x2x2xf32> to vector<8x2xf32>
    %432 = vector.shape_cast %431 : vector<8x2xf32> to vector<8x2x1xf32>
    %433 = vector.broadcast %432 : vector<8x2x1xf32> to vector<8x2x2xf32>
    %434 = arith.divf %430, %433 : vector<8x2x2xf32>
    %435 = vector.extract_strided_slice %274 {offsets = [0, 0, 112], sizes = [8, 2, 16], strides = [1, 1, 1]} : vector<8x2x128xbf16> to vector<8x2x16xbf16>
    %436 = arith.truncf %434 : vector<8x2x2xf32> to vector<8x2x2xbf16>
    "tpu.trace_start"() <{level = 10 : i32, message = "nij,njd->nid"}> : () -> ()
    %cst_157 = arith.constant dense<0.000000e+00> : vector<8x2x16xf32>
    %437 = tpu.matmul %436, %435, %cst_157 {dimension_numbers = #tpu.dot_dimension_numbers<[2], [1], [1], [2], [0, 0, 0, 1, 1, 2], [0], [0]>} : vector<8x2x2xbf16>, vector<8x2x16xbf16>, vector<8x2x16xf32> -> vector<8x2x16xf32>
    "tpu.trace_stop"() : () -> ()
    %438 = vector.shape_cast %437 : vector<8x2x16xf32> to vector<16x16xf32>
    %c1_158 = arith.constant 1 : index
    %c112_159 = arith.constant 112 : index
    %c0_160 = arith.constant 0 : index
    %439 = vector.load %arg3[%c1_158, %c112_159, %c0_160] : memref<2x128x128xbf16, #tpu.memory_space<vmem>>, vector<1x16x128xbf16>
    %440 = vector.shape_cast %439 : vector<1x16x128xbf16> to vector<16x128xbf16>
    %441 = arith.truncf %438 : vector<16x16xf32> to vector<16x16xbf16>
    %cst_161 = arith.constant dense<0.000000e+00> : vector<16x128xf32>
    %442 = tpu.matmul %441, %440, %cst_161 {dimension_numbers = #tpu.dot_dimension_numbers<[1], [0], [0], [1], [0, 0, 1, 1], [], []>} : vector<16x16xbf16>, vector<16x128xbf16>, vector<16x128xf32> -> vector<16x128xf32>
    %443 = arith.addf %422, %442 : vector<16x128xf32>
    %c1_162 = arith.constant 1 : index
    %c384_163 = arith.constant 384 : index
    %444 = vector.load %arg1[%c1_162, %c384_163] : memref<2x1408xf32, #tpu.memory_space<vmem>>, vector<1x128xf32>
    %445 = vector.broadcast %444 : vector<1x128xf32> to vector<16x128xf32>
    %446 = arith.addf %443, %445 : vector<16x128xf32>
    %447 = arith.addf %256, %446 : vector<16x128xf32>
    %c1_164 = arith.constant 1 : index
    %c896_165 = arith.constant 896 : index
    %448 = vector.load %arg1[%c1_164, %c896_165] : memref<2x1408xf32, #tpu.memory_space<vmem>>, vector<1x128xf32>
    %c1_166 = arith.constant 1 : index
    %c1024_167 = arith.constant 1024 : index
    %449 = vector.load %arg1[%c1_166, %c1024_167] : memref<2x1408xf32, #tpu.memory_space<vmem>>, vector<1x128xf32>
    %cst_168 = arith.constant dense<0.000000e+00> : vector<16xf32>
    %450 = vector.multi_reduction <add>, %447, %cst_168 [1] : vector<16x128xf32> to vector<16xf32>
    %451 = vector.shape_cast %450 : vector<16xf32> to vector<16x1xf32>
    %cst_169 = arith.constant 1.280000e+02 : f32
    %452 = vector.broadcast %cst_169 : f32 to vector<16x1xf32>
    %453 = arith.divf %451, %452 : vector<16x1xf32>
    %454 = vector.broadcast %453 : vector<16x1xf32> to vector<16x128xf32>
    %455 = arith.subf %447, %454 : vector<16x128xf32>
    %456 = arith.mulf %455, %455 : vector<16x128xf32>
    %cst_170 = arith.constant dense<0.000000e+00> : vector<16xf32>
    %457 = vector.multi_reduction <add>, %456, %cst_170 [1] : vector<16x128xf32> to vector<16xf32>
    %458 = vector.shape_cast %457 : vector<16xf32> to vector<16x1xf32>
    %cst_171 = arith.constant 1.280000e+02 : f32
    %459 = vector.broadcast %cst_171 : f32 to vector<16x1xf32>
    %460 = arith.divf %458, %459 : vector<16x1xf32>
    %461 = vector.broadcast %453 : vector<16x1xf32> to vector<16x128xf32>
    %462 = arith.subf %447, %461 : vector<16x128xf32>
    %cst_172 = arith.constant 9.99999974E-6 : f32
    %463 = vector.broadcast %cst_172 : f32 to vector<16x1xf32>
    %464 = arith.addf %460, %463 : vector<16x1xf32>
    %465 = math.rsqrt %464 : vector<16x1xf32>
    %466 = vector.broadcast %465 : vector<16x1xf32> to vector<16x128xf32>
    %467 = arith.mulf %462, %466 : vector<16x128xf32>
    %468 = vector.broadcast %448 : vector<1x128xf32> to vector<16x128xf32>
    %469 = arith.mulf %467, %468 : vector<16x128xf32>
    %470 = vector.broadcast %449 : vector<1x128xf32> to vector<16x128xf32>
    %471 = arith.addf %469, %470 : vector<16x128xf32>
    %c1_173 = arith.constant 1 : index
    %c0_174 = arith.constant 0 : index
    %c0_175 = arith.constant 0 : index
    %472 = vector.load %arg4[%c1_173, %c0_174, %c0_175] : memref<2x128x256xbf16, #tpu.memory_space<vmem>>, vector<1x128x256xbf16>
    %473 = vector.shape_cast %472 : vector<1x128x256xbf16> to vector<128x256xbf16>
    %474 = arith.truncf %471 : vector<16x128xf32> to vector<16x128xbf16>
    %cst_176 = arith.constant dense<0.000000e+00> : vector<16x256xf32>
    %475 = tpu.matmul %474, %473, %cst_176 {dimension_numbers = #tpu.dot_dimension_numbers<[1], [0], [0], [1], [0, 0, 1, 1], [], []>} : vector<16x128xbf16>, vector<128x256xbf16>, vector<16x256xf32> -> vector<16x256xf32>
    %c1_177 = arith.constant 1 : index
    %c512_178 = arith.constant 512 : index
    %476 = vector.load %arg1[%c1_177, %c512_178] : memref<2x1408xf32, #tpu.memory_space<vmem>>, vector<1x256xf32>
    %477 = vector.broadcast %476 : vector<1x256xf32> to vector<16x256xf32>
    %478 = arith.addf %475, %477 : vector<16x256xf32>
    %cst_179 = arith.constant 0.000000e+00 : f32
    %479 = vector.broadcast %cst_179 : f32 to vector<16x256xf32>
    %480 = arith.maximumf %478, %479 : vector<16x256xf32>
    %c1_180 = arith.constant 1 : index
    %c0_181 = arith.constant 0 : index
    %c0_182 = arith.constant 0 : index
    %481 = vector.load %arg5[%c1_180, %c0_181, %c0_182] : memref<2x256x128xbf16, #tpu.memory_space<vmem>>, vector<1x256x128xbf16>
    %482 = vector.shape_cast %481 : vector<1x256x128xbf16> to vector<256x128xbf16>
    %483 = arith.truncf %480 : vector<16x256xf32> to vector<16x256xbf16>
    %cst_183 = arith.constant dense<0.000000e+00> : vector<16x128xf32>
    %484 = tpu.matmul %483, %482, %cst_183 {dimension_numbers = #tpu.dot_dimension_numbers<[1], [0], [0], [1], [0, 0, 1, 1], [], []>} : vector<16x256xbf16>, vector<256x128xbf16>, vector<16x128xf32> -> vector<16x128xf32>
    %c1_184 = arith.constant 1 : index
    %c768_185 = arith.constant 768 : index
    %485 = vector.load %arg1[%c1_184, %c768_185] : memref<2x1408xf32, #tpu.memory_space<vmem>>, vector<1x128xf32>
    %486 = vector.broadcast %485 : vector<1x128xf32> to vector<16x128xf32>
    %487 = arith.addf %484, %486 : vector<16x128xf32>
    %488 = arith.addf %471, %487 : vector<16x128xf32>
    %c1_186 = arith.constant 1 : index
    %c1152_187 = arith.constant 1152 : index
    %489 = vector.load %arg1[%c1_186, %c1152_187] : memref<2x1408xf32, #tpu.memory_space<vmem>>, vector<1x128xf32>
    %c1_188 = arith.constant 1 : index
    %c1280_189 = arith.constant 1280 : index
    %490 = vector.load %arg1[%c1_188, %c1280_189] : memref<2x1408xf32, #tpu.memory_space<vmem>>, vector<1x128xf32>
    %cst_190 = arith.constant dense<0.000000e+00> : vector<16xf32>
    %491 = vector.multi_reduction <add>, %488, %cst_190 [1] : vector<16x128xf32> to vector<16xf32>
    %492 = vector.shape_cast %491 : vector<16xf32> to vector<16x1xf32>
    %cst_191 = arith.constant 1.280000e+02 : f32
    %493 = vector.broadcast %cst_191 : f32 to vector<16x1xf32>
    %494 = arith.divf %492, %493 : vector<16x1xf32>
    %495 = vector.broadcast %494 : vector<16x1xf32> to vector<16x128xf32>
    %496 = arith.subf %488, %495 : vector<16x128xf32>
    %497 = arith.mulf %496, %496 : vector<16x128xf32>
    %cst_192 = arith.constant dense<0.000000e+00> : vector<16xf32>
    %498 = vector.multi_reduction <add>, %497, %cst_192 [1] : vector<16x128xf32> to vector<16xf32>
    %499 = vector.shape_cast %498 : vector<16xf32> to vector<16x1xf32>
    %cst_193 = arith.constant 1.280000e+02 : f32
    %500 = vector.broadcast %cst_193 : f32 to vector<16x1xf32>
    %501 = arith.divf %499, %500 : vector<16x1xf32>
    %502 = vector.broadcast %494 : vector<16x1xf32> to vector<16x128xf32>
    %503 = arith.subf %488, %502 : vector<16x128xf32>
    %cst_194 = arith.constant 9.99999974E-6 : f32
    %504 = vector.broadcast %cst_194 : f32 to vector<16x1xf32>
    %505 = arith.addf %501, %504 : vector<16x1xf32>
    %506 = math.rsqrt %505 : vector<16x1xf32>
    %507 = vector.broadcast %506 : vector<16x1xf32> to vector<16x128xf32>
    %508 = arith.mulf %503, %507 : vector<16x128xf32>
    %509 = vector.broadcast %489 : vector<1x128xf32> to vector<16x128xf32>
    %510 = arith.mulf %508, %509 : vector<16x128xf32>
    %511 = vector.broadcast %490 : vector<1x128xf32> to vector<16x128xf32>
    %512 = arith.addf %510, %511 : vector<16x128xf32>
    %513 = vector.shape_cast %512 : vector<16x128xf32> to vector<8x2x128xf32>
    %cst_195 = arith.constant dense<0.000000e+00> : vector<2x128xf32>
    %514 = vector.multi_reduction <add>, %513, %cst_195 [0] : vector<8x2x128xf32> to vector<2x128xf32>
    %cst_196 = arith.constant 8.000000e+00 : f32
    %515 = vector.broadcast %cst_196 : f32 to vector<2x128xf32>
    %516 = arith.divf %514, %515 : vector<2x128xf32>
    %c0_197 = arith.constant 0 : index
    %c0_198 = arith.constant 0 : index
    %517 = vector.load %arg6[%c0_197, %c0_198] : memref<128x128xbf16, #tpu.memory_space<vmem>>, vector<128x128xbf16>
    %518 = arith.truncf %516 : vector<2x128xf32> to vector<2x128xbf16>
    %cst_199 = arith.constant dense<0.000000e+00> : vector<2x128xf32>
    %519 = tpu.matmul %518, %517, %cst_199 {dimension_numbers = #tpu.dot_dimension_numbers<[1], [0], [0], [1], [0, 0, 1, 1], [], []>} : vector<2x128xbf16>, vector<128x128xbf16>, vector<2x128xf32> -> vector<2x128xf32>
    %c0_200 = arith.constant 0 : index
    %c0_201 = arith.constant 0 : index
    %520 = vector.load %arg7[%c0_200, %c0_201] : memref<1x128xf32, #tpu.memory_space<vmem>>, vector<1x128xf32>
    %521 = vector.broadcast %520 : vector<1x128xf32> to vector<2x128xf32>
    %522 = arith.addf %519, %521 : vector<2x128xf32>
    %c0_202 = arith.constant 0 : index
    %c0_203 = arith.constant 0 : index
    %523 = vector.load %arg8[%c0_202, %c0_203] : memref<2x128xf32, #tpu.memory_space<vmem>>, vector<2x128xf32>
    tpu.vector_store %arg8[%c0_202, %c0_203], %522 {strides = array<i32>} : memref<2x128xf32, #tpu.memory_space<vmem>>, vector<2x128xf32>,
    return
  }
}

</mosaic_0001>

<llo_original>
// kernel: forward.1
$region0: #{forward.1}
  #allocation0 [shape = 'u32[]', space=smem, size = 0x4, offset = 0x4, fixed_abs, tag = 'smem constant byte address 0x4 - core index']
  #allocation1 [shape = 'u32[72,128]{1,0:T(1,128)}', space=vmem, size = 0x9000, scoped, tag = 'internal scratch']
  %s0 = inlined_call_operand.vmem [shape: f32[16,128], index: 0, kind: input, shape index: {}]
  %s1 = inlined_call_operand.vmem [shape: f32[2,1408], index: 1, kind: input, shape index: {}]
  %s2 = inlined_call_operand.hbm [shape: bf16[2,128,384], index: 2, kind: input, shape index: {}]
  %s3 = inlined_call_operand.vmem [shape: bf16[2,128,128], index: 3, kind: input, shape index: {}]
  %s4 = inlined_call_operand.hbm [shape: bf16[2,128,256], index: 4, kind: input, shape index: {}]
  %s5 = inlined_call_operand.hbm [shape: bf16[2,256,128], index: 5, kind: input, shape index: {}]
  %s6 = inlined_call_operand.vmem [shape: bf16[128,128], index: 6, kind: input, shape index: {}]
  %s7 = inlined_call_operand.vmem [shape: f32[1,128], index: 7, kind: input, shape index: {}]
  %s8 = inlined_call_operand.hbm [shape: f32[2,128], index: 8, kind: output, shape index: {}]
  %s9 = sld [smem:[#allocation0]]
  $region54: #{forward.1} parent=0
    _
  %s11 = ssub.s32 1, %s9
  %s12 = scalar_select 0, %s11, %s9
  $region1: #{forward.1} parent=0
    #allocation2 [shape = 'u8[196608]{0}', space=vmem, size = 0x30000, scoped, tag = 'input window, operand 2, single buffered']
    #allocation3 [shape = 's32[1]{0}', space=sflag, size = 0x4, scoped, tag = 'scoped memory for forward.1']
    #allocation4 [shape = 's32[1]{0}', space=sflag, size = 0x4, scoped, tag = 'scoped memory for forward.1']
    #allocation5 [shape = 'u8[131072]{0}', space=vmem, size = 0x20000, scoped, tag = 'input window, operand 4, single buffered']
    #allocation6 [shape = 's32[1]{0}', space=sflag, size = 0x4, scoped, tag = 'scoped memory for forward.1']
    #allocation7 [shape = 'u8[131072]{0}', space=vmem, size = 0x20000, scoped, tag = 'input window, operand 5, single buffered']
    #allocation8 [shape = 'u8[1024]{0}', space=vmem, size = 0x400, scoped, tag = 'output window, operand 0, single buffered']
    %13 = vsyncpa [#allocation3], 0
    %14 = vsyncpa [#allocation6], 0
    %15 = vsyncpa [#allocation4], 0
    // Predicated region
    $region2: #{forward.1} parent=1 // pred_check
      _
    $region3: #{forward.1} parent=1 // pred_check_branch
      %17 = sbr.rel (0) target = $region5
    $region4: #{forward.1} parent=1 // pred_region
      _
    $region5: #{forward.1} parent=1 // pred_fallthru
      _
    // Predicated region
    $region6: #{forward.1} parent=1 // pred_check
      _
    $region7: #{forward.1} parent=1 // pred_check_branch
      %19 = sbr.rel (0) target = $region9
    $region8: #{forward.1} parent=1 // pred_region
      _
    $region9: #{forward.1} parent=1 // pred_fallthru
      _
    // Predicated region
    $region10: #{forward.1} parent=1 // pred_check
      _
    $region11: #{forward.1} parent=1 // pred_check_branch
      %21 = sbr.rel (0) target = $region13
    $region12: #{forward.1} parent=1 // pred_region
      %23 = vsyncadd [#allocation3], 0
      %s24 = sshll.u32 %s2, 4
      %s25 = int_to_ptr.hbm [resolvable:$true] %s24
      %s26 = sshll.u32 [#allocation2], 4
      %s27 = int_to_ptr.vmem [resolvable:$true] %s26
      %32 = dma.hbm_to_vmem [thread:$0]  %s25, 6144, %s27, [#allocation3], 192, 192, 12
    $region13: #{forward.1} parent=1 // pred_fallthru
      _
    // Predicated region
    $region14: #{forward.1} parent=1 // pred_check
      _
    $region15: #{forward.1} parent=1 // pred_check_branch
      %34 = sbr.rel (0) target = $region17
    $region16: #{forward.1} parent=1 // pred_region
      _
    $region17: #{forward.1} parent=1 // pred_fallthru
      _
    // Predicated region
    $region18: #{forward.1} parent=1 // pred_check
      _
    $region19: #{forward.1} parent=1 // pred_check_branch
      %36 = sbr.rel (0) target = $region21
    $region20: #{forward.1} parent=1 // pred_region
      %38 = vsyncadd [#allocation6], 0
      %s39 = sshll.u32 %s4, 4
      %s40 = int_to_ptr.hbm [resolvable:$true] %s39
      %s41 = sshll.u32 [#allocation5], 4
      %s42 = int_to_ptr.vmem [resolvable:$true] %s41
      %47 = dma.hbm_to_vmem [thread:$0]  %s40, 4096, %s42, [#allocation6], 128, 128, 8
    $region21: #{forward.1} parent=1 // pred_fallthru
      _
    // Predicated region
    $region22: #{forward.1} parent=1 // pred_check
      _
    $region23: #{forward.1} parent=1 // pred_check_branch
      %49 = sbr.rel (0) target = $region25
    $region24: #{forward.1} parent=1 // pred_region
      %51 = vsyncadd [#allocation6], 0
      %s52 = sshll.u32 %s5, 4
      %s53 = int_to_ptr.hbm [resolvable:$true] %s52
      %s54 = sshll.u32 [#allocation7], 4
      %s55 = int_to_ptr.vmem [resolvable:$true] %s54
      %60 = dma.hbm_to_vmem [thread:$0]  %s53, 4096, %s55, [#allocation6], 64, 64, 4
    $region25: #{forward.1} parent=1 // pred_fallthru
      _
    // Predicated region
    $region26: #{forward.1} parent=1 // pred_check
      _
    $region27: #{forward.1} parent=1 // pred_check_branch
      %62 = sbr.rel (0) target = $region29
    $region28: #{forward.1} parent=1 // pred_region
      _
    $region29: #{forward.1} parent=1 // pred_fallthru
      _
    // Predicated region
    $region30: #{forward.1} parent=1 // pred_check
      _
    $region31: #{forward.1} parent=1 // pred_check_branch
      %64 = sbr.rel (0) target = $region33
    $region32: #{forward.1} parent=1 // pred_region
      _
    $region33: #{forward.1} parent=1 // pred_fallthru
      _
    // Predicated region
    $region34: #{forward.1} parent=1 // pred_check
      _
    $region35: #{forward.1} parent=1 // pred_check_branch
      %66 = sbr.rel (0) target = $region37
    $region36: #{forward.1} parent=1 // pred_region
      %68 = dma.done [#allocation3], 6144
    $region37: #{forward.1} parent=1 // pred_fallthru
      _
    // Predicated region
    $region38: #{forward.1} parent=1 // pred_check
      _
    $region39: #{forward.1} parent=1 // pred_check_branch
      %70 = sbr.rel (0) target = $region41
    $region40: #{forward.1} parent=1 // pred_region
      %72 = dma.done [#allocation6], 4096
    $region41: #{forward.1} parent=1 // pred_fallthru
      _
    // Predicated region
    $region42: #{forward.1} parent=1 // pred_check
      _
    $region43: #{forward.1} parent=1 // pred_check_branch
      %74 = sbr.rel (0) target = $region45
    $region44: #{forward.1} parent=1 // pred_region
      %76 = dma.done [#allocation6], 4096
    $region45: #{forward.1} parent=1 // pred_fallthru
      _
    %v78 = vld [vmem:[%s0] sm:$0xff]
    %v79 = vld [vmem:[%s0 + $0x8] sm:$0xff]
    %v80 = vld [vmem:[#allocation2] sm:$0xff]
    %v81 = vld [vmem:[#allocation2 + $0x8] sm:$0xf]
    %v82 = vld [vmem:[#allocation2 + $0xc] sm:$0xff]
    %v83 = vld [vmem:[#allocation2 + $0x14] sm:$0xf]
    %v84 = vld [vmem:[#allocation2 + $0x18] sm:$0xff]
    %v85 = vld [vmem:[#allocation2 + $0x20] sm:$0xf]
    %v86 = vld [vmem:[#allocation2 + $0x24] sm:$0xff]
    %v87 = vld [vmem:[#allocation2 + $0x2c] sm:$0xf]
    %v88 = vld [vmem:[#allocation2 + $0x30] sm:$0xff]
    %v89 = vld [vmem:[#allocation2 + $0x38] sm:$0xf]
    %v90 = vld [vmem:[#allocation2 + $0x3c] sm:$0xff]
    %v91 = vld [vmem:[#allocation2 + $0x44] sm:$0xf]
    %v92 = vld [vmem:[#allocation2 + $0x48] sm:$0xff]
    %v93 = vld [vmem:[#allocation2 + $0x50] sm:$0xf]
    %v94 = vld [vmem:[#allocation2 + $0x54] sm:$0xff]
    %v95 = vld [vmem:[#allocation2 + $0x5c] sm:$0xf]
    %v96 = vld [vmem:[#allocation2 + $0x60] sm:$0xff]
    %v97 = vld [vmem:[#allocation2 + $0x68] sm:$0xf]
    %v98 = vld [vmem:[#allocation2 + $0x6c] sm:$0xff]
    %v99 = vld [vmem:[#allocation2 + $0x74] sm:$0xf]
    %v100 = vld [vmem:[#allocation2 + $0x78] sm:$0xff]
    %v101 = vld [vmem:[#allocation2 + $0x80] sm:$0xf]
    %v102 = vld [vmem:[#allocation2 + $0x84] sm:$0xff]
    %v103 = vld [vmem:[#allocation2 + $0x8c] sm:$0xf]
    %v104 = vld [vmem:[#allocation2 + $0x90] sm:$0xff]
    %v105 = vld [vmem:[#allocation2 + $0x98] sm:$0xf]
    %v106 = vld [vmem:[#allocation2 + $0x9c] sm:$0xff]
    %v107 = vld [vmem:[#allocation2 + $0xa4] sm:$0xf]
    %v108 = vld [vmem:[#allocation2 + $0xa8] sm:$0xff]
    %v109 = vld [vmem:[#allocation2 + $0xb0] sm:$0xf]
    %v110 = vld [vmem:[#allocation2 + $0xb4] sm:$0xff]
    %v111 = vld [vmem:[#allocation2 + $0xbc] sm:$0xf]
    %v112 = vpack.c.bf16 %v79, %v78
    %v113 = vld [vmem:[%s1] ss:$2 sm:$0x7]
    %v115 = vperm.slane %v113, 0
    %v116 = vperm.slane %v113, 1
    %v117 = vperm.slane %v113, 2
    %v153 = vunpack.c.l.b16 %v80
    %v154 = vunpack.c.h.b16 %v80
    %v155 = vunpack.c.l.b16 %v81
    %v156 = vunpack.c.l.b16 %v82
    %v157 = vunpack.c.h.b16 %v82
    %v158 = vunpack.c.l.b16 %v83
    %v159 = vunpack.c.l.b16 %v84
    %v160 = vunpack.c.h.b16 %v84
    %v161 = vunpack.c.l.b16 %v85
    %v162 = vunpack.c.l.b16 %v86
    %v163 = vunpack.c.h.b16 %v86
    %v164 = vunpack.c.l.b16 %v87
    %v165 = vunpack.c.l.b16 %v88
    %v166 = vunpack.c.h.b16 %v88
    %v167 = vunpack.c.l.b16 %v89
    %v168 = vunpack.c.l.b16 %v90
    %v169 = vunpack.c.h.b16 %v90
    %v170 = vunpack.c.l.b16 %v91
    %v171 = vunpack.c.l.b16 %v92
    %v172 = vunpack.c.h.b16 %v92
    %v173 = vunpack.c.l.b16 %v93
    %v174 = vunpack.c.l.b16 %v94
    %v175 = vunpack.c.h.b16 %v94
    %v176 = vunpack.c.l.b16 %v95
    %v177 = vunpack.c.l.b16 %v96
    %v178 = vunpack.c.h.b16 %v96
    %v179 = vunpack.c.l.b16 %v97
    %v180 = vunpack.c.l.b16 %v98
    %v181 = vunpack.c.h.b16 %v98
    %v182 = vunpack.c.l.b16 %v99
    %v183 = vunpack.c.l.b16 %v100
    %v184 = vunpack.c.h.b16 %v100
    %v185 = vunpack.c.l.b16 %v101
    %v186 = vunpack.c.l.b16 %v102
    %v187 = vunpack.c.h.b16 %v102
    %v188 = vunpack.c.l.b16 %v103
    %v189 = vunpack.c.l.b16 %v104
    %v190 = vunpack.c.h.b16 %v104
    %v191 = vunpack.c.l.b16 %v105
    %v192 = vunpack.c.l.b16 %v106
    %v193 = vunpack.c.h.b16 %v106
    %v194 = vunpack.c.l.b16 %v107
    %v195 = vunpack.c.l.b16 %v108
    %v196 = vunpack.c.h.b16 %v108
    %v197 = vunpack.c.l.b16 %v109
    %v198 = vunpack.c.l.b16 %v110
    %v199 = vunpack.c.h.b16 %v110
    %v200 = vunpack.c.l.b16 %v111
    %v201 = vpack.c.b16 %v156, %v153
    %v202 = vpack.c.b16 %v157, %v154
    %v203 = vpack.c.b16 %v158, %v155
    %v204 = vpack.c.b16 %v162, %v159
    %v205 = vpack.c.b16 %v163, %v160
    %v206 = vpack.c.b16 %v164, %v161
    %v207 = vpack.c.b16 %v168, %v165
    %v208 = vpack.c.b16 %v169, %v166
    %v209 = vpack.c.b16 %v170, %v167
    %v210 = vpack.c.b16 %v174, %v171
    %v211 = vpack.c.b16 %v175, %v172
    %v212 = vpack.c.b16 %v176, %v173
    %v213 = vpack.c.b16 %v180, %v177
    %v214 = vpack.c.b16 %v181, %v178
    %v215 = vpack.c.b16 %v182, %v179
    %v216 = vpack.c.b16 %v186, %v183
    %v217 = vpack.c.b16 %v187, %v184
    %v218 = vpack.c.b16 %v188, %v185
    %v219 = vpack.c.b16 %v192, %v189
    %v220 = vpack.c.b16 %v193, %v190
    %v221 = vpack.c.b16 %v194, %v191
    %v222 = vpack.c.b16 %v198, %v195
    %v223 = vpack.c.b16 %v199, %v196
    %v224 = vpack.c.b16 %v200, %v197
    %249 = vmatpush.bf16.msra.mxu0 %v222
    %250 = vmatpush.bf16.msra.mxu0 %v219
    %251 = vmatpush.bf16.msra.mxu0 %v216
    %252 = vmatpush.bf16.msra.mxu0 %v213
    %253 = vmatpush.bf16.msra.mxu0 %v210
    %254 = vmatpush.bf16.msra.mxu0 %v207
    %255 = vmatpush.bf16.msra.mxu0 %v204
    %256 = vmatpush.bf16.msra.mxu0 %v201
    %257 = vmatmul.bf16.gmra.mxu0 %v112
    %v258 = vpop.f32.mrf.mxu0
    %v259 = vadd.f32 %v115, %v258
    %v260 = vpop.f32.mrf.mxu0
    %v261 = vadd.f32 %v115, %v260
    %262 = vdwg.mxu0
    %263 = vmatpush.bf16.msra.mxu0 %v223
    %264 = vmatpush.bf16.msra.mxu0 %v220
    %265 = vmatpush.bf16.msra.mxu0 %v217
    %266 = vmatpush.bf16.msra.mxu0 %v214
    %267 = vmatpush.bf16.msra.mxu0 %v211
    %268 = vmatpush.bf16.msra.mxu0 %v208
    %269 = vmatpush.bf16.msra.mxu0 %v205
    %270 = vmatpush.bf16.msra.mxu0 %v202
    %271 = vmatmul.bf16.gmra.mxu0 %v112
    %v272 = vpop.f32.mrf.mxu0
    %v273 = vadd.f32 %v116, %v272
    %v274 = vpop.f32.mrf.mxu0
    %v275 = vadd.f32 %v116, %v274
    %276 = vdwg.mxu0
    %277 = vmatpush.bf16.msra.mxu0 %v224
    %278 = vmatpush.bf16.msra.mxu0 %v221
    %279 = vmatpush.bf16.msra.mxu0 %v218
    %280 = vmatpush.bf16.msra.mxu0 %v215
    %281 = vmatpush.bf16.msra.mxu0 %v212
    %282 = vmatpush.bf16.msra.mxu0 %v209
    %283 = vmatpush.bf16.msra.mxu0 %v206
    %284 = vmatpush.bf16.msra.mxu0 %v203
    %285 = vmatmul.bf16.gmra.mxu0 %v112
    %v286 = vpop.f32.mrf.mxu0
    %v287 = vadd.f32 %v117, %v286
    %v288 = vpop.f32.mrf.mxu0
    %v289 = vadd.f32 %v117, %v288
    %290 = vdwg.mxu0
    %v291 = vmul.f32 %v259, 0.25
    %v292 = vmul.f32 %v261, 0.25
    %v293 = vpack.c.bf16 %v291, %v291
    %v294 = vpack.c.bf16 %v292, %v292
    %v297 = vrot.slane %v293, 3
    %v298 = vrot.slane %v294, 3
    %vm299 = vcmask 1040384
    %v302 = vsel %vm299, %v293, %v297
    %vm303 = vcmask 1041409
    %v304 = vsel %vm303, %v293, %v297
    %v306 = vrot.slane %v304, 1
    %vm307 = vcmask 1042434
    %v308 = vsel %vm307, %v293, %v297
    %v310 = vrot.slane %v308, 2
    %vm311 = vcmask 1043459
    %v312 = vsel %vm311, %v293, %v297
    %v314 = vrot.slane %v312, 3
    %v317 = vsel %vm299, %v294, %v298
    %v318 = vsel %vm303, %v294, %v298
    %v320 = vrot.slane %v318, 1
    %v321 = vsel %vm307, %v294, %v298
    %v323 = vrot.slane %v321, 2
    %v324 = vsel %vm311, %v294, %v298
    %v326 = vrot.slane %v324, 3
    %v327 = vpack.c.bf16 %v273, %v273
    %v328 = vpack.c.bf16 %v275, %v275
    %v331 = vrot.slane %v327, 3
    %v332 = vrot.slane %v328, 3
    %v335 = vsel %vm299, %v327, %v331
    %v336 = vsel %vm303, %v327, %v331
    %v338 = vrot.slane %v336, 1
    %v339 = vsel %vm307, %v327, %v331
    %v341 = vrot.slane %v339, 2
    %v342 = vsel %vm311, %v327, %v331
    %v344 = vrot.slane %v342, 3
    %v347 = vsel %vm299, %v328, %v332
    %v348 = vsel %vm303, %v328, %v332
    %v350 = vrot.slane %v348, 1
    %v351 = vsel %vm307, %v328, %v332
    %v353 = vrot.slane %v351, 2
    %v354 = vsel %vm311, %v328, %v332
    %v356 = vrot.slane %v354, 3
    %v357 = vpack.c.bf16 %v287, %v287
    %v358 = vpack.c.bf16 %v289, %v289
    %v361 = vrot.slane %v357, 3
    %v362 = vrot.slane %v358, 3
    %v365 = vsel %vm299, %v357, %v361
    %v366 = vsel %vm303, %v357, %v361
    %v368 = vrot.slane %v366, 1
    %v369 = vsel %vm307, %v357, %v361
    %v371 = vrot.slane %v369, 2
    %v372 = vsel %vm311, %v357, %v361
    %v374 = vrot.slane %v372, 3
    %v377 = vsel %vm299, %v358, %v362
    %v378 = vsel %vm303, %v358, %v362
    %v380 = vrot.slane %v378, 1
    %v381 = vsel %vm307, %v358, %v362
    %v383 = vrot.slane %v381, 2
    %v384 = vsel %vm311, %v358, %v362
    %v386 = vrot.slane %v384, 3
    %vm387 = vcmask 130048
    %v388 = vsel %vm387, %v302, 0
    %v390 = vsel %vm387, %v335, 0
    %392 = vmatpush.bf16.xpose.msra.mxu0 0
    %393 = vmatpush.bf16.xpose.msra.mxu0 0
    %394 = vmatpush.bf16.xpose.msra.mxu0 0
    %395 = vmatpush.bf16.xpose.msra.mxu0 0
    %396 = vmatpush.bf16.xpose.msra.mxu0 0
    %397 = vmatpush.bf16.xpose.msra.mxu0 0
    %398 = vmatpush.bf16.xpose.msra.mxu0 0
    %399 = vmatpush.bf16.xpose.msra.mxu0 %v390
    %400 = vmatmul.bf16.gmra.mxu0 %v388
    %v401 = vpop.f32.mrf.mxu0
    %v402 = vadd.f32 0.0, %v401
    %v403 = vpop.f32.mrf.mxu0
    %404 = vdwg.mxu0
    %v406 = vsel %vm387, %v306, 0
    %v409 = vsel %vm387, %v338, 0
    %411 = vmatpush.bf16.xpose.msra.mxu0 0
    %412 = vmatpush.bf16.xpose.msra.mxu0 0
    %413 = vmatpush.bf16.xpose.msra.mxu0 0
    %414 = vmatpush.bf16.xpose.msra.mxu0 0
    %415 = vmatpush.bf16.xpose.msra.mxu0 0
    %416 = vmatpush.bf16.xpose.msra.mxu0 0
    %417 = vmatpush.bf16.xpose.msra.mxu0 0
    %418 = vmatpush.bf16.xpose.msra.mxu0 %v409
    %419 = vmatmul.bf16.gmra.mxu0 %v406
    %v420 = vpop.f32.mrf.mxu0
    %v421 = vadd.f32 0.0, %v420
    %v422 = vpop.f32.mrf.mxu0
    %423 = vdwg.mxu0
    %v425 = vsel %vm387, %v310, 0
    %v428 = vsel %vm387, %v341, 0
    %430 = vmatpush.bf16.xpose.msra.mxu0 0
    %431 = vmatpush.bf16.xpose.msra.mxu0 0
    %432 = vmatpush.bf16.xpose.msra.mxu0 0
    %433 = vmatpush.bf16.xpose.msra.mxu0 0
    %434 = vmatpush.bf16.xpose.msra.mxu0 0
    %435 = vmatpush.bf16.xpose.msra.mxu0 0
    %436 = vmatpush.bf16.xpose.msra.mxu0 0
    %437 = vmatpush.bf16.xpose.msra.mxu0 %v428
    %438 = vmatmul.bf16.gmra.mxu0 %v425
    %v439 = vpop.f32.mrf.mxu0
    %v440 = vadd.f32 0.0, %v439
    %v441 = vpop.f32.mrf.mxu0
    %442 = vdwg.mxu0
    %v444 = vsel %vm387, %v314, 0
    %v447 = vsel %vm387, %v344, 0
    %449 = vmatpush.bf16.xpose.msra.mxu0 0
    %450 = vmatpush.bf16.xpose.msra.mxu0 0
    %451 = vmatpush.bf16.xpose.msra.mxu0 0
    %452 = vmatpush.bf16.xpose.msra.mxu0 0
    %453 = vmatpush.bf16.xpose.msra.mxu0 0
    %454 = vmatpush.bf16.xpose.msra.mxu0 0
    %455 = vmatpush.bf16.xpose.msra.mxu0 0
    %456 = vmatpush.bf16.xpose.msra.mxu0 %v447
    %457 = vmatmul.bf16.gmra.mxu0 %v444
    %v458 = vpop.f32.mrf.mxu0
    %v459 = vadd.f32 0.0, %v458
    %v460 = vpop.f32.mrf.mxu0
    %461 = vdwg.mxu0
    %v462 = vsel %vm387, %v317, 0
    %v464 = vsel %vm387, %v347, 0
    %466 = vmatpush.bf16.xpose.msra.mxu0 0
    %467 = vmatpush.bf16.xpose.msra.mxu0 0
    %468 = vmatpush.bf16.xpose.msra.mxu0 0
    %469 = vmatpush.bf16.xpose.msra.mxu0 0
    %470 = vmatpush.bf16.xpose.msra.mxu0 0
    %471 = vmatpush.bf16.xpose.msra.mxu0 0
    %472 = vmatpush.bf16.xpose.msra.mxu0 0
    %473 = vmatpush.bf16.xpose.msra.mxu0 %v464
    %474 = vmatmul.bf16.gmra.mxu0 %v462
    %v475 = vpop.f32.mrf.mxu0
    %v476 = vadd.f32 0.0, %v475
    %v477 = vpop.f32.mrf.mxu0
    %478 = vdwg.mxu0
    %v480 = vsel %vm387, %v320, 0
    %v483 = vsel %vm387, %v350, 0
    %485 = vmatpush.bf16.xpose.msra.mxu0 0
    %486 = vmatpush.bf16.xpose.msra.mxu0 0
    %487 = vmatpush.bf16.xpose.msra.mxu0 0
    %488 = vmatpush.bf16.xpose.msra.mxu0 0
    %489 = vmatpush.bf16.xpose.msra.mxu0 0
    %490 = vmatpush.bf16.xpose.msra.mxu0 0
    %491 = vmatpush.bf16.xpose.msra.mxu0 0
    %492 = vmatpush.bf16.xpose.msra.mxu0 %v483
    %493 = vmatmul.bf16.gmra.mxu0 %v480
    %v494 = vpop.f32.mrf.mxu0
    %v495 = vadd.f32 0.0, %v494
    %v496 = vpop.f32.mrf.mxu0
    %497 = vdwg.mxu0
    %v499 = vsel %vm387, %v323, 0
    %v502 = vsel %vm387, %v353, 0
    %504 = vmatpush.bf16.xpose.msra.mxu0 0
    %505 = vmatpush.bf16.xpose.msra.mxu0 0
    %506 = vmatpush.bf16.xpose.msra.mxu0 0
    %507 = vmatpush.bf16.xpose.msra.mxu0 0
    %508 = vmatpush.bf16.xpose.msra.mxu0 0
    %509 = vmatpush.bf16.xpose.msra.mxu0 0
    %510 = vmatpush.bf16.xpose.msra.mxu0 0
    %511 = vmatpush.bf16.xpose.msra.mxu0 %v502
    %512 = vmatmul.bf16.gmra.mxu0 %v499
    %v513 = vpop.f32.mrf.mxu0
    %v514 = vadd.f32 0.0, %v513
    %v515 = vpop.f32.mrf.mxu0
    %516 = vdwg.mxu0
    %v518 = vsel %vm387, %v326, 0
    %v521 = vsel %vm387, %v356, 0
    %523 = vmatpush.bf16.xpose.msra.mxu0 0
    %524 = vmatpush.bf16.xpose.msra.mxu0 0
    %525 = vmatpush.bf16.xpose.msra.mxu0 0
    %526 = vmatpush.bf16.xpose.msra.mxu0 0
    %527 = vmatpush.bf16.xpose.msra.mxu0 0
    %528 = vmatpush.bf16.xpose.msra.mxu0 0
    %529 = vmatpush.bf16.xpose.msra.mxu0 0
    %530 = vmatpush.bf16.xpose.msra.mxu0 %v521
    %531 = vmatmul.bf16.gmra.mxu0 %v518
    %v532 = vpop.f32.mrf.mxu0
    %v533 = vadd.f32 0.0, %v532
    %v534 = vpop.f32.mrf.mxu0
    %535 = vdwg.mxu0
    %vm536 = vcmask 9216
    %v537 = vsel %vm536, %v402, -inf
    %538 = vmax.xlane.f32.xlu0 %v537
    %v539 = vpop.xlane.xlu0 %538
    %v540 = vsel %vm536, %v421, -inf
    %541 = vmax.xlane.f32.xlu0 %v540
    %v542 = vpop.xlane.xlu0 %541
    %v543 = vsel %vm536, %v440, -inf
    %544 = vmax.xlane.f32.xlu0 %v543
    %v545 = vpop.xlane.xlu0 %544
    %v546 = vsel %vm536, %v459, -inf
    %547 = vmax.xlane.f32.xlu0 %v546
    %v548 = vpop.xlane.xlu0 %547
    %v549 = vsel %vm536, %v476, -inf
    %550 = vmax.xlane.f32.xlu0 %v549
    %v551 = vpop.xlane.xlu0 %550
    %v552 = vsel %vm536, %v495, -inf
    %553 = vmax.xlane.f32.xlu0 %v552
    %v554 = vpop.xlane.xlu0 %553
    %v555 = vsel %vm536, %v514, -inf
    %556 = vmax.xlane.f32.xlu0 %v555
    %v557 = vpop.xlane.xlu0 %556
    %v558 = vsel %vm536, %v533, -inf
    %559 = vmax.xlane.f32.xlu0 %v558
    %v560 = vpop.xlane.xlu0 %559
    %v561 = vsub.f32 %v402, %v539
    %v562 = vsub.f32 %v421, %v542
    %v563 = vsub.f32 %v440, %v545
    %v564 = vsub.f32 %v459, %v548
    %v565 = vsub.f32 %v476, %v551
    %v566 = vsub.f32 %v495, %v554
    %v567 = vsub.f32 %v514, %v557
    %v568 = vsub.f32 %v533, %v560
    %v569 = vmul.f32 %v561, 1.442695
    %v570 = vpow.pop %v569
    %v571 = vmul.f32 %v562, 1.442695
    %v572 = vpow.pop %v571
    %v573 = vmul.f32 %v563, 1.442695
    %v574 = vpow.pop %v573
    %v575 = vmul.f32 %v564, 1.442695
    %v576 = vpow.pop %v575
    %v577 = vmul.f32 %v565, 1.442695
    %v578 = vpow.pop %v577
    %v579 = vmul.f32 %v566, 1.442695
    %v580 = vpow.pop %v579
    %v581 = vmul.f32 %v567, 1.442695
    %v582 = vpow.pop %v581
    %v583 = vmul.f32 %v568, 1.442695
    %v584 = vpow.pop %v583
    %v585 = vsel %vm536, %v570, 0.0
    %586 = vadd.xlane.f32.xlu0 %v585
    %v587 = vpop.xlane.xlu0 %586
    %v588 = vsel %vm536, %v572, 0.0
    %589 = vadd.xlane.f32.xlu0 %v588
    %v590 = vpop.xlane.xlu0 %589
    %v591 = vsel %vm536, %v574, 0.0
    %592 = vadd.xlane.f32.xlu0 %v591
    %v593 = vpop.xlane.xlu0 %592
    %v594 = vsel %vm536, %v576, 0.0
    %595 = vadd.xlane.f32.xlu0 %v594
    %v596 = vpop.xlane.xlu0 %595
    %v597 = vsel %vm536, %v578, 0.0
    %598 = vadd.xlane.f32.xlu0 %v597
    %v599 = vpop.xlane.xlu0 %598
    %v600 = vsel %vm536, %v580, 0.0
    %601 = vadd.xlane.f32.xlu0 %v600
    %v602 = vpop.xlane.xlu0 %601
    %v603 = vsel %vm536, %v582, 0.0
    %604 = vadd.xlane.f32.xlu0 %v603
    %v605 = vpop.xlane.xlu0 %604
    %v606 = vsel %vm536, %v584, 0.0
    %607 = vadd.xlane.f32.xlu0 %v606
    %v608 = vpop.xlane.xlu0 %607
    %v609 = vrcp.pop %v587
    %v610 = vmul.f32 %v587, %v609
    %v611 = vsub.f32 1.0, %v610
    %v612 = vmul.f32 %v609, %v611
    %v613 = vadd.f32 %v609, %v612
    %vm614 = vweird.f32 %v587
    %vm615 = vweird.f32 %v609
    %vm616 = vmor %vm614, %vm615
    %v617 = vsel %vm616, %v609, %v613
    %v618 = vand.u32 2147483647, %v587
    %vm619 = vcmp.eq.f32.partialorder %v618, 8.507059e+37
    %v620 = vand.u32 %v587, 2147483648
    %v621 = vor.u32 1.1754944e-38, %v620
    %v622 = vsel %vm619, %v621, %v617
    %v623 = vmul.f32 %v570, %v622
    %v624 = vrcp.pop %v590
    %v625 = vmul.f32 %v590, %v624
    %v626 = vsub.f32 1.0, %v625
    %v627 = vmul.f32 %v624, %v626
    %v628 = vadd.f32 %v624, %v627
    %vm629 = vweird.f32 %v590
    %vm630 = vweird.f32 %v624
    %vm631 = vmor %vm629, %vm630
    %v632 = vsel %vm631, %v624, %v628
    %v633 = vand.u32 2147483647, %v590
    %vm634 = vcmp.eq.f32.partialorder %v633, 8.507059e+37
    %v635 = vand.u32 %v590, 2147483648
    %v636 = vor.u32 1.1754944e-38, %v635
    %v637 = vsel %vm634, %v636, %v632
    %v638 = vmul.f32 %v572, %v637
    %v639 = vrcp.pop %v593
    %v640 = vmul.f32 %v593, %v639
    %v641 = vsub.f32 1.0, %v640
    %v642 = vmul.f32 %v639, %v641
    %v643 = vadd.f32 %v639, %v642
    %vm644 = vweird.f32 %v593
    %vm645 = vweird.f32 %v639
    %vm646 = vmor %vm644, %vm645
    %v647 = vsel %vm646, %v639, %v643
    %v648 = vand.u32 2147483647, %v593
    %vm649 = vcmp.eq.f32.partialorder %v648, 8.507059e+37
    %v650 = vand.u32 %v593, 2147483648
    %v651 = vor.u32 1.1754944e-38, %v650
    %v652 = vsel %vm649, %v651, %v647
    %v653 = vmul.f32 %v574, %v652
    %v654 = vrcp.pop %v596
    %v655 = vmul.f32 %v596, %v654
    %v656 = vsub.f32 1.0, %v655
    %v657 = vmul.f32 %v654, %v656
    %v658 = vadd.f32 %v654, %v657
    %vm659 = vweird.f32 %v596
    %vm660 = vweird.f32 %v654
    %vm661 = vmor %vm659, %vm660
    %v662 = vsel %vm661, %v654, %v658
    %v663 = vand.u32 2147483647, %v596
    %vm664 = vcmp.eq.f32.partialorder %v663, 8.507059e+37
    %v665 = vand.u32 %v596, 2147483648
    %v666 = vor.u32 1.1754944e-38, %v665
    %v667 = vsel %vm664, %v666, %v662
    %v668 = vmul.f32 %v576, %v667
    %v669 = vrcp.pop %v599
    %v670 = vmul.f32 %v599, %v669
    %v671 = vsub.f32 1.0, %v670
    %v672 = vmul.f32 %v669, %v671
    %v673 = vadd.f32 %v669, %v672
    %vm674 = vweird.f32 %v599
    %vm675 = vweird.f32 %v669
    %vm676 = vmor %vm674, %vm675
    %v677 = vsel %vm676, %v669, %v673
    %v678 = vand.u32 2147483647, %v599
    %vm679 = vcmp.eq.f32.partialorder %v678, 8.507059e+37
    %v680 = vand.u32 %v599, 2147483648
    %v681 = vor.u32 1.1754944e-38, %v680
    %v682 = vsel %vm679, %v681, %v677
    %v683 = vmul.f32 %v578, %v682
    %v684 = vrcp.pop %v602
    %v685 = vmul.f32 %v602, %v684
    %v686 = vsub.f32 1.0, %v685
    %v687 = vmul.f32 %v684, %v686
    %v688 = vadd.f32 %v684, %v687
    %vm689 = vweird.f32 %v602
    %vm690 = vweird.f32 %v684
    %vm691 = vmor %vm689, %vm690
    %v692 = vsel %vm691, %v684, %v688
    %v693 = vand.u32 2147483647, %v602
    %vm694 = vcmp.eq.f32.partialorder %v693, 8.507059e+37
    %v695 = vand.u32 %v602, 2147483648
    %v696 = vor.u32 1.1754944e-38, %v695
    %v697 = vsel %vm694, %v696, %v692
    %v698 = vmul.f32 %v580, %v697
    %v699 = vrcp.pop %v605
    %v700 = vmul.f32 %v605, %v699
    %v701 = vsub.f32 1.0, %v700
    %v702 = vmul.f32 %v699, %v701
    %v703 = vadd.f32 %v699, %v702
    %vm704 = vweird.f32 %v605
    %vm705 = vweird.f32 %v699
    %vm706 = vmor %vm704, %vm705
    %v707 = vsel %vm706, %v699, %v703
    %v708 = vand.u32 2147483647, %v605
    %vm709 = vcmp.eq.f32.partialorder %v708, 8.507059e+37
    %v710 = vand.u32 %v605, 2147483648
    %v711 = vor.u32 1.1754944e-38, %v710
    %v712 = vsel %vm709, %v711, %v707
    %v713 = vmul.f32 %v582, %v712
    %v714 = vrcp.pop %v608
    %v715 = vmul.f32 %v608, %v714
    %v716 = vsub.f32 1.0, %v715
    %v717 = vmul.f32 %v714, %v716
    %v718 = vadd.f32 %v714, %v717
    %vm719 = vweird.f32 %v608
    %vm720 = vweird.f32 %v714
    %vm721 = vmor %vm719, %vm720
    %v722 = vsel %vm721, %v714, %v718
    %v723 = vand.u32 2147483647, %v608
    %vm724 = vcmp.eq.f32.partialorder %v723, 8.507059e+37
    %v725 = vand.u32 %v608, 2147483648
    %v726 = vor.u32 1.1754944e-38, %v725
    %v727 = vsel %vm724, %v726, %v722
    %v728 = vmul.f32 %v584, %v727
    %v729 = vpack.c.bf16 %v623, %v623
    %v730 = vpack.c.bf16 %v638, %v638
    %v731 = vpack.c.bf16 %v653, %v653
    %v732 = vpack.c.bf16 %v668, %v668
    %v733 = vpack.c.bf16 %v683, %v683
    %v734 = vpack.c.bf16 %v698, %v698
    %v735 = vpack.c.bf16 %v713, %v713
    %v736 = vpack.c.bf16 %v728, %v728
    %vm737 = vcmask 15360
    %v739 = vsel %vm737, %v729, 0
    %v741 = vsel %vm299, %v365, 0
    %743 = vmatpush.bf16.msra.mxu0 0
    %744 = vmatpush.bf16.msra.mxu0 0
    %745 = vmatpush.bf16.msra.mxu0 0
    %746 = vmatpush.bf16.msra.mxu0 0
    %747 = vmatpush.bf16.msra.mxu0 0
    %748 = vmatpush.bf16.msra.mxu0 0
    %749 = vmatpush.bf16.msra.mxu0 0
    %750 = vmatpush.bf16.msra.mxu0 %v741
    %751 = vmatmul.bf16.gmra.mxu0 %v739
    %v752 = vpop.f32.mrf.mxu0
    %v753 = vadd.f32 0.0, %v752
    %v754 = vpop.f32.mrf.mxu0
    %755 = vdwg.mxu0
    %v757 = vsel %vm737, %v730, 0
    %v760 = vsel %vm299, %v368, 0
    %762 = vmatpush.bf16.msra.mxu0 0
    %763 = vmatpush.bf16.msra.mxu0 0
    %764 = vmatpush.bf16.msra.mxu0 0
    %765 = vmatpush.bf16.msra.mxu0 0
    %766 = vmatpush.bf16.msra.mxu0 0
    %767 = vmatpush.bf16.msra.mxu0 0
    %768 = vmatpush.bf16.msra.mxu0 0
    %769 = vmatpush.bf16.msra.mxu0 %v760
    %770 = vmatmul.bf16.gmra.mxu0 %v757
    %v771 = vpop.f32.mrf.mxu0
    %v772 = vadd.f32 0.0, %v771
    %v773 = vpop.f32.mrf.mxu0
    %774 = vdwg.mxu0
    %v776 = vsel %vm737, %v731, 0
    %v779 = vsel %vm299, %v371, 0
    %781 = vmatpush.bf16.msra.mxu0 0
    %782 = vmatpush.bf16.msra.mxu0 0
    %783 = vmatpush.bf16.msra.mxu0 0
    %784 = vmatpush.bf16.msra.mxu0 0
    %785 = vmatpush.bf16.msra.mxu0 0
    %786 = vmatpush.bf16.msra.mxu0 0
    %787 = vmatpush.bf16.msra.mxu0 0
    %788 = vmatpush.bf16.msra.mxu0 %v779
    %789 = vmatmul.bf16.gmra.mxu0 %v776
    %v790 = vpop.f32.mrf.mxu0
    %v791 = vadd.f32 0.0, %v790
    %v792 = vpop.f32.mrf.mxu0
    %793 = vdwg.mxu0
    %v795 = vsel %vm737, %v732, 0
    %v798 = vsel %vm299, %v374, 0
    %800 = vmatpush.bf16.msra.mxu0 0
    %801 = vmatpush.bf16.msra.mxu0 0
    %802 = vmatpush.bf16.msra.mxu0 0
    %803 = vmatpush.bf16.msra.mxu0 0
    %804 = vmatpush.bf16.msra.mxu0 0
    %805 = vmatpush.bf16.msra.mxu0 0
    %806 = vmatpush.bf16.msra.mxu0 0
    %807 = vmatpush.bf16.msra.mxu0 %v798
    %808 = vmatmul.bf16.gmra.mxu0 %v795
    %v809 = vpop.f32.mrf.mxu0
    %v810 = vadd.f32 0.0, %v809
    %v811 = vpop.f32.mrf.mxu0
    %812 = vdwg.mxu0
    %v814 = vsel %vm737, %v733, 0
    %v816 = vsel %vm299, %v377, 0
    %818 = vmatpush.bf16.msra.mxu0 0
    %819 = vmatpush.bf16.msra.mxu0 0
    %820 = vmatpush.bf16.msra.mxu0 0
    %821 = vmatpush.bf16.msra.mxu0 0
    %822 = vmatpush.bf16.msra.mxu0 0
    %823 = vmatpush.bf16.msra.mxu0 0
    %824 = vmatpush.bf16.msra.mxu0 0
    %825 = vmatpush.bf16.msra.mxu0 %v816
    %826 = vmatmul.bf16.gmra.mxu0 %v814
    %v827 = vpop.f32.mrf.mxu0
    %v828 = vadd.f32 0.0, %v827
    %v829 = vpop.f32.mrf.mxu0
    %830 = vdwg.mxu0
    %v832 = vsel %vm737, %v734, 0
    %v835 = vsel %vm299, %v380, 0
    %837 = vmatpush.bf16.msra.mxu0 0
    %838 = vmatpush.bf16.msra.mxu0 0
    %839 = vmatpush.bf16.msra.mxu0 0
    %840 = vmatpush.bf16.msra.mxu0 0
    %841 = vmatpush.bf16.msra.mxu0 0
    %842 = vmatpush.bf16.msra.mxu0 0
    %843 = vmatpush.bf16.msra.mxu0 0
    %844 = vmatpush.bf16.msra.mxu0 %v835
    %845 = vmatmul.bf16.gmra.mxu0 %v832
    %v846 = vpop.f32.mrf.mxu0
    %v847 = vadd.f32 0.0, %v846
    %v848 = vpop.f32.mrf.mxu0
    %849 = vdwg.mxu0
    %v851 = vsel %vm737, %v735, 0
    %v854 = vsel %vm299, %v383, 0
    %856 = vmatpush.bf16.msra.mxu0 0
    %857 = vmatpush.bf16.msra.mxu0 0
    %858 = vmatpush.bf16.msra.mxu0 0
    %859 = vmatpush.bf16.msra.mxu0 0
    %860 = vmatpush.bf16.msra.mxu0 0
    %861 = vmatpush.bf16.msra.mxu0 0
    %862 = vmatpush.bf16.msra.mxu0 0
    %863 = vmatpush.bf16.msra.mxu0 %v854
    %864 = vmatmul.bf16.gmra.mxu0 %v851
    %v865 = vpop.f32.mrf.mxu0
    %v866 = vadd.f32 0.0, %v865
    %v867 = vpop.f32.mrf.mxu0
    %868 = vdwg.mxu0
    %v870 = vsel %vm737, %v736, 0
    %v873 = vsel %vm299, %v386, 0
    %875 = vmatpush.bf16.msra.mxu0 0
    %876 = vmatpush.bf16.msra.mxu0 0
    %877 = vmatpush.bf16.msra.mxu0 0
    %878 = vmatpush.bf16.msra.mxu0 0
    %879 = vmatpush.bf16.msra.mxu0 0
    %880 = vmatpush.bf16.msra.mxu0 0
    %881 = vmatpush.bf16.msra.mxu0 0
    %882 = vmatpush.bf16.msra.mxu0 %v873
    %883 = vmatmul.bf16.gmra.mxu0 %v870
    %v884 = vpop.f32.mrf.mxu0
    %v885 = vadd.f32 0.0, %v884
    %v886 = vpop.f32.mrf.mxu0
    %887 = vdwg.mxu0
    %v888 = vld [vmem:[%s3] sm:$0xf]
    %v889 = vld [vmem:[%s3 + $0x4] sm:$0xf]
    %898 = vst [vmem:[#allocation1] ss:$4 sm:$0xff] %v753
    %s899 = scalar_lea.vmem [#allocation1], 1
    %900 = vst [vmem:[%s899] ss:$4 sm:$0xff] %v772
    %s901 = scalar_lea.vmem [#allocation1], 2
    %902 = vst [vmem:[%s901] ss:$4 sm:$0xff] %v791
    %s903 = scalar_lea.vmem [#allocation1], 3
    %904 = vst [vmem:[%s903] ss:$4 sm:$0xff] %v810
    %s905 = scalar_lea.vmem [#allocation1], 32
    %906 = vst [vmem:[%s905] ss:$4 sm:$0xff] %v828
    %s907 = scalar_lea.vmem [#allocation1], 33
    %908 = vst [vmem:[%s907] ss:$4 sm:$0xff] %v847
    %s909 = scalar_lea.vmem [#allocation1], 34
    %910 = vst [vmem:[%s909] ss:$4 sm:$0xff] %v866
    %s911 = scalar_lea.vmem [#allocation1], 35
    %912 = vst [vmem:[%s911] ss:$4 sm:$0xff] %v885
    %v913 = vld.sshfl [vmem:[#allocation1] sm:$0xff pattern:$0x73625140]
    %v914 = vld.sshfl [vmem:[#allocation1 + $0x20] sm:$0xff pattern:$0x73625140]
    %v917 = vpack.c.bf16 %v914, %v913
    %918 = vst [vmem:[#allocation1] ss:$9 sm:$0xff] %v302
    %v919 = vld [vmem:[#allocation1] sm:$0xff]
    %921 = vrot.lane.b32.xlu0 %v919, 112
    %v922 = vpop.permute.xlu0 %921
    %923 = vst [vmem:[#allocation1] ss:$9 sm:$0xff] %v335
    %v924 = vld [vmem:[#allocation1] sm:$0xff]
    %926 = vrot.lane.b32.xlu0 %v924, 112
    %v927 = vpop.permute.xlu0 %926
    %v929 = vsel %vm387, %v922, 0
    %v932 = vsel %vm387, %v927, 0
    %934 = vmatpush.bf16.xpose.msra.mxu0 0
    %935 = vmatpush.bf16.xpose.msra.mxu0 0
    %936 = vmatpush.bf16.xpose.msra.mxu0 0
    %937 = vmatpush.bf16.xpose.msra.mxu0 0
    %938 = vmatpush.bf16.xpose.msra.mxu0 0
    %939 = vmatpush.bf16.xpose.msra.mxu0 0
    %940 = vmatpush.bf16.xpose.msra.mxu0 0
    %941 = vmatpush.bf16.xpose.msra.mxu0 %v932
    %942 = vmatmul.bf16.gmra.mxu0 %v929
    %v943 = vpop.f32.mrf.mxu0
    %v944 = vadd.f32 0.0, %v943
    %v945 = vpop.f32.mrf.mxu0
    %946 = vdwg.mxu0
    %947 = vst [vmem:[#allocation1] ss:$9 sm:$0xff] %v306
    %v948 = vld [vmem:[#allocation1] sm:$0xff]
    %950 = vrot.lane.b32.xlu0 %v948, 112
    %v951 = vpop.permute.xlu0 %950
    %952 = vst [vmem:[#allocation1] ss:$9 sm:$0xff] %v338
    %v953 = vld [vmem:[#allocation1] sm:$0xff]
    %955 = vrot.lane.b32.xlu0 %v953, 112
    %v956 = vpop.permute.xlu0 %955
    %v958 = vsel %vm387, %v951, 0
    %v961 = vsel %vm387, %v956, 0
    %963 = vmatpush.bf16.xpose.msra.mxu0 0
    %964 = vmatpush.bf16.xpose.msra.mxu0 0
    %965 = vmatpush.bf16.xpose.msra.mxu0 0
    %966 = vmatpush.bf16.xpose.msra.mxu0 0
    %967 = vmatpush.bf16.xpose.msra.mxu0 0
    %968 = vmatpush.bf16.xpose.msra.mxu0 0
    %969 = vmatpush.bf16.xpose.msra.mxu0 0
    %970 = vmatpush.bf16.xpose.msra.mxu0 %v961
    %971 = vmatmul.bf16.gmra.mxu0 %v958
    %v972 = vpop.f32.mrf.mxu0
    %v973 = vadd.f32 0.0, %v972
    %v974 = vpop.f32.mrf.mxu0
    %975 = vdwg.mxu0
    %976 = vst [vmem:[#allocation1] ss:$9 sm:$0xff] %v310
    %v977 = vld [vmem:[#allocation1] sm:$0xff]
    %979 = vrot.lane.b32.xlu0 %v977, 112
    %v980 = vpop.permute.xlu0 %979
    %981 = vst [vmem:[#allocation1] ss:$9 sm:$0xff] %v341
    %v982 = vld [vmem:[#allocation1] sm:$0xff]
    %984 = vrot.lane.b32.xlu0 %v982, 112
    %v985 = vpop.permute.xlu0 %984
    %v987 = vsel %vm387, %v980, 0
    %v990 = vsel %vm387, %v985, 0
    %992 = vmatpush.bf16.xpose.msra.mxu0 0
    %993 = vmatpush.bf16.xpose.msra.mxu0 0
    %994 = vmatpush.bf16.xpose.msra.mxu0 0
    %995 = vmatpush.bf16.xpose.msra.mxu0 0
    %996 = vmatpush.bf16.xpose.msra.mxu0 0
    %997 = vmatpush.bf16.xpose.msra.mxu0 0
    %998 = vmatpush.bf16.xpose.msra.mxu0 0
    %999 = vmatpush.bf16.xpose.msra.mxu0 %v990
    %1000 = vmatmul.bf16.gmra.mxu0 %v987
    %v1001 = vpop.f32.mrf.mxu0
    %v1002 = vadd.f32 0.0, %v1001
    %v1003 = vpop.f32.mrf.mxu0
    %1004 = vdwg.mxu0
    %1005 = vst [vmem:[#allocation1] ss:$9 sm:$0xff] %v314
    %v1006 = vld [vmem:[#allocation1] sm:$0xff]
    %1008 = vrot.lane.b32.xlu0 %v1006, 112
    %v1009 = vpop.permute.xlu0 %1008
    %1010 = vst [vmem:[#allocation1] ss:$9 sm:$0xff] %v344
    %v1011 = vld [vmem:[#allocation1] sm:$0xff]
    %1013 = vrot.lane.b32.xlu0 %v1011, 112
    %v1014 = vpop.permute.xlu0 %1013
    %v1016 = vsel %vm387, %v1009, 0
    %v1019 = vsel %vm387, %v1014, 0
    %1021 = vmatpush.bf16.xpose.msra.mxu0 0
    %1022 = vmatpush.bf16.xpose.msra.mxu0 0
    %1023 = vmatpush.bf16.xpose.msra.mxu0 0
    %1024 = vmatpush.bf16.xpose.msra.mxu0 0
    %1025 = vmatpush.bf16.xpose.msra.mxu0 0
    %1026 = vmatpush.bf16.xpose.msra.mxu0 0
    %1027 = vmatpush.bf16.xpose.msra.mxu0 0
    %1028 = vmatpush.bf16.xpose.msra.mxu0 %v1019
    %1029 = vmatmul.bf16.gmra.mxu0 %v1016
    %v1030 = vpop.f32.mrf.mxu0
    %v1031 = vadd.f32 0.0, %v1030
    %v1032 = vpop.f32.mrf.mxu0
    %1033 = vdwg.mxu0
    %1034 = vst [vmem:[#allocation1] ss:$9 sm:$0xff] %v317
    %v1035 = vld [vmem:[#allocation1] sm:$0xff]
    %1037 = vrot.lane.b32.xlu0 %v1035, 112
    %v1038 = vpop.permute.xlu0 %1037
    %1039 = vst [vmem:[#allocation1] ss:$9 sm:$0xff] %v347
    %v1040 = vld [vmem:[#allocation1] sm:$0xff]
    %1042 = vrot.lane.b32.xlu0 %v1040, 112
    %v1043 = vpop.permute.xlu0 %1042
    %v1045 = vsel %vm387, %v1038, 0
    %v1048 = vsel %vm387, %v1043, 0
    %1050 = vmatpush.bf16.xpose.msra.mxu0 0
    %1051 = vmatpush.bf16.xpose.msra.mxu0 0
    %1052 = vmatpush.bf16.xpose.msra.mxu0 0
    %1053 = vmatpush.bf16.xpose.msra.mxu0 0
    %1054 = vmatpush.bf16.xpose.msra.mxu0 0
    %1055 = vmatpush.bf16.xpose.msra.mxu0 0
    %1056 = vmatpush.bf16.xpose.msra.mxu0 0
    %1057 = vmatpush.bf16.xpose.msra.mxu0 %v1048
    %1058 = vmatmul.bf16.gmra.mxu0 %v1045
    %v1059 = vpop.f32.mrf.mxu0
    %v1060 = vadd.f32 0.0, %v1059
    %v1061 = vpop.f32.mrf.mxu0
    %1062 = vdwg.mxu0
    %1063 = vst [vmem:[#allocation1] ss:$9 sm:$0xff] %v320
    %v1064 = vld [vmem:[#allocation1] sm:$0xff]
    %1066 = vrot.lane.b32.xlu0 %v1064, 112
    %v1067 = vpop.permute.xlu0 %1066
    %1068 = vst [vmem:[#allocation1] ss:$9 sm:$0xff] %v350
    %v1069 = vld [vmem:[#allocation1] sm:$0xff]
    %1071 = vrot.lane.b32.xlu0 %v1069, 112
    %v1072 = vpop.permute.xlu0 %1071
    %v1074 = vsel %vm387, %v1067, 0
    %v1077 = vsel %vm387, %v1072, 0
    %1079 = vmatpush.bf16.xpose.msra.mxu0 0
    %1080 = vmatpush.bf16.xpose.msra.mxu0 0
    %1081 = vmatpush.bf16.xpose.msra.mxu0 0
    %1082 = vmatpush.bf16.xpose.msra.mxu0 0
    %1083 = vmatpush.bf16.xpose.msra.mxu0 0
    %1084 = vmatpush.bf16.xpose.msra.mxu0 0
    %1085 = vmatpush.bf16.xpose.msra.mxu0 0
    %1086 = vmatpush.bf16.xpose.msra.mxu0 %v1077
    %1087 = vmatmul.bf16.gmra.mxu0 %v1074
    %v1088 = vpop.f32.mrf.mxu0
    %v1089 = vadd.f32 0.0, %v1088
    %v1090 = vpop.f32.mrf.mxu0
    %1091 = vdwg.mxu0
    %1092 = vst [vmem:[#allocation1] ss:$9 sm:$0xff] %v323
    %v1093 = vld [vmem:[#allocation1] sm:$0xff]
    %1095 = vrot.lane.b32.xlu0 %v1093, 112
    %v1096 = vpop.permute.xlu0 %1095
    %1097 = vst [vmem:[#allocation1] ss:$9 sm:$0xff] %v353
    %v1098 = vld [vmem:[#allocation1] sm:$0xff]
    %1100 = vrot.lane.b32.xlu0 %v1098, 112
    %v1101 = vpop.permute.xlu0 %1100
    %v1103 = vsel %vm387, %v1096, 0
    %v1106 = vsel %vm387, %v1101, 0
    %1108 = vmatpush.bf16.xpose.msra.mxu0 0
    %1109 = vmatpush.bf16.xpose.msra.mxu0 0
    %1110 = vmatpush.bf16.xpose.msra.mxu0 0
    %1111 = vmatpush.bf16.xpose.msra.mxu0 0
    %1112 = vmatpush.bf16.xpose.msra.mxu0 0
    %1113 = vmatpush.bf16.xpose.msra.mxu0 0
    %1114 = vmatpush.bf16.xpose.msra.mxu0 0
    %1115 = vmatpush.bf16.xpose.msra.mxu0 %v1106
    %1116 = vmatmul.bf16.gmra.mxu0 %v1103
    %v1117 = vpop.f32.mrf.mxu0
    %v1118 = vadd.f32 0.0, %v1117
    %v1119 = vpop.f32.mrf.mxu0
    %1120 = vdwg.mxu0
    %1121 = vst [vmem:[#allocation1] ss:$9 sm:$0xff] %v326
    %v1122 = vld [vmem:[#allocation1] sm:$0xff]
    %1124 = vrot.lane.b32.xlu0 %v1122, 112
    %v1125 = vpop.permute.xlu0 %1124
    %1126 = vst [vmem:[#allocation1] ss:$9 sm:$0xff] %v356
    %v1127 = vld [vmem:[#allocation1] sm:$0xff]
    %1129 = vrot.lane.b32.xlu0 %v1127, 112
    %v1130 = vpop.permute.xlu0 %1129
    %v1132 = vsel %vm387, %v1125, 0
    %v1135 = vsel %vm387, %v1130, 0
    %1137 = vmatpush.bf16.xpose.msra.mxu0 0
    %1138 = vmatpush.bf16.xpose.msra.mxu0 0
    %1139 = vmatpush.bf16.xpose.msra.mxu0 0
    %1140 = vmatpush.bf16.xpose.msra.mxu0 0
    %1141 = vmatpush.bf16.xpose.msra.mxu0 0
    %1142 = vmatpush.bf16.xpose.msra.mxu0 0
    %1143 = vmatpush.bf16.xpose.msra.mxu0 0
    %1144 = vmatpush.bf16.xpose.msra.mxu0 %v1135
    %1145 = vmatmul.bf16.gmra.mxu0 %v1132
    %v1146 = vpop.f32.mrf.mxu0
    %v1147 = vadd.f32 0.0, %v1146
    %v1148 = vpop.f32.mrf.mxu0
    %1149 = vdwg.mxu0
    %v1150 = vsel %vm536, %v944, -inf
    %1151 = vmax.xlane.f32.xlu0 %v1150
    %v1152 = vpop.xlane.xlu0 %1151
    %v1153 = vsel %vm536, %v973, -inf
    %1154 = vmax.xlane.f32.xlu0 %v1153
    %v1155 = vpop.xlane.xlu0 %1154
    %v1156 = vsel %vm536, %v1002, -inf
    %1157 = vmax.xlane.f32.xlu0 %v1156
    %v1158 = vpop.xlane.xlu0 %1157
    %v1159 = vsel %vm536, %v1031, -inf
    %1160 = vmax.xlane.f32.xlu0 %v1159
    %v1161 = vpop.xlane.xlu0 %1160
    %v1162 = vsel %vm536, %v1060, -inf
    %1163 = vmax.xlane.f32.xlu0 %v1162
    %v1164 = vpop.xlane.xlu0 %1163
    %v1165 = vsel %vm536, %v1089, -inf
    %1166 = vmax.xlane.f32.xlu0 %v1165
    %v1167 = vpop.xlane.xlu0 %1166
    %v1168 = vsel %vm536, %v1118, -inf
    %1169 = vmax.xlane.f32.xlu0 %v1168
    %v1170 = vpop.xlane.xlu0 %1169
    %v1171 = vsel %vm536, %v1147, -inf
    %1172 = vmax.xlane.f32.xlu0 %v1171
    %v1173 = vpop.xlane.xlu0 %1172
    %v1174 = vsub.f32 %v944, %v1152
    %v1175 = vsub.f32 %v973, %v1155
    %v1176 = vsub.f32 %v1002, %v1158
    %v1177 = vsub.f32 %v1031, %v1161
    %v1178 = vsub.f32 %v1060, %v1164
    %v1179 = vsub.f32 %v1089, %v1167
    %v1180 = vsub.f32 %v1118, %v1170
    %v1181 = vsub.f32 %v1147, %v1173
    %v1182 = vmul.f32 %v1174, 1.442695
    %v1183 = vpow.pop %v1182
    %v1184 = vmul.f32 %v1175, 1.442695
    %v1185 = vpow.pop %v1184
    %v1186 = vmul.f32 %v1176, 1.442695
    %v1187 = vpow.pop %v1186
    %v1188 = vmul.f32 %v1177, 1.442695
    %v1189 = vpow.pop %v1188
    %v1190 = vmul.f32 %v1178, 1.442695
    %v1191 = vpow.pop %v1190
    %v1192 = vmul.f32 %v1179, 1.442695
    %v1193 = vpow.pop %v1192
    %v1194 = vmul.f32 %v1180, 1.442695
    %v1195 = vpow.pop %v1194
    %v1196 = vmul.f32 %v1181, 1.442695
    %v1197 = vpow.pop %v1196
    %v1198 = vsel %vm536, %v1183, 0.0
    %1199 = vadd.xlane.f32.xlu0 %v1198
    %v1200 = vpop.xlane.xlu0 %1199
    %v1201 = vsel %vm536, %v1185, 0.0
    %1202 = vadd.xlane.f32.xlu0 %v1201
    %v1203 = vpop.xlane.xlu0 %1202
    %v1204 = vsel %vm536, %v1187, 0.0
    %1205 = vadd.xlane.f32.xlu0 %v1204
    %v1206 = vpop.xlane.xlu0 %1205
    %v1207 = vsel %vm536, %v1189, 0.0
    %1208 = vadd.xlane.f32.xlu0 %v1207
    %v1209 = vpop.xlane.xlu0 %1208
    %v1210 = vsel %vm536, %v1191, 0.0
    %1211 = vadd.xlane.f32.xlu0 %v1210
    %v1212 = vpop.xlane.xlu0 %1211
    %v1213 = vsel %vm536, %v1193, 0.0
    %1214 = vadd.xlane.f32.xlu0 %v1213
    %v1215 = vpop.xlane.xlu0 %1214
    %v1216 = vsel %vm536, %v1195, 0.0
    %1217 = vadd.xlane.f32.xlu0 %v1216
    %v1218 = vpop.xlane.xlu0 %1217
    %v1219 = vsel %vm536, %v1197, 0.0
    %1220 = vadd.xlane.f32.xlu0 %v1219
    %v1221 = vpop.xlane.xlu0 %1220
    %v1222 = vrcp.pop %v1200
    %v1223 = vmul.f32 %v1200, %v1222
    %v1224 = vsub.f32 1.0, %v1223
    %v1225 = vmul.f32 %v1222, %v1224
    %v1226 = vadd.f32 %v1222, %v1225
    %vm1227 = vweird.f32 %v1200
    %vm1228 = vweird.f32 %v1222
    %vm1229 = vmor %vm1227, %vm1228
    %v1230 = vsel %vm1229, %v1222, %v1226
    %v1231 = vand.u32 2147483647, %v1200
    %vm1232 = vcmp.eq.f32.partialorder %v1231, 8.507059e+37
    %v1233 = vand.u32 %v1200, 2147483648
    %v1234 = vor.u32 1.1754944e-38, %v1233
    %v1235 = vsel %vm1232, %v1234, %v1230
    %v1236 = vmul.f32 %v1183, %v1235
    %v1237 = vrcp.pop %v1203
    %v1238 = vmul.f32 %v1203, %v1237
    %v1239 = vsub.f32 1.0, %v1238
    %v1240 = vmul.f32 %v1237, %v1239
    %v1241 = vadd.f32 %v1237, %v1240
    %vm1242 = vweird.f32 %v1203
    %vm1243 = vweird.f32 %v1237
    %vm1244 = vmor %vm1242, %vm1243
    %v1245 = vsel %vm1244, %v1237, %v1241
    %v1246 = vand.u32 2147483647, %v1203
    %vm1247 = vcmp.eq.f32.partialorder %v1246, 8.507059e+37
    %v1248 = vand.u32 %v1203, 2147483648
    %v1249 = vor.u32 1.1754944e-38, %v1248
    %v1250 = vsel %vm1247, %v1249, %v1245
    %v1251 = vmul.f32 %v1185, %v1250
    %v1252 = vrcp.pop %v1206
    %v1253 = vmul.f32 %v1206, %v1252
    %v1254 = vsub.f32 1.0, %v1253
    %v1255 = vmul.f32 %v1252, %v1254
    %v1256 = vadd.f32 %v1252, %v1255
    %vm1257 = vweird.f32 %v1206
    %vm1258 = vweird.f32 %v1252
    %vm1259 = vmor %vm1257, %vm1258
    %v1260 = vsel %vm1259, %v1252, %v1256
    %v1261 = vand.u32 2147483647, %v1206
    %vm1262 = vcmp.eq.f32.partialorder %v1261, 8.507059e+37
    %v1263 = vand.u32 %v1206, 2147483648
    %v1264 = vor.u32 1.1754944e-38, %v1263
    %v1265 = vsel %vm1262, %v1264, %v1260
    %v1266 = vmul.f32 %v1187, %v1265
    %v1267 = vrcp.pop %v1209
    %v1268 = vmul.f32 %v1209, %v1267
    %v1269 = vsub.f32 1.0, %v1268
    %v1270 = vmul.f32 %v1267, %v1269
    %v1271 = vadd.f32 %v1267, %v1270
    %vm1272 = vweird.f32 %v1209
    %vm1273 = vweird.f32 %v1267
    %vm1274 = vmor %vm1272, %vm1273
    %v1275 = vsel %vm1274, %v1267, %v1271
    %v1276 = vand.u32 2147483647, %v1209
    %vm1277 = vcmp.eq.f32.partialorder %v1276, 8.507059e+37
    %v1278 = vand.u32 %v1209, 2147483648
    %v1279 = vor.u32 1.1754944e-38, %v1278
    %v1280 = vsel %vm1277, %v1279, %v1275
    %v1281 = vmul.f32 %v1189, %v1280
    %v1282 = vrcp.pop %v1212
    %v1283 = vmul.f32 %v1212, %v1282
    %v1284 = vsub.f32 1.0, %v1283
    %v1285 = vmul.f32 %v1282, %v1284
    %v1286 = vadd.f32 %v1282, %v1285
    %vm1287 = vweird.f32 %v1212
    %vm1288 = vweird.f32 %v1282
    %vm1289 = vmor %vm1287, %vm1288
    %v1290 = vsel %vm1289, %v1282, %v1286
    %v1291 = vand.u32 2147483647, %v1212
    %vm1292 = vcmp.eq.f32.partialorder %v1291, 8.507059e+37
    %v1293 = vand.u32 %v1212, 2147483648
    %v1294 = vor.u32 1.1754944e-38, %v1293
    %v1295 = vsel %vm1292, %v1294, %v1290
    %v1296 = vmul.f32 %v1191, %v1295
    %v1297 = vrcp.pop %v1215
    %v1298 = vmul.f32 %v1215, %v1297
    %v1299 = vsub.f32 1.0, %v1298
    %v1300 = vmul.f32 %v1297, %v1299
    %v1301 = vadd.f32 %v1297, %v1300
    %vm1302 = vweird.f32 %v1215
    %vm1303 = vweird.f32 %v1297
    %vm1304 = vmor %vm1302, %vm1303
    %v1305 = vsel %vm1304, %v1297, %v1301
    %v1306 = vand.u32 2147483647, %v1215
    %vm1307 = vcmp.eq.f32.partialorder %v1306, 8.507059e+37
    %v1308 = vand.u32 %v1215, 2147483648
    %v1309 = vor.u32 1.1754944e-38, %v1308
    %v1310 = vsel %vm1307, %v1309, %v1305
    %v1311 = vmul.f32 %v1193, %v1310
    %v1312 = vrcp.pop %v1218
    %v1313 = vmul.f32 %v1218, %v1312
    %v1314 = vsub.f32 1.0, %v1313
    %v1315 = vmul.f32 %v1312, %v1314
    %v1316 = vadd.f32 %v1312, %v1315
    %vm1317 = vweird.f32 %v1218
    %vm1318 = vweird.f32 %v1312
    %vm1319 = vmor %vm1317, %vm1318
    %v1320 = vsel %vm1319, %v1312, %v1316
    %v1321 = vand.u32 2147483647, %v1218
    %vm1322 = vcmp.eq.f32.partialorder %v1321, 8.507059e+37
    %v1323 = vand.u32 %v1218, 2147483648
    %v1324 = vor.u32 1.1754944e-38, %v1323
    %v1325 = vsel %vm1322, %v1324, %v1320
    %v1326 = vmul.f32 %v1195, %v1325
    %v1327 = vrcp.pop %v1221
    %v1328 = vmul.f32 %v1221, %v1327
    %v1329 = vsub.f32 1.0, %v1328
    %v1330 = vmul.f32 %v1327, %v1329
    %v1331 = vadd.f32 %v1327, %v1330
    %vm1332 = vweird.f32 %v1221
    %vm1333 = vweird.f32 %v1327
    %vm1334 = vmor %vm1332, %vm1333
    %v1335 = vsel %vm1334, %v1327, %v1331
    %v1336 = vand.u32 2147483647, %v1221
    %vm1337 = vcmp.eq.f32.partialorder %v1336, 8.507059e+37
    %v1338 = vand.u32 %v1221, 2147483648
    %v1339 = vor.u32 1.1754944e-38, %v1338
    %v1340 = vsel %vm1337, %v1339, %v1335
    %v1341 = vmul.f32 %v1197, %v1340
    %v1342 = vpack.c.bf16 %v1236, %v1236
    %v1343 = vpack.c.bf16 %v1251, %v1251
    %v1344 = vpack.c.bf16 %v1266, %v1266
    %v1345 = vpack.c.bf16 %v1281, %v1281
    %v1346 = vpack.c.bf16 %v1296, %v1296
    %v1347 = vpack.c.bf16 %v1311, %v1311
    %v1348 = vpack.c.bf16 %v1326, %v1326
    %v1349 = vpack.c.bf16 %v1341, %v1341
    %1350 = vst [vmem:[#allocation1] ss:$9 sm:$0xff] %v365
    %v1351 = vld [vmem:[#allocation1] sm:$0xff]
    %1353 = vrot.lane.b32.xlu0 %v1351, 112
    %v1354 = vpop.permute.xlu0 %1353
    %v1356 = vsel %vm737, %v1342, 0
    %v1359 = vsel %vm299, %v1354, 0
    %1361 = vmatpush.bf16.msra.mxu0 0
    %1362 = vmatpush.bf16.msra.mxu0 0
    %1363 = vmatpush.bf16.msra.mxu0 0
    %1364 = vmatpush.bf16.msra.mxu0 0
    %1365 = vmatpush.bf16.msra.mxu0 0
    %1366 = vmatpush.bf16.msra.mxu0 0
    %1367 = vmatpush.bf16.msra.mxu0 0
    %1368 = vmatpush.bf16.msra.mxu0 %v1359
    %1369 = vmatmul.bf16.gmra.mxu0 %v1356
    %v1370 = vpop.f32.mrf.mxu0
    %v1371 = vadd.f32 0.0, %v1370
    %v1372 = vpop.f32.mrf.mxu0
    %1373 = vdwg.mxu0
    %1374 = vst [vmem:[#allocation1] ss:$9 sm:$0xff] %v368
    %v1375 = vld [vmem:[#allocation1] sm:$0xff]
    %1377 = vrot.lane.b32.xlu0 %v1375, 112
    %v1378 = vpop.permute.xlu0 %1377
    %v1380 = vsel %vm737, %v1343, 0
    %v1383 = vsel %vm299, %v1378, 0
    %1385 = vmatpush.bf16.msra.mxu0 0
    %1386 = vmatpush.bf16.msra.mxu0 0
    %1387 = vmatpush.bf16.msra.mxu0 0
    %1388 = vmatpush.bf16.msra.mxu0 0
    %1389 = vmatpush.bf16.msra.mxu0 0
    %1390 = vmatpush.bf16.msra.mxu0 0
    %1391 = vmatpush.bf16.msra.mxu0 0
    %1392 = vmatpush.bf16.msra.mxu0 %v1383
    %1393 = vmatmul.bf16.gmra.mxu0 %v1380
    %v1394 = vpop.f32.mrf.mxu0
    %v1395 = vadd.f32 0.0, %v1394
    %v1396 = vpop.f32.mrf.mxu0
    %1397 = vdwg.mxu0
    %1398 = vst [vmem:[#allocation1] ss:$9 sm:$0xff] %v371
    %v1399 = vld [vmem:[#allocation1] sm:$0xff]
    %1401 = vrot.lane.b32.xlu0 %v1399, 112
    %v1402 = vpop.permute.xlu0 %1401
    %v1404 = vsel %vm737, %v1344, 0
    %v1407 = vsel %vm299, %v1402, 0
    %1409 = vmatpush.bf16.msra.mxu0 0
    %1410 = vmatpush.bf16.msra.mxu0 0
    %1411 = vmatpush.bf16.msra.mxu0 0
    %1412 = vmatpush.bf16.msra.mxu0 0
    %1413 = vmatpush.bf16.msra.mxu0 0
    %1414 = vmatpush.bf16.msra.mxu0 0
    %1415 = vmatpush.bf16.msra.mxu0 0
    %1416 = vmatpush.bf16.msra.mxu0 %v1407
    %1417 = vmatmul.bf16.gmra.mxu0 %v1404
    %v1418 = vpop.f32.mrf.mxu0
    %v1419 = vadd.f32 0.0, %v1418
    %v1420 = vpop.f32.mrf.mxu0
    %1421 = vdwg.mxu0
    %1422 = vst [vmem:[#allocation1] ss:$9 sm:$0xff] %v374
    %v1423 = vld [vmem:[#allocation1] sm:$0xff]
    %1425 = vrot.lane.b32.xlu0 %v1423, 112
    %v1426 = vpop.permute.xlu0 %1425
    %v1428 = vsel %vm737, %v1345, 0
    %v1431 = vsel %vm299, %v1426, 0
    %1433 = vmatpush.bf16.msra.mxu0 0
    %1434 = vmatpush.bf16.msra.mxu0 0
    %1435 = vmatpush.bf16.msra.mxu0 0
    %1436 = vmatpush.bf16.msra.mxu0 0
    %1437 = vmatpush.bf16.msra.mxu0 0
    %1438 = vmatpush.bf16.msra.mxu0 0
    %1439 = vmatpush.bf16.msra.mxu0 0
    %1440 = vmatpush.bf16.msra.mxu0 %v1431
    %1441 = vmatmul.bf16.gmra.mxu0 %v1428
    %v1442 = vpop.f32.mrf.mxu0
    %v1443 = vadd.f32 0.0, %v1442
    %v1444 = vpop.f32.mrf.mxu0
    %1445 = vdwg.mxu0
    %1446 = vst [vmem:[#allocation1] ss:$9 sm:$0xff] %v377
    %v1447 = vld [vmem:[#allocation1] sm:$0xff]
    %1449 = vrot.lane.b32.xlu0 %v1447, 112
    %v1450 = vpop.permute.xlu0 %1449
    %v1452 = vsel %vm737, %v1346, 0
    %v1455 = vsel %vm299, %v1450, 0
    %1457 = vmatpush.bf16.msra.mxu0 0
    %1458 = vmatpush.bf16.msra.mxu0 0
    %1459 = vmatpush.bf16.msra.mxu0 0
    %1460 = vmatpush.bf16.msra.mxu0 0
    %1461 = vmatpush.bf16.msra.mxu0 0
    %1462 = vmatpush.bf16.msra.mxu0 0
    %1463 = vmatpush.bf16.msra.mxu0 0
    %1464 = vmatpush.bf16.msra.mxu0 %v1455
    %1465 = vmatmul.bf16.gmra.mxu0 %v1452
    %v1466 = vpop.f32.mrf.mxu0
    %v1467 = vadd.f32 0.0, %v1466
    %v1468 = vpop.f32.mrf.mxu0
    %1469 = vdwg.mxu0
    %1470 = vst [vmem:[#allocation1] ss:$9 sm:$0xff] %v380
    %v1471 = vld [vmem:[#allocation1] sm:$0xff]
    %1473 = vrot.lane.b32.xlu0 %v1471, 112
    %v1474 = vpop.permute.xlu0 %1473
    %v1476 = vsel %vm737, %v1347, 0
    %v1479 = vsel %vm299, %v1474, 0
    %1481 = vmatpush.bf16.msra.mxu0 0
    %1482 = vmatpush.bf16.msra.mxu0 0
    %1483 = vmatpush.bf16.msra.mxu0 0
    %1484 = vmatpush.bf16.msra.mxu0 0
    %1485 = vmatpush.bf16.msra.mxu0 0
    %1486 = vmatpush.bf16.msra.mxu0 0
    %1487 = vmatpush.bf16.msra.mxu0 0
    %1488 = vmatpush.bf16.msra.mxu0 %v1479
    %1489 = vmatmul.bf16.gmra.mxu0 %v1476
    %v1490 = vpop.f32.mrf.mxu0
    %v1491 = vadd.f32 0.0, %v1490
    %v1492 = vpop.f32.mrf.mxu0
    %1493 = vdwg.mxu0
    %1494 = vst [vmem:[#allocation1] ss:$9 sm:$0xff] %v383
    %v1495 = vld [vmem:[#allocation1] sm:$0xff]
    %1497 = vrot.lane.b32.xlu0 %v1495, 112
    %v1498 = vpop.permute.xlu0 %1497
    %v1500 = vsel %vm737, %v1348, 0
    %v1503 = vsel %vm299, %v1498, 0
    %1505 = vmatpush.bf16.msra.mxu0 0
    %1506 = vmatpush.bf16.msra.mxu0 0
    %1507 = vmatpush.bf16.msra.mxu0 0
    %1508 = vmatpush.bf16.msra.mxu0 0
    %1509 = vmatpush.bf16.msra.mxu0 0
    %1510 = vmatpush.bf16.msra.mxu0 0
    %1511 = vmatpush.bf16.msra.mxu0 0
    %1512 = vmatpush.bf16.msra.mxu0 %v1503
    %1513 = vmatmul.bf16.gmra.mxu0 %v1500
    %v1514 = vpop.f32.mrf.mxu0
    %v1515 = vadd.f32 0.0, %v1514
    %v1516 = vpop.f32.mrf.mxu0
    %1517 = vdwg.mxu0
    %1518 = vst [vmem:[#allocation1] ss:$9 sm:$0xff] %v386
    %v1519 = vld [vmem:[#allocation1] sm:$0xff]
    %1521 = vrot.lane.b32.xlu0 %v1519, 112
    %v1522 = vpop.permute.xlu0 %1521
    %v1524 = vsel %vm737, %v1349, 0
    %v1527 = vsel %vm299, %v1522, 0
    %1529 = vmatpush.bf16.msra.mxu0 0
    %1530 = vmatpush.bf16.msra.mxu0 0
    %1531 = vmatpush.bf16.msra.mxu0 0
    %1532 = vmatpush.bf16.msra.mxu0 0
    %1533 = vmatpush.bf16.msra.mxu0 0
    %1534 = vmatpush.bf16.msra.mxu0 0
    %1535 = vmatpush.bf16.msra.mxu0 0
    %1536 = vmatpush.bf16.msra.mxu0 %v1527
    %1537 = vmatmul.bf16.gmra.mxu0 %v1524
    %v1538 = vpop.f32.mrf.mxu0
    %v1539 = vadd.f32 0.0, %v1538
    %v1540 = vpop.f32.mrf.mxu0
    %1541 = vdwg.mxu0
    %v1542 = vld [vmem:[%s3 + $0x8] sm:$0xf]
    %v1543 = vld [vmem:[%s3 + $0xc] sm:$0xf]
    %1552 = vst [vmem:[#allocation1] ss:$4 sm:$0xff] %v1371
    %s1553 = scalar_lea.vmem [#allocation1], 1
    %1554 = vst [vmem:[%s1553] ss:$4 sm:$0xff] %v1395
    %s1555 = scalar_lea.vmem [#allocation1], 2
    %1556 = vst [vmem:[%s1555] ss:$4 sm:$0xff] %v1419
    %s1557 = scalar_lea.vmem [#allocation1], 3
    %1558 = vst [vmem:[%s1557] ss:$4 sm:$0xff] %v1443
    %s1559 = scalar_lea.vmem [#allocation1], 32
    %1560 = vst [vmem:[%s1559] ss:$4 sm:$0xff] %v1467
    %s1561 = scalar_lea.vmem [#allocation1], 33
    %1562 = vst [vmem:[%s1561] ss:$4 sm:$0xff] %v1491
    %s1563 = scalar_lea.vmem [#allocation1], 34
    %1564 = vst [vmem:[%s1563] ss:$4 sm:$0xff] %v1515
    %s1565 = scalar_lea.vmem [#allocation1], 35
    %1566 = vst [vmem:[%s1565] ss:$4 sm:$0xff] %v1539
    %v1567 = vld.sshfl [vmem:[#allocation1] sm:$0xff pattern:$0x73625140]
    %v1568 = vld.sshfl [vmem:[#allocation1 + $0x20] sm:$0xff pattern:$0x73625140]
    %v1571 = vpack.c.bf16 %v1568, %v1567
    %v1574 = vunpack.c.l.b16 %v1542
    %v1575 = vunpack.c.l.b16 %v1543
    %v1576 = vpack.c.b16 %v1575, %v1574
    %v1579 = vsel %vm387, %v1571, 0
    %1581 = vmatpush.bf16.msra.mxu0 0
    %1582 = vmatpush.bf16.msra.mxu0 0
    %1583 = vmatpush.bf16.msra.mxu0 0
    %1584 = vmatpush.bf16.msra.mxu0 0
    %1585 = vmatpush.bf16.msra.mxu0 0
    %1586 = vmatpush.bf16.msra.mxu0 0
    %1587 = vmatpush.bf16.msra.mxu0 0
    %1588 = vmatpush.bf16.msra.mxu0 %v1576
    %1589 = vmatmul.bf16.gmra.mxu0 %v1579
    %v1590 = vpop.f32.mrf.mxu0
    %v1591 = vadd.f32 0.0, %v1590
    %v1592 = vpop.f32.mrf.mxu0
    %v1593 = vadd.f32 0.0, %v1592
    %1594 = vdwg.mxu0
    %v1597 = vunpack.c.l.b16 %v888
    %v1598 = vunpack.c.l.b16 %v889
    %v1599 = vpack.c.b16 %v1598, %v1597
    %v1602 = vsel %vm387, %v917, 0
    %1604 = vmatpush.bf16.msra.mxu0 0
    %1605 = vmatpush.bf16.msra.mxu0 0
    %1606 = vmatpush.bf16.msra.mxu0 0
    %1607 = vmatpush.bf16.msra.mxu0 0
    %1608 = vmatpush.bf16.msra.mxu0 0
    %1609 = vmatpush.bf16.msra.mxu0 0
    %1610 = vmatpush.bf16.msra.mxu0 0
    %1611 = vmatpush.bf16.msra.mxu0 %v1599
    %1612 = vmatmul.bf16.gmra.mxu0 %v1602
    %v1613 = vpop.f32.mrf.mxu0
    %v1614 = vadd.f32 %v1591, %v1613
    %v1615 = vpop.f32.mrf.mxu0
    %v1616 = vadd.f32 %v1593, %v1615
    %1617 = vdwg.mxu0
    %1618 = vst [vmem:[#allocation1] ss:$9 sm:$0xff] %v302
    %v1619 = vld [vmem:[#allocation1] sm:$0xff]
    %1621 = vrot.lane.b32.xlu0 %v1619, 96
    %v1622 = vpop.permute.xlu0 %1621
    %1623 = vst [vmem:[#allocation1] ss:$9 sm:$0xff] %v335
    %v1624 = vld [vmem:[#allocation1] sm:$0xff]
    %1626 = vrot.lane.b32.xlu0 %v1624, 96
    %v1627 = vpop.permute.xlu0 %1626
    %v1629 = vsel %vm387, %v1622, 0
    %v1632 = vsel %vm387, %v1627, 0
    %1634 = vmatpush.bf16.xpose.msra.mxu0 0
    %1635 = vmatpush.bf16.xpose.msra.mxu0 0
    %1636 = vmatpush.bf16.xpose.msra.mxu0 0
    %1637 = vmatpush.bf16.xpose.msra.mxu0 0
    %1638 = vmatpush.bf16.xpose.msra.mxu0 0
    %1639 = vmatpush.bf16.xpose.msra.mxu0 0
    %1640 = vmatpush.bf16.xpose.msra.mxu0 0
    %1641 = vmatpush.bf16.xpose.msra.mxu0 %v1632
    %1642 = vmatmul.bf16.gmra.mxu0 %v1629
    %v1643 = vpop.f32.mrf.mxu0
    %v1644 = vadd.f32 0.0, %v1643
    %v1645 = vpop.f32.mrf.mxu0
    %1646 = vdwg.mxu0
    %1647 = vst [vmem:[#allocation1] ss:$9 sm:$0xff] %v306
    %v1648 = vld [vmem:[#allocation1] sm:$0xff]
    %1650 = vrot.lane.b32.xlu0 %v1648, 96
    %v1651 = vpop.permute.xlu0 %1650
    %1652 = vst [vmem:[#allocation1] ss:$9 sm:$0xff] %v338
    %v1653 = vld [vmem:[#allocation1] sm:$0xff]
    %1655 = vrot.lane.b32.xlu0 %v1653, 96
    %v1656 = vpop.permute.xlu0 %1655
    %v1658 = vsel %vm387, %v1651, 0
    %v1661 = vsel %vm387, %v1656, 0
    %1663 = vmatpush.bf16.xpose.msra.mxu0 0
    %1664 = vmatpush.bf16.xpose.msra.mxu0 0
    %1665 = vmatpush.bf16.xpose.msra.mxu0 0
    %1666 = vmatpush.bf16.xpose.msra.mxu0 0
    %1667 = vmatpush.bf16.xpose.msra.mxu0 0
    %1668 = vmatpush.bf16.xpose.msra.mxu0 0
    %1669 = vmatpush.bf16.xpose.msra.mxu0 0
    %1670 = vmatpush.bf16.xpose.msra.mxu0 %v1661
    %1671 = vmatmul.bf16.gmra.mxu0 %v1658
    %v1672 = vpop.f32.mrf.mxu0
    %v1673 = vadd.f32 0.0, %v1672
    %v1674 = vpop.f32.mrf.mxu0
    %1675 = vdwg.mxu0
    %1676 = vst [vmem:[#allocation1] ss:$9 sm:$0xff] %v310
    %v1677 = vld [vmem:[#allocation1] sm:$0xff]
    %1679 = vrot.lane.b32.xlu0 %v1677, 96
    %v1680 = vpop.permute.xlu0 %1679
    %1681 = vst [vmem:[#allocation1] ss:$9 sm:$0xff] %v341
    %v1682 = vld [vmem:[#allocation1] sm:$0xff]
    %1684 = vrot.lane.b32.xlu0 %v1682, 96
    %v1685 = vpop.permute.xlu0 %1684
    %v1687 = vsel %vm387, %v1680, 0
    %v1690 = vsel %vm387, %v1685, 0
    %1692 = vmatpush.bf16.xpose.msra.mxu0 0
    %1693 = vmatpush.bf16.xpose.msra.mxu0 0
    %1694 = vmatpush.bf16.xpose.msra.mxu0 0
    %1695 = vmatpush.bf16.xpose.msra.mxu0 0
    %1696 = vmatpush.bf16.xpose.msra.mxu0 0
    %1697 = vmatpush.bf16.xpose.msra.mxu0 0
    %1698 = vmatpush.bf16.xpose.msra.mxu0 0
    %1699 = vmatpush.bf16.xpose.msra.mxu0 %v1690
    %1700 = vmatmul.bf16.gmra.mxu0 %v1687
    %v1701 = vpop.f32.mrf.mxu0
    %v1702 = vadd.f32 0.0, %v1701
    %v1703 = vpop.f32.mrf.mxu0
    %1704 = vdwg.mxu0
    %1705 = vst [vmem:[#allocation1] ss:$9 sm:$0xff] %v314
    %v1706 = vld [vmem:[#allocation1] sm:$0xff]
    %1708 = vrot.lane.b32.xlu0 %v1706, 96
    %v1709 = vpop.permute.xlu0 %1708
    %1710 = vst [vmem:[#allocation1] ss:$9 sm:$0xff] %v344
    %v1711 = vld [vmem:[#allocation1] sm:$0xff]
    %1713 = vrot.lane.b32.xlu0 %v1711, 96
    %v1714 = vpop.permute.xlu0 %1713
    %v1716 = vsel %vm387, %v1709, 0
    %v1719 = vsel %vm387, %v1714, 0
    %1721 = vmatpush.bf16.xpose.msra.mxu0 0
    %1722 = vmatpush.bf16.xpose.msra.mxu0 0
    %1723 = vmatpush.bf16.xpose.msra.mxu0 0
    %1724 = vmatpush.bf16.xpose.msra.mxu0 0
    %1725 = vmatpush.bf16.xpose.msra.mxu0 0
    %1726 = vmatpush.bf16.xpose.msra.mxu0 0
    %1727 = vmatpush.bf16.xpose.msra.mxu0 0
    %1728 = vmatpush.bf16.xpose.msra.mxu0 %v1719
    %1729 = vmatmul.bf16.gmra.mxu0 %v1716
    %v1730 = vpop.f32.mrf.mxu0
    %v1731 = vadd.f32 0.0, %v1730
    %v1732 = vpop.f32.mrf.mxu0
    %1733 = vdwg.mxu0
    %1734 = vst [vmem:[#allocation1] ss:$9 sm:$0xff] %v317
    %v1735 = vld [vmem:[#allocation1] sm:$0xff]
    %1737 = vrot.lane.b32.xlu0 %v1735, 96
    %v1738 = vpop.permute.xlu0 %1737
    %1739 = vst [vmem:[#allocation1] ss:$9 sm:$0xff] %v347
    %v1740 = vld [vmem:[#allocation1] sm:$0xff]
    %1742 = vrot.lane.b32.xlu0 %v1740, 96
    %v1743 = vpop.permute.xlu0 %1742
    %v1745 = vsel %vm387, %v1738, 0
    %v1748 = vsel %vm387, %v1743, 0
    %1750 = vmatpush.bf16.xpose.msra.mxu0 0
    %1751 = vmatpush.bf16.xpose.msra.mxu0 0
    %1752 = vmatpush.bf16.xpose.msra.mxu0 0
    %1753 = vmatpush.bf16.xpose.msra.mxu0 0
    %1754 = vmatpush.bf16.xpose.msra.mxu0 0
    %1755 = vmatpush.bf16.xpose.msra.mxu0 0
    %1756 = vmatpush.bf16.xpose.msra.mxu0 0
    %1757 = vmatpush.bf16.xpose.msra.mxu0 %v1748
    %1758 = vmatmul.bf16.gmra.mxu0 %v1745
    %v1759 = vpop.f32.mrf.mxu0
    %v1760 = vadd.f32 0.0, %v1759
    %v1761 = vpop.f32.mrf.mxu0
    %1762 = vdwg.mxu0
    %1763 = vst [vmem:[#allocation1] ss:$9 sm:$0xff] %v320
    %v1764 = vld [vmem:[#allocation1] sm:$0xff]
    %1766 = vrot.lane.b32.xlu0 %v1764, 96
    %v1767 = vpop.permute.xlu0 %1766
    %1768 = vst [vmem:[#allocation1] ss:$9 sm:$0xff] %v350
    %v1769 = vld [vmem:[#allocation1] sm:$0xff]
    %1771 = vrot.lane.b32.xlu0 %v1769, 96
    %v1772 = vpop.permute.xlu0 %1771
    %v1774 = vsel %vm387, %v1767, 0
    %v1777 = vsel %vm387, %v1772, 0
    %1779 = vmatpush.bf16.xpose.msra.mxu0 0
    %1780 = vmatpush.bf16.xpose.msra.mxu0 0
    %1781 = vmatpush.bf16.xpose.msra.mxu0 0
    %1782 = vmatpush.bf16.xpose.msra.mxu0 0
    %1783 = vmatpush.bf16.xpose.msra.mxu0 0
    %1784 = vmatpush.bf16.xpose.msra.mxu0 0
    %1785 = vmatpush.bf16.xpose.msra.mxu0 0
    %1786 = vmatpush.bf16.xpose.msra.mxu0 %v1777
    %1787 = vmatmul.bf16.gmra.mxu0 %v1774
    %v1788 = vpop.f32.mrf.mxu0
    %v1789 = vadd.f32 0.0, %v1788
    %v1790 = vpop.f32.mrf.mxu0
    %1791 = vdwg.mxu0
    %1792 = vst [vmem:[#allocation1] ss:$9 sm:$0xff] %v323
    %v1793 = vld [vmem:[#allocation1] sm:$0xff]
    %1795 = vrot.lane.b32.xlu0 %v1793, 96
    %v1796 = vpop.permute.xlu0 %1795
    %1797 = vst [vmem:[#allocation1] ss:$9 sm:$0xff] %v353
    %v1798 = vld [vmem:[#allocation1] sm:$0xff]
    %1800 = vrot.lane.b32.xlu0 %v1798, 96
    %v1801 = vpop.permute.xlu0 %1800
    %v1803 = vsel %vm387, %v1796, 0
    %v1806 = vsel %vm387, %v1801, 0
    %1808 = vmatpush.bf16.xpose.msra.mxu0 0
    %1809 = vmatpush.bf16.xpose.msra.mxu0 0
    %1810 = vmatpush.bf16.xpose.msra.mxu0 0
    %1811 = vmatpush.bf16.xpose.msra.mxu0 0
    %1812 = vmatpush.bf16.xpose.msra.mxu0 0
    %1813 = vmatpush.bf16.xpose.msra.mxu0 0
    %1814 = vmatpush.bf16.xpose.msra.mxu0 0
    %1815 = vmatpush.bf16.xpose.msra.mxu0 %v1806
    %1816 = vmatmul.bf16.gmra.mxu0 %v1803
    %v1817 = vpop.f32.mrf.mxu0
    %v1818 = vadd.f32 0.0, %v1817
    %v1819 = vpop.f32.mrf.mxu0
    %1820 = vdwg.mxu0
    %1821 = vst [vmem:[#allocation1] ss:$9 sm:$0xff] %v326
    %v1822 = vld [vmem:[#allocation1] sm:$0xff]
    %1824 = vrot.lane.b32.xlu0 %v1822, 96
    %v1825 = vpop.permute.xlu0 %1824
    %1826 = vst [vmem:[#allocation1] ss:$9 sm:$0xff] %v356
    %v1827 = vld [vmem:[#allocation1] sm:$0xff]
    %1829 = vrot.lane.b32.xlu0 %v1827, 96
    %v1830 = vpop.permute.xlu0 %1829
    %v1832 = vsel %vm387, %v1825, 0
    %v1835 = vsel %vm387, %v1830, 0
    %1837 = vmatpush.bf16.xpose.msra.mxu0 0
    %1838 = vmatpush.bf16.xpose.msra.mxu0 0
    %1839 = vmatpush.bf16.xpose.msra.mxu0 0
    %1840 = vmatpush.bf16.xpose.msra.mxu0 0
    %1841 = vmatpush.bf16.xpose.msra.mxu0 0
    %1842 = vmatpush.bf16.xpose.msra.mxu0 0
    %1843 = vmatpush.bf16.xpose.msra.mxu0 0
    %1844 = vmatpush.bf16.xpose.msra.mxu0 %v1835
    %1845 = vmatmul.bf16.gmra.mxu0 %v1832
    %v1846 = vpop.f32.mrf.mxu0
    %v1847 = vadd.f32 0.0, %v1846
    %v1848 = vpop.f32.mrf.mxu0
    %1849 = vdwg.mxu0
    %v1850 = vsel %vm536, %v1644, -inf
    %1851 = vmax.xlane.f32.xlu0 %v1850
    %v1852 = vpop.xlane.xlu0 %1851
    %v1853 = vsel %vm536, %v1673, -inf
    %1854 = vmax.xlane.f32.xlu0 %v1853
    %v1855 = vpop.xlane.xlu0 %1854
    %v1856 = vsel %vm536, %v1702, -inf
    %1857 = vmax.xlane.f32.xlu0 %v1856
    %v1858 = vpop.xlane.xlu0 %1857
    %v1859 = vsel %vm536, %v1731, -inf
    %1860 = vmax.xlane.f32.xlu0 %v1859
    %v1861 = vpop.xlane.xlu0 %1860
    %v1862 = vsel %vm536, %v1760, -inf
    %1863 = vmax.xlane.f32.xlu0 %v1862
    %v1864 = vpop.xlane.xlu0 %1863
    %v1865 = vsel %vm536, %v1789, -inf
    %1866 = vmax.xlane.f32.xlu0 %v1865
    %v1867 = vpop.xlane.xlu0 %1866
    %v1868 = vsel %vm536, %v1818, -inf
    %1869 = vmax.xlane.f32.xlu0 %v1868
    %v1870 = vpop.xlane.xlu0 %1869
    %v1871 = vsel %vm536, %v1847, -inf
    %1872 = vmax.xlane.f32.xlu0 %v1871
    %v1873 = vpop.xlane.xlu0 %1872
    %v1874 = vsub.f32 %v1644, %v1852
    %v1875 = vsub.f32 %v1673, %v1855
    %v1876 = vsub.f32 %v1702, %v1858
    %v1877 = vsub.f32 %v1731, %v1861
    %v1878 = vsub.f32 %v1760, %v1864
    %v1879 = vsub.f32 %v1789, %v1867
    %v1880 = vsub.f32 %v1818, %v1870
    %v1881 = vsub.f32 %v1847, %v1873
    %v1882 = vmul.f32 %v1874, 1.442695
    %v1883 = vpow.pop %v1882
    %v1884 = vmul.f32 %v1875, 1.442695
    %v1885 = vpow.pop %v1884
    %v1886 = vmul.f32 %v1876, 1.442695
    %v1887 = vpow.pop %v1886
    %v1888 = vmul.f32 %v1877, 1.442695
    %v1889 = vpow.pop %v1888
    %v1890 = vmul.f32 %v1878, 1.442695
    %v1891 = vpow.pop %v1890
    %v1892 = vmul.f32 %v1879, 1.442695
    %v1893 = vpow.pop %v1892
    %v1894 = vmul.f32 %v1880, 1.442695
    %v1895 = vpow.pop %v1894
    %v1896 = vmul.f32 %v1881, 1.442695
    %v1897 = vpow.pop %v1896
    %v1898 = vsel %vm536, %v1883, 0.0
    %1899 = vadd.xlane.f32.xlu0 %v1898
    %v1900 = vpop.xlane.xlu0 %1899
    %v1901 = vsel %vm536, %v1885, 0.0
    %1902 = vadd.xlane.f32.xlu0 %v1901
    %v1903 = vpop.xlane.xlu0 %1902
    %v1904 = vsel %vm536, %v1887, 0.0
    %1905 = vadd.xlane.f32.xlu0 %v1904
    %v1906 = vpop.xlane.xlu0 %1905
    %v1907 = vsel %vm536, %v1889, 0.0
    %1908 = vadd.xlane.f32.xlu0 %v1907
    %v1909 = vpop.xlane.xlu0 %1908
    %v1910 = vsel %vm536, %v1891, 0.0
    %1911 = vadd.xlane.f32.xlu0 %v1910
    %v1912 = vpop.xlane.xlu0 %1911
    %v1913 = vsel %vm536, %v1893, 0.0
    %1914 = vadd.xlane.f32.xlu0 %v1913
    %v1915 = vpop.xlane.xlu0 %1914
    %v1916 = vsel %vm536, %v1895, 0.0
    %1917 = vadd.xlane.f32.xlu0 %v1916
    %v1918 = vpop.xlane.xlu0 %1917
    %v1919 = vsel %vm536, %v1897, 0.0
    %1920 = vadd.xlane.f32.xlu0 %v1919
    %v1921 = vpop.xlane.xlu0 %1920
    %v1922 = vrcp.pop %v1900
    %v1923 = vmul.f32 %v1900, %v1922
    %v1924 = vsub.f32 1.0, %v1923
    %v1925 = vmul.f32 %v1922, %v1924
    %v1926 = vadd.f32 %v1922, %v1925
    %vm1927 = vweird.f32 %v1900
    %vm1928 = vweird.f32 %v1922
    %vm1929 = vmor %vm1927, %vm1928
    %v1930 = vsel %vm1929, %v1922, %v1926
    %v1931 = vand.u32 2147483647, %v1900
    %vm1932 = vcmp.eq.f32.partialorder %v1931, 8.507059e+37
    %v1933 = vand.u32 %v1900, 2147483648
    %v1934 = vor.u32 1.1754944e-38, %v1933
    %v1935 = vsel %vm1932, %v1934, %v1930
    %v1936 = vmul.f32 %v1883, %v1935
    %v1937 = vrcp.pop %v1903
    %v1938 = vmul.f32 %v1903, %v1937
    %v1939 = vsub.f32 1.0, %v1938
    %v1940 = vmul.f32 %v1937, %v1939
    %v1941 = vadd.f32 %v1937, %v1940
    %vm1942 = vweird.f32 %v1903
    %vm1943 = vweird.f32 %v1937
    %vm1944 = vmor %vm1942, %vm1943
    %v1945 = vsel %vm1944, %v1937, %v1941
    %v1946 = vand.u32 2147483647, %v1903
    %vm1947 = vcmp.eq.f32.partialorder %v1946, 8.507059e+37
    %v1948 = vand.u32 %v1903, 2147483648
    %v1949 = vor.u32 1.1754944e-38, %v1948
    %v1950 = vsel %vm1947, %v1949, %v1945
    %v1951 = vmul.f32 %v1885, %v1950
    %v1952 = vrcp.pop %v1906
    %v1953 = vmul.f32 %v1906, %v1952
    %v1954 = vsub.f32 1.0, %v1953
    %v1955 = vmul.f32 %v1952, %v1954
    %v1956 = vadd.f32 %v1952, %v1955
    %vm1957 = vweird.f32 %v1906
    %vm1958 = vweird.f32 %v1952
    %vm1959 = vmor %vm1957, %vm1958
    %v1960 = vsel %vm1959, %v1952, %v1956
    %v1961 = vand.u32 2147483647, %v1906
    %vm1962 = vcmp.eq.f32.partialorder %v1961, 8.507059e+37
    %v1963 = vand.u32 %v1906, 2147483648
    %v1964 = vor.u32 1.1754944e-38, %v1963
    %v1965 = vsel %vm1962, %v1964, %v1960
    %v1966 = vmul.f32 %v1887, %v1965
    %v1967 = vrcp.pop %v1909
    %v1968 = vmul.f32 %v1909, %v1967
    %v1969 = vsub.f32 1.0, %v1968
    %v1970 = vmul.f32 %v1967, %v1969
    %v1971 = vadd.f32 %v1967, %v1970
    %vm1972 = vweird.f32 %v1909
    %vm1973 = vweird.f32 %v1967
    %vm1974 = vmor %vm1972, %vm1973
    %v1975 = vsel %vm1974, %v1967, %v1971
    %v1976 = vand.u32 2147483647, %v1909
    %vm1977 = vcmp.eq.f32.partialorder %v1976, 8.507059e+37
    %v1978 = vand.u32 %v1909, 2147483648
    %v1979 = vor.u32 1.1754944e-38, %v1978
    %v1980 = vsel %vm1977, %v1979, %v1975
    %v1981 = vmul.f32 %v1889, %v1980
    %v1982 = vrcp.pop %v1912
    %v1983 = vmul.f32 %v1912, %v1982
    %v1984 = vsub.f32 1.0, %v1983
    %v1985 = vmul.f32 %v1982, %v1984
    %v1986 = vadd.f32 %v1982, %v1985
    %vm1987 = vweird.f32 %v1912
    %vm1988 = vweird.f32 %v1982
    %vm1989 = vmor %vm1987, %vm1988
    %v1990 = vsel %vm1989, %v1982, %v1986
    %v1991 = vand.u32 2147483647, %v1912
    %vm1992 = vcmp.eq.f32.partialorder %v1991, 8.507059e+37
    %v1993 = vand.u32 %v1912, 2147483648
    %v1994 = vor.u32 1.1754944e-38, %v1993
    %v1995 = vsel %vm1992, %v1994, %v1990
    %v1996 = vmul.f32 %v1891, %v1995
    %v1997 = vrcp.pop %v1915
    %v1998 = vmul.f32 %v1915, %v1997
    %v1999 = vsub.f32 1.0, %v1998
    %v2000 = vmul.f32 %v1997, %v1999
    %v2001 = vadd.f32 %v1997, %v2000
    %vm2002 = vweird.f32 %v1915
    %vm2003 = vweird.f32 %v1997
    %vm2004 = vmor %vm2002, %vm2003
    %v2005 = vsel %vm2004, %v1997, %v2001
    %v2006 = vand.u32 2147483647, %v1915
    %vm2007 = vcmp.eq.f32.partialorder %v2006, 8.507059e+37
    %v2008 = vand.u32 %v1915, 2147483648
    %v2009 = vor.u32 1.1754944e-38, %v2008
    %v2010 = vsel %vm2007, %v2009, %v2005
    %v2011 = vmul.f32 %v1893, %v2010
    %v2012 = vrcp.pop %v1918
    %v2013 = vmul.f32 %v1918, %v2012
    %v2014 = vsub.f32 1.0, %v2013
    %v2015 = vmul.f32 %v2012, %v2014
    %v2016 = vadd.f32 %v2012, %v2015
    %vm2017 = vweird.f32 %v1918
    %vm2018 = vweird.f32 %v2012
    %vm2019 = vmor %vm2017, %vm2018
    %v2020 = vsel %vm2019, %v2012, %v2016
    %v2021 = vand.u32 2147483647, %v1918
    %vm2022 = vcmp.eq.f32.partialorder %v2021, 8.507059e+37
    %v2023 = vand.u32 %v1918, 2147483648
    %v2024 = vor.u32 1.1754944e-38, %v2023
    %v2025 = vsel %vm2022, %v2024, %v2020
    %v2026 = vmul.f32 %v1895, %v2025
    %v2027 = vrcp.pop %v1921
    %v2028 = vmul.f32 %v1921, %v2027
    %v2029 = vsub.f32 1.0, %v2028
    %v2030 = vmul.f32 %v2027, %v2029
    %v2031 = vadd.f32 %v2027, %v2030
    %vm2032 = vweird.f32 %v1921
    %vm2033 = vweird.f32 %v2027
    %vm2034 = vmor %vm2032, %vm2033
    %v2035 = vsel %vm2034, %v2027, %v2031
    %v2036 = vand.u32 2147483647, %v1921
    %vm2037 = vcmp.eq.f32.partialorder %v2036, 8.507059e+37
    %v2038 = vand.u32 %v1921, 2147483648
    %v2039 = vor.u32 1.1754944e-38, %v2038
    %v2040 = vsel %vm2037, %v2039, %v2035
    %v2041 = vmul.f32 %v1897, %v2040
    %v2042 = vpack.c.bf16 %v1936, %v1936
    %v2043 = vpack.c.bf16 %v1951, %v1951
    %v2044 = vpack.c.bf16 %v1966, %v1966
    %v2045 = vpack.c.bf16 %v1981, %v1981
    %v2046 = vpack.c.bf16 %v1996, %v1996
    %v2047 = vpack.c.bf16 %v2011, %v2011
    %v2048 = vpack.c.bf16 %v2026, %v2026
    %v2049 = vpack.c.bf16 %v2041, %v2041
    %2050 = vst [vmem:[#allocation1] ss:$9 sm:$0xff] %v365
    %v2051 = vld [vmem:[#allocation1] sm:$0xff]
    %2053 = vrot.lane.b32.xlu0 %v2051, 96
    %v2054 = vpop.permute.xlu0 %2053
    %v2056 = vsel %vm737, %v2042, 0
    %v2059 = vsel %vm299, %v2054, 0
    %2061 = vmatpush.bf16.msra.mxu0 0
    %2062 = vmatpush.bf16.msra.mxu0 0
    %2063 = vmatpush.bf16.msra.mxu0 0
    %2064 = vmatpush.bf16.msra.mxu0 0
    %2065 = vmatpush.bf16.msra.mxu0 0
    %2066 = vmatpush.bf16.msra.mxu0 0
    %2067 = vmatpush.bf16.msra.mxu0 0
    %2068 = vmatpush.bf16.msra.mxu0 %v2059
    %2069 = vmatmul.bf16.gmra.mxu0 %v2056
    %v2070 = vpop.f32.mrf.mxu0
    %v2071 = vadd.f32 0.0, %v2070
    %v2072 = vpop.f32.mrf.mxu0
    %2073 = vdwg.mxu0
    %2074 = vst [vmem:[#allocation1] ss:$9 sm:$0xff] %v368
    %v2075 = vld [vmem:[#allocation1] sm:$0xff]
    %2077 = vrot.lane.b32.xlu0 %v2075, 96
    %v2078 = vpop.permute.xlu0 %2077
    %v2080 = vsel %vm737, %v2043, 0
    %v2083 = vsel %vm299, %v2078, 0
    %2085 = vmatpush.bf16.msra.mxu0 0
    %2086 = vmatpush.bf16.msra.mxu0 0
    %2087 = vmatpush.bf16.msra.mxu0 0
    %2088 = vmatpush.bf16.msra.mxu0 0
    %2089 = vmatpush.bf16.msra.mxu0 0
    %2090 = vmatpush.bf16.msra.mxu0 0
    %2091 = vmatpush.bf16.msra.mxu0 0
    %2092 = vmatpush.bf16.msra.mxu0 %v2083
    %2093 = vmatmul.bf16.gmra.mxu0 %v2080
    %v2094 = vpop.f32.mrf.mxu0
    %v2095 = vadd.f32 0.0, %v2094
    %v2096 = vpop.f32.mrf.mxu0
    %2097 = vdwg.mxu0
    %2098 = vst [vmem:[#allocation1] ss:$9 sm:$0xff] %v371
    %v2099 = vld [vmem:[#allocation1] sm:$0xff]
    %2101 = vrot.lane.b32.xlu0 %v2099, 96
    %v2102 = vpop.permute.xlu0 %2101
    %v2104 = vsel %vm737, %v2044, 0
    %v2107 = vsel %vm299, %v2102, 0
    %2109 = vmatpush.bf16.msra.mxu0 0
    %2110 = vmatpush.bf16.msra.mxu0 0
    %2111 = vmatpush.bf16.msra.mxu0 0
    %2112 = vmatpush.bf16.msra.mxu0 0
    %2113 = vmatpush.bf16.msra.mxu0 0
    %2114 = vmatpush.bf16.msra.mxu0 0
    %2115 = vmatpush.bf16.msra.mxu0 0
    %2116 = vmatpush.bf16.msra.mxu0 %v2107
    %2117 = vmatmul.bf16.gmra.mxu0 %v2104
    %v2118 = vpop.f32.mrf.mxu0
    %v2119 = vadd.f32 0.0, %v2118
    %v2120 = vpop.f32.mrf.mxu0
    %2121 = vdwg.mxu0
    %2122 = vst [vmem:[#allocation1] ss:$9 sm:$0xff] %v374
    %v2123 = vld [vmem:[#allocation1] sm:$0xff]
    %2125 = vrot.lane.b32.xlu0 %v2123, 96
    %v2126 = vpop.permute.xlu0 %2125
    %v2128 = vsel %vm737, %v2045, 0
    %v2131 = vsel %vm299, %v2126, 0
    %2133 = vmatpush.bf16.msra.mxu0 0
    %2134 = vmatpush.bf16.msra.mxu0 0
    %2135 = vmatpush.bf16.msra.mxu0 0
    %2136 = vmatpush.bf16.msra.mxu0 0
    %2137 = vmatpush.bf16.msra.mxu0 0
    %2138 = vmatpush.bf16.msra.mxu0 0
    %2139 = vmatpush.bf16.msra.mxu0 0
    %2140 = vmatpush.bf16.msra.mxu0 %v2131
    %2141 = vmatmul.bf16.gmra.mxu0 %v2128
    %v2142 = vpop.f32.mrf.mxu0
    %v2143 = vadd.f32 0.0, %v2142
    %v2144 = vpop.f32.mrf.mxu0
    %2145 = vdwg.mxu0
    %2146 = vst [vmem:[#allocation1] ss:$9 sm:$0xff] %v377
    %v2147 = vld [vmem:[#allocation1] sm:$0xff]
    %2149 = vrot.lane.b32.xlu0 %v2147, 96
    %v2150 = vpop.permute.xlu0 %2149
    %v2152 = vsel %vm737, %v2046, 0
    %v2155 = vsel %vm299, %v2150, 0
    %2157 = vmatpush.bf16.msra.mxu0 0
    %2158 = vmatpush.bf16.msra.mxu0 0
    %2159 = vmatpush.bf16.msra.mxu0 0
    %2160 = vmatpush.bf16.msra.mxu0 0
    %2161 = vmatpush.bf16.msra.mxu0 0
    %2162 = vmatpush.bf16.msra.mxu0 0
    %2163 = vmatpush.bf16.msra.mxu0 0
    %2164 = vmatpush.bf16.msra.mxu0 %v2155
    %2165 = vmatmul.bf16.gmra.mxu0 %v2152
    %v2166 = vpop.f32.mrf.mxu0
    %v2167 = vadd.f32 0.0, %v2166
    %v2168 = vpop.f32.mrf.mxu0
    %2169 = vdwg.mxu0
    %2170 = vst [vmem:[#allocation1] ss:$9 sm:$0xff] %v380
    %v2171 = vld [vmem:[#allocation1] sm:$0xff]
    %2173 = vrot.lane.b32.xlu0 %v2171, 96
    %v2174 = vpop.permute.xlu0 %2173
    %v2176 = vsel %vm737, %v2047, 0
    %v2179 = vsel %vm299, %v2174, 0
    %2181 = vmatpush.bf16.msra.mxu0 0
    %2182 = vmatpush.bf16.msra.mxu0 0
    %2183 = vmatpush.bf16.msra.mxu0 0
    %2184 = vmatpush.bf16.msra.mxu0 0
    %2185 = vmatpush.bf16.msra.mxu0 0
    %2186 = vmatpush.bf16.msra.mxu0 0
    %2187 = vmatpush.bf16.msra.mxu0 0
    %2188 = vmatpush.bf16.msra.mxu0 %v2179
    %2189 = vmatmul.bf16.gmra.mxu0 %v2176
    %v2190 = vpop.f32.mrf.mxu0
    %v2191 = vadd.f32 0.0, %v2190
    %v2192 = vpop.f32.mrf.mxu0
    %2193 = vdwg.mxu0
    %2194 = vst [vmem:[#allocation1] ss:$9 sm:$0xff] %v383
    %v2195 = vld [vmem:[#allocation1] sm:$0xff]
    %2197 = vrot.lane.b32.xlu0 %v2195, 96
    %v2198 = vpop.permute.xlu0 %2197
    %v2200 = vsel %vm737, %v2048, 0
    %v2203 = vsel %vm299, %v2198, 0
    %2205 = vmatpush.bf16.msra.mxu0 0
    %2206 = vmatpush.bf16.msra.mxu0 0
    %2207 = vmatpush.bf16.msra.mxu0 0
    %2208 = vmatpush.bf16.msra.mxu0 0
    %2209 = vmatpush.bf16.msra.mxu0 0
    %2210 = vmatpush.bf16.msra.mxu0 0
    %2211 = vmatpush.bf16.msra.mxu0 0
    %2212 = vmatpush.bf16.msra.mxu0 %v2203
    %2213 = vmatmul.bf16.gmra.mxu0 %v2200
    %v2214 = vpop.f32.mrf.mxu0
    %v2215 = vadd.f32 0.0, %v2214
    %v2216 = vpop.f32.mrf.mxu0
    %2217 = vdwg.mxu0
    %2218 = vst [vmem:[#allocation1] ss:$9 sm:$0xff] %v386
    %v2219 = vld [vmem:[#allocation1] sm:$0xff]
    %2221 = vrot.lane.b32.xlu0 %v2219, 96
    %v2222 = vpop.permute.xlu0 %2221
    %v2224 = vsel %vm737, %v2049, 0
    %v2227 = vsel %vm299, %v2222, 0
    %2229 = vmatpush.bf16.msra.mxu0 0
    %2230 = vmatpush.bf16.msra.mxu0 0
    %2231 = vmatpush.bf16.msra.mxu0 0
    %2232 = vmatpush.bf16.msra.mxu0 0
    %2233 = vmatpush.bf16.msra.mxu0 0
    %2234 = vmatpush.bf16.msra.mxu0 0
    %2235 = vmatpush.bf16.msra.mxu0 0
    %2236 = vmatpush.bf16.msra.mxu0 %v2227
    %2237 = vmatmul.bf16.gmra.mxu0 %v2224
    %v2238 = vpop.f32.mrf.mxu0
    %v2239 = vadd.f32 0.0, %v2238
    %v2240 = vpop.f32.mrf.mxu0
    %2241 = vdwg.mxu0
    %v2242 = vld [vmem:[%s3 + $0x10] sm:$0xf]
    %v2243 = vld [vmem:[%s3 + $0x14] sm:$0xf]
    %2252 = vst [vmem:[#allocation1] ss:$4 sm:$0xff] %v2071
    %s2253 = scalar_lea.vmem [#allocation1], 1
    %2254 = vst [vmem:[%s2253] ss:$4 sm:$0xff] %v2095
    %s2255 = scalar_lea.vmem [#allocation1], 2
    %2256 = vst [vmem:[%s2255] ss:$4 sm:$0xff] %v2119
    %s2257 = scalar_lea.vmem [#allocation1], 3
    %2258 = vst [vmem:[%s2257] ss:$4 sm:$0xff] %v2143
    %s2259 = scalar_lea.vmem [#allocation1], 32
    %2260 = vst [vmem:[%s2259] ss:$4 sm:$0xff] %v2167
    %s2261 = scalar_lea.vmem [#allocation1], 33
    %2262 = vst [vmem:[%s2261] ss:$4 sm:$0xff] %v2191
    %s2263 = scalar_lea.vmem [#allocation1], 34
    %2264 = vst [vmem:[%s2263] ss:$4 sm:$0xff] %v2215
    %s2265 = scalar_lea.vmem [#allocation1], 35
    %2266 = vst [vmem:[%s2265] ss:$4 sm:$0xff] %v2239
    %v2267 = vld.sshfl [vmem:[#allocation1] sm:$0xff pattern:$0x73625140]
    %v2268 = vld.sshfl [vmem:[#allocation1 + $0x20] sm:$0xff pattern:$0x73625140]
    %v2271 = vpack.c.bf16 %v2268, %v2267
    %v2274 = vunpack.c.l.b16 %v2242
    %v2275 = vunpack.c.l.b16 %v2243
    %v2276 = vpack.c.b16 %v2275, %v2274
    %v2279 = vsel %vm387, %v2271, 0
    %2281 = vmatpush.bf16.msra.mxu0 0
    %2282 = vmatpush.bf16.msra.mxu0 0
    %2283 = vmatpush.bf16.msra.mxu0 0
    %2284 = vmatpush.bf16.msra.mxu0 0
    %2285 = vmatpush.bf16.msra.mxu0 0
    %2286 = vmatpush.bf16.msra.mxu0 0
    %2287 = vmatpush.bf16.msra.mxu0 0
    %2288 = vmatpush.bf16.msra.mxu0 %v2276
    %2289 = vmatmul.bf16.gmra.mxu0 %v2279
    %v2290 = vpop.f32.mrf.mxu0
    %v2291 = vadd.f32 0.0, %v2290
    %v2292 = vpop.f32.mrf.mxu0
    %v2293 = vadd.f32 0.0, %v2292
    %2294 = vdwg.mxu0
    %v2295 = vadd.f32 %v1614, %v2291
    %v2296 = vadd.f32 %v1616, %v2293
    %2297 = vst [vmem:[#allocation1] ss:$9 sm:$0xff] %v302
    %v2298 = vld [vmem:[#allocation1] sm:$0xff]
    %2300 = vrot.lane.b32.xlu0 %v2298, 80
    %v2301 = vpop.permute.xlu0 %2300
    %2302 = vst [vmem:[#allocation1] ss:$9 sm:$0xff] %v335
    %v2303 = vld [vmem:[#allocation1] sm:$0xff]
    %2305 = vrot.lane.b32.xlu0 %v2303, 80
    %v2306 = vpop.permute.xlu0 %2305
    %v2308 = vsel %vm387, %v2301, 0
    %v2311 = vsel %vm387, %v2306, 0
    %2313 = vmatpush.bf16.xpose.msra.mxu0 0
    %2314 = vmatpush.bf16.xpose.msra.mxu0 0
    %2315 = vmatpush.bf16.xpose.msra.mxu0 0
    %2316 = vmatpush.bf16.xpose.msra.mxu0 0
    %2317 = vmatpush.bf16.xpose.msra.mxu0 0
    %2318 = vmatpush.bf16.xpose.msra.mxu0 0
    %2319 = vmatpush.bf16.xpose.msra.mxu0 0
    %2320 = vmatpush.bf16.xpose.msra.mxu0 %v2311
    %2321 = vmatmul.bf16.gmra.mxu0 %v2308
    %v2322 = vpop.f32.mrf.mxu0
    %v2323 = vadd.f32 0.0, %v2322
    %v2324 = vpop.f32.mrf.mxu0
    %2325 = vdwg.mxu0
    %2326 = vst [vmem:[#allocation1] ss:$9 sm:$0xff] %v306
    %v2327 = vld [vmem:[#allocation1] sm:$0xff]
    %2329 = vrot.lane.b32.xlu0 %v2327, 80
    %v2330 = vpop.permute.xlu0 %2329
    %2331 = vst [vmem:[#allocation1] ss:$9 sm:$0xff] %v338
    %v2332 = vld [vmem:[#allocation1] sm:$0xff]
    %2334 = vrot.lane.b32.xlu0 %v2332, 80
    %v2335 = vpop.permute.xlu0 %2334
    %v2337 = vsel %vm387, %v2330, 0
    %v2340 = vsel %vm387, %v2335, 0
    %2342 = vmatpush.bf16.xpose.msra.mxu0 0
    %2343 = vmatpush.bf16.xpose.msra.mxu0 0
    %2344 = vmatpush.bf16.xpose.msra.mxu0 0
    %2345 = vmatpush.bf16.xpose.msra.mxu0 0
    %2346 = vmatpush.bf16.xpose.msra.mxu0 0
    %2347 = vmatpush.bf16.xpose.msra.mxu0 0
    %2348 = vmatpush.bf16.xpose.msra.mxu0 0
    %2349 = vmatpush.bf16.xpose.msra.mxu0 %v2340
    %2350 = vmatmul.bf16.gmra.mxu0 %v2337
    %v2351 = vpop.f32.mrf.mxu0
    %v2352 = vadd.f32 0.0, %v2351
    %v2353 = vpop.f32.mrf.mxu0
    %2354 = vdwg.mxu0
    %2355 = vst [vmem:[#allocation1] ss:$9 sm:$0xff] %v310
    %v2356 = vld [vmem:[#allocation1] sm:$0xff]
    %2358 = vrot.lane.b32.xlu0 %v2356, 80
    %v2359 = vpop.permute.xlu0 %2358
    %2360 = vst [vmem:[#allocation1] ss:$9 sm:$0xff] %v341
    %v2361 = vld [vmem:[#allocation1] sm:$0xff]
    %2363 = vrot.lane.b32.xlu0 %v2361, 80
    %v2364 = vpop.permute.xlu0 %2363
    %v2366 = vsel %vm387, %v2359, 0
    %v2369 = vsel %vm387, %v2364, 0
    %2371 = vmatpush.bf16.xpose.msra.mxu0 0
    %2372 = vmatpush.bf16.xpose.msra.mxu0 0
    %2373 = vmatpush.bf16.xpose.msra.mxu0 0
    %2374 = vmatpush.bf16.xpose.msra.mxu0 0
    %2375 = vmatpush.bf16.xpose.msra.mxu0 0
    %2376 = vmatpush.bf16.xpose.msra.mxu0 0
    %2377 = vmatpush.bf16.xpose.msra.mxu0 0
    %2378 = vmatpush.bf16.xpose.msra.mxu0 %v2369
    %2379 = vmatmul.bf16.gmra.mxu0 %v2366
    %v2380 = vpop.f32.mrf.mxu0
    %v2381 = vadd.f32 0.0, %v2380
    %v2382 = vpop.f32.mrf.mxu0
    %2383 = vdwg.mxu0
    %2384 = vst [vmem:[#allocation1] ss:$9 sm:$0xff] %v314
    %v2385 = vld [vmem:[#allocation1] sm:$0xff]
    %2387 = vrot.lane.b32.xlu0 %v2385, 80
    %v2388 = vpop.permute.xlu0 %2387
    %2389 = vst [vmem:[#allocation1] ss:$9 sm:$0xff] %v344
    %v2390 = vld [vmem:[#allocation1] sm:$0xff]
    %2392 = vrot.lane.b32.xlu0 %v2390, 80
    %v2393 = vpop.permute.xlu0 %2392
    %v2395 = vsel %vm387, %v2388, 0
    %v2398 = vsel %vm387, %v2393, 0
    %2400 = vmatpush.bf16.xpose.msra.mxu0 0
    %2401 = vmatpush.bf16.xpose.msra.mxu0 0
    %2402 = vmatpush.bf16.xpose.msra.mxu0 0
    %2403 = vmatpush.bf16.xpose.msra.mxu0 0
    %2404 = vmatpush.bf16.xpose.msra.mxu0 0
    %2405 = vmatpush.bf16.xpose.msra.mxu0 0
    %2406 = vmatpush.bf16.xpose.msra.mxu0 0
    %2407 = vmatpush.bf16.xpose.msra.mxu0 %v2398
    %2408 = vmatmul.bf16.gmra.mxu0 %v2395
    %v2409 = vpop.f32.mrf.mxu0
    %v2410 = vadd.f32 0.0, %v2409
    %v2411 = vpop.f32.mrf.mxu0
    %2412 = vdwg.mxu0
    %2413 = vst [vmem:[#allocation1] ss:$9 sm:$0xff] %v317
    %v2414 = vld [vmem:[#allocation1] sm:$0xff]
    %2416 = vrot.lane.b32.xlu0 %v2414, 80
    %v2417 = vpop.permute.xlu0 %2416
    %2418 = vst [vmem:[#allocation1] ss:$9 sm:$0xff] %v347
    %v2419 = vld [vmem:[#allocation1] sm:$0xff]
    %2421 = vrot.lane.b32.xlu0 %v2419, 80
    %v2422 = vpop.permute.xlu0 %2421
    %v2424 = vsel %vm387, %v2417, 0
    %v2427 = vsel %vm387, %v2422, 0
    %2429 = vmatpush.bf16.xpose.msra.mxu0 0
    %2430 = vmatpush.bf16.xpose.msra.mxu0 0
    %2431 = vmatpush.bf16.xpose.msra.mxu0 0
    %2432 = vmatpush.bf16.xpose.msra.mxu0 0
    %2433 = vmatpush.bf16.xpose.msra.mxu0 0
    %2434 = vmatpush.bf16.xpose.msra.mxu0 0
    %2435 = vmatpush.bf16.xpose.msra.mxu0 0
    %2436 = vmatpush.bf16.xpose.msra.mxu0 %v2427
    %2437 = vmatmul.bf16.gmra.mxu0 %v2424
    %v2438 = vpop.f32.mrf.mxu0
    %v2439 = vadd.f32 0.0, %v2438
    %v2440 = vpop.f32.mrf.mxu0
    %2441 = vdwg.mxu0
    %2442 = vst [vmem:[#allocation1] ss:$9 sm:$0xff] %v320
    %v2443 = vld [vmem:[#allocation1] sm:$0xff]
    %2445 = vrot.lane.b32.xlu0 %v2443, 80
    %v2446 = vpop.permute.xlu0 %2445
    %2447 = vst [vmem:[#allocation1] ss:$9 sm:$0xff] %v350
    %v2448 = vld [vmem:[#allocation1] sm:$0xff]
    %2450 = vrot.lane.b32.xlu0 %v2448, 80
    %v2451 = vpop.permute.xlu0 %2450
    %v2453 = vsel %vm387, %v2446, 0
    %v2456 = vsel %vm387, %v2451, 0
    %2458 = vmatpush.bf16.xpose.msra.mxu0 0
    %2459 = vmatpush.bf16.xpose.msra.mxu0 0
    %2460 = vmatpush.bf16.xpose.msra.mxu0 0
    %2461 = vmatpush.bf16.xpose.msra.mxu0 0
    %2462 = vmatpush.bf16.xpose.msra.mxu0 0
    %2463 = vmatpush.bf16.xpose.msra.mxu0 0
    %2464 = vmatpush.bf16.xpose.msra.mxu0 0
    %2465 = vmatpush.bf16.xpose.msra.mxu0 %v2456
    %2466 = vmatmul.bf16.gmra.mxu0 %v2453
    %v2467 = vpop.f32.mrf.mxu0
    %v2468 = vadd.f32 0.0, %v2467
    %v2469 = vpop.f32.mrf.mxu0
    %2470 = vdwg.mxu0
    %2471 = vst [vmem:[#allocation1] ss:$9 sm:$0xff] %v323
    %v2472 = vld [vmem:[#allocation1] sm:$0xff]
    %2474 = vrot.lane.b32.xlu0 %v2472, 80
    %v2475 = vpop.permute.xlu0 %2474
    %2476 = vst [vmem:[#allocation1] ss:$9 sm:$0xff] %v353
    %v2477 = vld [vmem:[#allocation1] sm:$0xff]
    %2479 = vrot.lane.b32.xlu0 %v2477, 80
    %v2480 = vpop.permute.xlu0 %2479
    %v2482 = vsel %vm387, %v2475, 0
    %v2485 = vsel %vm387, %v2480, 0
    %2487 = vmatpush.bf16.xpose.msra.mxu0 0
    %2488 = vmatpush.bf16.xpose.msra.mxu0 0
    %2489 = vmatpush.bf16.xpose.msra.mxu0 0
    %2490 = vmatpush.bf16.xpose.msra.mxu0 0
    %2491 = vmatpush.bf16.xpose.msra.mxu0 0
    %2492 = vmatpush.bf16.xpose.msra.mxu0 0
    %2493 = vmatpush.bf16.xpose.msra.mxu0 0
    %2494 = vmatpush.bf16.xpose.msra.mxu0 %v2485
    %2495 = vmatmul.bf16.gmra.mxu0 %v2482
    %v2496 = vpop.f32.mrf.mxu0
    %v2497 = vadd.f32 0.0, %v2496
    %v2498 = vpop.f32.mrf.mxu0
    %2499 = vdwg.mxu0
    %2500 = vst [vmem:[#allocation1] ss:$9 sm:$0xff] %v326
    %v2501 = vld [vmem:[#allocation1] sm:$0xff]
    %2503 = vrot.lane.b32.xlu0 %v2501, 80
    %v2504 = vpop.permute.xlu0 %2503
    %2505 = vst [vmem:[#allocation1] ss:$9 sm:$0xff] %v356
    %v2506 = vld [vmem:[#allocation1] sm:$0xff]
    %2508 = vrot.lane.b32.xlu0 %v2506, 80
    %v2509 = vpop.permute.xlu0 %2508
    %v2511 = vsel %vm387, %v2504, 0
    %v2514 = vsel %vm387, %v2509, 0
    %2516 = vmatpush.bf16.xpose.msra.mxu0 0
    %2517 = vmatpush.bf16.xpose.msra.mxu0 0
    %2518 = vmatpush.bf16.xpose.msra.mxu0 0
    %2519 = vmatpush.bf16.xpose.msra.mxu0 0
    %2520 = vmatpush.bf16.xpose.msra.mxu0 0
    %2521 = vmatpush.bf16.xpose.msra.mxu0 0
    %2522 = vmatpush.bf16.xpose.msra.mxu0 0
    %2523 = vmatpush.bf16.xpose.msra.mxu0 %v2514
    %2524 = vmatmul.bf16.gmra.mxu0 %v2511
    %v2525 = vpop.f32.mrf.mxu0
    %v2526 = vadd.f32 0.0, %v2525
    %v2527 = vpop.f32.mrf.mxu0
    %2528 = vdwg.mxu0
    %v2529 = vsel %vm536, %v2323, -inf
    %2530 = vmax.xlane.f32.xlu0 %v2529
    %v2531 = vpop.xlane.xlu0 %2530
    %v2532 = vsel %vm536, %v2352, -inf
    %2533 = vmax.xlane.f32.xlu0 %v2532
    %v2534 = vpop.xlane.xlu0 %2533
    %v2535 = vsel %vm536, %v2381, -inf
    %2536 = vmax.xlane.f32.xlu0 %v2535
    %v2537 = vpop.xlane.xlu0 %2536
    %v2538 = vsel %vm536, %v2410, -inf
    %2539 = vmax.xlane.f32.xlu0 %v2538
    %v2540 = vpop.xlane.xlu0 %2539
    %v2541 = vsel %vm536, %v2439, -inf
    %2542 = vmax.xlane.f32.xlu0 %v2541
    %v2543 = vpop.xlane.xlu0 %2542
    %v2544 = vsel %vm536, %v2468, -inf
    %2545 = vmax.xlane.f32.xlu0 %v2544
    %v2546 = vpop.xlane.xlu0 %2545
    %v2547 = vsel %vm536, %v2497, -inf
    %2548 = vmax.xlane.f32.xlu0 %v2547
    %v2549 = vpop.xlane.xlu0 %2548
    %v2550 = vsel %vm536, %v2526, -inf
    %2551 = vmax.xlane.f32.xlu0 %v2550
    %v2552 = vpop.xlane.xlu0 %2551
    %v2553 = vsub.f32 %v2323, %v2531
    %v2554 = vsub.f32 %v2352, %v2534
    %v2555 = vsub.f32 %v2381, %v2537
    %v2556 = vsub.f32 %v2410, %v2540
    %v2557 = vsub.f32 %v2439, %v2543
    %v2558 = vsub.f32 %v2468, %v2546
    %v2559 = vsub.f32 %v2497, %v2549
    %v2560 = vsub.f32 %v2526, %v2552
    %v2561 = vmul.f32 %v2553, 1.442695
    %v2562 = vpow.pop %v2561
    %v2563 = vmul.f32 %v2554, 1.442695
    %v2564 = vpow.pop %v2563
    %v2565 = vmul.f32 %v2555, 1.442695
    %v2566 = vpow.pop %v2565
    %v2567 = vmul.f32 %v2556, 1.442695
    %v2568 = vpow.pop %v2567
    %v2569 = vmul.f32 %v2557, 1.442695
    %v2570 = vpow.pop %v2569
    %v2571 = vmul.f32 %v2558, 1.442695
    %v2572 = vpow.pop %v2571
    %v2573 = vmul.f32 %v2559, 1.442695
    %v2574 = vpow.pop %v2573
    %v2575 = vmul.f32 %v2560, 1.442695
    %v2576 = vpow.pop %v2575
    %v2577 = vsel %vm536, %v2562, 0.0
    %2578 = vadd.xlane.f32.xlu0 %v2577
    %v2579 = vpop.xlane.xlu0 %2578
    %v2580 = vsel %vm536, %v2564, 0.0
    %2581 = vadd.xlane.f32.xlu0 %v2580
    %v2582 = vpop.xlane.xlu0 %2581
    %v2583 = vsel %vm536, %v2566, 0.0
    %2584 = vadd.xlane.f32.xlu0 %v2583
    %v2585 = vpop.xlane.xlu0 %2584
    %v2586 = vsel %vm536, %v2568, 0.0
    %2587 = vadd.xlane.f32.xlu0 %v2586
    %v2588 = vpop.xlane.xlu0 %2587
    %v2589 = vsel %vm536, %v2570, 0.0
    %2590 = vadd.xlane.f32.xlu0 %v2589
    %v2591 = vpop.xlane.xlu0 %2590
    %v2592 = vsel %vm536, %v2572, 0.0
    %2593 = vadd.xlane.f32.xlu0 %v2592
    %v2594 = vpop.xlane.xlu0 %2593
    %v2595 = vsel %vm536, %v2574, 0.0
    %2596 = vadd.xlane.f32.xlu0 %v2595
    %v2597 = vpop.xlane.xlu0 %2596
    %v2598 = vsel %vm536, %v2576, 0.0
    %2599 = vadd.xlane.f32.xlu0 %v2598
    %v2600 = vpop.xlane.xlu0 %2599
    %v2601 = vrcp.pop %v2579
    %v2602 = vmul.f32 %v2579, %v2601
    %v2603 = vsub.f32 1.0, %v2602
    %v2604 = vmul.f32 %v2601, %v2603
    %v2605 = vadd.f32 %v2601, %v2604
    %vm2606 = vweird.f32 %v2579
    %vm2607 = vweird.f32 %v2601
    %vm2608 = vmor %vm2606, %vm2607
    %v2609 = vsel %vm2608, %v2601, %v2605
    %v2610 = vand.u32 2147483647, %v2579
    %vm2611 = vcmp.eq.f32.partialorder %v2610, 8.507059e+37
    %v2612 = vand.u32 %v2579, 2147483648
    %v2613 = vor.u32 1.1754944e-38, %v2612
    %v2614 = vsel %vm2611, %v2613, %v2609
    %v2615 = vmul.f32 %v2562, %v2614
    %v2616 = vrcp.pop %v2582
    %v2617 = vmul.f32 %v2582, %v2616
    %v2618 = vsub.f32 1.0, %v2617
    %v2619 = vmul.f32 %v2616, %v2618
    %v2620 = vadd.f32 %v2616, %v2619
    %vm2621 = vweird.f32 %v2582
    %vm2622 = vweird.f32 %v2616
    %vm2623 = vmor %vm2621, %vm2622
    %v2624 = vsel %vm2623, %v2616, %v2620
    %v2625 = vand.u32 2147483647, %v2582
    %vm2626 = vcmp.eq.f32.partialorder %v2625, 8.507059e+37
    %v2627 = vand.u32 %v2582, 2147483648
    %v2628 = vor.u32 1.1754944e-38, %v2627
    %v2629 = vsel %vm2626, %v2628, %v2624
    %v2630 = vmul.f32 %v2564, %v2629
    %v2631 = vrcp.pop %v2585
    %v2632 = vmul.f32 %v2585, %v2631
    %v2633 = vsub.f32 1.0, %v2632
    %v2634 = vmul.f32 %v2631, %v2633
    %v2635 = vadd.f32 %v2631, %v2634
    %vm2636 = vweird.f32 %v2585
    %vm2637 = vweird.f32 %v2631
    %vm2638 = vmor %vm2636, %vm2637
    %v2639 = vsel %vm2638, %v2631, %v2635
    %v2640 = vand.u32 2147483647, %v2585
    %vm2641 = vcmp.eq.f32.partialorder %v2640, 8.507059e+37
    %v2642 = vand.u32 %v2585, 2147483648
    %v2643 = vor.u32 1.1754944e-38, %v2642
    %v2644 = vsel %vm2641, %v2643, %v2639
    %v2645 = vmul.f32 %v2566, %v2644
    %v2646 = vrcp.pop %v2588
    %v2647 = vmul.f32 %v2588, %v2646
    %v2648 = vsub.f32 1.0, %v2647
    %v2649 = vmul.f32 %v2646, %v2648
    %v2650 = vadd.f32 %v2646, %v2649
    %vm2651 = vweird.f32 %v2588
    %vm2652 = vweird.f32 %v2646
    %vm2653 = vmor %vm2651, %vm2652
    %v2654 = vsel %vm2653, %v2646, %v2650
    %v2655 = vand.u32 2147483647, %v2588
    %vm2656 = vcmp.eq.f32.partialorder %v2655, 8.507059e+37
    %v2657 = vand.u32 %v2588, 2147483648
    %v2658 = vor.u32 1.1754944e-38, %v2657
    %v2659 = vsel %vm2656, %v2658, %v2654
    %v2660 = vmul.f32 %v2568, %v2659
    %v2661 = vrcp.pop %v2591
    %v2662 = vmul.f32 %v2591, %v2661
    %v2663 = vsub.f32 1.0, %v2662
    %v2664 = vmul.f32 %v2661, %v2663
    %v2665 = vadd.f32 %v2661, %v2664
    %vm2666 = vweird.f32 %v2591
    %vm2667 = vweird.f32 %v2661
    %vm2668 = vmor %vm2666, %vm2667
    %v2669 = vsel %vm2668, %v2661, %v2665
    %v2670 = vand.u32 2147483647, %v2591
    %vm2671 = vcmp.eq.f32.partialorder %v2670, 8.507059e+37
    %v2672 = vand.u32 %v2591, 2147483648
    %v2673 = vor.u32 1.1754944e-38, %v2672
    %v2674 = vsel %vm2671, %v2673, %v2669
    %v2675 = vmul.f32 %v2570, %v2674
    %v2676 = vrcp.pop %v2594
    %v2677 = vmul.f32 %v2594, %v2676
    %v2678 = vsub.f32 1.0, %v2677
    %v2679 = vmul.f32 %v2676, %v2678
    %v2680 = vadd.f32 %v2676, %v2679
    %vm2681 = vweird.f32 %v2594
    %vm2682 = vweird.f32 %v2676
    %vm2683 = vmor %vm2681, %vm2682
    %v2684 = vsel %vm2683, %v2676, %v2680
    %v2685 = vand.u32 2147483647, %v2594
    %vm2686 = vcmp.eq.f32.partialorder %v2685, 8.507059e+37
    %v2687 = vand.u32 %v2594, 2147483648
    %v2688 = vor.u32 1.1754944e-38, %v2687
    %v2689 = vsel %vm2686, %v2688, %v2684
    %v2690 = vmul.f32 %v2572, %v2689
    %v2691 = vrcp.pop %v2597
    %v2692 = vmul.f32 %v2597, %v2691
    %v2693 = vsub.f32 1.0, %v2692
    %v2694 = vmul.f32 %v2691, %v2693
    %v2695 = vadd.f32 %v2691, %v2694
    %vm2696 = vweird.f32 %v2597
    %vm2697 = vweird.f32 %v2691
    %vm2698 = vmor %vm2696, %vm2697
    %v2699 = vsel %vm2698, %v2691, %v2695
    %v2700 = vand.u32 2147483647, %v2597
    %vm2701 = vcmp.eq.f32.partialorder %v2700, 8.507059e+37
    %v2702 = vand.u32 %v2597, 2147483648
    %v2703 = vor.u32 1.1754944e-38, %v2702
    %v2704 = vsel %vm2701, %v2703, %v2699
    %v2705 = vmul.f32 %v2574, %v2704
    %v2706 = vrcp.pop %v2600
    %v2707 = vmul.f32 %v2600, %v2706
    %v2708 = vsub.f32 1.0, %v2707
    %v2709 = vmul.f32 %v2706, %v2708
    %v2710 = vadd.f32 %v2706, %v2709
    %vm2711 = vweird.f32 %v2600
    %vm2712 = vweird.f32 %v2706
    %vm2713 = vmor %vm2711, %vm2712
    %v2714 = vsel %vm2713, %v2706, %v2710
    %v2715 = vand.u32 2147483647, %v2600
    %vm2716 = vcmp.eq.f32.partialorder %v2715, 8.507059e+37
    %v2717 = vand.u32 %v2600, 2147483648
    %v2718 = vor.u32 1.1754944e-38, %v2717
    %v2719 = vsel %vm2716, %v2718, %v2714
    %v2720 = vmul.f32 %v2576, %v2719
    %v2721 = vpack.c.bf16 %v2615, %v2615
    %v2722 = vpack.c.bf16 %v2630, %v2630
    %v2723 = vpack.c.bf16 %v2645, %v2645
    %v2724 = vpack.c.bf16 %v2660, %v2660
    %v2725 = vpack.c.bf16 %v2675, %v2675
    %v2726 = vpack.c.bf16 %v2690, %v2690
    %v2727 = vpack.c.bf16 %v2705, %v2705
    %v2728 = vpack.c.bf16 %v2720, %v2720
    %2729 = vst [vmem:[#allocation1] ss:$9 sm:$0xff] %v365
    %v2730 = vld [vmem:[#allocation1] sm:$0xff]
    %2732 = vrot.lane.b32.xlu0 %v2730, 80
    %v2733 = vpop.permute.xlu0 %2732
    %v2735 = vsel %vm737, %v2721, 0
    %v2738 = vsel %vm299, %v2733, 0
    %2740 = vmatpush.bf16.msra.mxu0 0
    %2741 = vmatpush.bf16.msra.mxu0 0
    %2742 = vmatpush.bf16.msra.mxu0 0
    %2743 = vmatpush.bf16.msra.mxu0 0
    %2744 = vmatpush.bf16.msra.mxu0 0
    %2745 = vmatpush.bf16.msra.mxu0 0
    %2746 = vmatpush.bf16.msra.mxu0 0
    %2747 = vmatpush.bf16.msra.mxu0 %v2738
    %2748 = vmatmul.bf16.gmra.mxu0 %v2735
    %v2749 = vpop.f32.mrf.mxu0
    %v2750 = vadd.f32 0.0, %v2749
    %v2751 = vpop.f32.mrf.mxu0
    %2752 = vdwg.mxu0
    %2753 = vst [vmem:[#allocation1] ss:$9 sm:$0xff] %v368
    %v2754 = vld [vmem:[#allocation1] sm:$0xff]
    %2756 = vrot.lane.b32.xlu0 %v2754, 80
    %v2757 = vpop.permute.xlu0 %2756
    %v2759 = vsel %vm737, %v2722, 0
    %v2762 = vsel %vm299, %v2757, 0
    %2764 = vmatpush.bf16.msra.mxu0 0
    %2765 = vmatpush.bf16.msra.mxu0 0
    %2766 = vmatpush.bf16.msra.mxu0 0
    %2767 = vmatpush.bf16.msra.mxu0 0
    %2768 = vmatpush.bf16.msra.mxu0 0
    %2769 = vmatpush.bf16.msra.mxu0 0
    %2770 = vmatpush.bf16.msra.mxu0 0
    %2771 = vmatpush.bf16.msra.mxu0 %v2762
    %2772 = vmatmul.bf16.gmra.mxu0 %v2759
    %v2773 = vpop.f32.mrf.mxu0
    %v2774 = vadd.f32 0.0, %v2773
    %v2775 = vpop.f32.mrf.mxu0
    %2776 = vdwg.mxu0
    %2777 = vst [vmem:[#allocation1] ss:$9 sm:$0xff] %v371
    %v2778 = vld [vmem:[#allocation1] sm:$0xff]
    %2780 = vrot.lane.b32.xlu0 %v2778, 80
    %v2781 = vpop.permute.xlu0 %2780
    %v2783 = vsel %vm737, %v2723, 0
    %v2786 = vsel %vm299, %v2781, 0
    %2788 = vmatpush.bf16.msra.mxu0 0
    %2789 = vmatpush.bf16.msra.mxu0 0
    %2790 = vmatpush.bf16.msra.mxu0 0
    %2791 = vmatpush.bf16.msra.mxu0 0
    %2792 = vmatpush.bf16.msra.mxu0 0
    %2793 = vmatpush.bf16.msra.mxu0 0
    %2794 = vmatpush.bf16.msra.mxu0 0
    %2795 = vmatpush.bf16.msra.mxu0 %v2786
    %2796 = vmatmul.bf16.gmra.mxu0 %v2783
    %v2797 = vpop.f32.mrf.mxu0
    %v2798 = vadd.f32 0.0, %v2797
    %v2799 = vpop.f32.mrf.mxu0
    %2800 = vdwg.mxu0
    %2801 = vst [vmem:[#allocation1] ss:$9 sm:$0xff] %v374
    %v2802 = vld [vmem:[#allocation1] sm:$0xff]
    %2804 = vrot.lane.b32.xlu0 %v2802, 80
    %v2805 = vpop.permute.xlu0 %2804
    %v2807 = vsel %vm737, %v2724, 0
    %v2810 = vsel %vm299, %v2805, 0
    %2812 = vmatpush.bf16.msra.mxu0 0
    %2813 = vmatpush.bf16.msra.mxu0 0
    %2814 = vmatpush.bf16.msra.mxu0 0
    %2815 = vmatpush.bf16.msra.mxu0 0
    %2816 = vmatpush.bf16.msra.mxu0 0
    %2817 = vmatpush.bf16.msra.mxu0 0
    %2818 = vmatpush.bf16.msra.mxu0 0
    %2819 = vmatpush.bf16.msra.mxu0 %v2810
    %2820 = vmatmul.bf16.gmra.mxu0 %v2807
    %v2821 = vpop.f32.mrf.mxu0
    %v2822 = vadd.f32 0.0, %v2821
    %v2823 = vpop.f32.mrf.mxu0
    %2824 = vdwg.mxu0
    %2825 = vst [vmem:[#allocation1] ss:$9 sm:$0xff] %v377
    %v2826 = vld [vmem:[#allocation1] sm:$0xff]
    %2828 = vrot.lane.b32.xlu0 %v2826, 80
    %v2829 = vpop.permute.xlu0 %2828
    %v2831 = vsel %vm737, %v2725, 0
    %v2834 = vsel %vm299, %v2829, 0
    %2836 = vmatpush.bf16.msra.mxu0 0
    %2837 = vmatpush.bf16.msra.mxu0 0
    %2838 = vmatpush.bf16.msra.mxu0 0
    %2839 = vmatpush.bf16.msra.mxu0 0
    %2840 = vmatpush.bf16.msra.mxu0 0
    %2841 = vmatpush.bf16.msra.mxu0 0
    %2842 = vmatpush.bf16.msra.mxu0 0
    %2843 = vmatpush.bf16.msra.mxu0 %v2834
    %2844 = vmatmul.bf16.gmra.mxu0 %v2831
    %v2845 = vpop.f32.mrf.mxu0
    %v2846 = vadd.f32 0.0, %v2845
    %v2847 = vpop.f32.mrf.mxu0
    %2848 = vdwg.mxu0
    %2849 = vst [vmem:[#allocation1] ss:$9 sm:$0xff] %v380
    %v2850 = vld [vmem:[#allocation1] sm:$0xff]
    %2852 = vrot.lane.b32.xlu0 %v2850, 80
    %v2853 = vpop.permute.xlu0 %2852
    %v2855 = vsel %vm737, %v2726, 0
    %v2858 = vsel %vm299, %v2853, 0
    %2860 = vmatpush.bf16.msra.mxu0 0
    %2861 = vmatpush.bf16.msra.mxu0 0
    %2862 = vmatpush.bf16.msra.mxu0 0
    %2863 = vmatpush.bf16.msra.mxu0 0
    %2864 = vmatpush.bf16.msra.mxu0 0
    %2865 = vmatpush.bf16.msra.mxu0 0
    %2866 = vmatpush.bf16.msra.mxu0 0
    %2867 = vmatpush.bf16.msra.mxu0 %v2858
    %2868 = vmatmul.bf16.gmra.mxu0 %v2855
    %v2869 = vpop.f32.mrf.mxu0
    %v2870 = vadd.f32 0.0, %v2869
    %v2871 = vpop.f32.mrf.mxu0
    %2872 = vdwg.mxu0
    %2873 = vst [vmem:[#allocation1] ss:$9 sm:$0xff] %v383
    %v2874 = vld [vmem:[#allocation1] sm:$0xff]
    %2876 = vrot.lane.b32.xlu0 %v2874, 80
    %v2877 = vpop.permute.xlu0 %2876
    %v2879 = vsel %vm737, %v2727, 0
    %v2882 = vsel %vm299, %v2877, 0
    %2884 = vmatpush.bf16.msra.mxu0 0
    %2885 = vmatpush.bf16.msra.mxu0 0
    %2886 = vmatpush.bf16.msra.mxu0 0
    %2887 = vmatpush.bf16.msra.mxu0 0
    %2888 = vmatpush.bf16.msra.mxu0 0
    %2889 = vmatpush.bf16.msra.mxu0 0
    %2890 = vmatpush.bf16.msra.mxu0 0
    %2891 = vmatpush.bf16.msra.mxu0 %v2882
    %2892 = vmatmul.bf16.gmra.mxu0 %v2879
    %v2893 = vpop.f32.mrf.mxu0
    %v2894 = vadd.f32 0.0, %v2893
    %v2895 = vpop.f32.mrf.mxu0
    %2896 = vdwg.mxu0
    %2897 = vst [vmem:[#allocation1] ss:$9 sm:$0xff] %v386
    %v2898 = vld [vmem:[#allocation1] sm:$0xff]
    %2900 = vrot.lane.b32.xlu0 %v2898, 80
    %v2901 = vpop.permute.xlu0 %2900
    %v2903 = vsel %vm737, %v2728, 0
    %v2906 = vsel %vm299, %v2901, 0
    %2908 = vmatpush.bf16.msra.mxu0 0
    %2909 = vmatpush.bf16.msra.mxu0 0
    %2910 = vmatpush.bf16.msra.mxu0 0
    %2911 = vmatpush.bf16.msra.mxu0 0
    %2912 = vmatpush.bf16.msra.mxu0 0
    %2913 = vmatpush.bf16.msra.mxu0 0
    %2914 = vmatpush.bf16.msra.mxu0 0
    %2915 = vmatpush.bf16.msra.mxu0 %v2906
    %2916 = vmatmul.bf16.gmra.mxu0 %v2903
    %v2917 = vpop.f32.mrf.mxu0
    %v2918 = vadd.f32 0.0, %v2917
    %v2919 = vpop.f32.mrf.mxu0
    %2920 = vdwg.mxu0
    %v2921 = vld [vmem:[%s3 + $0x18] sm:$0xf]
    %v2922 = vld [vmem:[%s3 + $0x1c] sm:$0xf]
    %2931 = vst [vmem:[#allocation1] ss:$4 sm:$0xff] %v2750
    %s2932 = scalar_lea.vmem [#allocation1], 1
    %2933 = vst [vmem:[%s2932] ss:$4 sm:$0xff] %v2774
    %s2934 = scalar_lea.vmem [#allocation1], 2
    %2935 = vst [vmem:[%s2934] ss:$4 sm:$0xff] %v2798
    %s2936 = scalar_lea.vmem [#allocation1], 3
    %2937 = vst [vmem:[%s2936] ss:$4 sm:$0xff] %v2822
    %s2938 = scalar_lea.vmem [#allocation1], 32
    %2939 = vst [vmem:[%s2938] ss:$4 sm:$0xff] %v2846
    %s2940 = scalar_lea.vmem [#allocation1], 33
    %2941 = vst [vmem:[%s2940] ss:$4 sm:$0xff] %v2870
    %s2942 = scalar_lea.vmem [#allocation1], 34
    %2943 = vst [vmem:[%s2942] ss:$4 sm:$0xff] %v2894
    %s2944 = scalar_lea.vmem [#allocation1], 35
    %2945 = vst [vmem:[%s2944] ss:$4 sm:$0xff] %v2918
    %v2946 = vld.sshfl [vmem:[#allocation1] sm:$0xff pattern:$0x73625140]
    %v2947 = vld.sshfl [vmem:[#allocation1 + $0x20] sm:$0xff pattern:$0x73625140]
    %v2950 = vpack.c.bf16 %v2947, %v2946
    %v2953 = vunpack.c.l.b16 %v2921
    %v2954 = vunpack.c.l.b16 %v2922
    %v2955 = vpack.c.b16 %v2954, %v2953
    %v2958 = vsel %vm387, %v2950, 0
    %2960 = vmatpush.bf16.msra.mxu0 0
    %2961 = vmatpush.bf16.msra.mxu0 0
    %2962 = vmatpush.bf16.msra.mxu0 0
    %2963 = vmatpush.bf16.msra.mxu0 0
    %2964 = vmatpush.bf16.msra.mxu0 0
    %2965 = vmatpush.bf16.msra.mxu0 0
    %2966 = vmatpush.bf16.msra.mxu0 0
    %2967 = vmatpush.bf16.msra.mxu0 %v2955
    %2968 = vmatmul.bf16.gmra.mxu0 %v2958
    %v2969 = vpop.f32.mrf.mxu0
    %v2970 = vadd.f32 0.0, %v2969
    %v2971 = vpop.f32.mrf.mxu0
    %v2972 = vadd.f32 0.0, %v2971
    %2973 = vdwg.mxu0
    %v2974 = vadd.f32 %v2295, %v2970
    %v2975 = vadd.f32 %v2296, %v2972
    %2976 = vst [vmem:[#allocation1] ss:$9 sm:$0xff] %v302
    %v2977 = vld [vmem:[#allocation1] sm:$0xff]
    %2979 = vrot.lane.b32.xlu0 %v2977, 64
    %v2980 = vpop.permute.xlu0 %2979
    %2981 = vst [vmem:[#allocation1] ss:$9 sm:$0xff] %v335
    %v2982 = vld [vmem:[#allocation1] sm:$0xff]
    %2984 = vrot.lane.b32.xlu0 %v2982, 64
    %v2985 = vpop.permute.xlu0 %2984
    %v2987 = vsel %vm387, %v2980, 0
    %v2990 = vsel %vm387, %v2985, 0
    %2992 = vmatpush.bf16.xpose.msra.mxu0 0
    %2993 = vmatpush.bf16.xpose.msra.mxu0 0
    %2994 = vmatpush.bf16.xpose.msra.mxu0 0
    %2995 = vmatpush.bf16.xpose.msra.mxu0 0
    %2996 = vmatpush.bf16.xpose.msra.mxu0 0
    %2997 = vmatpush.bf16.xpose.msra.mxu0 0
    %2998 = vmatpush.bf16.xpose.msra.mxu0 0
    %2999 = vmatpush.bf16.xpose.msra.mxu0 %v2990
    %3000 = vmatmul.bf16.gmra.mxu0 %v2987
    %v3001 = vpop.f32.mrf.mxu0
    %v3002 = vadd.f32 0.0, %v3001
    %v3003 = vpop.f32.mrf.mxu0
    %3004 = vdwg.mxu0
    %3005 = vst [vmem:[#allocation1] ss:$9 sm:$0xff] %v306
    %v3006 = vld [vmem:[#allocation1] sm:$0xff]
    %3008 = vrot.lane.b32.xlu0 %v3006, 64
    %v3009 = vpop.permute.xlu0 %3008
    %3010 = vst [vmem:[#allocation1] ss:$9 sm:$0xff] %v338
    %v3011 = vld [vmem:[#allocation1] sm:$0xff]
    %3013 = vrot.lane.b32.xlu0 %v3011, 64
    %v3014 = vpop.permute.xlu0 %3013
    %v3016 = vsel %vm387, %v3009, 0
    %v3019 = vsel %vm387, %v3014, 0
    %3021 = vmatpush.bf16.xpose.msra.mxu0 0
    %3022 = vmatpush.bf16.xpose.msra.mxu0 0
    %3023 = vmatpush.bf16.xpose.msra.mxu0 0
    %3024 = vmatpush.bf16.xpose.msra.mxu0 0
    %3025 = vmatpush.bf16.xpose.msra.mxu0 0
    %3026 = vmatpush.bf16.xpose.msra.mxu0 0
    %3027 = vmatpush.bf16.xpose.msra.mxu0 0
    %3028 = vmatpush.bf16.xpose.msra.mxu0 %v3019
    %3029 = vmatmul.bf16.gmra.mxu0 %v3016
    %v3030 = vpop.f32.mrf.mxu0
    %v3031 = vadd.f32 0.0, %v3030
    %v3032 = vpop.f32.mrf.mxu0
    %3033 = vdwg.mxu0
    %3034 = vst [vmem:[#allocation1] ss:$9 sm:$0xff] %v310
    %v3035 = vld [vmem:[#allocation1] sm:$0xff]
    %3037 = vrot.lane.b32.xlu0 %v3035, 64
    %v3038 = vpop.permute.xlu0 %3037
    %3039 = vst [vmem:[#allocation1] ss:$9 sm:$0xff] %v341
    %v3040 = vld [vmem:[#allocation1] sm:$0xff]
    %3042 = vrot.lane.b32.xlu0 %v3040, 64
    %v3043 = vpop.permute.xlu0 %3042
    %v3045 = vsel %vm387, %v3038, 0
    %v3048 = vsel %vm387, %v3043, 0
    %3050 = vmatpush.bf16.xpose.msra.mxu0 0
    %3051 = vmatpush.bf16.xpose.msra.mxu0 0
    %3052 = vmatpush.bf16.xpose.msra.mxu0 0
    %3053 = vmatpush.bf16.xpose.msra.mxu0 0
    %3054 = vmatpush.bf16.xpose.msra.mxu0 0
    %3055 = vmatpush.bf16.xpose.msra.mxu0 0
    %3056 = vmatpush.bf16.xpose.msra.mxu0 0
    %3057 = vmatpush.bf16.xpose.msra.mxu0 %v3048
    %3058 = vmatmul.bf16.gmra.mxu0 %v3045
    %v3059 = vpop.f32.mrf.mxu0
    %v3060 = vadd.f32 0.0, %v3059
    %v3061 = vpop.f32.mrf.mxu0
    %3062 = vdwg.mxu0
    %3063 = vst [vmem:[#allocation1] ss:$9 sm:$0xff] %v314
    %v3064 = vld [vmem:[#allocation1] sm:$0xff]
    %3066 = vrot.lane.b32.xlu0 %v3064, 64
    %v3067 = vpop.permute.xlu0 %3066
    %3068 = vst [vmem:[#allocation1] ss:$9 sm:$0xff] %v344
    %v3069 = vld [vmem:[#allocation1] sm:$0xff]
    %3071 = vrot.lane.b32.xlu0 %v3069, 64
    %v3072 = vpop.permute.xlu0 %3071
    %v3074 = vsel %vm387, %v3067, 0
    %v3077 = vsel %vm387, %v3072, 0
    %3079 = vmatpush.bf16.xpose.msra.mxu0 0
    %3080 = vmatpush.bf16.xpose.msra.mxu0 0
    %3081 = vmatpush.bf16.xpose.msra.mxu0 0
    %3082 = vmatpush.bf16.xpose.msra.mxu0 0
    %3083 = vmatpush.bf16.xpose.msra.mxu0 0
    %3084 = vmatpush.bf16.xpose.msra.mxu0 0
    %3085 = vmatpush.bf16.xpose.msra.mxu0 0
    %3086 = vmatpush.bf16.xpose.msra.mxu0 %v3077
    %3087 = vmatmul.bf16.gmra.mxu0 %v3074
    %v3088 = vpop.f32.mrf.mxu0
    %v3089 = vadd.f32 0.0, %v3088
    %v3090 = vpop.f32.mrf.mxu0
    %3091 = vdwg.mxu0
    %3092 = vst [vmem:[#allocation1] ss:$9 sm:$0xff] %v317
    %v3093 = vld [vmem:[#allocation1] sm:$0xff]
    %3095 = vrot.lane.b32.xlu0 %v3093, 64
    %v3096 = vpop.permute.xlu0 %3095
    %3097 = vst [vmem:[#allocation1] ss:$9 sm:$0xff] %v347
    %v3098 = vld [vmem:[#allocation1] sm:$0xff]
    %3100 = vrot.lane.b32.xlu0 %v3098, 64
    %v3101 = vpop.permute.xlu0 %3100
    %v3103 = vsel %vm387, %v3096, 0
    %v3106 = vsel %vm387, %v3101, 0
    %3108 = vmatpush.bf16.xpose.msra.mxu0 0
    %3109 = vmatpush.bf16.xpose.msra.mxu0 0
    %3110 = vmatpush.bf16.xpose.msra.mxu0 0
    %3111 = vmatpush.bf16.xpose.msra.mxu0 0
    %3112 = vmatpush.bf16.xpose.msra.mxu0 0
    %3113 = vmatpush.bf16.xpose.msra.mxu0 0
    %3114 = vmatpush.bf16.xpose.msra.mxu0 0
    %3115 = vmatpush.bf16.xpose.msra.mxu0 %v3106
    %3116 = vmatmul.bf16.gmra.mxu0 %v3103
    %v3117 = vpop.f32.mrf.mxu0
    %v3118 = vadd.f32 0.0, %v3117
    %v3119 = vpop.f32.mrf.mxu0
    %3120 = vdwg.mxu0
    %3121 = vst [vmem:[#allocation1] ss:$9 sm:$0xff] %v320
    %v3122 = vld [vmem:[#allocation1] sm:$0xff]
    %3124 = vrot.lane.b32.xlu0 %v3122, 64
    %v3125 = vpop.permute.xlu0 %3124
    %3126 = vst [vmem:[#allocation1] ss:$9 sm:$0xff] %v350
    %v3127 = vld [vmem:[#allocation1] sm:$0xff]
    %3129 = vrot.lane.b32.xlu0 %v3127, 64
    %v3130 = vpop.permute.xlu0 %3129
    %v3132 = vsel %vm387, %v3125, 0
    %v3135 = vsel %vm387, %v3130, 0
    %3137 = vmatpush.bf16.xpose.msra.mxu0 0
    %3138 = vmatpush.bf16.xpose.msra.mxu0 0
    %3139 = vmatpush.bf16.xpose.msra.mxu0 0
    %3140 = vmatpush.bf16.xpose.msra.mxu0 0
    %3141 = vmatpush.bf16.xpose.msra.mxu0 0
    %3142 = vmatpush.bf16.xpose.msra.mxu0 0
    %3143 = vmatpush.bf16.xpose.msra.mxu0 0
    %3144 = vmatpush.bf16.xpose.msra.mxu0 %v3135
    %3145 = vmatmul.bf16.gmra.mxu0 %v3132
    %v3146 = vpop.f32.mrf.mxu0
    %v3147 = vadd.f32 0.0, %v3146
    %v3148 = vpop.f32.mrf.mxu0
    %3149 = vdwg.mxu0
    %3150 = vst [vmem:[#allocation1] ss:$9 sm:$0xff] %v323
    %v3151 = vld [vmem:[#allocation1] sm:$0xff]
    %3153 = vrot.lane.b32.xlu0 %v3151, 64
    %v3154 = vpop.permute.xlu0 %3153
    %3155 = vst [vmem:[#allocation1] ss:$9 sm:$0xff] %v353
    %v3156 = vld [vmem:[#allocation1] sm:$0xff]
    %3158 = vrot.lane.b32.xlu0 %v3156, 64
    %v3159 = vpop.permute.xlu0 %3158
    %v3161 = vsel %vm387, %v3154, 0
    %v3164 = vsel %vm387, %v3159, 0
    %3166 = vmatpush.bf16.xpose.msra.mxu0 0
    %3167 = vmatpush.bf16.xpose.msra.mxu0 0
    %3168 = vmatpush.bf16.xpose.msra.mxu0 0
    %3169 = vmatpush.bf16.xpose.msra.mxu0 0
    %3170 = vmatpush.bf16.xpose.msra.mxu0 0
    %3171 = vmatpush.bf16.xpose.msra.mxu0 0
    %3172 = vmatpush.bf16.xpose.msra.mxu0 0
    %3173 = vmatpush.bf16.xpose.msra.mxu0 %v3164
    %3174 = vmatmul.bf16.gmra.mxu0 %v3161
    %v3175 = vpop.f32.mrf.mxu0
    %v3176 = vadd.f32 0.0, %v3175
    %v3177 = vpop.f32.mrf.mxu0
    %3178 = vdwg.mxu0
    %3179 = vst [vmem:[#allocation1] ss:$9 sm:$0xff] %v326
    %v3180 = vld [vmem:[#allocation1] sm:$0xff]
    %3182 = vrot.lane.b32.xlu0 %v3180, 64
    %v3183 = vpop.permute.xlu0 %3182
    %3184 = vst [vmem:[#allocation1] ss:$9 sm:$0xff] %v356
    %v3185 = vld [vmem:[#allocation1] sm:$0xff]
    %3187 = vrot.lane.b32.xlu0 %v3185, 64
    %v3188 = vpop.permute.xlu0 %3187
    %v3190 = vsel %vm387, %v3183, 0
    %v3193 = vsel %vm387, %v3188, 0
    %3195 = vmatpush.bf16.xpose.msra.mxu0 0
    %3196 = vmatpush.bf16.xpose.msra.mxu0 0
    %3197 = vmatpush.bf16.xpose.msra.mxu0 0
    %3198 = vmatpush.bf16.xpose.msra.mxu0 0
    %3199 = vmatpush.bf16.xpose.msra.mxu0 0
    %3200 = vmatpush.bf16.xpose.msra.mxu0 0
    %3201 = vmatpush.bf16.xpose.msra.mxu0 0
    %3202 = vmatpush.bf16.xpose.msra.mxu0 %v3193
    %3203 = vmatmul.bf16.gmra.mxu0 %v3190
    %v3204 = vpop.f32.mrf.mxu0
    %v3205 = vadd.f32 0.0, %v3204
    %v3206 = vpop.f32.mrf.mxu0
    %3207 = vdwg.mxu0
    %v3208 = vsel %vm536, %v3002, -inf
    %3209 = vmax.xlane.f32.xlu0 %v3208
    %v3210 = vpop.xlane.xlu0 %3209
    %v3211 = vsel %vm536, %v3031, -inf
    %3212 = vmax.xlane.f32.xlu0 %v3211
    %v3213 = vpop.xlane.xlu0 %3212
    %v3214 = vsel %vm536, %v3060, -inf
    %3215 = vmax.xlane.f32.xlu0 %v3214
    %v3216 = vpop.xlane.xlu0 %3215
    %v3217 = vsel %vm536, %v3089, -inf
    %3218 = vmax.xlane.f32.xlu0 %v3217
    %v3219 = vpop.xlane.xlu0 %3218
    %v3220 = vsel %vm536, %v3118, -inf
    %3221 = vmax.xlane.f32.xlu0 %v3220
    %v3222 = vpop.xlane.xlu0 %3221
    %v3223 = vsel %vm536, %v3147, -inf
    %3224 = vmax.xlane.f32.xlu0 %v3223
    %v3225 = vpop.xlane.xlu0 %3224
    %v3226 = vsel %vm536, %v3176, -inf
    %3227 = vmax.xlane.f32.xlu0 %v3226
    %v3228 = vpop.xlane.xlu0 %3227
    %v3229 = vsel %vm536, %v3205, -inf
    %3230 = vmax.xlane.f32.xlu0 %v3229
    %v3231 = vpop.xlane.xlu0 %3230
    %v3232 = vsub.f32 %v3002, %v3210
    %v3233 = vsub.f32 %v3031, %v3213
    %v3234 = vsub.f32 %v3060, %v3216
    %v3235 = vsub.f32 %v3089, %v3219
    %v3236 = vsub.f32 %v3118, %v3222
    %v3237 = vsub.f32 %v3147, %v3225
    %v3238 = vsub.f32 %v3176, %v3228
    %v3239 = vsub.f32 %v3205, %v3231
    %v3240 = vmul.f32 %v3232, 1.442695
    %v3241 = vpow.pop %v3240
    %v3242 = vmul.f32 %v3233, 1.442695
    %v3243 = vpow.pop %v3242
    %v3244 = vmul.f32 %v3234, 1.442695
    %v3245 = vpow.pop %v3244
    %v3246 = vmul.f32 %v3235, 1.442695
    %v3247 = vpow.pop %v3246
    %v3248 = vmul.f32 %v3236, 1.442695
    %v3249 = vpow.pop %v3248
    %v3250 = vmul.f32 %v3237, 1.442695
    %v3251 = vpow.pop %v3250
    %v3252 = vmul.f32 %v3238, 1.442695
    %v3253 = vpow.pop %v3252
    %v3254 = vmul.f32 %v3239, 1.442695
    %v3255 = vpow.pop %v3254
    %v3256 = vsel %vm536, %v3241, 0.0
    %3257 = vadd.xlane.f32.xlu0 %v3256
    %v3258 = vpop.xlane.xlu0 %3257
    %v3259 = vsel %vm536, %v3243, 0.0
    %3260 = vadd.xlane.f32.xlu0 %v3259
    %v3261 = vpop.xlane.xlu0 %3260
    %v3262 = vsel %vm536, %v3245, 0.0
    %3263 = vadd.xlane.f32.xlu0 %v3262
    %v3264 = vpop.xlane.xlu0 %3263
    %v3265 = vsel %vm536, %v3247, 0.0
    %3266 = vadd.xlane.f32.xlu0 %v3265
    %v3267 = vpop.xlane.xlu0 %3266
    %v3268 = vsel %vm536, %v3249, 0.0
    %3269 = vadd.xlane.f32.xlu0 %v3268
    %v3270 = vpop.xlane.xlu0 %3269
    %v3271 = vsel %vm536, %v3251, 0.0
    %3272 = vadd.xlane.f32.xlu0 %v3271
    %v3273 = vpop.xlane.xlu0 %3272
    %v3274 = vsel %vm536, %v3253, 0.0
    %3275 = vadd.xlane.f32.xlu0 %v3274
    %v3276 = vpop.xlane.xlu0 %3275
    %v3277 = vsel %vm536, %v3255, 0.0
    %3278 = vadd.xlane.f32.xlu0 %v3277
    %v3279 = vpop.xlane.xlu0 %3278
    %v3280 = vrcp.pop %v3258
    %v3281 = vmul.f32 %v3258, %v3280
    %v3282 = vsub.f32 1.0, %v3281
    %v3283 = vmul.f32 %v3280, %v3282
    %v3284 = vadd.f32 %v3280, %v3283
    %vm3285 = vweird.f32 %v3258
    %vm3286 = vweird.f32 %v3280
    %vm3287 = vmor %vm3285, %vm3286
    %v3288 = vsel %vm3287, %v3280, %v3284
    %v3289 = vand.u32 2147483647, %v3258
    %vm3290 = vcmp.eq.f32.partialorder %v3289, 8.507059e+37
    %v3291 = vand.u32 %v3258, 2147483648
    %v3292 = vor.u32 1.1754944e-38, %v3291
    %v3293 = vsel %vm3290, %v3292, %v3288
    %v3294 = vmul.f32 %v3241, %v3293
    %v3295 = vrcp.pop %v3261
    %v3296 = vmul.f32 %v3261, %v3295
    %v3297 = vsub.f32 1.0, %v3296
    %v3298 = vmul.f32 %v3295, %v3297
    %v3299 = vadd.f32 %v3295, %v3298
    %vm3300 = vweird.f32 %v3261
    %vm3301 = vweird.f32 %v3295
    %vm3302 = vmor %vm3300, %vm3301
    %v3303 = vsel %vm3302, %v3295, %v3299
    %v3304 = vand.u32 2147483647, %v3261
    %vm3305 = vcmp.eq.f32.partialorder %v3304, 8.507059e+37
    %v3306 = vand.u32 %v3261, 2147483648
    %v3307 = vor.u32 1.1754944e-38, %v3306
    %v3308 = vsel %vm3305, %v3307, %v3303
    %v3309 = vmul.f32 %v3243, %v3308
    %v3310 = vrcp.pop %v3264
    %v3311 = vmul.f32 %v3264, %v3310
    %v3312 = vsub.f32 1.0, %v3311
    %v3313 = vmul.f32 %v3310, %v3312
    %v3314 = vadd.f32 %v3310, %v3313
    %vm3315 = vweird.f32 %v3264
    %vm3316 = vweird.f32 %v3310
    %vm3317 = vmor %vm3315, %vm3316
    %v3318 = vsel %vm3317, %v3310, %v3314
    %v3319 = vand.u32 2147483647, %v3264
    %vm3320 = vcmp.eq.f32.partialorder %v3319, 8.507059e+37
    %v3321 = vand.u32 %v3264, 2147483648
    %v3322 = vor.u32 1.1754944e-38, %v3321
    %v3323 = vsel %vm3320, %v3322, %v3318
    %v3324 = vmul.f32 %v3245, %v3323
    %v3325 = vrcp.pop %v3267
    %v3326 = vmul.f32 %v3267, %v3325
    %v3327 = vsub.f32 1.0, %v3326
    %v3328 = vmul.f32 %v3325, %v3327
    %v3329 = vadd.f32 %v3325, %v3328
    %vm3330 = vweird.f32 %v3267
    %vm3331 = vweird.f32 %v3325
    %vm3332 = vmor %vm3330, %vm3331
    %v3333 = vsel %vm3332, %v3325, %v3329
    %v3334 = vand.u32 2147483647, %v3267
    %vm3335 = vcmp.eq.f32.partialorder %v3334, 8.507059e+37
    %v3336 = vand.u32 %v3267, 2147483648
    %v3337 = vor.u32 1.1754944e-38, %v3336
    %v3338 = vsel %vm3335, %v3337, %v3333
    %v3339 = vmul.f32 %v3247, %v3338
    %v3340 = vrcp.pop %v3270
    %v3341 = vmul.f32 %v3270, %v3340
    %v3342 = vsub.f32 1.0, %v3341
    %v3343 = vmul.f32 %v3340, %v3342
    %v3344 = vadd.f32 %v3340, %v3343
    %vm3345 = vweird.f32 %v3270
    %vm3346 = vweird.f32 %v3340
    %vm3347 = vmor %vm3345, %vm3346
    %v3348 = vsel %vm3347, %v3340, %v3344
    %v3349 = vand.u32 2147483647, %v3270
    %vm3350 = vcmp.eq.f32.partialorder %v3349, 8.507059e+37
    %v3351 = vand.u32 %v3270, 2147483648
    %v3352 = vor.u32 1.1754944e-38, %v3351
    %v3353 = vsel %vm3350, %v3352, %v3348
    %v3354 = vmul.f32 %v3249, %v3353
    %v3355 = vrcp.pop %v3273
    %v3356 = vmul.f32 %v3273, %v3355
    %v3357 = vsub.f32 1.0, %v3356
    %v3358 = vmul.f32 %v3355, %v3357
    %v3359 = vadd.f32 %v3355, %v3358
    %vm3360 = vweird.f32 %v3273
    %vm3361 = vweird.f32 %v3355
    %vm3362 = vmor %vm3360, %vm3361
    %v3363 = vsel %vm3362, %v3355, %v3359
    %v3364 = vand.u32 2147483647, %v3273
    %vm3365 = vcmp.eq.f32.partialorder %v3364, 8.507059e+37
    %v3366 = vand.u32 %v3273, 2147483648
    %v3367 = vor.u32 1.1754944e-38, %v3366
    %v3368 = vsel %vm3365, %v3367, %v3363
    %v3369 = vmul.f32 %v3251, %v3368
    %v3370 = vrcp.pop %v3276
    %v3371 = vmul.f32 %v3276, %v3370
    %v3372 = vsub.f32 1.0, %v3371
    %v3373 = vmul.f32 %v3370, %v3372
    %v3374 = vadd.f32 %v3370, %v3373
    %vm3375 = vweird.f32 %v3276
    %vm3376 = vweird.f32 %v3370
    %vm3377 = vmor %vm3375, %vm3376
    %v3378 = vsel %vm3377, %v3370, %v3374
    %v3379 = vand.u32 2147483647, %v3276
    %vm3380 = vcmp.eq.f32.partialorder %v3379, 8.507059e+37
    %v3381 = vand.u32 %v3276, 2147483648
    %v3382 = vor.u32 1.1754944e-38, %v3381
    %v3383 = vsel %vm3380, %v3382, %v3378
    %v3384 = vmul.f32 %v3253, %v3383
    %v3385 = vrcp.pop %v3279
    %v3386 = vmul.f32 %v3279, %v3385
    %v3387 = vsub.f32 1.0, %v3386
    %v3388 = vmul.f32 %v3385, %v3387
    %v3389 = vadd.f32 %v3385, %v3388
    %vm3390 = vweird.f32 %v3279
    %vm3391 = vweird.f32 %v3385
    %vm3392 = vmor %vm3390, %vm3391
    %v3393 = vsel %vm3392, %v3385, %v3389
    %v3394 = vand.u32 2147483647, %v3279
    %vm3395 = vcmp.eq.f32.partialorder %v3394, 8.507059e+37
    %v3396 = vand.u32 %v3279, 2147483648
    %v3397 = vor.u32 1.1754944e-38, %v3396
    %v3398 = vsel %vm3395, %v3397, %v3393
    %v3399 = vmul.f32 %v3255, %v3398
    %v3400 = vpack.c.bf16 %v3294, %v3294
    %v3401 = vpack.c.bf16 %v3309, %v3309
    %v3402 = vpack.c.bf16 %v3324, %v3324
    %v3403 = vpack.c.bf16 %v3339, %v3339
    %v3404 = vpack.c.bf16 %v3354, %v3354
    %v3405 = vpack.c.bf16 %v3369, %v3369
    %v3406 = vpack.c.bf16 %v3384, %v3384
    %v3407 = vpack.c.bf16 %v3399, %v3399
    %3408 = vst [vmem:[#allocation1] ss:$9 sm:$0xff] %v365
    %v3409 = vld [vmem:[#allocation1] sm:$0xff]
    %3411 = vrot.lane.b32.xlu0 %v3409, 64
    %v3412 = vpop.permute.xlu0 %3411
    %v3414 = vsel %vm737, %v3400, 0
    %v3417 = vsel %vm299, %v3412, 0
    %3419 = vmatpush.bf16.msra.mxu0 0
    %3420 = vmatpush.bf16.msra.mxu0 0
    %3421 = vmatpush.bf16.msra.mxu0 0
    %3422 = vmatpush.bf16.msra.mxu0 0
    %3423 = vmatpush.bf16.msra.mxu0 0
    %3424 = vmatpush.bf16.msra.mxu0 0
    %3425 = vmatpush.bf16.msra.mxu0 0
    %3426 = vmatpush.bf16.msra.mxu0 %v3417
    %3427 = vmatmul.bf16.gmra.mxu0 %v3414
    %v3428 = vpop.f32.mrf.mxu0
    %v3429 = vadd.f32 0.0, %v3428
    %v3430 = vpop.f32.mrf.mxu0
    %3431 = vdwg.mxu0
    %3432 = vst [vmem:[#allocation1] ss:$9 sm:$0xff] %v368
    %v3433 = vld [vmem:[#allocation1] sm:$0xff]
    %3435 = vrot.lane.b32.xlu0 %v3433, 64
    %v3436 = vpop.permute.xlu0 %3435
    %v3438 = vsel %vm737, %v3401, 0
    %v3441 = vsel %vm299, %v3436, 0
    %3443 = vmatpush.bf16.msra.mxu0 0
    %3444 = vmatpush.bf16.msra.mxu0 0
    %3445 = vmatpush.bf16.msra.mxu0 0
    %3446 = vmatpush.bf16.msra.mxu0 0
    %3447 = vmatpush.bf16.msra.mxu0 0
    %3448 = vmatpush.bf16.msra.mxu0 0
    %3449 = vmatpush.bf16.msra.mxu0 0
    %3450 = vmatpush.bf16.msra.mxu0 %v3441
    %3451 = vmatmul.bf16.gmra.mxu0 %v3438
    %v3452 = vpop.f32.mrf.mxu0
    %v3453 = vadd.f32 0.0, %v3452
    %v3454 = vpop.f32.mrf.mxu0
    %3455 = vdwg.mxu0
    %3456 = vst [vmem:[#allocation1] ss:$9 sm:$0xff] %v371
    %v3457 = vld [vmem:[#allocation1] sm:$0xff]
    %3459 = vrot.lane.b32.xlu0 %v3457, 64
    %v3460 = vpop.permute.xlu0 %3459
    %v3462 = vsel %vm737, %v3402, 0
    %v3465 = vsel %vm299, %v3460, 0
    %3467 = vmatpush.bf16.msra.mxu0 0
    %3468 = vmatpush.bf16.msra.mxu0 0
    %3469 = vmatpush.bf16.msra.mxu0 0
    %3470 = vmatpush.bf16.msra.mxu0 0
    %3471 = vmatpush.bf16.msra.mxu0 0
    %3472 = vmatpush.bf16.msra.mxu0 0
    %3473 = vmatpush.bf16.msra.mxu0 0
    %3474 = vmatpush.bf16.msra.mxu0 %v3465
    %3475 = vmatmul.bf16.gmra.mxu0 %v3462
    %v3476 = vpop.f32.mrf.mxu0
    %v3477 = vadd.f32 0.0, %v3476
    %v3478 = vpop.f32.mrf.mxu0
    %3479 = vdwg.mxu0
    %3480 = vst [vmem:[#allocation1] ss:$9 sm:$0xff] %v374
    %v3481 = vld [vmem:[#allocation1] sm:$0xff]
    %3483 = vrot.lane.b32.xlu0 %v3481, 64
    %v3484 = vpop.permute.xlu0 %3483
    %v3486 = vsel %vm737, %v3403, 0
    %v3489 = vsel %vm299, %v3484, 0
    %3491 = vmatpush.bf16.msra.mxu0 0
    %3492 = vmatpush.bf16.msra.mxu0 0
    %3493 = vmatpush.bf16.msra.mxu0 0
    %3494 = vmatpush.bf16.msra.mxu0 0
    %3495 = vmatpush.bf16.msra.mxu0 0
    %3496 = vmatpush.bf16.msra.mxu0 0
    %3497 = vmatpush.bf16.msra.mxu0 0
    %3498 = vmatpush.bf16.msra.mxu0 %v3489
    %3499 = vmatmul.bf16.gmra.mxu0 %v3486
    %v3500 = vpop.f32.mrf.mxu0
    %v3501 = vadd.f32 0.0, %v3500
    %v3502 = vpop.f32.mrf.mxu0
    %3503 = vdwg.mxu0
    %3504 = vst [vmem:[#allocation1] ss:$9 sm:$0xff] %v377
    %v3505 = vld [vmem:[#allocation1] sm:$0xff]
    %3507 = vrot.lane.b32.xlu0 %v3505, 64
    %v3508 = vpop.permute.xlu0 %3507
    %v3510 = vsel %vm737, %v3404, 0
    %v3513 = vsel %vm299, %v3508, 0
    %3515 = vmatpush.bf16.msra.mxu0 0
    %3516 = vmatpush.bf16.msra.mxu0 0
    %3517 = vmatpush.bf16.msra.mxu0 0
    %3518 = vmatpush.bf16.msra.mxu0 0
    %3519 = vmatpush.bf16.msra.mxu0 0
    %3520 = vmatpush.bf16.msra.mxu0 0
    %3521 = vmatpush.bf16.msra.mxu0 0
    %3522 = vmatpush.bf16.msra.mxu0 %v3513
    %3523 = vmatmul.bf16.gmra.mxu0 %v3510
    %v3524 = vpop.f32.mrf.mxu0
    %v3525 = vadd.f32 0.0, %v3524
    %v3526 = vpop.f32.mrf.mxu0
    %3527 = vdwg.mxu0
    %3528 = vst [vmem:[#allocation1] ss:$9 sm:$0xff] %v380
    %v3529 = vld [vmem:[#allocation1] sm:$0xff]
    %3531 = vrot.lane.b32.xlu0 %v3529, 64
    %v3532 = vpop.permute.xlu0 %3531
    %v3534 = vsel %vm737, %v3405, 0
    %v3537 = vsel %vm299, %v3532, 0
    %3539 = vmatpush.bf16.msra.mxu0 0
    %3540 = vmatpush.bf16.msra.mxu0 0
    %3541 = vmatpush.bf16.msra.mxu0 0
    %3542 = vmatpush.bf16.msra.mxu0 0
    %3543 = vmatpush.bf16.msra.mxu0 0
    %3544 = vmatpush.bf16.msra.mxu0 0
    %3545 = vmatpush.bf16.msra.mxu0 0
    %3546 = vmatpush.bf16.msra.mxu0 %v3537
    %3547 = vmatmul.bf16.gmra.mxu0 %v3534
    %v3548 = vpop.f32.mrf.mxu0
    %v3549 = vadd.f32 0.0, %v3548
    %v3550 = vpop.f32.mrf.mxu0
    %3551 = vdwg.mxu0
    %3552 = vst [vmem:[#allocation1] ss:$9 sm:$0xff] %v383
    %v3553 = vld [vmem:[#allocation1] sm:$0xff]
    %3555 = vrot.lane.b32.xlu0 %v3553, 64
    %v3556 = vpop.permute.xlu0 %3555
    %v3558 = vsel %vm737, %v3406, 0
    %v3561 = vsel %vm299, %v3556, 0
    %3563 = vmatpush.bf16.msra.mxu0 0
    %3564 = vmatpush.bf16.msra.mxu0 0
    %3565 = vmatpush.bf16.msra.mxu0 0
    %3566 = vmatpush.bf16.msra.mxu0 0
    %3567 = vmatpush.bf16.msra.mxu0 0
    %3568 = vmatpush.bf16.msra.mxu0 0
    %3569 = vmatpush.bf16.msra.mxu0 0
    %3570 = vmatpush.bf16.msra.mxu0 %v3561
    %3571 = vmatmul.bf16.gmra.mxu0 %v3558
    %v3572 = vpop.f32.mrf.mxu0
    %v3573 = vadd.f32 0.0, %v3572
    %v3574 = vpop.f32.mrf.mxu0
    %3575 = vdwg.mxu0
    %3576 = vst [vmem:[#allocation1] ss:$9 sm:$0xff] %v386
    %v3577 = vld [vmem:[#allocation1] sm:$0xff]
    %3579 = vrot.lane.b32.xlu0 %v3577, 64
    %v3580 = vpop.permute.xlu0 %3579
    %v3582 = vsel %vm737, %v3407, 0
    %v3585 = vsel %vm299, %v3580, 0
    %3587 = vmatpush.bf16.msra.mxu0 0
    %3588 = vmatpush.bf16.msra.mxu0 0
    %3589 = vmatpush.bf16.msra.mxu0 0
    %3590 = vmatpush.bf16.msra.mxu0 0
    %3591 = vmatpush.bf16.msra.mxu0 0
    %3592 = vmatpush.bf16.msra.mxu0 0
    %3593 = vmatpush.bf16.msra.mxu0 0
    %3594 = vmatpush.bf16.msra.mxu0 %v3585
    %3595 = vmatmul.bf16.gmra.mxu0 %v3582
    %v3596 = vpop.f32.mrf.mxu0
    %v3597 = vadd.f32 0.0, %v3596
    %v3598 = vpop.f32.mrf.mxu0
    %3599 = vdwg.mxu0
    %v3600 = vld [vmem:[%s3 + $0x20] sm:$0xf]
    %v3601 = vld [vmem:[%s3 + $0x24] sm:$0xf]
    %3610 = vst [vmem:[#allocation1] ss:$4 sm:$0xff] %v3429
    %s3611 = scalar_lea.vmem [#allocation1], 1
    %3612 = vst [vmem:[%s3611] ss:$4 sm:$0xff] %v3453
    %s3613 = scalar_lea.vmem [#allocation1], 2
    %3614 = vst [vmem:[%s3613] ss:$4 sm:$0xff] %v3477
    %s3615 = scalar_lea.vmem [#allocation1], 3
    %3616 = vst [vmem:[%s3615] ss:$4 sm:$0xff] %v3501
    %s3617 = scalar_lea.vmem [#allocation1], 32
    %3618 = vst [vmem:[%s3617] ss:$4 sm:$0xff] %v3525
    %s3619 = scalar_lea.vmem [#allocation1], 33
    %3620 = vst [vmem:[%s3619] ss:$4 sm:$0xff] %v3549
    %s3621 = scalar_lea.vmem [#allocation1], 34
    %3622 = vst [vmem:[%s3621] ss:$4 sm:$0xff] %v3573
    %s3623 = scalar_lea.vmem [#allocation1], 35
    %3624 = vst [vmem:[%s3623] ss:$4 sm:$0xff] %v3597
    %v3625 = vld.sshfl [vmem:[#allocation1] sm:$0xff pattern:$0x73625140]
    %v3626 = vld.sshfl [vmem:[#allocation1 + $0x20] sm:$0xff pattern:$0x73625140]
    %v3629 = vpack.c.bf16 %v3626, %v3625
    %v3632 = vunpack.c.l.b16 %v3600
    %v3633 = vunpack.c.l.b16 %v3601
    %v3634 = vpack.c.b16 %v3633, %v3632
    %v3637 = vsel %vm387, %v3629, 0
    %3639 = vmatpush.bf16.msra.mxu0 0
    %3640 = vmatpush.bf16.msra.mxu0 0
    %3641 = vmatpush.bf16.msra.mxu0 0
    %3642 = vmatpush.bf16.msra.mxu0 0
    %3643 = vmatpush.bf16.msra.mxu0 0
    %3644 = vmatpush.bf16.msra.mxu0 0
    %3645 = vmatpush.bf16.msra.mxu0 0
    %3646 = vmatpush.bf16.msra.mxu0 %v3634
    %3647 = vmatmul.bf16.gmra.mxu0 %v3637
    %v3648 = vpop.f32.mrf.mxu0
    %v3649 = vadd.f32 0.0, %v3648
    %v3650 = vpop.f32.mrf.mxu0
    %v3651 = vadd.f32 0.0, %v3650
    %3652 = vdwg.mxu0
    %v3653 = vadd.f32 %v2974, %v3649
    %v3654 = vadd.f32 %v2975, %v3651
    %3655 = vst [vmem:[#allocation1] ss:$9 sm:$0xff] %v302
    %v3656 = vld [vmem:[#allocation1] sm:$0xff]
    %3658 = vrot.lane.b32.xlu0 %v3656, 48
    %v3659 = vpop.permute.xlu0 %3658
    %3660 = vst [vmem:[#allocation1] ss:$9 sm:$0xff] %v335
    %v3661 = vld [vmem:[#allocation1] sm:$0xff]
    %3663 = vrot.lane.b32.xlu0 %v3661, 48
    %v3664 = vpop.permute.xlu0 %3663
    %v3666 = vsel %vm387, %v3659, 0
    %v3669 = vsel %vm387, %v3664, 0
    %3671 = vmatpush.bf16.xpose.msra.mxu0 0
    %3672 = vmatpush.bf16.xpose.msra.mxu0 0
    %3673 = vmatpush.bf16.xpose.msra.mxu0 0
    %3674 = vmatpush.bf16.xpose.msra.mxu0 0
    %3675 = vmatpush.bf16.xpose.msra.mxu0 0
    %3676 = vmatpush.bf16.xpose.msra.mxu0 0
    %3677 = vmatpush.bf16.xpose.msra.mxu0 0
    %3678 = vmatpush.bf16.xpose.msra.mxu0 %v3669
    %3679 = vmatmul.bf16.gmra.mxu0 %v3666
    %v3680 = vpop.f32.mrf.mxu0
    %v3681 = vadd.f32 0.0, %v3680
    %v3682 = vpop.f32.mrf.mxu0
    %3683 = vdwg.mxu0
    %3684 = vst [vmem:[#allocation1] ss:$9 sm:$0xff] %v306
    %v3685 = vld [vmem:[#allocation1] sm:$0xff]
    %3687 = vrot.lane.b32.xlu0 %v3685, 48
    %v3688 = vpop.permute.xlu0 %3687
    %3689 = vst [vmem:[#allocation1] ss:$9 sm:$0xff] %v338
    %v3690 = vld [vmem:[#allocation1] sm:$0xff]
    %3692 = vrot.lane.b32.xlu0 %v3690, 48
    %v3693 = vpop.permute.xlu0 %3692
    %v3695 = vsel %vm387, %v3688, 0
    %v3698 = vsel %vm387, %v3693, 0
    %3700 = vmatpush.bf16.xpose.msra.mxu0 0
    %3701 = vmatpush.bf16.xpose.msra.mxu0 0
    %3702 = vmatpush.bf16.xpose.msra.mxu0 0
    %3703 = vmatpush.bf16.xpose.msra.mxu0 0
    %3704 = vmatpush.bf16.xpose.msra.mxu0 0
    %3705 = vmatpush.bf16.xpose.msra.mxu0 0
    %3706 = vmatpush.bf16.xpose.msra.mxu0 0
    %3707 = vmatpush.bf16.xpose.msra.mxu0 %v3698
    %3708 = vmatmul.bf16.gmra.mxu0 %v3695
    %v3709 = vpop.f32.mrf.mxu0
    %v3710 = vadd.f32 0.0, %v3709
    %v3711 = vpop.f32.mrf.mxu0
    %3712 = vdwg.mxu0
    %3713 = vst [vmem:[#allocation1] ss:$9 sm:$0xff] %v310
    %v3714 = vld [vmem:[#allocation1] sm:$0xff]
    %3716 = vrot.lane.b32.xlu0 %v3714, 48
    %v3717 = vpop.permute.xlu0 %3716
    %3718 = vst [vmem:[#allocation1] ss:$9 sm:$0xff] %v341
    %v3719 = vld [vmem:[#allocation1] sm:$0xff]
    %3721 = vrot.lane.b32.xlu0 %v3719, 48
    %v3722 = vpop.permute.xlu0 %3721
    %v3724 = vsel %vm387, %v3717, 0
    %v3727 = vsel %vm387, %v3722, 0
    %3729 = vmatpush.bf16.xpose.msra.mxu0 0
    %3730 = vmatpush.bf16.xpose.msra.mxu0 0
    %3731 = vmatpush.bf16.xpose.msra.mxu0 0
    %3732 = vmatpush.bf16.xpose.msra.mxu0 0
    %3733 = vmatpush.bf16.xpose.msra.mxu0 0
    %3734 = vmatpush.bf16.xpose.msra.mxu0 0
    %3735 = vmatpush.bf16.xpose.msra.mxu0 0
    %3736 = vmatpush.bf16.xpose.msra.mxu0 %v3727
    %3737 = vmatmul.bf16.gmra.mxu0 %v3724
    %v3738 = vpop.f32.mrf.mxu0
    %v3739 = vadd.f32 0.0, %v3738
    %v3740 = vpop.f32.mrf.mxu0
    %3741 = vdwg.mxu0
    %3742 = vst [vmem:[#allocation1] ss:$9 sm:$0xff] %v314
    %v3743 = vld [vmem:[#allocation1] sm:$0xff]
    %3745 = vrot.lane.b32.xlu0 %v3743, 48
    %v3746 = vpop.permute.xlu0 %3745
    %3747 = vst [vmem:[#allocation1] ss:$9 sm:$0xff] %v344
    %v3748 = vld [vmem:[#allocation1] sm:$0xff]
    %3750 = vrot.lane.b32.xlu0 %v3748, 48
    %v3751 = vpop.permute.xlu0 %3750
    %v3753 = vsel %vm387, %v3746, 0
    %v3756 = vsel %vm387, %v3751, 0
    %3758 = vmatpush.bf16.xpose.msra.mxu0 0
    %3759 = vmatpush.bf16.xpose.msra.mxu0 0
    %3760 = vmatpush.bf16.xpose.msra.mxu0 0
    %3761 = vmatpush.bf16.xpose.msra.mxu0 0
    %3762 = vmatpush.bf16.xpose.msra.mxu0 0
    %3763 = vmatpush.bf16.xpose.msra.mxu0 0
    %3764 = vmatpush.bf16.xpose.msra.mxu0 0
    %3765 = vmatpush.bf16.xpose.msra.mxu0 %v3756
    %3766 = vmatmul.bf16.gmra.mxu0 %v3753
    %v3767 = vpop.f32.mrf.mxu0
    %v3768 = vadd.f32 0.0, %v3767
    %v3769 = vpop.f32.mrf.mxu0
    %3770 = vdwg.mxu0
    %3771 = vst [vmem:[#allocation1] ss:$9 sm:$0xff] %v317
    %v3772 = vld [vmem:[#allocation1] sm:$0xff]
    %3774 = vrot.lane.b32.xlu0 %v3772, 48
    %v3775 = vpop.permute.xlu0 %3774
    %3776 = vst [vmem:[#allocation1] ss:$9 sm:$0xff] %v347
    %v3777 = vld [vmem:[#allocation1] sm:$0xff]
    %3779 = vrot.lane.b32.xlu0 %v3777, 48
    %v3780 = vpop.permute.xlu0 %3779
    %v3782 = vsel %vm387, %v3775, 0
    %v3785 = vsel %vm387, %v3780, 0
    %3787 = vmatpush.bf16.xpose.msra.mxu0 0
    %3788 = vmatpush.bf16.xpose.msra.mxu0 0
    %3789 = vmatpush.bf16.xpose.msra.mxu0 0
    %3790 = vmatpush.bf16.xpose.msra.mxu0 0
    %3791 = vmatpush.bf16.xpose.msra.mxu0 0
    %3792 = vmatpush.bf16.xpose.msra.mxu0 0
    %3793 = vmatpush.bf16.xpose.msra.mxu0 0
    %3794 = vmatpush.bf16.xpose.msra.mxu0 %v3785
    %3795 = vmatmul.bf16.gmra.mxu0 %v3782
    %v3796 = vpop.f32.mrf.mxu0
    %v3797 = vadd.f32 0.0, %v3796
    %v3798 = vpop.f32.mrf.mxu0
    %3799 = vdwg.mxu0
    %3800 = vst [vmem:[#allocation1] ss:$9 sm:$0xff] %v320
    %v3801 = vld [vmem:[#allocation1] sm:$0xff]
    %3803 = vrot.lane.b32.xlu0 %v3801, 48
    %v3804 = vpop.permute.xlu0 %3803
    %3805 = vst [vmem:[#allocation1] ss:$9 sm:$0xff] %v350
    %v3806 = vld [vmem:[#allocation1] sm:$0xff]
    %3808 = vrot.lane.b32.xlu0 %v3806, 48
    %v3809 = vpop.permute.xlu0 %3808
    %v3811 = vsel %vm387, %v3804, 0
    %v3814 = vsel %vm387, %v3809, 0
    %3816 = vmatpush.bf16.xpose.msra.mxu0 0
    %3817 = vmatpush.bf16.xpose.msra.mxu0 0
    %3818 = vmatpush.bf16.xpose.msra.mxu0 0
    %3819 = vmatpush.bf16.xpose.msra.mxu0 0
    %3820 = vmatpush.bf16.xpose.msra.mxu0 0
    %3821 = vmatpush.bf16.xpose.msra.mxu0 0
    %3822 = vmatpush.bf16.xpose.msra.mxu0 0
    %3823 = vmatpush.bf16.xpose.msra.mxu0 %v3814
    %3824 = vmatmul.bf16.gmra.mxu0 %v3811
    %v3825 = vpop.f32.mrf.mxu0
    %v3826 = vadd.f32 0.0, %v3825
    %v3827 = vpop.f32.mrf.mxu0
    %3828 = vdwg.mxu0
    %3829 = vst [vmem:[#allocation1] ss:$9 sm:$0xff] %v323
    %v3830 = vld [vmem:[#allocation1] sm:$0xff]
    %3832 = vrot.lane.b32.xlu0 %v3830, 48
    %v3833 = vpop.permute.xlu0 %3832
    %3834 = vst [vmem:[#allocation1] ss:$9 sm:$0xff] %v353
    %v3835 = vld [vmem:[#allocation1] sm:$0xff]
    %3837 = vrot.lane.b32.xlu0 %v3835, 48
    %v3838 = vpop.permute.xlu0 %3837
    %v3840 = vsel %vm387, %v3833, 0
    %v3843 = vsel %vm387, %v3838, 0
    %3845 = vmatpush.bf16.xpose.msra.mxu0 0
    %3846 = vmatpush.bf16.xpose.msra.mxu0 0
    %3847 = vmatpush.bf16.xpose.msra.mxu0 0
    %3848 = vmatpush.bf16.xpose.msra.mxu0 0
    %3849 = vmatpush.bf16.xpose.msra.mxu0 0
    %3850 = vmatpush.bf16.xpose.msra.mxu0 0
    %3851 = vmatpush.bf16.xpose.msra.mxu0 0
    %3852 = vmatpush.bf16.xpose.msra.mxu0 %v3843
    %3853 = vmatmul.bf16.gmra.mxu0 %v3840
    %v3854 = vpop.f32.mrf.mxu0
    %v3855 = vadd.f32 0.0, %v3854
    %v3856 = vpop.f32.mrf.mxu0
    %3857 = vdwg.mxu0
    %3858 = vst [vmem:[#allocation1] ss:$9 sm:$0xff] %v326
    %v3859 = vld [vmem:[#allocation1] sm:$0xff]
    %3861 = vrot.lane.b32.xlu0 %v3859, 48
    %v3862 = vpop.permute.xlu0 %3861
    %3863 = vst [vmem:[#allocation1] ss:$9 sm:$0xff] %v356
    %v3864 = vld [vmem:[#allocation1] sm:$0xff]
    %3866 = vrot.lane.b32.xlu0 %v3864, 48
    %v3867 = vpop.permute.xlu0 %3866
    %v3869 = vsel %vm387, %v3862, 0
    %v3872 = vsel %vm387, %v3867, 0
    %3874 = vmatpush.bf16.xpose.msra.mxu0 0
    %3875 = vmatpush.bf16.xpose.msra.mxu0 0
    %3876 = vmatpush.bf16.xpose.msra.mxu0 0
    %3877 = vmatpush.bf16.xpose.msra.mxu0 0
    %3878 = vmatpush.bf16.xpose.msra.mxu0 0
    %3879 = vmatpush.bf16.xpose.msra.mxu0 0
    %3880 = vmatpush.bf16.xpose.msra.mxu0 0
    %3881 = vmatpush.bf16.xpose.msra.mxu0 %v3872
    %3882 = vmatmul.bf16.gmra.mxu0 %v3869
    %v3883 = vpop.f32.mrf.mxu0
    %v3884 = vadd.f32 0.0, %v3883
    %v3885 = vpop.f32.mrf.mxu0
    %3886 = vdwg.mxu0
    %v3887 = vsel %vm536, %v3681, -inf
    %3888 = vmax.xlane.f32.xlu0 %v3887
    %v3889 = vpop.xlane.xlu0 %3888
    %v3890 = vsel %vm536, %v3710, -inf
    %3891 = vmax.xlane.f32.xlu0 %v3890
    %v3892 = vpop.xlane.xlu0 %3891
    %v3893 = vsel %vm536, %v3739, -inf
    %3894 = vmax.xlane.f32.xlu0 %v3893
    %v3895 = vpop.xlane.xlu0 %3894
    %v3896 = vsel %vm536, %v3768, -inf
    %3897 = vmax.xlane.f32.xlu0 %v3896
    %v3898 = vpop.xlane.xlu0 %3897
    %v3899 = vsel %vm536, %v3797, -inf
    %3900 = vmax.xlane.f32.xlu0 %v3899
    %v3901 = vpop.xlane.xlu0 %3900
    %v3902 = vsel %vm536, %v3826, -inf
    %3903 = vmax.xlane.f32.xlu0 %v3902
    %v3904 = vpop.xlane.xlu0 %3903
    %v3905 = vsel %vm536, %v3855, -inf
    %3906 = vmax.xlane.f32.xlu0 %v3905
    %v3907 = vpop.xlane.xlu0 %3906
    %v3908 = vsel %vm536, %v3884, -inf
    %3909 = vmax.xlane.f32.xlu0 %v3908
    %v3910 = vpop.xlane.xlu0 %3909
    %v3911 = vsub.f32 %v3681, %v3889
    %v3912 = vsub.f32 %v3710, %v3892
    %v3913 = vsub.f32 %v3739, %v3895
    %v3914 = vsub.f32 %v3768, %v3898
    %v3915 = vsub.f32 %v3797, %v3901
    %v3916 = vsub.f32 %v3826, %v3904
    %v3917 = vsub.f32 %v3855, %v3907
    %v3918 = vsub.f32 %v3884, %v3910
    %v3919 = vmul.f32 %v3911, 1.442695
    %v3920 = vpow.pop %v3919
    %v3921 = vmul.f32 %v3912, 1.442695
    %v3922 = vpow.pop %v3921
    %v3923 = vmul.f32 %v3913, 1.442695
    %v3924 = vpow.pop %v3923
    %v3925 = vmul.f32 %v3914, 1.442695
    %v3926 = vpow.pop %v3925
    %v3927 = vmul.f32 %v3915, 1.442695
    %v3928 = vpow.pop %v3927
    %v3929 = vmul.f32 %v3916, 1.442695
    %v3930 = vpow.pop %v3929
    %v3931 = vmul.f32 %v3917, 1.442695
    %v3932 = vpow.pop %v3931
    %v3933 = vmul.f32 %v3918, 1.442695
    %v3934 = vpow.pop %v3933
    %v3935 = vsel %vm536, %v3920, 0.0
    %3936 = vadd.xlane.f32.xlu0 %v3935
    %v3937 = vpop.xlane.xlu0 %3936
    %v3938 = vsel %vm536, %v3922, 0.0
    %3939 = vadd.xlane.f32.xlu0 %v3938
    %v3940 = vpop.xlane.xlu0 %3939
    %v3941 = vsel %vm536, %v3924, 0.0
    %3942 = vadd.xlane.f32.xlu0 %v3941
    %v3943 = vpop.xlane.xlu0 %3942
    %v3944 = vsel %vm536, %v3926, 0.0
    %3945 = vadd.xlane.f32.xlu0 %v3944
    %v3946 = vpop.xlane.xlu0 %3945
    %v3947 = vsel %vm536, %v3928, 0.0
    %3948 = vadd.xlane.f32.xlu0 %v3947
    %v3949 = vpop.xlane.xlu0 %3948
    %v3950 = vsel %vm536, %v3930, 0.0
    %3951 = vadd.xlane.f32.xlu0 %v3950
    %v3952 = vpop.xlane.xlu0 %3951
    %v3953 = vsel %vm536, %v3932, 0.0
    %3954 = vadd.xlane.f32.xlu0 %v3953
    %v3955 = vpop.xlane.xlu0 %3954
    %v3956 = vsel %vm536, %v3934, 0.0
    %3957 = vadd.xlane.f32.xlu0 %v3956
    %v3958 = vpop.xlane.xlu0 %3957
    %v3959 = vrcp.pop %v3937
    %v3960 = vmul.f32 %v3937, %v3959
    %v3961 = vsub.f32 1.0, %v3960
    %v3962 = vmul.f32 %v3959, %v3961
    %v3963 = vadd.f32 %v3959, %v3962
    %vm3964 = vweird.f32 %v3937
    %vm3965 = vweird.f32 %v3959
    %vm3966 = vmor %vm3964, %vm3965
    %v3967 = vsel %vm3966, %v3959, %v3963
    %v3968 = vand.u32 2147483647, %v3937
    %vm3969 = vcmp.eq.f32.partialorder %v3968, 8.507059e+37
    %v3970 = vand.u32 %v3937, 2147483648
    %v3971 = vor.u32 1.1754944e-38, %v3970
    %v3972 = vsel %vm3969, %v3971, %v3967
    %v3973 = vmul.f32 %v3920, %v3972
    %v3974 = vrcp.pop %v3940
    %v3975 = vmul.f32 %v3940, %v3974
    %v3976 = vsub.f32 1.0, %v3975
    %v3977 = vmul.f32 %v3974, %v3976
    %v3978 = vadd.f32 %v3974, %v3977
    %vm3979 = vweird.f32 %v3940
    %vm3980 = vweird.f32 %v3974
    %vm3981 = vmor %vm3979, %vm3980
    %v3982 = vsel %vm3981, %v3974, %v3978
    %v3983 = vand.u32 2147483647, %v3940
    %vm3984 = vcmp.eq.f32.partialorder %v3983, 8.507059e+37
    %v3985 = vand.u32 %v3940, 2147483648
    %v3986 = vor.u32 1.1754944e-38, %v3985
    %v3987 = vsel %vm3984, %v3986, %v3982
    %v3988 = vmul.f32 %v3922, %v3987
    %v3989 = vrcp.pop %v3943
    %v3990 = vmul.f32 %v3943, %v3989
    %v3991 = vsub.f32 1.0, %v3990
    %v3992 = vmul.f32 %v3989, %v3991
    %v3993 = vadd.f32 %v3989, %v3992
    %vm3994 = vweird.f32 %v3943
    %vm3995 = vweird.f32 %v3989
    %vm3996 = vmor %vm3994, %vm3995
    %v3997 = vsel %vm3996, %v3989, %v3993
    %v3998 = vand.u32 2147483647, %v3943
    %vm3999 = vcmp.eq.f32.partialorder %v3998, 8.507059e+37
    %v4000 = vand.u32 %v3943, 2147483648
    %v4001 = vor.u32 1.1754944e-38, %v4000
    %v4002 = vsel %vm3999, %v4001, %v3997
    %v4003 = vmul.f32 %v3924, %v4002
    %v4004 = vrcp.pop %v3946
    %v4005 = vmul.f32 %v3946, %v4004
    %v4006 = vsub.f32 1.0, %v4005
    %v4007 = vmul.f32 %v4004, %v4006
    %v4008 = vadd.f32 %v4004, %v4007
    %vm4009 = vweird.f32 %v3946
    %vm4010 = vweird.f32 %v4004
    %vm4011 = vmor %vm4009, %vm4010
    %v4012 = vsel %vm4011, %v4004, %v4008
    %v4013 = vand.u32 2147483647, %v3946
    %vm4014 = vcmp.eq.f32.partialorder %v4013, 8.507059e+37
    %v4015 = vand.u32 %v3946, 2147483648
    %v4016 = vor.u32 1.1754944e-38, %v4015
    %v4017 = vsel %vm4014, %v4016, %v4012
    %v4018 = vmul.f32 %v3926, %v4017
    %v4019 = vrcp.pop %v3949
    %v4020 = vmul.f32 %v3949, %v4019
    %v4021 = vsub.f32 1.0, %v4020
    %v4022 = vmul.f32 %v4019, %v4021
    %v4023 = vadd.f32 %v4019, %v4022
    %vm4024 = vweird.f32 %v3949
    %vm4025 = vweird.f32 %v4019
    %vm4026 = vmor %vm4024, %vm4025
    %v4027 = vsel %vm4026, %v4019, %v4023
    %v4028 = vand.u32 2147483647, %v3949
    %vm4029 = vcmp.eq.f32.partialorder %v4028, 8.507059e+37
    %v4030 = vand.u32 %v3949, 2147483648
    %v4031 = vor.u32 1.1754944e-38, %v4030
    %v4032 = vsel %vm4029, %v4031, %v4027
    %v4033 = vmul.f32 %v3928, %v4032
    %v4034 = vrcp.pop %v3952
    %v4035 = vmul.f32 %v3952, %v4034
    %v4036 = vsub.f32 1.0, %v4035
    %v4037 = vmul.f32 %v4034, %v4036
    %v4038 = vadd.f32 %v4034, %v4037
    %vm4039 = vweird.f32 %v3952
    %vm4040 = vweird.f32 %v4034
    %vm4041 = vmor %vm4039, %vm4040
    %v4042 = vsel %vm4041, %v4034, %v4038
    %v4043 = vand.u32 2147483647, %v3952
    %vm4044 = vcmp.eq.f32.partialorder %v4043, 8.507059e+37
    %v4045 = vand.u32 %v3952, 2147483648
    %v4046 = vor.u32 1.1754944e-38, %v4045
    %v4047 = vsel %vm4044, %v4046, %v4042
    %v4048 = vmul.f32 %v3930, %v4047
    %v4049 = vrcp.pop %v3955
    %v4050 = vmul.f32 %v3955, %v4049
    %v4051 = vsub.f32 1.0, %v4050
    %v4052 = vmul.f32 %v4049, %v4051
    %v4053 = vadd.f32 %v4049, %v4052
    %vm4054 = vweird.f32 %v3955
    %vm4055 = vweird.f32 %v4049
    %vm4056 = vmor %vm4054, %vm4055
    %v4057 = vsel %vm4056, %v4049, %v4053
    %v4058 = vand.u32 2147483647, %v3955
    %vm4059 = vcmp.eq.f32.partialorder %v4058, 8.507059e+37
    %v4060 = vand.u32 %v3955, 2147483648
    %v4061 = vor.u32 1.1754944e-38, %v4060
    %v4062 = vsel %vm4059, %v4061, %v4057
    %v4063 = vmul.f32 %v3932, %v4062
    %v4064 = vrcp.pop %v3958
    %v4065 = vmul.f32 %v3958, %v4064
    %v4066 = vsub.f32 1.0, %v4065
    %v4067 = vmul.f32 %v4064, %v4066
    %v4068 = vadd.f32 %v4064, %v4067
    %vm4069 = vweird.f32 %v3958
    %vm4070 = vweird.f32 %v4064
    %vm4071 = vmor %vm4069, %vm4070
    %v4072 = vsel %vm4071, %v4064, %v4068
    %v4073 = vand.u32 2147483647, %v3958
    %vm4074 = vcmp.eq.f32.partialorder %v4073, 8.507059e+37
    %v4075 = vand.u32 %v3958, 2147483648
    %v4076 = vor.u32 1.1754944e-38, %v4075
    %v4077 = vsel %vm4074, %v4076, %v4072
    %v4078 = vmul.f32 %v3934, %v4077
    %v4079 = vpack.c.bf16 %v3973, %v3973
    %v4080 = vpack.c.bf16 %v3988, %v3988
    %v4081 = vpack.c.bf16 %v4003, %v4003
    %v4082 = vpack.c.bf16 %v4018, %v4018
    %v4083 = vpack.c.bf16 %v4033, %v4033
    %v4084 = vpack.c.bf16 %v4048, %v4048
    %v4085 = vpack.c.bf16 %v4063, %v4063
    %v4086 = vpack.c.bf16 %v4078, %v4078
    %4087 = vst [vmem:[#allocation1] ss:$9 sm:$0xff] %v365
    %v4088 = vld [vmem:[#allocation1] sm:$0xff]
    %4090 = vrot.lane.b32.xlu0 %v4088, 48
    %v4091 = vpop.permute.xlu0 %4090
    %v4093 = vsel %vm737, %v4079, 0
    %v4096 = vsel %vm299, %v4091, 0
    %4098 = vmatpush.bf16.msra.mxu0 0
    %4099 = vmatpush.bf16.msra.mxu0 0
    %4100 = vmatpush.bf16.msra.mxu0 0
    %4101 = vmatpush.bf16.msra.mxu0 0
    %4102 = vmatpush.bf16.msra.mxu0 0
    %4103 = vmatpush.bf16.msra.mxu0 0
    %4104 = vmatpush.bf16.msra.mxu0 0
    %4105 = vmatpush.bf16.msra.mxu0 %v4096
    %4106 = vmatmul.bf16.gmra.mxu0 %v4093
    %v4107 = vpop.f32.mrf.mxu0
    %v4108 = vadd.f32 0.0, %v4107
    %v4109 = vpop.f32.mrf.mxu0
    %4110 = vdwg.mxu0
    %4111 = vst [vmem:[#allocation1] ss:$9 sm:$0xff] %v368
    %v4112 = vld [vmem:[#allocation1] sm:$0xff]
    %4114 = vrot.lane.b32.xlu0 %v4112, 48
    %v4115 = vpop.permute.xlu0 %4114
    %v4117 = vsel %vm737, %v4080, 0
    %v4120 = vsel %vm299, %v4115, 0
    %4122 = vmatpush.bf16.msra.mxu0 0
    %4123 = vmatpush.bf16.msra.mxu0 0
    %4124 = vmatpush.bf16.msra.mxu0 0
    %4125 = vmatpush.bf16.msra.mxu0 0
    %4126 = vmatpush.bf16.msra.mxu0 0
    %4127 = vmatpush.bf16.msra.mxu0 0
    %4128 = vmatpush.bf16.msra.mxu0 0
    %4129 = vmatpush.bf16.msra.mxu0 %v4120
    %4130 = vmatmul.bf16.gmra.mxu0 %v4117
    %v4131 = vpop.f32.mrf.mxu0
    %v4132 = vadd.f32 0.0, %v4131
    %v4133 = vpop.f32.mrf.mxu0
    %4134 = vdwg.mxu0
    %4135 = vst [vmem:[#allocation1] ss:$9 sm:$0xff] %v371
    %v4136 = vld [vmem:[#allocation1] sm:$0xff]
    %4138 = vrot.lane.b32.xlu0 %v4136, 48
    %v4139 = vpop.permute.xlu0 %4138
    %v4141 = vsel %vm737, %v4081, 0
    %v4144 = vsel %vm299, %v4139, 0
    %4146 = vmatpush.bf16.msra.mxu0 0
    %4147 = vmatpush.bf16.msra.mxu0 0
    %4148 = vmatpush.bf16.msra.mxu0 0
    %4149 = vmatpush.bf16.msra.mxu0 0
    %4150 = vmatpush.bf16.msra.mxu0 0
    %4151 = vmatpush.bf16.msra.mxu0 0
    %4152 = vmatpush.bf16.msra.mxu0 0
    %4153 = vmatpush.bf16.msra.mxu0 %v4144
    %4154 = vmatmul.bf16.gmra.mxu0 %v4141
    %v4155 = vpop.f32.mrf.mxu0
    %v4156 = vadd.f32 0.0, %v4155
    %v4157 = vpop.f32.mrf.mxu0
    %4158 = vdwg.mxu0
    %4159 = vst [vmem:[#allocation1] ss:$9 sm:$0xff] %v374
    %v4160 = vld [vmem:[#allocation1] sm:$0xff]
    %4162 = vrot.lane.b32.xlu0 %v4160, 48
    %v4163 = vpop.permute.xlu0 %4162
    %v4165 = vsel %vm737, %v4082, 0
    %v4168 = vsel %vm299, %v4163, 0
    %4170 = vmatpush.bf16.msra.mxu0 0
    %4171 = vmatpush.bf16.msra.mxu0 0
    %4172 = vmatpush.bf16.msra.mxu0 0
    %4173 = vmatpush.bf16.msra.mxu0 0
    %4174 = vmatpush.bf16.msra.mxu0 0
    %4175 = vmatpush.bf16.msra.mxu0 0
    %4176 = vmatpush.bf16.msra.mxu0 0
    %4177 = vmatpush.bf16.msra.mxu0 %v4168
    %4178 = vmatmul.bf16.gmra.mxu0 %v4165
    %v4179 = vpop.f32.mrf.mxu0
    %v4180 = vadd.f32 0.0, %v4179
    %v4181 = vpop.f32.mrf.mxu0
    %4182 = vdwg.mxu0
    %4183 = vst [vmem:[#allocation1] ss:$9 sm:$0xff] %v377
    %v4184 = vld [vmem:[#allocation1] sm:$0xff]
    %4186 = vrot.lane.b32.xlu0 %v4184, 48
    %v4187 = vpop.permute.xlu0 %4186
    %v4189 = vsel %vm737, %v4083, 0
    %v4192 = vsel %vm299, %v4187, 0
    %4194 = vmatpush.bf16.msra.mxu0 0
    %4195 = vmatpush.bf16.msra.mxu0 0
    %4196 = vmatpush.bf16.msra.mxu0 0
    %4197 = vmatpush.bf16.msra.mxu0 0
    %4198 = vmatpush.bf16.msra.mxu0 0
    %4199 = vmatpush.bf16.msra.mxu0 0
    %4200 = vmatpush.bf16.msra.mxu0 0
    %4201 = vmatpush.bf16.msra.mxu0 %v4192
    %4202 = vmatmul.bf16.gmra.mxu0 %v4189
    %v4203 = vpop.f32.mrf.mxu0
    %v4204 = vadd.f32 0.0, %v4203
    %v4205 = vpop.f32.mrf.mxu0
    %4206 = vdwg.mxu0
    %4207 = vst [vmem:[#allocation1] ss:$9 sm:$0xff] %v380
    %v4208 = vld [vmem:[#allocation1] sm:$0xff]
    %4210 = vrot.lane.b32.xlu0 %v4208, 48
    %v4211 = vpop.permute.xlu0 %4210
    %v4213 = vsel %vm737, %v4084, 0
    %v4216 = vsel %vm299, %v4211, 0
    %4218 = vmatpush.bf16.msra.mxu0 0
    %4219 = vmatpush.bf16.msra.mxu0 0
    %4220 = vmatpush.bf16.msra.mxu0 0
    %4221 = vmatpush.bf16.msra.mxu0 0
    %4222 = vmatpush.bf16.msra.mxu0 0
    %4223 = vmatpush.bf16.msra.mxu0 0
    %4224 = vmatpush.bf16.msra.mxu0 0
    %4225 = vmatpush.bf16.msra.mxu0 %v4216
    %4226 = vmatmul.bf16.gmra.mxu0 %v4213
    %v4227 = vpop.f32.mrf.mxu0
    %v4228 = vadd.f32 0.0, %v4227
    %v4229 = vpop.f32.mrf.mxu0
    %4230 = vdwg.mxu0
    %4231 = vst [vmem:[#allocation1] ss:$9 sm:$0xff] %v383
    %v4232 = vld [vmem:[#allocation1] sm:$0xff]
    %4234 = vrot.lane.b32.xlu0 %v4232, 48
    %v4235 = vpop.permute.xlu0 %4234
    %v4237 = vsel %vm737, %v4085, 0
    %v4240 = vsel %vm299, %v4235, 0
    %4242 = vmatpush.bf16.msra.mxu0 0
    %4243 = vmatpush.bf16.msra.mxu0 0
    %4244 = vmatpush.bf16.msra.mxu0 0
    %4245 = vmatpush.bf16.msra.mxu0 0
    %4246 = vmatpush.bf16.msra.mxu0 0
    %4247 = vmatpush.bf16.msra.mxu0 0
    %4248 = vmatpush.bf16.msra.mxu0 0
    %4249 = vmatpush.bf16.msra.mxu0 %v4240
    %4250 = vmatmul.bf16.gmra.mxu0 %v4237
    %v4251 = vpop.f32.mrf.mxu0
    %v4252 = vadd.f32 0.0, %v4251
    %v4253 = vpop.f32.mrf.mxu0
    %4254 = vdwg.mxu0
    %4255 = vst [vmem:[#allocation1] ss:$9 sm:$0xff] %v386
    %v4256 = vld [vmem:[#allocation1] sm:$0xff]
    %4258 = vrot.lane.b32.xlu0 %v4256, 48
    %v4259 = vpop.permute.xlu0 %4258
    %v4261 = vsel %vm737, %v4086, 0
    %v4264 = vsel %vm299, %v4259, 0
    %4266 = vmatpush.bf16.msra.mxu0 0
    %4267 = vmatpush.bf16.msra.mxu0 0
    %4268 = vmatpush.bf16.msra.mxu0 0
    %4269 = vmatpush.bf16.msra.mxu0 0
    %4270 = vmatpush.bf16.msra.mxu0 0
    %4271 = vmatpush.bf16.msra.mxu0 0
    %4272 = vmatpush.bf16.msra.mxu0 0
    %4273 = vmatpush.bf16.msra.mxu0 %v4264
    %4274 = vmatmul.bf16.gmra.mxu0 %v4261
    %v4275 = vpop.f32.mrf.mxu0
    %v4276 = vadd.f32 0.0, %v4275
    %v4277 = vpop.f32.mrf.mxu0
    %4278 = vdwg.mxu0
    %v4279 = vld [vmem:[%s3 + $0x28] sm:$0xf]
    %v4280 = vld [vmem:[%s3 + $0x2c] sm:$0xf]
    %4289 = vst [vmem:[#allocation1] ss:$4 sm:$0xff] %v4108
    %s4290 = scalar_lea.vmem [#allocation1], 1
    %4291 = vst [vmem:[%s4290] ss:$4 sm:$0xff] %v4132
    %s4292 = scalar_lea.vmem [#allocation1], 2
    %4293 = vst [vmem:[%s4292] ss:$4 sm:$0xff] %v4156
    %s4294 = scalar_lea.vmem [#allocation1], 3
    %4295 = vst [vmem:[%s4294] ss:$4 sm:$0xff] %v4180
    %s4296 = scalar_lea.vmem [#allocation1], 32
    %4297 = vst [vmem:[%s4296] ss:$4 sm:$0xff] %v4204
    %s4298 = scalar_lea.vmem [#allocation1], 33
    %4299 = vst [vmem:[%s4298] ss:$4 sm:$0xff] %v4228
    %s4300 = scalar_lea.vmem [#allocation1], 34
    %4301 = vst [vmem:[%s4300] ss:$4 sm:$0xff] %v4252
    %s4302 = scalar_lea.vmem [#allocation1], 35
    %4303 = vst [vmem:[%s4302] ss:$4 sm:$0xff] %v4276
    %v4304 = vld.sshfl [vmem:[#allocation1] sm:$0xff pattern:$0x73625140]
    %v4305 = vld.sshfl [vmem:[#allocation1 + $0x20] sm:$0xff pattern:$0x73625140]
    %v4308 = vpack.c.bf16 %v4305, %v4304
    %v4311 = vunpack.c.l.b16 %v4279
    %v4312 = vunpack.c.l.b16 %v4280
    %v4313 = vpack.c.b16 %v4312, %v4311
    %v4316 = vsel %vm387, %v4308, 0
    %4318 = vmatpush.bf16.msra.mxu0 0
    %4319 = vmatpush.bf16.msra.mxu0 0
    %4320 = vmatpush.bf16.msra.mxu0 0
    %4321 = vmatpush.bf16.msra.mxu0 0
    %4322 = vmatpush.bf16.msra.mxu0 0
    %4323 = vmatpush.bf16.msra.mxu0 0
    %4324 = vmatpush.bf16.msra.mxu0 0
    %4325 = vmatpush.bf16.msra.mxu0 %v4313
    %4326 = vmatmul.bf16.gmra.mxu0 %v4316
    %v4327 = vpop.f32.mrf.mxu0
    %v4328 = vadd.f32 0.0, %v4327
    %v4329 = vpop.f32.mrf.mxu0
    %v4330 = vadd.f32 0.0, %v4329
    %4331 = vdwg.mxu0
    %v4332 = vadd.f32 %v3653, %v4328
    %v4333 = vadd.f32 %v3654, %v4330
    %4334 = vst [vmem:[#allocation1] ss:$9 sm:$0xff] %v302
    %v4335 = vld [vmem:[#allocation1] sm:$0xff]
    %4337 = vrot.lane.b32.xlu0 %v4335, 32
    %v4338 = vpop.permute.xlu0 %4337
    %4339 = vst [vmem:[#allocation1] ss:$9 sm:$0xff] %v335
    %v4340 = vld [vmem:[#allocation1] sm:$0xff]
    %4342 = vrot.lane.b32.xlu0 %v4340, 32
    %v4343 = vpop.permute.xlu0 %4342
    %v4345 = vsel %vm387, %v4338, 0
    %v4348 = vsel %vm387, %v4343, 0
    %4350 = vmatpush.bf16.xpose.msra.mxu0 0
    %4351 = vmatpush.bf16.xpose.msra.mxu0 0
    %4352 = vmatpush.bf16.xpose.msra.mxu0 0
    %4353 = vmatpush.bf16.xpose.msra.mxu0 0
    %4354 = vmatpush.bf16.xpose.msra.mxu0 0
    %4355 = vmatpush.bf16.xpose.msra.mxu0 0
    %4356 = vmatpush.bf16.xpose.msra.mxu0 0
    %4357 = vmatpush.bf16.xpose.msra.mxu0 %v4348
    %4358 = vmatmul.bf16.gmra.mxu0 %v4345
    %v4359 = vpop.f32.mrf.mxu0
    %v4360 = vadd.f32 0.0, %v4359
    %v4361 = vpop.f32.mrf.mxu0
    %4362 = vdwg.mxu0
    %4363 = vst [vmem:[#allocation1] ss:$9 sm:$0xff] %v306
    %v4364 = vld [vmem:[#allocation1] sm:$0xff]
    %4366 = vrot.lane.b32.xlu0 %v4364, 32
    %v4367 = vpop.permute.xlu0 %4366
    %4368 = vst [vmem:[#allocation1] ss:$9 sm:$0xff] %v338
    %v4369 = vld [vmem:[#allocation1] sm:$0xff]
    %4371 = vrot.lane.b32.xlu0 %v4369, 32
    %v4372 = vpop.permute.xlu0 %4371
    %v4374 = vsel %vm387, %v4367, 0
    %v4377 = vsel %vm387, %v4372, 0
    %4379 = vmatpush.bf16.xpose.msra.mxu0 0
    %4380 = vmatpush.bf16.xpose.msra.mxu0 0
    %4381 = vmatpush.bf16.xpose.msra.mxu0 0
    %4382 = vmatpush.bf16.xpose.msra.mxu0 0
    %4383 = vmatpush.bf16.xpose.msra.mxu0 0
    %4384 = vmatpush.bf16.xpose.msra.mxu0 0
    %4385 = vmatpush.bf16.xpose.msra.mxu0 0
    %4386 = vmatpush.bf16.xpose.msra.mxu0 %v4377
    %4387 = vmatmul.bf16.gmra.mxu0 %v4374
    %v4388 = vpop.f32.mrf.mxu0
    %v4389 = vadd.f32 0.0, %v4388
    %v4390 = vpop.f32.mrf.mxu0
    %4391 = vdwg.mxu0
    %4392 = vst [vmem:[#allocation1] ss:$9 sm:$0xff] %v310
    %v4393 = vld [vmem:[#allocation1] sm:$0xff]
    %4395 = vrot.lane.b32.xlu0 %v4393, 32
    %v4396 = vpop.permute.xlu0 %4395
    %4397 = vst [vmem:[#allocation1] ss:$9 sm:$0xff] %v341
    %v4398 = vld [vmem:[#allocation1] sm:$0xff]
    %4400 = vrot.lane.b32.xlu0 %v4398, 32
    %v4401 = vpop.permute.xlu0 %4400
    %v4403 = vsel %vm387, %v4396, 0
    %v4406 = vsel %vm387, %v4401, 0
    %4408 = vmatpush.bf16.xpose.msra.mxu0 0
    %4409 = vmatpush.bf16.xpose.msra.mxu0 0
    %4410 = vmatpush.bf16.xpose.msra.mxu0 0
    %4411 = vmatpush.bf16.xpose.msra.mxu0 0
    %4412 = vmatpush.bf16.xpose.msra.mxu0 0
    %4413 = vmatpush.bf16.xpose.msra.mxu0 0
    %4414 = vmatpush.bf16.xpose.msra.mxu0 0
    %4415 = vmatpush.bf16.xpose.msra.mxu0 %v4406
    %4416 = vmatmul.bf16.gmra.mxu0 %v4403
    %v4417 = vpop.f32.mrf.mxu0
    %v4418 = vadd.f32 0.0, %v4417
    %v4419 = vpop.f32.mrf.mxu0
    %4420 = vdwg.mxu0
    %4421 = vst [vmem:[#allocation1] ss:$9 sm:$0xff] %v314
    %v4422 = vld [vmem:[#allocation1] sm:$0xff]
    %4424 = vrot.lane.b32.xlu0 %v4422, 32
    %v4425 = vpop.permute.xlu0 %4424
    %4426 = vst [vmem:[#allocation1] ss:$9 sm:$0xff] %v344
    %v4427 = vld [vmem:[#allocation1] sm:$0xff]
    %4429 = vrot.lane.b32.xlu0 %v4427, 32
    %v4430 = vpop.permute.xlu0 %4429
    %v4432 = vsel %vm387, %v4425, 0
    %v4435 = vsel %vm387, %v4430, 0
    %4437 = vmatpush.bf16.xpose.msra.mxu0 0
    %4438 = vmatpush.bf16.xpose.msra.mxu0 0
    %4439 = vmatpush.bf16.xpose.msra.mxu0 0
    %4440 = vmatpush.bf16.xpose.msra.mxu0 0
    %4441 = vmatpush.bf16.xpose.msra.mxu0 0
    %4442 = vmatpush.bf16.xpose.msra.mxu0 0
    %4443 = vmatpush.bf16.xpose.msra.mxu0 0
    %4444 = vmatpush.bf16.xpose.msra.mxu0 %v4435
    %4445 = vmatmul.bf16.gmra.mxu0 %v4432
    %v4446 = vpop.f32.mrf.mxu0
    %v4447 = vadd.f32 0.0, %v4446
    %v4448 = vpop.f32.mrf.mxu0
    %4449 = vdwg.mxu0
    %4450 = vst [vmem:[#allocation1] ss:$9 sm:$0xff] %v317
    %v4451 = vld [vmem:[#allocation1] sm:$0xff]
    %4453 = vrot.lane.b32.xlu0 %v4451, 32
    %v4454 = vpop.permute.xlu0 %4453
    %4455 = vst [vmem:[#allocation1] ss:$9 sm:$0xff] %v347
    %v4456 = vld [vmem:[#allocation1] sm:$0xff]
    %4458 = vrot.lane.b32.xlu0 %v4456, 32
    %v4459 = vpop.permute.xlu0 %4458
    %v4461 = vsel %vm387, %v4454, 0
    %v4464 = vsel %vm387, %v4459, 0
    %4466 = vmatpush.bf16.xpose.msra.mxu0 0
    %4467 = vmatpush.bf16.xpose.msra.mxu0 0
    %4468 = vmatpush.bf16.xpose.msra.mxu0 0
    %4469 = vmatpush.bf16.xpose.msra.mxu0 0
    %4470 = vmatpush.bf16.xpose.msra.mxu0 0
    %4471 = vmatpush.bf16.xpose.msra.mxu0 0
    %4472 = vmatpush.bf16.xpose.msra.mxu0 0
    %4473 = vmatpush.bf16.xpose.msra.mxu0 %v4464
    %4474 = vmatmul.bf16.gmra.mxu0 %v4461
    %v4475 = vpop.f32.mrf.mxu0
    %v4476 = vadd.f32 0.0, %v4475
    %v4477 = vpop.f32.mrf.mxu0
    %4478 = vdwg.mxu0
    %4479 = vst [vmem:[#allocation1] ss:$9 sm:$0xff] %v320
    %v4480 = vld [vmem:[#allocation1] sm:$0xff]
    %4482 = vrot.lane.b32.xlu0 %v4480, 32
    %v4483 = vpop.permute.xlu0 %4482
    %4484 = vst [vmem:[#allocation1] ss:$9 sm:$0xff] %v350
    %v4485 = vld [vmem:[#allocation1] sm:$0xff]
    %4487 = vrot.lane.b32.xlu0 %v4485, 32
    %v4488 = vpop.permute.xlu0 %4487
    %v4490 = vsel %vm387, %v4483, 0
    %v4493 = vsel %vm387, %v4488, 0
    %4495 = vmatpush.bf16.xpose.msra.mxu0 0
    %4496 = vmatpush.bf16.xpose.msra.mxu0 0
    %4497 = vmatpush.bf16.xpose.msra.mxu0 0
    %4498 = vmatpush.bf16.xpose.msra.mxu0 0
    %4499 = vmatpush.bf16.xpose.msra.mxu0 0
    %4500 = vmatpush.bf16.xpose.msra.mxu0 0
    %4501 = vmatpush.bf16.xpose.msra.mxu0 0
    %4502 = vmatpush.bf16.xpose.msra.mxu0 %v4493
    %4503 = vmatmul.bf16.gmra.mxu0 %v4490
    %v4504 = vpop.f32.mrf.mxu0
    %v4505 = vadd.f32 0.0, %v4504
    %v4506 = vpop.f32.mrf.mxu0
    %4507 = vdwg.mxu0
    %4508 = vst [vmem:[#allocation1] ss:$9 sm:$0xff] %v323
    %v4509 = vld [vmem:[#allocation1] sm:$0xff]
    %4511 = vrot.lane.b32.xlu0 %v4509, 32
    %v4512 = vpop.permute.xlu0 %4511
    %4513 = vst [vmem:[#allocation1] ss:$9 sm:$0xff] %v353
    %v4514 = vld [vmem:[#allocation1] sm:$0xff]
    %4516 = vrot.lane.b32.xlu0 %v4514, 32
    %v4517 = vpop.permute.xlu0 %4516
    %v4519 = vsel %vm387, %v4512, 0
    %v4522 = vsel %vm387, %v4517, 0
    %4524 = vmatpush.bf16.xpose.msra.mxu0 0
    %4525 = vmatpush.bf16.xpose.msra.mxu0 0
    %4526 = vmatpush.bf16.xpose.msra.mxu0 0
    %4527 = vmatpush.bf16.xpose.msra.mxu0 0
    %4528 = vmatpush.bf16.xpose.msra.mxu0 0
    %4529 = vmatpush.bf16.xpose.msra.mxu0 0
    %4530 = vmatpush.bf16.xpose.msra.mxu0 0
    %4531 = vmatpush.bf16.xpose.msra.mxu0 %v4522
    %4532 = vmatmul.bf16.gmra.mxu0 %v4519
    %v4533 = vpop.f32.mrf.mxu0
    %v4534 = vadd.f32 0.0, %v4533
    %v4535 = vpop.f32.mrf.mxu0
    %4536 = vdwg.mxu0
    %4537 = vst [vmem:[#allocation1] ss:$9 sm:$0xff] %v326
    %v4538 = vld [vmem:[#allocation1] sm:$0xff]
    %4540 = vrot.lane.b32.xlu0 %v4538, 32
    %v4541 = vpop.permute.xlu0 %4540
    %4542 = vst [vmem:[#allocation1] ss:$9 sm:$0xff] %v356
    %v4543 = vld [vmem:[#allocation1] sm:$0xff]
    %4545 = vrot.lane.b32.xlu0 %v4543, 32
    %v4546 = vpop.permute.xlu0 %4545
    %v4548 = vsel %vm387, %v4541, 0
    %v4551 = vsel %vm387, %v4546, 0
    %4553 = vmatpush.bf16.xpose.msra.mxu0 0
    %4554 = vmatpush.bf16.xpose.msra.mxu0 0
    %4555 = vmatpush.bf16.xpose.msra.mxu0 0
    %4556 = vmatpush.bf16.xpose.msra.mxu0 0
    %4557 = vmatpush.bf16.xpose.msra.mxu0 0
    %4558 = vmatpush.bf16.xpose.msra.mxu0 0
    %4559 = vmatpush.bf16.xpose.msra.mxu0 0
    %4560 = vmatpush.bf16.xpose.msra.mxu0 %v4551
    %4561 = vmatmul.bf16.gmra.mxu0 %v4548
    %v4562 = vpop.f32.mrf.mxu0
    %v4563 = vadd.f32 0.0, %v4562
    %v4564 = vpop.f32.mrf.mxu0
    %4565 = vdwg.mxu0
    %v4566 = vsel %vm536, %v4360, -inf
    %4567 = vmax.xlane.f32.xlu0 %v4566
    %v4568 = vpop.xlane.xlu0 %4567
    %v4569 = vsel %vm536, %v4389, -inf
    %4570 = vmax.xlane.f32.xlu0 %v4569
    %v4571 = vpop.xlane.xlu0 %4570
    %v4572 = vsel %vm536, %v4418, -inf
    %4573 = vmax.xlane.f32.xlu0 %v4572
    %v4574 = vpop.xlane.xlu0 %4573
    %v4575 = vsel %vm536, %v4447, -inf
    %4576 = vmax.xlane.f32.xlu0 %v4575
    %v4577 = vpop.xlane.xlu0 %4576
    %v4578 = vsel %vm536, %v4476, -inf
    %4579 = vmax.xlane.f32.xlu0 %v4578
    %v4580 = vpop.xlane.xlu0 %4579
    %v4581 = vsel %vm536, %v4505, -inf
    %4582 = vmax.xlane.f32.xlu0 %v4581
    %v4583 = vpop.xlane.xlu0 %4582
    %v4584 = vsel %vm536, %v4534, -inf
    %4585 = vmax.xlane.f32.xlu0 %v4584
    %v4586 = vpop.xlane.xlu0 %4585
    %v4587 = vsel %vm536, %v4563, -inf
    %4588 = vmax.xlane.f32.xlu0 %v4587
    %v4589 = vpop.xlane.xlu0 %4588
    %v4590 = vsub.f32 %v4360, %v4568
    %v4591 = vsub.f32 %v4389, %v4571
    %v4592 = vsub.f32 %v4418, %v4574
    %v4593 = vsub.f32 %v4447, %v4577
    %v4594 = vsub.f32 %v4476, %v4580
    %v4595 = vsub.f32 %v4505, %v4583
    %v4596 = vsub.f32 %v4534, %v4586
    %v4597 = vsub.f32 %v4563, %v4589
    %v4598 = vmul.f32 %v4590, 1.442695
    %v4599 = vpow.pop %v4598
    %v4600 = vmul.f32 %v4591, 1.442695
    %v4601 = vpow.pop %v4600
    %v4602 = vmul.f32 %v4592, 1.442695
    %v4603 = vpow.pop %v4602
    %v4604 = vmul.f32 %v4593, 1.442695
    %v4605 = vpow.pop %v4604
    %v4606 = vmul.f32 %v4594, 1.442695
    %v4607 = vpow.pop %v4606
    %v4608 = vmul.f32 %v4595, 1.442695
    %v4609 = vpow.pop %v4608
    %v4610 = vmul.f32 %v4596, 1.442695
    %v4611 = vpow.pop %v4610
    %v4612 = vmul.f32 %v4597, 1.442695
    %v4613 = vpow.pop %v4612
    %v4614 = vsel %vm536, %v4599, 0.0
    %4615 = vadd.xlane.f32.xlu0 %v4614
    %v4616 = vpop.xlane.xlu0 %4615
    %v4617 = vsel %vm536, %v4601, 0.0
    %4618 = vadd.xlane.f32.xlu0 %v4617
    %v4619 = vpop.xlane.xlu0 %4618
    %v4620 = vsel %vm536, %v4603, 0.0
    %4621 = vadd.xlane.f32.xlu0 %v4620
    %v4622 = vpop.xlane.xlu0 %4621
    %v4623 = vsel %vm536, %v4605, 0.0
    %4624 = vadd.xlane.f32.xlu0 %v4623
    %v4625 = vpop.xlane.xlu0 %4624
    %v4626 = vsel %vm536, %v4607, 0.0
    %4627 = vadd.xlane.f32.xlu0 %v4626
    %v4628 = vpop.xlane.xlu0 %4627
    %v4629 = vsel %vm536, %v4609, 0.0
    %4630 = vadd.xlane.f32.xlu0 %v4629
    %v4631 = vpop.xlane.xlu0 %4630
    %v4632 = vsel %vm536, %v4611, 0.0
    %4633 = vadd.xlane.f32.xlu0 %v4632
    %v4634 = vpop.xlane.xlu0 %4633
    %v4635 = vsel %vm536, %v4613, 0.0
    %4636 = vadd.xlane.f32.xlu0 %v4635
    %v4637 = vpop.xlane.xlu0 %4636
    %v4638 = vrcp.pop %v4616
    %v4639 = vmul.f32 %v4616, %v4638
    %v4640 = vsub.f32 1.0, %v4639
    %v4641 = vmul.f32 %v4638, %v4640
    %v4642 = vadd.f32 %v4638, %v4641
    %vm4643 = vweird.f32 %v4616
    %vm4644 = vweird.f32 %v4638
    %vm4645 = vmor %vm4643, %vm4644
    %v4646 = vsel %vm4645, %v4638, %v4642
    %v4647 = vand.u32 2147483647, %v4616
    %vm4648 = vcmp.eq.f32.partialorder %v4647, 8.507059e+37
    %v4649 = vand.u32 %v4616, 2147483648
    %v4650 = vor.u32 1.1754944e-38, %v4649
    %v4651 = vsel %vm4648, %v4650, %v4646
    %v4652 = vmul.f32 %v4599, %v4651
    %v4653 = vrcp.pop %v4619
    %v4654 = vmul.f32 %v4619, %v4653
    %v4655 = vsub.f32 1.0, %v4654
    %v4656 = vmul.f32 %v4653, %v4655
    %v4657 = vadd.f32 %v4653, %v4656
    %vm4658 = vweird.f32 %v4619
    %vm4659 = vweird.f32 %v4653
    %vm4660 = vmor %vm4658, %vm4659
    %v4661 = vsel %vm4660, %v4653, %v4657
    %v4662 = vand.u32 2147483647, %v4619
    %vm4663 = vcmp.eq.f32.partialorder %v4662, 8.507059e+37
    %v4664 = vand.u32 %v4619, 2147483648
    %v4665 = vor.u32 1.1754944e-38, %v4664
    %v4666 = vsel %vm4663, %v4665, %v4661
    %v4667 = vmul.f32 %v4601, %v4666
    %v4668 = vrcp.pop %v4622
    %v4669 = vmul.f32 %v4622, %v4668
    %v4670 = vsub.f32 1.0, %v4669
    %v4671 = vmul.f32 %v4668, %v4670
    %v4672 = vadd.f32 %v4668, %v4671
    %vm4673 = vweird.f32 %v4622
    %vm4674 = vweird.f32 %v4668
    %vm4675 = vmor %vm4673, %vm4674
    %v4676 = vsel %vm4675, %v4668, %v4672
    %v4677 = vand.u32 2147483647, %v4622
    %vm4678 = vcmp.eq.f32.partialorder %v4677, 8.507059e+37
    %v4679 = vand.u32 %v4622, 2147483648
    %v4680 = vor.u32 1.1754944e-38, %v4679
    %v4681 = vsel %vm4678, %v4680, %v4676
    %v4682 = vmul.f32 %v4603, %v4681
    %v4683 = vrcp.pop %v4625
    %v4684 = vmul.f32 %v4625, %v4683
    %v4685 = vsub.f32 1.0, %v4684
    %v4686 = vmul.f32 %v4683, %v4685
    %v4687 = vadd.f32 %v4683, %v4686
    %vm4688 = vweird.f32 %v4625
    %vm4689 = vweird.f32 %v4683
    %vm4690 = vmor %vm4688, %vm4689
    %v4691 = vsel %vm4690, %v4683, %v4687
    %v4692 = vand.u32 2147483647, %v4625
    %vm4693 = vcmp.eq.f32.partialorder %v4692, 8.507059e+37
    %v4694 = vand.u32 %v4625, 2147483648
    %v4695 = vor.u32 1.1754944e-38, %v4694
    %v4696 = vsel %vm4693, %v4695, %v4691
    %v4697 = vmul.f32 %v4605, %v4696
    %v4698 = vrcp.pop %v4628
    %v4699 = vmul.f32 %v4628, %v4698
    %v4700 = vsub.f32 1.0, %v4699
    %v4701 = vmul.f32 %v4698, %v4700
    %v4702 = vadd.f32 %v4698, %v4701
    %vm4703 = vweird.f32 %v4628
    %vm4704 = vweird.f32 %v4698
    %vm4705 = vmor %vm4703, %vm4704
    %v4706 = vsel %vm4705, %v4698, %v4702
    %v4707 = vand.u32 2147483647, %v4628
    %vm4708 = vcmp.eq.f32.partialorder %v4707, 8.507059e+37
    %v4709 = vand.u32 %v4628, 2147483648
    %v4710 = vor.u32 1.1754944e-38, %v4709
    %v4711 = vsel %vm4708, %v4710, %v4706
    %v4712 = vmul.f32 %v4607, %v4711
    %v4713 = vrcp.pop %v4631
    %v4714 = vmul.f32 %v4631, %v4713
    %v4715 = vsub.f32 1.0, %v4714
    %v4716 = vmul.f32 %v4713, %v4715
    %v4717 = vadd.f32 %v4713, %v4716
    %vm4718 = vweird.f32 %v4631
    %vm4719 = vweird.f32 %v4713
    %vm4720 = vmor %vm4718, %vm4719
    %v4721 = vsel %vm4720, %v4713, %v4717
    %v4722 = vand.u32 2147483647, %v4631
    %vm4723 = vcmp.eq.f32.partialorder %v4722, 8.507059e+37
    %v4724 = vand.u32 %v4631, 2147483648
    %v4725 = vor.u32 1.1754944e-38, %v4724
    %v4726 = vsel %vm4723, %v4725, %v4721
    %v4727 = vmul.f32 %v4609, %v4726
    %v4728 = vrcp.pop %v4634
    %v4729 = vmul.f32 %v4634, %v4728
    %v4730 = vsub.f32 1.0, %v4729
    %v4731 = vmul.f32 %v4728, %v4730
    %v4732 = vadd.f32 %v4728, %v4731
    %vm4733 = vweird.f32 %v4634
    %vm4734 = vweird.f32 %v4728
    %vm4735 = vmor %vm4733, %vm4734
    %v4736 = vsel %vm4735, %v4728, %v4732
    %v4737 = vand.u32 2147483647, %v4634
    %vm4738 = vcmp.eq.f32.partialorder %v4737, 8.507059e+37
    %v4739 = vand.u32 %v4634, 2147483648
    %v4740 = vor.u32 1.1754944e-38, %v4739
    %v4741 = vsel %vm4738, %v4740, %v4736
    %v4742 = vmul.f32 %v4611, %v4741
    %v4743 = vrcp.pop %v4637
    %v4744 = vmul.f32 %v4637, %v4743
    %v4745 = vsub.f32 1.0, %v4744
    %v4746 = vmul.f32 %v4743, %v4745
    %v4747 = vadd.f32 %v4743, %v4746
    %vm4748 = vweird.f32 %v4637
    %vm4749 = vweird.f32 %v4743
    %vm4750 = vmor %vm4748, %vm4749
    %v4751 = vsel %vm4750, %v4743, %v4747
    %v4752 = vand.u32 2147483647, %v4637
    %vm4753 = vcmp.eq.f32.partialorder %v4752, 8.507059e+37
    %v4754 = vand.u32 %v4637, 2147483648
    %v4755 = vor.u32 1.1754944e-38, %v4754
    %v4756 = vsel %vm4753, %v4755, %v4751
    %v4757 = vmul.f32 %v4613, %v4756
    %v4758 = vpack.c.bf16 %v4652, %v4652
    %v4759 = vpack.c.bf16 %v4667, %v4667
    %v4760 = vpack.c.bf16 %v4682, %v4682
    %v4761 = vpack.c.bf16 %v4697, %v4697
    %v4762 = vpack.c.bf16 %v4712, %v4712
    %v4763 = vpack.c.bf16 %v4727, %v4727
    %v4764 = vpack.c.bf16 %v4742, %v4742
    %v4765 = vpack.c.bf16 %v4757, %v4757
    %4766 = vst [vmem:[#allocation1] ss:$9 sm:$0xff] %v365
    %v4767 = vld [vmem:[#allocation1] sm:$0xff]
    %4769 = vrot.lane.b32.xlu0 %v4767, 32
    %v4770 = vpop.permute.xlu0 %4769
    %v4772 = vsel %vm737, %v4758, 0
    %v4775 = vsel %vm299, %v4770, 0
    %4777 = vmatpush.bf16.msra.mxu0 0
    %4778 = vmatpush.bf16.msra.mxu0 0
    %4779 = vmatpush.bf16.msra.mxu0 0
    %4780 = vmatpush.bf16.msra.mxu0 0
    %4781 = vmatpush.bf16.msra.mxu0 0
    %4782 = vmatpush.bf16.msra.mxu0 0
    %4783 = vmatpush.bf16.msra.mxu0 0
    %4784 = vmatpush.bf16.msra.mxu0 %v4775
    %4785 = vmatmul.bf16.gmra.mxu0 %v4772
    %v4786 = vpop.f32.mrf.mxu0
    %v4787 = vadd.f32 0.0, %v4786
    %v4788 = vpop.f32.mrf.mxu0
    %4789 = vdwg.mxu0
    %4790 = vst [vmem:[#allocation1] ss:$9 sm:$0xff] %v368
    %v4791 = vld [vmem:[#allocation1] sm:$0xff]
    %4793 = vrot.lane.b32.xlu0 %v4791, 32
    %v4794 = vpop.permute.xlu0 %4793
    %v4796 = vsel %vm737, %v4759, 0
    %v4799 = vsel %vm299, %v4794, 0
    %4801 = vmatpush.bf16.msra.mxu0 0
    %4802 = vmatpush.bf16.msra.mxu0 0
    %4803 = vmatpush.bf16.msra.mxu0 0
    %4804 = vmatpush.bf16.msra.mxu0 0
    %4805 = vmatpush.bf16.msra.mxu0 0
    %4806 = vmatpush.bf16.msra.mxu0 0
    %4807 = vmatpush.bf16.msra.mxu0 0
    %4808 = vmatpush.bf16.msra.mxu0 %v4799
    %4809 = vmatmul.bf16.gmra.mxu0 %v4796
    %v4810 = vpop.f32.mrf.mxu0
    %v4811 = vadd.f32 0.0, %v4810
    %v4812 = vpop.f32.mrf.mxu0
    %4813 = vdwg.mxu0
    %4814 = vst [vmem:[#allocation1] ss:$9 sm:$0xff] %v371
    %v4815 = vld [vmem:[#allocation1] sm:$0xff]
    %4817 = vrot.lane.b32.xlu0 %v4815, 32
    %v4818 = vpop.permute.xlu0 %4817
    %v4820 = vsel %vm737, %v4760, 0
    %v4823 = vsel %vm299, %v4818, 0
    %4825 = vmatpush.bf16.msra.mxu0 0
    %4826 = vmatpush.bf16.msra.mxu0 0
    %4827 = vmatpush.bf16.msra.mxu0 0
    %4828 = vmatpush.bf16.msra.mxu0 0
    %4829 = vmatpush.bf16.msra.mxu0 0
    %4830 = vmatpush.bf16.msra.mxu0 0
    %4831 = vmatpush.bf16.msra.mxu0 0
    %4832 = vmatpush.bf16.msra.mxu0 %v4823
    %4833 = vmatmul.bf16.gmra.mxu0 %v4820
    %v4834 = vpop.f32.mrf.mxu0
    %v4835 = vadd.f32 0.0, %v4834
    %v4836 = vpop.f32.mrf.mxu0
    %4837 = vdwg.mxu0
    %4838 = vst [vmem:[#allocation1] ss:$9 sm:$0xff] %v374
    %v4839 = vld [vmem:[#allocation1] sm:$0xff]
    %4841 = vrot.lane.b32.xlu0 %v4839, 32
    %v4842 = vpop.permute.xlu0 %4841
    %v4844 = vsel %vm737, %v4761, 0
    %v4847 = vsel %vm299, %v4842, 0
    %4849 = vmatpush.bf16.msra.mxu0 0
    %4850 = vmatpush.bf16.msra.mxu0 0
    %4851 = vmatpush.bf16.msra.mxu0 0
    %4852 = vmatpush.bf16.msra.mxu0 0
    %4853 = vmatpush.bf16.msra.mxu0 0
    %4854 = vmatpush.bf16.msra.mxu0 0
    %4855 = vmatpush.bf16.msra.mxu0 0
    %4856 = vmatpush.bf16.msra.mxu0 %v4847
    %4857 = vmatmul.bf16.gmra.mxu0 %v4844
    %v4858 = vpop.f32.mrf.mxu0
    %v4859 = vadd.f32 0.0, %v4858
    %v4860 = vpop.f32.mrf.mxu0
    %4861 = vdwg.mxu0
    %4862 = vst [vmem:[#allocation1] ss:$9 sm:$0xff] %v377
    %v4863 = vld [vmem:[#allocation1] sm:$0xff]
    %4865 = vrot.lane.b32.xlu0 %v4863, 32
    %v4866 = vpop.permute.xlu0 %4865
    %v4868 = vsel %vm737, %v4762, 0
    %v4871 = vsel %vm299, %v4866, 0
    %4873 = vmatpush.bf16.msra.mxu0 0
    %4874 = vmatpush.bf16.msra.mxu0 0
    %4875 = vmatpush.bf16.msra.mxu0 0
    %4876 = vmatpush.bf16.msra.mxu0 0
    %4877 = vmatpush.bf16.msra.mxu0 0
    %4878 = vmatpush.bf16.msra.mxu0 0
    %4879 = vmatpush.bf16.msra.mxu0 0
    %4880 = vmatpush.bf16.msra.mxu0 %v4871
    %4881 = vmatmul.bf16.gmra.mxu0 %v4868
    %v4882 = vpop.f32.mrf.mxu0
    %v4883 = vadd.f32 0.0, %v4882
    %v4884 = vpop.f32.mrf.mxu0
    %4885 = vdwg.mxu0
    %4886 = vst [vmem:[#allocation1] ss:$9 sm:$0xff] %v380
    %v4887 = vld [vmem:[#allocation1] sm:$0xff]
    %4889 = vrot.lane.b32.xlu0 %v4887, 32
    %v4890 = vpop.permute.xlu0 %4889
    %v4892 = vsel %vm737, %v4763, 0
    %v4895 = vsel %vm299, %v4890, 0
    %4897 = vmatpush.bf16.msra.mxu0 0
    %4898 = vmatpush.bf16.msra.mxu0 0
    %4899 = vmatpush.bf16.msra.mxu0 0
    %4900 = vmatpush.bf16.msra.mxu0 0
    %4901 = vmatpush.bf16.msra.mxu0 0
    %4902 = vmatpush.bf16.msra.mxu0 0
    %4903 = vmatpush.bf16.msra.mxu0 0
    %4904 = vmatpush.bf16.msra.mxu0 %v4895
    %4905 = vmatmul.bf16.gmra.mxu0 %v4892
    %v4906 = vpop.f32.mrf.mxu0
    %v4907 = vadd.f32 0.0, %v4906
    %v4908 = vpop.f32.mrf.mxu0
    %4909 = vdwg.mxu0
    %4910 = vst [vmem:[#allocation1] ss:$9 sm:$0xff] %v383
    %v4911 = vld [vmem:[#allocation1] sm:$0xff]
    %4913 = vrot.lane.b32.xlu0 %v4911, 32
    %v4914 = vpop.permute.xlu0 %4913
    %v4916 = vsel %vm737, %v4764, 0
    %v4919 = vsel %vm299, %v4914, 0
    %4921 = vmatpush.bf16.msra.mxu0 0
    %4922 = vmatpush.bf16.msra.mxu0 0
    %4923 = vmatpush.bf16.msra.mxu0 0
    %4924 = vmatpush.bf16.msra.mxu0 0
    %4925 = vmatpush.bf16.msra.mxu0 0
    %4926 = vmatpush.bf16.msra.mxu0 0
    %4927 = vmatpush.bf16.msra.mxu0 0
    %4928 = vmatpush.bf16.msra.mxu0 %v4919
    %4929 = vmatmul.bf16.gmra.mxu0 %v4916
    %v4930 = vpop.f32.mrf.mxu0
    %v4931 = vadd.f32 0.0, %v4930
    %v4932 = vpop.f32.mrf.mxu0
    %4933 = vdwg.mxu0
    %4934 = vst [vmem:[#allocation1] ss:$9 sm:$0xff] %v386
    %v4935 = vld [vmem:[#allocation1] sm:$0xff]
    %4937 = vrot.lane.b32.xlu0 %v4935, 32
    %v4938 = vpop.permute.xlu0 %4937
    %v4940 = vsel %vm737, %v4765, 0
    %v4943 = vsel %vm299, %v4938, 0
    %4945 = vmatpush.bf16.msra.mxu0 0
    %4946 = vmatpush.bf16.msra.mxu0 0
    %4947 = vmatpush.bf16.msra.mxu0 0
    %4948 = vmatpush.bf16.msra.mxu0 0
    %4949 = vmatpush.bf16.msra.mxu0 0
    %4950 = vmatpush.bf16.msra.mxu0 0
    %4951 = vmatpush.bf16.msra.mxu0 0
    %4952 = vmatpush.bf16.msra.mxu0 %v4943
    %4953 = vmatmul.bf16.gmra.mxu0 %v4940
    %v4954 = vpop.f32.mrf.mxu0
    %v4955 = vadd.f32 0.0, %v4954
    %v4956 = vpop.f32.mrf.mxu0
    %4957 = vdwg.mxu0
    %v4958 = vld [vmem:[%s3 + $0x30] sm:$0xf]
    %v4959 = vld [vmem:[%s3 + $0x34] sm:$0xf]
    %4968 = vst [vmem:[#allocation1] ss:$4 sm:$0xff] %v4787
    %s4969 = scalar_lea.vmem [#allocation1], 1
    %4970 = vst [vmem:[%s4969] ss:$4 sm:$0xff] %v4811
    %s4971 = scalar_lea.vmem [#allocation1], 2
    %4972 = vst [vmem:[%s4971] ss:$4 sm:$0xff] %v4835
    %s4973 = scalar_lea.vmem [#allocation1], 3
    %4974 = vst [vmem:[%s4973] ss:$4 sm:$0xff] %v4859
    %s4975 = scalar_lea.vmem [#allocation1], 32
    %4976 = vst [vmem:[%s4975] ss:$4 sm:$0xff] %v4883
    %s4977 = scalar_lea.vmem [#allocation1], 33
    %4978 = vst [vmem:[%s4977] ss:$4 sm:$0xff] %v4907
    %s4979 = scalar_lea.vmem [#allocation1], 34
    %4980 = vst [vmem:[%s4979] ss:$4 sm:$0xff] %v4931
    %s4981 = scalar_lea.vmem [#allocation1], 35
    %4982 = vst [vmem:[%s4981] ss:$4 sm:$0xff] %v4955
    %v4983 = vld.sshfl [vmem:[#allocation1] sm:$0xff pattern:$0x73625140]
    %v4984 = vld.sshfl [vmem:[#allocation1 + $0x20] sm:$0xff pattern:$0x73625140]
    %v4987 = vpack.c.bf16 %v4984, %v4983
    %v4990 = vunpack.c.l.b16 %v4958
    %v4991 = vunpack.c.l.b16 %v4959
    %v4992 = vpack.c.b16 %v4991, %v4990
    %v4995 = vsel %vm387, %v4987, 0
    %4997 = vmatpush.bf16.msra.mxu0 0
    %4998 = vmatpush.bf16.msra.mxu0 0
    %4999 = vmatpush.bf16.msra.mxu0 0
    %5000 = vmatpush.bf16.msra.mxu0 0
    %5001 = vmatpush.bf16.msra.mxu0 0
    %5002 = vmatpush.bf16.msra.mxu0 0
    %5003 = vmatpush.bf16.msra.mxu0 0
    %5004 = vmatpush.bf16.msra.mxu0 %v4992
    %5005 = vmatmul.bf16.gmra.mxu0 %v4995
    %v5006 = vpop.f32.mrf.mxu0
    %v5007 = vadd.f32 0.0, %v5006
    %v5008 = vpop.f32.mrf.mxu0
    %v5009 = vadd.f32 0.0, %v5008
    %5010 = vdwg.mxu0
    %v5011 = vadd.f32 %v4332, %v5007
    %v5012 = vadd.f32 %v4333, %v5009
    %5013 = vst [vmem:[#allocation1] ss:$9 sm:$0xff] %v302
    %v5014 = vld [vmem:[#allocation1] sm:$0xff]
    %5016 = vrot.lane.b32.xlu0 %v5014, 16
    %v5017 = vpop.permute.xlu0 %5016
    %5018 = vst [vmem:[#allocation1] ss:$9 sm:$0xff] %v335
    %v5019 = vld [vmem:[#allocation1] sm:$0xff]
    %5021 = vrot.lane.b32.xlu0 %v5019, 16
    %v5022 = vpop.permute.xlu0 %5021
    %v5024 = vsel %vm387, %v5017, 0
    %v5027 = vsel %vm387, %v5022, 0
    %5029 = vmatpush.bf16.xpose.msra.mxu0 0
    %5030 = vmatpush.bf16.xpose.msra.mxu0 0
    %5031 = vmatpush.bf16.xpose.msra.mxu0 0
    %5032 = vmatpush.bf16.xpose.msra.mxu0 0
    %5033 = vmatpush.bf16.xpose.msra.mxu0 0
    %5034 = vmatpush.bf16.xpose.msra.mxu0 0
    %5035 = vmatpush.bf16.xpose.msra.mxu0 0
    %5036 = vmatpush.bf16.xpose.msra.mxu0 %v5027
    %5037 = vmatmul.bf16.gmra.mxu0 %v5024
    %v5038 = vpop.f32.mrf.mxu0
    %v5039 = vadd.f32 0.0, %v5038
    %v5040 = vpop.f32.mrf.mxu0
    %5041 = vdwg.mxu0
    %5042 = vst [vmem:[#allocation1] ss:$9 sm:$0xff] %v306
    %v5043 = vld [vmem:[#allocation1] sm:$0xff]
    %5045 = vrot.lane.b32.xlu0 %v5043, 16
    %v5046 = vpop.permute.xlu0 %5045
    %5047 = vst [vmem:[#allocation1] ss:$9 sm:$0xff] %v338
    %v5048 = vld [vmem:[#allocation1] sm:$0xff]
    %5050 = vrot.lane.b32.xlu0 %v5048, 16
    %v5051 = vpop.permute.xlu0 %5050
    %v5053 = vsel %vm387, %v5046, 0
    %v5056 = vsel %vm387, %v5051, 0
    %5058 = vmatpush.bf16.xpose.msra.mxu0 0
    %5059 = vmatpush.bf16.xpose.msra.mxu0 0
    %5060 = vmatpush.bf16.xpose.msra.mxu0 0
    %5061 = vmatpush.bf16.xpose.msra.mxu0 0
    %5062 = vmatpush.bf16.xpose.msra.mxu0 0
    %5063 = vmatpush.bf16.xpose.msra.mxu0 0
    %5064 = vmatpush.bf16.xpose.msra.mxu0 0
    %5065 = vmatpush.bf16.xpose.msra.mxu0 %v5056
    %5066 = vmatmul.bf16.gmra.mxu0 %v5053
    %v5067 = vpop.f32.mrf.mxu0
    %v5068 = vadd.f32 0.0, %v5067
    %v5069 = vpop.f32.mrf.mxu0
    %5070 = vdwg.mxu0
    %5071 = vst [vmem:[#allocation1] ss:$9 sm:$0xff] %v310
    %v5072 = vld [vmem:[#allocation1] sm:$0xff]
    %5074 = vrot.lane.b32.xlu0 %v5072, 16
    %v5075 = vpop.permute.xlu0 %5074
    %5076 = vst [vmem:[#allocation1] ss:$9 sm:$0xff] %v341
    %v5077 = vld [vmem:[#allocation1] sm:$0xff]
    %5079 = vrot.lane.b32.xlu0 %v5077, 16
    %v5080 = vpop.permute.xlu0 %5079
    %v5082 = vsel %vm387, %v5075, 0
    %v5085 = vsel %vm387, %v5080, 0
    %5087 = vmatpush.bf16.xpose.msra.mxu0 0
    %5088 = vmatpush.bf16.xpose.msra.mxu0 0
    %5089 = vmatpush.bf16.xpose.msra.mxu0 0
    %5090 = vmatpush.bf16.xpose.msra.mxu0 0
    %5091 = vmatpush.bf16.xpose.msra.mxu0 0
    %5092 = vmatpush.bf16.xpose.msra.mxu0 0
    %5093 = vmatpush.bf16.xpose.msra.mxu0 0
    %5094 = vmatpush.bf16.xpose.msra.mxu0 %v5085
    %5095 = vmatmul.bf16.gmra.mxu0 %v5082
    %v5096 = vpop.f32.mrf.mxu0
    %v5097 = vadd.f32 0.0, %v5096
    %v5098 = vpop.f32.mrf.mxu0
    %5099 = vdwg.mxu0
    %5100 = vst [vmem:[#allocation1] ss:$9 sm:$0xff] %v314
    %v5101 = vld [vmem:[#allocation1] sm:$0xff]
    %5103 = vrot.lane.b32.xlu0 %v5101, 16
    %v5104 = vpop.permute.xlu0 %5103
    %5105 = vst [vmem:[#allocation1] ss:$9 sm:$0xff] %v344
    %v5106 = vld [vmem:[#allocation1] sm:$0xff]
    %5108 = vrot.lane.b32.xlu0 %v5106, 16
    %v5109 = vpop.permute.xlu0 %5108
    %v5111 = vsel %vm387, %v5104, 0
    %v5114 = vsel %vm387, %v5109, 0
    %5116 = vmatpush.bf16.xpose.msra.mxu0 0
    %5117 = vmatpush.bf16.xpose.msra.mxu0 0
    %5118 = vmatpush.bf16.xpose.msra.mxu0 0
    %5119 = vmatpush.bf16.xpose.msra.mxu0 0
    %5120 = vmatpush.bf16.xpose.msra.mxu0 0
    %5121 = vmatpush.bf16.xpose.msra.mxu0 0
    %5122 = vmatpush.bf16.xpose.msra.mxu0 0
    %5123 = vmatpush.bf16.xpose.msra.mxu0 %v5114
    %5124 = vmatmul.bf16.gmra.mxu0 %v5111
    %v5125 = vpop.f32.mrf.mxu0
    %v5126 = vadd.f32 0.0, %v5125
    %v5127 = vpop.f32.mrf.mxu0
    %5128 = vdwg.mxu0
    %5129 = vst [vmem:[#allocation1] ss:$9 sm:$0xff] %v317
    %v5130 = vld [vmem:[#allocation1] sm:$0xff]
    %5132 = vrot.lane.b32.xlu0 %v5130, 16
    %v5133 = vpop.permute.xlu0 %5132
    %5134 = vst [vmem:[#allocation1] ss:$9 sm:$0xff] %v347
    %v5135 = vld [vmem:[#allocation1] sm:$0xff]
    %5137 = vrot.lane.b32.xlu0 %v5135, 16
    %v5138 = vpop.permute.xlu0 %5137
    %v5140 = vsel %vm387, %v5133, 0
    %v5143 = vsel %vm387, %v5138, 0
    %5145 = vmatpush.bf16.xpose.msra.mxu0 0
    %5146 = vmatpush.bf16.xpose.msra.mxu0 0
    %5147 = vmatpush.bf16.xpose.msra.mxu0 0
    %5148 = vmatpush.bf16.xpose.msra.mxu0 0
    %5149 = vmatpush.bf16.xpose.msra.mxu0 0
    %5150 = vmatpush.bf16.xpose.msra.mxu0 0
    %5151 = vmatpush.bf16.xpose.msra.mxu0 0
    %5152 = vmatpush.bf16.xpose.msra.mxu0 %v5143
    %5153 = vmatmul.bf16.gmra.mxu0 %v5140
    %v5154 = vpop.f32.mrf.mxu0
    %v5155 = vadd.f32 0.0, %v5154
    %v5156 = vpop.f32.mrf.mxu0
    %5157 = vdwg.mxu0
    %5158 = vst [vmem:[#allocation1] ss:$9 sm:$0xff] %v320
    %v5159 = vld [vmem:[#allocation1] sm:$0xff]
    %5161 = vrot.lane.b32.xlu0 %v5159, 16
    %v5162 = vpop.permute.xlu0 %5161
    %5163 = vst [vmem:[#allocation1] ss:$9 sm:$0xff] %v350
    %v5164 = vld [vmem:[#allocation1] sm:$0xff]
    %5166 = vrot.lane.b32.xlu0 %v5164, 16
    %v5167 = vpop.permute.xlu0 %5166
    %v5169 = vsel %vm387, %v5162, 0
    %v5172 = vsel %vm387, %v5167, 0
    %5174 = vmatpush.bf16.xpose.msra.mxu0 0
    %5175 = vmatpush.bf16.xpose.msra.mxu0 0
    %5176 = vmatpush.bf16.xpose.msra.mxu0 0
    %5177 = vmatpush.bf16.xpose.msra.mxu0 0
    %5178 = vmatpush.bf16.xpose.msra.mxu0 0
    %5179 = vmatpush.bf16.xpose.msra.mxu0 0
    %5180 = vmatpush.bf16.xpose.msra.mxu0 0
    %5181 = vmatpush.bf16.xpose.msra.mxu0 %v5172
    %5182 = vmatmul.bf16.gmra.mxu0 %v5169
    %v5183 = vpop.f32.mrf.mxu0
    %v5184 = vadd.f32 0.0, %v5183
    %v5185 = vpop.f32.mrf.mxu0
    %5186 = vdwg.mxu0
    %5187 = vst [vmem:[#allocation1] ss:$9 sm:$0xff] %v323
    %v5188 = vld [vmem:[#allocation1] sm:$0xff]
    %5190 = vrot.lane.b32.xlu0 %v5188, 16
    %v5191 = vpop.permute.xlu0 %5190
    %5192 = vst [vmem:[#allocation1] ss:$9 sm:$0xff] %v353
    %v5193 = vld [vmem:[#allocation1] sm:$0xff]
    %5195 = vrot.lane.b32.xlu0 %v5193, 16
    %v5196 = vpop.permute.xlu0 %5195
    %v5198 = vsel %vm387, %v5191, 0
    %v5201 = vsel %vm387, %v5196, 0
    %5203 = vmatpush.bf16.xpose.msra.mxu0 0
    %5204 = vmatpush.bf16.xpose.msra.mxu0 0
    %5205 = vmatpush.bf16.xpose.msra.mxu0 0
    %5206 = vmatpush.bf16.xpose.msra.mxu0 0
    %5207 = vmatpush.bf16.xpose.msra.mxu0 0
    %5208 = vmatpush.bf16.xpose.msra.mxu0 0
    %5209 = vmatpush.bf16.xpose.msra.mxu0 0
    %5210 = vmatpush.bf16.xpose.msra.mxu0 %v5201
    %5211 = vmatmul.bf16.gmra.mxu0 %v5198
    %v5212 = vpop.f32.mrf.mxu0
    %v5213 = vadd.f32 0.0, %v5212
    %v5214 = vpop.f32.mrf.mxu0
    %5215 = vdwg.mxu0
    %5216 = vst [vmem:[#allocation1] ss:$9 sm:$0xff] %v326
    %v5217 = vld [vmem:[#allocation1] sm:$0xff]
    %5219 = vrot.lane.b32.xlu0 %v5217, 16
    %v5220 = vpop.permute.xlu0 %5219
    %5221 = vst [vmem:[#allocation1] ss:$9 sm:$0xff] %v356
    %v5222 = vld [vmem:[#allocation1] sm:$0xff]
    %5224 = vrot.lane.b32.xlu0 %v5222, 16
    %v5225 = vpop.permute.xlu0 %5224
    %v5227 = vsel %vm387, %v5220, 0
    %v5230 = vsel %vm387, %v5225, 0
    %5232 = vmatpush.bf16.xpose.msra.mxu0 0
    %5233 = vmatpush.bf16.xpose.msra.mxu0 0
    %5234 = vmatpush.bf16.xpose.msra.mxu0 0
    %5235 = vmatpush.bf16.xpose.msra.mxu0 0
    %5236 = vmatpush.bf16.xpose.msra.mxu0 0
    %5237 = vmatpush.bf16.xpose.msra.mxu0 0
    %5238 = vmatpush.bf16.xpose.msra.mxu0 0
    %5239 = vmatpush.bf16.xpose.msra.mxu0 %v5230
    %5240 = vmatmul.bf16.gmra.mxu0 %v5227
    %v5241 = vpop.f32.mrf.mxu0
    %v5242 = vadd.f32 0.0, %v5241
    %v5243 = vpop.f32.mrf.mxu0
    %5244 = vdwg.mxu0
    %v5245 = vsel %vm536, %v5039, -inf
    %5246 = vmax.xlane.f32.xlu0 %v5245
    %v5247 = vpop.xlane.xlu0 %5246
    %v5248 = vsel %vm536, %v5068, -inf
    %5249 = vmax.xlane.f32.xlu0 %v5248
    %v5250 = vpop.xlane.xlu0 %5249
    %v5251 = vsel %vm536, %v5097, -inf
    %5252 = vmax.xlane.f32.xlu0 %v5251
    %v5253 = vpop.xlane.xlu0 %5252
    %v5254 = vsel %vm536, %v5126, -inf
    %5255 = vmax.xlane.f32.xlu0 %v5254
    %v5256 = vpop.xlane.xlu0 %5255
    %v5257 = vsel %vm536, %v5155, -inf
    %5258 = vmax.xlane.f32.xlu0 %v5257
    %v5259 = vpop.xlane.xlu0 %5258
    %v5260 = vsel %vm536, %v5184, -inf
    %5261 = vmax.xlane.f32.xlu0 %v5260
    %v5262 = vpop.xlane.xlu0 %5261
    %v5263 = vsel %vm536, %v5213, -inf
    %5264 = vmax.xlane.f32.xlu0 %v5263
    %v5265 = vpop.xlane.xlu0 %5264
    %v5266 = vsel %vm536, %v5242, -inf
    %5267 = vmax.xlane.f32.xlu0 %v5266
    %v5268 = vpop.xlane.xlu0 %5267
    %v5269 = vsub.f32 %v5039, %v5247
    %v5270 = vsub.f32 %v5068, %v5250
    %v5271 = vsub.f32 %v5097, %v5253
    %v5272 = vsub.f32 %v5126, %v5256
    %v5273 = vsub.f32 %v5155, %v5259
    %v5274 = vsub.f32 %v5184, %v5262
    %v5275 = vsub.f32 %v5213, %v5265
    %v5276 = vsub.f32 %v5242, %v5268
    %v5277 = vmul.f32 %v5269, 1.442695
    %v5278 = vpow.pop %v5277
    %v5279 = vmul.f32 %v5270, 1.442695
    %v5280 = vpow.pop %v5279
    %v5281 = vmul.f32 %v5271, 1.442695
    %v5282 = vpow.pop %v5281
    %v5283 = vmul.f32 %v5272, 1.442695
    %v5284 = vpow.pop %v5283
    %v5285 = vmul.f32 %v5273, 1.442695
    %v5286 = vpow.pop %v5285
    %v5287 = vmul.f32 %v5274, 1.442695
    %v5288 = vpow.pop %v5287
    %v5289 = vmul.f32 %v5275, 1.442695
    %v5290 = vpow.pop %v5289
    %v5291 = vmul.f32 %v5276, 1.442695
    %v5292 = vpow.pop %v5291
    %v5293 = vsel %vm536, %v5278, 0.0
    %5294 = vadd.xlane.f32.xlu0 %v5293
    %v5295 = vpop.xlane.xlu0 %5294
    %v5296 = vsel %vm536, %v5280, 0.0
    %5297 = vadd.xlane.f32.xlu0 %v5296
    %v5298 = vpop.xlane.xlu0 %5297
    %v5299 = vsel %vm536, %v5282, 0.0
    %5300 = vadd.xlane.f32.xlu0 %v5299
    %v5301 = vpop.xlane.xlu0 %5300
    %v5302 = vsel %vm536, %v5284, 0.0
    %5303 = vadd.xlane.f32.xlu0 %v5302
    %v5304 = vpop.xlane.xlu0 %5303
    %v5305 = vsel %vm536, %v5286, 0.0
    %5306 = vadd.xlane.f32.xlu0 %v5305
    %v5307 = vpop.xlane.xlu0 %5306
    %v5308 = vsel %vm536, %v5288, 0.0
    %5309 = vadd.xlane.f32.xlu0 %v5308
    %v5310 = vpop.xlane.xlu0 %5309
    %v5311 = vsel %vm536, %v5290, 0.0
    %5312 = vadd.xlane.f32.xlu0 %v5311
    %v5313 = vpop.xlane.xlu0 %5312
    %v5314 = vsel %vm536, %v5292, 0.0
    %5315 = vadd.xlane.f32.xlu0 %v5314
    %v5316 = vpop.xlane.xlu0 %5315
    %v5317 = vrcp.pop %v5295
    %v5318 = vmul.f32 %v5295, %v5317
    %v5319 = vsub.f32 1.0, %v5318
    %v5320 = vmul.f32 %v5317, %v5319
    %v5321 = vadd.f32 %v5317, %v5320
    %vm5322 = vweird.f32 %v5295
    %vm5323 = vweird.f32 %v5317
    %vm5324 = vmor %vm5322, %vm5323
    %v5325 = vsel %vm5324, %v5317, %v5321
    %v5326 = vand.u32 2147483647, %v5295
    %vm5327 = vcmp.eq.f32.partialorder %v5326, 8.507059e+37
    %v5328 = vand.u32 %v5295, 2147483648
    %v5329 = vor.u32 1.1754944e-38, %v5328
    %v5330 = vsel %vm5327, %v5329, %v5325
    %v5331 = vmul.f32 %v5278, %v5330
    %v5332 = vrcp.pop %v5298
    %v5333 = vmul.f32 %v5298, %v5332
    %v5334 = vsub.f32 1.0, %v5333
    %v5335 = vmul.f32 %v5332, %v5334
    %v5336 = vadd.f32 %v5332, %v5335
    %vm5337 = vweird.f32 %v5298
    %vm5338 = vweird.f32 %v5332
    %vm5339 = vmor %vm5337, %vm5338
    %v5340 = vsel %vm5339, %v5332, %v5336
    %v5341 = vand.u32 2147483647, %v5298
    %vm5342 = vcmp.eq.f32.partialorder %v5341, 8.507059e+37
    %v5343 = vand.u32 %v5298, 2147483648
    %v5344 = vor.u32 1.1754944e-38, %v5343
    %v5345 = vsel %vm5342, %v5344, %v5340
    %v5346 = vmul.f32 %v5280, %v5345
    %v5347 = vrcp.pop %v5301
    %v5348 = vmul.f32 %v5301, %v5347
    %v5349 = vsub.f32 1.0, %v5348
    %v5350 = vmul.f32 %v5347, %v5349
    %v5351 = vadd.f32 %v5347, %v5350
    %vm5352 = vweird.f32 %v5301
    %vm5353 = vweird.f32 %v5347
    %vm5354 = vmor %vm5352, %vm5353
    %v5355 = vsel %vm5354, %v5347, %v5351
    %v5356 = vand.u32 2147483647, %v5301
    %vm5357 = vcmp.eq.f32.partialorder %v5356, 8.507059e+37
    %v5358 = vand.u32 %v5301, 2147483648
    %v5359 = vor.u32 1.1754944e-38, %v5358
    %v5360 = vsel %vm5357, %v5359, %v5355
    %v5361 = vmul.f32 %v5282, %v5360
    %v5362 = vrcp.pop %v5304
    %v5363 = vmul.f32 %v5304, %v5362
    %v5364 = vsub.f32 1.0, %v5363
    %v5365 = vmul.f32 %v5362, %v5364
    %v5366 = vadd.f32 %v5362, %v5365
    %vm5367 = vweird.f32 %v5304
    %vm5368 = vweird.f32 %v5362
    %vm5369 = vmor %vm5367, %vm5368
    %v5370 = vsel %vm5369, %v5362, %v5366
    %v5371 = vand.u32 2147483647, %v5304
    %vm5372 = vcmp.eq.f32.partialorder %v5371, 8.507059e+37
    %v5373 = vand.u32 %v5304, 2147483648
    %v5374 = vor.u32 1.1754944e-38, %v5373
    %v5375 = vsel %vm5372, %v5374, %v5370
    %v5376 = vmul.f32 %v5284, %v5375
    %v5377 = vrcp.pop %v5307
    %v5378 = vmul.f32 %v5307, %v5377
    %v5379 = vsub.f32 1.0, %v5378
    %v5380 = vmul.f32 %v5377, %v5379
    %v5381 = vadd.f32 %v5377, %v5380
    %vm5382 = vweird.f32 %v5307
    %vm5383 = vweird.f32 %v5377
    %vm5384 = vmor %vm5382, %vm5383
    %v5385 = vsel %vm5384, %v5377, %v5381
    %v5386 = vand.u32 2147483647, %v5307
    %vm5387 = vcmp.eq.f32.partialorder %v5386, 8.507059e+37
    %v5388 = vand.u32 %v5307, 2147483648
    %v5389 = vor.u32 1.1754944e-38, %v5388
    %v5390 = vsel %vm5387, %v5389, %v5385
    %v5391 = vmul.f32 %v5286, %v5390
    %v5392 = vrcp.pop %v5310
    %v5393 = vmul.f32 %v5310, %v5392
    %v5394 = vsub.f32 1.0, %v5393
    %v5395 = vmul.f32 %v5392, %v5394
    %v5396 = vadd.f32 %v5392, %v5395
    %vm5397 = vweird.f32 %v5310
    %vm5398 = vweird.f32 %v5392
    %vm5399 = vmor %vm5397, %vm5398
    %v5400 = vsel %vm5399, %v5392, %v5396
    %v5401 = vand.u32 2147483647, %v5310
    %vm5402 = vcmp.eq.f32.partialorder %v5401, 8.507059e+37
    %v5403 = vand.u32 %v5310, 2147483648
    %v5404 = vor.u32 1.1754944e-38, %v5403
    %v5405 = vsel %vm5402, %v5404, %v5400
    %v5406 = vmul.f32 %v5288, %v5405
    %v5407 = vrcp.pop %v5313
    %v5408 = vmul.f32 %v5313, %v5407
    %v5409 = vsub.f32 1.0, %v5408
    %v5410 = vmul.f32 %v5407, %v5409
    %v5411 = vadd.f32 %v5407, %v5410
    %vm5412 = vweird.f32 %v5313
    %vm5413 = vweird.f32 %v5407
    %vm5414 = vmor %vm5412, %vm5413
    %v5415 = vsel %vm5414, %v5407, %v5411
    %v5416 = vand.u32 2147483647, %v5313
    %vm5417 = vcmp.eq.f32.partialorder %v5416, 8.507059e+37
    %v5418 = vand.u32 %v5313, 2147483648
    %v5419 = vor.u32 1.1754944e-38, %v5418
    %v5420 = vsel %vm5417, %v5419, %v5415
    %v5421 = vmul.f32 %v5290, %v5420
    %v5422 = vrcp.pop %v5316
    %v5423 = vmul.f32 %v5316, %v5422
    %v5424 = vsub.f32 1.0, %v5423
    %v5425 = vmul.f32 %v5422, %v5424
    %v5426 = vadd.f32 %v5422, %v5425
    %vm5427 = vweird.f32 %v5316
    %vm5428 = vweird.f32 %v5422
    %vm5429 = vmor %vm5427, %vm5428
    %v5430 = vsel %vm5429, %v5422, %v5426
    %v5431 = vand.u32 2147483647, %v5316
    %vm5432 = vcmp.eq.f32.partialorder %v5431, 8.507059e+37
    %v5433 = vand.u32 %v5316, 2147483648
    %v5434 = vor.u32 1.1754944e-38, %v5433
    %v5435 = vsel %vm5432, %v5434, %v5430
    %v5436 = vmul.f32 %v5292, %v5435
    %v5437 = vpack.c.bf16 %v5331, %v5331
    %v5438 = vpack.c.bf16 %v5346, %v5346
    %v5439 = vpack.c.bf16 %v5361, %v5361
    %v5440 = vpack.c.bf16 %v5376, %v5376
    %v5441 = vpack.c.bf16 %v5391, %v5391
    %v5442 = vpack.c.bf16 %v5406, %v5406
    %v5443 = vpack.c.bf16 %v5421, %v5421
    %v5444 = vpack.c.bf16 %v5436, %v5436
    %5445 = vst [vmem:[#allocation1] ss:$9 sm:$0xff] %v365
    %v5446 = vld [vmem:[#allocation1] sm:$0xff]
    %5448 = vrot.lane.b32.xlu0 %v5446, 16
    %v5449 = vpop.permute.xlu0 %5448
    %v5451 = vsel %vm737, %v5437, 0
    %v5454 = vsel %vm299, %v5449, 0
    %5456 = vmatpush.bf16.msra.mxu0 0
    %5457 = vmatpush.bf16.msra.mxu0 0
    %5458 = vmatpush.bf16.msra.mxu0 0
    %5459 = vmatpush.bf16.msra.mxu0 0
    %5460 = vmatpush.bf16.msra.mxu0 0
    %5461 = vmatpush.bf16.msra.mxu0 0
    %5462 = vmatpush.bf16.msra.mxu0 0
    %5463 = vmatpush.bf16.msra.mxu0 %v5454
    %5464 = vmatmul.bf16.gmra.mxu0 %v5451
    %v5465 = vpop.f32.mrf.mxu0
    %v5466 = vadd.f32 0.0, %v5465
    %v5467 = vpop.f32.mrf.mxu0
    %5468 = vdwg.mxu0
    %5469 = vst [vmem:[#allocation1] ss:$9 sm:$0xff] %v368
    %v5470 = vld [vmem:[#allocation1] sm:$0xff]
    %5472 = vrot.lane.b32.xlu0 %v5470, 16
    %v5473 = vpop.permute.xlu0 %5472
    %v5475 = vsel %vm737, %v5438, 0
    %v5478 = vsel %vm299, %v5473, 0
    %5480 = vmatpush.bf16.msra.mxu0 0
    %5481 = vmatpush.bf16.msra.mxu0 0
    %5482 = vmatpush.bf16.msra.mxu0 0
    %5483 = vmatpush.bf16.msra.mxu0 0
    %5484 = vmatpush.bf16.msra.mxu0 0
    %5485 = vmatpush.bf16.msra.mxu0 0
    %5486 = vmatpush.bf16.msra.mxu0 0
    %5487 = vmatpush.bf16.msra.mxu0 %v5478
    %5488 = vmatmul.bf16.gmra.mxu0 %v5475
    %v5489 = vpop.f32.mrf.mxu0
    %v5490 = vadd.f32 0.0, %v5489
    %v5491 = vpop.f32.mrf.mxu0
    %5492 = vdwg.mxu0
    %5493 = vst [vmem:[#allocation1] ss:$9 sm:$0xff] %v371
    %v5494 = vld [vmem:[#allocation1] sm:$0xff]
    %5496 = vrot.lane.b32.xlu0 %v5494, 16
    %v5497 = vpop.permute.xlu0 %5496
    %v5499 = vsel %vm737, %v5439, 0
    %v5502 = vsel %vm299, %v5497, 0
    %5504 = vmatpush.bf16.msra.mxu0 0
    %5505 = vmatpush.bf16.msra.mxu0 0
    %5506 = vmatpush.bf16.msra.mxu0 0
    %5507 = vmatpush.bf16.msra.mxu0 0
    %5508 = vmatpush.bf16.msra.mxu0 0
    %5509 = vmatpush.bf16.msra.mxu0 0
    %5510 = vmatpush.bf16.msra.mxu0 0
    %5511 = vmatpush.bf16.msra.mxu0 %v5502
    %5512 = vmatmul.bf16.gmra.mxu0 %v5499
    %v5513 = vpop.f32.mrf.mxu0
    %v5514 = vadd.f32 0.0, %v5513
    %v5515 = vpop.f32.mrf.mxu0
    %5516 = vdwg.mxu0
    %5517 = vst [vmem:[#allocation1] ss:$9 sm:$0xff] %v374
    %v5518 = vld [vmem:[#allocation1] sm:$0xff]
    %5520 = vrot.lane.b32.xlu0 %v5518, 16
    %v5521 = vpop.permute.xlu0 %5520
    %v5523 = vsel %vm737, %v5440, 0
    %v5526 = vsel %vm299, %v5521, 0
    %5528 = vmatpush.bf16.msra.mxu0 0
    %5529 = vmatpush.bf16.msra.mxu0 0
    %5530 = vmatpush.bf16.msra.mxu0 0
    %5531 = vmatpush.bf16.msra.mxu0 0
    %5532 = vmatpush.bf16.msra.mxu0 0
    %5533 = vmatpush.bf16.msra.mxu0 0
    %5534 = vmatpush.bf16.msra.mxu0 0
    %5535 = vmatpush.bf16.msra.mxu0 %v5526
    %5536 = vmatmul.bf16.gmra.mxu0 %v5523
    %v5537 = vpop.f32.mrf.mxu0
    %v5538 = vadd.f32 0.0, %v5537
    %v5539 = vpop.f32.mrf.mxu0
    %5540 = vdwg.mxu0
    %5541 = vst [vmem:[#allocation1] ss:$9 sm:$0xff] %v377
    %v5542 = vld [vmem:[#allocation1] sm:$0xff]
    %5544 = vrot.lane.b32.xlu0 %v5542, 16
    %v5545 = vpop.permute.xlu0 %5544
    %v5547 = vsel %vm737, %v5441, 0
    %v5550 = vsel %vm299, %v5545, 0
    %5552 = vmatpush.bf16.msra.mxu0 0
    %5553 = vmatpush.bf16.msra.mxu0 0
    %5554 = vmatpush.bf16.msra.mxu0 0
    %5555 = vmatpush.bf16.msra.mxu0 0
    %5556 = vmatpush.bf16.msra.mxu0 0
    %5557 = vmatpush.bf16.msra.mxu0 0
    %5558 = vmatpush.bf16.msra.mxu0 0
    %5559 = vmatpush.bf16.msra.mxu0 %v5550
    %5560 = vmatmul.bf16.gmra.mxu0 %v5547
    %v5561 = vpop.f32.mrf.mxu0
    %v5562 = vadd.f32 0.0, %v5561
    %v5563 = vpop.f32.mrf.mxu0
    %5564 = vdwg.mxu0
    %5565 = vst [vmem:[#allocation1] ss:$9 sm:$0xff] %v380
    %v5566 = vld [vmem:[#allocation1] sm:$0xff]
    %5568 = vrot.lane.b32.xlu0 %v5566, 16
    %v5569 = vpop.permute.xlu0 %5568
    %v5571 = vsel %vm737, %v5442, 0
    %v5574 = vsel %vm299, %v5569, 0
    %5576 = vmatpush.bf16.msra.mxu0 0
    %5577 = vmatpush.bf16.msra.mxu0 0
    %5578 = vmatpush.bf16.msra.mxu0 0
    %5579 = vmatpush.bf16.msra.mxu0 0
    %5580 = vmatpush.bf16.msra.mxu0 0
    %5581 = vmatpush.bf16.msra.mxu0 0
    %5582 = vmatpush.bf16.msra.mxu0 0
    %5583 = vmatpush.bf16.msra.mxu0 %v5574
    %5584 = vmatmul.bf16.gmra.mxu0 %v5571
    %v5585 = vpop.f32.mrf.mxu0
    %v5586 = vadd.f32 0.0, %v5585
    %v5587 = vpop.f32.mrf.mxu0
    %5588 = vdwg.mxu0
    %5589 = vst [vmem:[#allocation1] ss:$9 sm:$0xff] %v383
    %v5590 = vld [vmem:[#allocation1] sm:$0xff]
    %5592 = vrot.lane.b32.xlu0 %v5590, 16
    %v5593 = vpop.permute.xlu0 %5592
    %v5595 = vsel %vm737, %v5443, 0
    %v5598 = vsel %vm299, %v5593, 0
    %5600 = vmatpush.bf16.msra.mxu0 0
    %5601 = vmatpush.bf16.msra.mxu0 0
    %5602 = vmatpush.bf16.msra.mxu0 0
    %5603 = vmatpush.bf16.msra.mxu0 0
    %5604 = vmatpush.bf16.msra.mxu0 0
    %5605 = vmatpush.bf16.msra.mxu0 0
    %5606 = vmatpush.bf16.msra.mxu0 0
    %5607 = vmatpush.bf16.msra.mxu0 %v5598
    %5608 = vmatmul.bf16.gmra.mxu0 %v5595
    %v5609 = vpop.f32.mrf.mxu0
    %v5610 = vadd.f32 0.0, %v5609
    %v5611 = vpop.f32.mrf.mxu0
    %5612 = vdwg.mxu0
    %5613 = vst [vmem:[#allocation1] ss:$9 sm:$0xff] %v386
    %v5614 = vld [vmem:[#allocation1] sm:$0xff]
    %5616 = vrot.lane.b32.xlu0 %v5614, 16
    %v5617 = vpop.permute.xlu0 %5616
    %v5619 = vsel %vm737, %v5444, 0
    %v5622 = vsel %vm299, %v5617, 0
    %5624 = vmatpush.bf16.msra.mxu0 0
    %5625 = vmatpush.bf16.msra.mxu0 0
    %5626 = vmatpush.bf16.msra.mxu0 0
    %5627 = vmatpush.bf16.msra.mxu0 0
    %5628 = vmatpush.bf16.msra.mxu0 0
    %5629 = vmatpush.bf16.msra.mxu0 0
    %5630 = vmatpush.bf16.msra.mxu0 0
    %5631 = vmatpush.bf16.msra.mxu0 %v5622
    %5632 = vmatmul.bf16.gmra.mxu0 %v5619
    %v5633 = vpop.f32.mrf.mxu0
    %v5634 = vadd.f32 0.0, %v5633
    %v5635 = vpop.f32.mrf.mxu0
    %5636 = vdwg.mxu0
    %v5637 = vld [vmem:[%s3 + $0x38] sm:$0xf]
    %v5638 = vld [vmem:[%s3 + $0x3c] sm:$0xf]
    %5647 = vst [vmem:[#allocation1] ss:$4 sm:$0xff] %v5466
    %s5648 = scalar_lea.vmem [#allocation1], 1
    %5649 = vst [vmem:[%s5648] ss:$4 sm:$0xff] %v5490
    %s5650 = scalar_lea.vmem [#allocation1], 2
    %5651 = vst [vmem:[%s5650] ss:$4 sm:$0xff] %v5514
    %s5652 = scalar_lea.vmem [#allocation1], 3
    %5653 = vst [vmem:[%s5652] ss:$4 sm:$0xff] %v5538
    %s5654 = scalar_lea.vmem [#allocation1], 32
    %5655 = vst [vmem:[%s5654] ss:$4 sm:$0xff] %v5562
    %s5656 = scalar_lea.vmem [#allocation1], 33
    %5657 = vst [vmem:[%s5656] ss:$4 sm:$0xff] %v5586
    %s5658 = scalar_lea.vmem [#allocation1], 34
    %5659 = vst [vmem:[%s5658] ss:$4 sm:$0xff] %v5610
    %s5660 = scalar_lea.vmem [#allocation1], 35
    %5661 = vst [vmem:[%s5660] ss:$4 sm:$0xff] %v5634
    %v5662 = vld.sshfl [vmem:[#allocation1] sm:$0xff pattern:$0x73625140]
    %v5663 = vld.sshfl [vmem:[#allocation1 + $0x20] sm:$0xff pattern:$0x73625140]
    %v5666 = vpack.c.bf16 %v5663, %v5662
    %v5669 = vunpack.c.l.b16 %v5637
    %v5670 = vunpack.c.l.b16 %v5638
    %v5671 = vpack.c.b16 %v5670, %v5669
    %v5674 = vsel %vm387, %v5666, 0
    %5676 = vmatpush.bf16.msra.mxu0 0
    %5677 = vmatpush.bf16.msra.mxu0 0
    %5678 = vmatpush.bf16.msra.mxu0 0
    %5679 = vmatpush.bf16.msra.mxu0 0
    %5680 = vmatpush.bf16.msra.mxu0 0
    %5681 = vmatpush.bf16.msra.mxu0 0
    %5682 = vmatpush.bf16.msra.mxu0 0
    %5683 = vmatpush.bf16.msra.mxu0 %v5671
    %5684 = vmatmul.bf16.gmra.mxu0 %v5674
    %v5685 = vpop.f32.mrf.mxu0
    %v5686 = vadd.f32 0.0, %v5685
    %v5687 = vpop.f32.mrf.mxu0
    %v5688 = vadd.f32 0.0, %v5687
    %5689 = vdwg.mxu0
    %v5690 = vadd.f32 %v5011, %v5686
    %v5691 = vadd.f32 %v5012, %v5688
    %v5692 = vld [vmem:[%s1 + $0x6] sm:$0x1]
    %v5693 = vperm.slane %v5692, 0
    %v5694 = vadd.f32 %v5690, %v5693
    %v5695 = vadd.f32 %v5691, %v5693
    %v5696 = vadd.f32 %v78, %v5694
    %v5697 = vadd.f32 %v79, %v5695
    %v5698 = vld [vmem:[%s1 + $0xe] sm:$0x1]
    %v5699 = vld [vmem:[%s1 + $0x10] sm:$0x1]
    %5700 = vadd.xlane.f32.xlu0 %v5696
    %v5701 = vpop.xlane.xlu0 %5700
    %5702 = vadd.xlane.f32.xlu0 %v5697
    %v5703 = vpop.xlane.xlu0 %5702
    %v5704 = vrcp.pop 128.0
    %v5705 = vmul.f32 128.0, %v5704
    %v5706 = vsub.f32 1.0, %v5705
    %v5707 = vmul.f32 %v5704, %v5706
    %v5708 = vadd.f32 %v5704, %v5707
    %vm5709 = vweird.f32 %v5704
    %v5710 = vsel %vm5709, %v5704, %v5708
    %v5711 = vmul.f32 %v5701, %v5710
    %v5712 = vmul.f32 %v5703, %v5710
    %v5713 = vsub.f32 %v5696, %v5711
    %v5714 = vsub.f32 %v5697, %v5712
    %v5715 = vmul.f32 %v5713, %v5713
    %v5716 = vmul.f32 %v5714, %v5714
    %5717 = vadd.xlane.f32.xlu0 %v5715
    %v5718 = vpop.xlane.xlu0 %5717
    %5719 = vadd.xlane.f32.xlu0 %v5716
    %v5720 = vpop.xlane.xlu0 %5719
    %v5721 = vmul.f32 %v5718, %v5710
    %v5722 = vmul.f32 %v5720, %v5710
    %v5723 = vadd.f32 %v5721, 1e-05
    %v5724 = vadd.f32 %v5722, 1e-05
    %v5725 = vrsqrt.pop %v5723
    %v5726 = vmul.f32 %v5725, %v5723
    %v5727 = vmul.f32 %v5726, %v5725
    %v5728 = vmul.f32 0.5, %v5727
    %v5729 = vsub.f32 1.5, %v5728
    %v5730 = vmul.f32 %v5725, %v5729
    %vm5731 = vweird.f32 %v5723
    %vm5732 = vweird.f32 %v5725
    %vm5733 = vmor %vm5731, %vm5732
    %v5734 = vsel %vm5733, %v5725, %v5730
    %v5735 = vrsqrt.pop %v5724
    %v5736 = vmul.f32 %v5735, %v5724
    %v5737 = vmul.f32 %v5736, %v5735
    %v5738 = vmul.f32 0.5, %v5737
    %v5739 = vsub.f32 1.5, %v5738
    %v5740 = vmul.f32 %v5735, %v5739
    %vm5741 = vweird.f32 %v5724
    %vm5742 = vweird.f32 %v5735
    %vm5743 = vmor %vm5741, %vm5742
    %v5744 = vsel %vm5743, %v5735, %v5740
    %v5745 = vmul.f32 %v5713, %v5734
    %v5746 = vmul.f32 %v5714, %v5744
    %v5747 = vperm.slane %v5698, 0
    %v5748 = vmul.f32 %v5745, %v5747
    %v5749 = vmul.f32 %v5746, %v5747
    %v5750 = vperm.slane %v5699, 0
    %v5751 = vadd.f32 %v5748, %v5750
    %v5752 = vadd.f32 %v5749, %v5750
    %v5753 = vld [vmem:[#allocation5] sm:$0xff]
    %v5754 = vld [vmem:[#allocation5 + $0x8] sm:$0xff]
    %v5755 = vld [vmem:[#allocation5 + $0x10] sm:$0xff]
    %v5756 = vld [vmem:[#allocation5 + $0x18] sm:$0xff]
    %v5757 = vld [vmem:[#allocation5 + $0x20] sm:$0xff]
    %v5758 = vld [vmem:[#allocation5 + $0x28] sm:$0xff]
    %v5759 = vld [vmem:[#allocation5 + $0x30] sm:$0xff]
    %v5760 = vld [vmem:[#allocation5 + $0x38] sm:$0xff]
    %v5761 = vld [vmem:[#allocation5 + $0x40] sm:$0xff]
    %v5762 = vld [vmem:[#allocation5 + $0x48] sm:$0xff]
    %v5763 = vld [vmem:[#allocation5 + $0x50] sm:$0xff]
    %v5764 = vld [vmem:[#allocation5 + $0x58] sm:$0xff]
    %v5765 = vld [vmem:[#allocation5 + $0x60] sm:$0xff]
    %v5766 = vld [vmem:[#allocation5 + $0x68] sm:$0xff]
    %v5767 = vld [vmem:[#allocation5 + $0x70] sm:$0xff]
    %v5768 = vld [vmem:[#allocation5 + $0x78] sm:$0xff]
    %v5769 = vpack.c.bf16 %v5752, %v5751
    %s5770 = scalar_lea.vmem %s1, 8
    %v5771 = vld [vmem:[%s5770] ss:$2 sm:$0x3]
    %v5773 = vperm.slane %v5771, 0
    %v5774 = vperm.slane %v5771, 1
    %v5793 = vunpack.c.l.b16 %v5753
    %v5794 = vunpack.c.h.b16 %v5753
    %v5795 = vunpack.c.l.b16 %v5754
    %v5796 = vunpack.c.h.b16 %v5754
    %v5797 = vunpack.c.l.b16 %v5755
    %v5798 = vunpack.c.h.b16 %v5755
    %v5799 = vunpack.c.l.b16 %v5756
    %v5800 = vunpack.c.h.b16 %v5756
    %v5801 = vunpack.c.l.b16 %v5757
    %v5802 = vunpack.c.h.b16 %v5757
    %v5803 = vunpack.c.l.b16 %v5758
    %v5804 = vunpack.c.h.b16 %v5758
    %v5805 = vunpack.c.l.b16 %v5759
    %v5806 = vunpack.c.h.b16 %v5759
    %v5807 = vunpack.c.l.b16 %v5760
    %v5808 = vunpack.c.h.b16 %v5760
    %v5809 = vunpack.c.l.b16 %v5761
    %v5810 = vunpack.c.h.b16 %v5761
    %v5811 = vunpack.c.l.b16 %v5762
    %v5812 = vunpack.c.h.b16 %v5762
    %v5813 = vunpack.c.l.b16 %v5763
    %v5814 = vunpack.c.h.b16 %v5763
    %v5815 = vunpack.c.l.b16 %v5764
    %v5816 = vunpack.c.h.b16 %v5764
    %v5817 = vunpack.c.l.b16 %v5765
    %v5818 = vunpack.c.h.b16 %v5765
    %v5819 = vunpack.c.l.b16 %v5766
    %v5820 = vunpack.c.h.b16 %v5766
    %v5821 = vunpack.c.l.b16 %v5767
    %v5822 = vunpack.c.h.b16 %v5767
    %v5823 = vunpack.c.l.b16 %v5768
    %v5824 = vunpack.c.h.b16 %v5768
    %v5825 = vpack.c.b16 %v5795, %v5793
    %v5826 = vpack.c.b16 %v5796, %v5794
    %v5827 = vpack.c.b16 %v5799, %v5797
    %v5828 = vpack.c.b16 %v5800, %v5798
    %v5829 = vpack.c.b16 %v5803, %v5801
    %v5830 = vpack.c.b16 %v5804, %v5802
    %v5831 = vpack.c.b16 %v5807, %v5805
    %v5832 = vpack.c.b16 %v5808, %v5806
    %v5833 = vpack.c.b16 %v5811, %v5809
    %v5834 = vpack.c.b16 %v5812, %v5810
    %v5835 = vpack.c.b16 %v5815, %v5813
    %v5836 = vpack.c.b16 %v5816, %v5814
    %v5837 = vpack.c.b16 %v5819, %v5817
    %v5838 = vpack.c.b16 %v5820, %v5818
    %v5839 = vpack.c.b16 %v5823, %v5821
    %v5840 = vpack.c.b16 %v5824, %v5822
    %5857 = vmatpush.bf16.msra.mxu0 %v5839
    %5858 = vmatpush.bf16.msra.mxu0 %v5837
    %5859 = vmatpush.bf16.msra.mxu0 %v5835
    %5860 = vmatpush.bf16.msra.mxu0 %v5833
    %5861 = vmatpush.bf16.msra.mxu0 %v5831
    %5862 = vmatpush.bf16.msra.mxu0 %v5829
    %5863 = vmatpush.bf16.msra.mxu0 %v5827
    %5864 = vmatpush.bf16.msra.mxu0 %v5825
    %5865 = vmatmul.bf16.gmra.mxu0 %v5769
    %v5866 = vpop.f32.mrf.mxu0
    %v5867 = vadd.f32 %v5773, %v5866
    %v5868 = vpop.f32.mrf.mxu0
    %v5869 = vadd.f32 %v5773, %v5868
    %5870 = vdwg.mxu0
    %5871 = vmatpush.bf16.msra.mxu0 %v5840
    %5872 = vmatpush.bf16.msra.mxu0 %v5838
    %5873 = vmatpush.bf16.msra.mxu0 %v5836
    %5874 = vmatpush.bf16.msra.mxu0 %v5834
    %5875 = vmatpush.bf16.msra.mxu0 %v5832
    %5876 = vmatpush.bf16.msra.mxu0 %v5830
    %5877 = vmatpush.bf16.msra.mxu0 %v5828
    %5878 = vmatpush.bf16.msra.mxu0 %v5826
    %5879 = vmatmul.bf16.gmra.mxu0 %v5769
    %v5880 = vpop.f32.mrf.mxu0
    %v5881 = vadd.f32 %v5774, %v5880
    %v5882 = vpop.f32.mrf.mxu0
    %v5883 = vadd.f32 %v5774, %v5882
    %5884 = vdwg.mxu0
    %v5885 = vmax.f32 %v5867, 0.0
    %v5886 = vmax.f32 %v5881, 0.0
    %v5887 = vmax.f32 %v5869, 0.0
    %v5888 = vmax.f32 %v5883, 0.0
    %v5889 = vld [vmem:[#allocation7] sm:$0xf]
    %v5890 = vld [vmem:[#allocation7 + $0x4] sm:$0xf]
    %v5891 = vld [vmem:[#allocation7 + $0x8] sm:$0xf]
    %v5892 = vld [vmem:[#allocation7 + $0xc] sm:$0xf]
    %v5893 = vld [vmem:[#allocation7 + $0x10] sm:$0xf]
    %v5894 = vld [vmem:[#allocation7 + $0x14] sm:$0xf]
    %v5895 = vld [vmem:[#allocation7 + $0x18] sm:$0xf]
    %v5896 = vld [vmem:[#allocation7 + $0x1c] sm:$0xf]
    %v5897 = vld [vmem:[#allocation7 + $0x20] sm:$0xf]
    %v5898 = vld [vmem:[#allocation7 + $0x24] sm:$0xf]
    %v5899 = vld [vmem:[#allocation7 + $0x28] sm:$0xf]
    %v5900 = vld [vmem:[#allocation7 + $0x2c] sm:$0xf]
    %v5901 = vld [vmem:[#allocation7 + $0x30] sm:$0xf]
    %v5902 = vld [vmem:[#allocation7 + $0x34] sm:$0xf]
    %v5903 = vld [vmem:[#allocation7 + $0x38] sm:$0xf]
    %v5904 = vld [vmem:[#allocation7 + $0x3c] sm:$0xf]
    %v5905 = vld [vmem:[#allocation7 + $0x40] sm:$0xf]
    %v5906 = vld [vmem:[#allocation7 + $0x44] sm:$0xf]
    %v5907 = vld [vmem:[#allocation7 + $0x48] sm:$0xf]
    %v5908 = vld [vmem:[#allocation7 + $0x4c] sm:$0xf]
    %v5909 = vld [vmem:[#allocation7 + $0x50] sm:$0xf]
    %v5910 = vld [vmem:[#allocation7 + $0x54] sm:$0xf]
    %v5911 = vld [vmem:[#allocation7 + $0x58] sm:$0xf]
    %v5912 = vld [vmem:[#allocation7 + $0x5c] sm:$0xf]
    %v5913 = vld [vmem:[#allocation7 + $0x60] sm:$0xf]
    %v5914 = vld [vmem:[#allocation7 + $0x64] sm:$0xf]
    %v5915 = vld [vmem:[#allocation7 + $0x68] sm:$0xf]
    %v5916 = vld [vmem:[#allocation7 + $0x6c] sm:$0xf]
    %v5917 = vld [vmem:[#allocation7 + $0x70] sm:$0xf]
    %v5918 = vld [vmem:[#allocation7 + $0x74] sm:$0xf]
    %v5919 = vld [vmem:[#allocation7 + $0x78] sm:$0xf]
    %v5920 = vld [vmem:[#allocation7 + $0x7c] sm:$0xf]
    %v5921 = vpack.c.bf16 %v5887, %v5885
    %v5922 = vpack.c.bf16 %v5888, %v5886
    %v5923 = vld [vmem:[%s1 + $0xc] sm:$0x1]
    %v5924 = vperm.slane %v5923, 0
    %v5957 = vunpack.c.l.b16 %v5889
    %v5958 = vunpack.c.l.b16 %v5890
    %v5959 = vunpack.c.l.b16 %v5891
    %v5960 = vunpack.c.l.b16 %v5892
    %v5961 = vunpack.c.l.b16 %v5893
    %v5962 = vunpack.c.l.b16 %v5894
    %v5963 = vunpack.c.l.b16 %v5895
    %v5964 = vunpack.c.l.b16 %v5896
    %v5965 = vunpack.c.l.b16 %v5897
    %v5966 = vunpack.c.l.b16 %v5898
    %v5967 = vunpack.c.l.b16 %v5899
    %v5968 = vunpack.c.l.b16 %v5900
    %v5969 = vunpack.c.l.b16 %v5901
    %v5970 = vunpack.c.l.b16 %v5902
    %v5971 = vunpack.c.l.b16 %v5903
    %v5972 = vunpack.c.l.b16 %v5904
    %v5973 = vunpack.c.l.b16 %v5905
    %v5974 = vunpack.c.l.b16 %v5906
    %v5975 = vunpack.c.l.b16 %v5907
    %v5976 = vunpack.c.l.b16 %v5908
    %v5977 = vunpack.c.l.b16 %v5909
    %v5978 = vunpack.c.l.b16 %v5910
    %v5979 = vunpack.c.l.b16 %v5911
    %v5980 = vunpack.c.l.b16 %v5912
    %v5981 = vunpack.c.l.b16 %v5913
    %v5982 = vunpack.c.l.b16 %v5914
    %v5983 = vunpack.c.l.b16 %v5915
    %v5984 = vunpack.c.l.b16 %v5916
    %v5985 = vunpack.c.l.b16 %v5917
    %v5986 = vunpack.c.l.b16 %v5918
    %v5987 = vunpack.c.l.b16 %v5919
    %v5988 = vunpack.c.l.b16 %v5920
    %v5989 = vpack.c.b16 %v5958, %v5957
    %v5990 = vpack.c.b16 %v5960, %v5959
    %v5991 = vpack.c.b16 %v5962, %v5961
    %v5992 = vpack.c.b16 %v5964, %v5963
    %v5993 = vpack.c.b16 %v5966, %v5965
    %v5994 = vpack.c.b16 %v5968, %v5967
    %v5995 = vpack.c.b16 %v5970, %v5969
    %v5996 = vpack.c.b16 %v5972, %v5971
    %v5997 = vpack.c.b16 %v5974, %v5973
    %v5998 = vpack.c.b16 %v5976, %v5975
    %v5999 = vpack.c.b16 %v5978, %v5977
    %v6000 = vpack.c.b16 %v5980, %v5979
    %v6001 = vpack.c.b16 %v5982, %v5981
    %v6002 = vpack.c.b16 %v5984, %v5983
    %v6003 = vpack.c.b16 %v5986, %v5985
    %v6004 = vpack.c.b16 %v5988, %v5987
    %6021 = vmatpush.bf16.msra.mxu0 %v5996
    %6022 = vmatpush.bf16.msra.mxu0 %v5995
    %6023 = vmatpush.bf16.msra.mxu0 %v5994
    %6024 = vmatpush.bf16.msra.mxu0 %v5993
    %6025 = vmatpush.bf16.msra.mxu0 %v5992
    %6026 = vmatpush.bf16.msra.mxu0 %v5991
    %6027 = vmatpush.bf16.msra.mxu0 %v5990
    %6028 = vmatpush.bf16.msra.mxu0 %v5989
    %6029 = vmatmul.bf16.gmra.mxu0 %v5921
    %v6030 = vpop.f32.mrf.mxu0
    %v6031 = vadd.f32 %v5924, %v6030
    %v6032 = vpop.f32.mrf.mxu0
    %v6033 = vadd.f32 %v5924, %v6032
    %6034 = vdwg.mxu0
    %6035 = vmatpush.bf16.msra.mxu0 %v6004
    %6036 = vmatpush.bf16.msra.mxu0 %v6003
    %6037 = vmatpush.bf16.msra.mxu0 %v6002
    %6038 = vmatpush.bf16.msra.mxu0 %v6001
    %6039 = vmatpush.bf16.msra.mxu0 %v6000
    %6040 = vmatpush.bf16.msra.mxu0 %v5999
    %6041 = vmatpush.bf16.msra.mxu0 %v5998
    %6042 = vmatpush.bf16.msra.mxu0 %v5997
    %6043 = vmatmul.bf16.gmra.mxu0 %v5922
    %v6044 = vpop.f32.mrf.mxu0
    %v6045 = vadd.f32 %v6031, %v6044
    %v6046 = vpop.f32.mrf.mxu0
    %v6047 = vadd.f32 %v6033, %v6046
    %6048 = vdwg.mxu0
    %v6049 = vadd.f32 %v5751, %v6045
    %v6050 = vadd.f32 %v5752, %v6047
    %v6051 = vld [vmem:[%s1 + $0x12] sm:$0x1]
    %v6052 = vld [vmem:[%s1 + $0x14] sm:$0x1]
    %6053 = vadd.xlane.f32.xlu0 %v6049
    %v6054 = vpop.xlane.xlu0 %6053
    %6055 = vadd.xlane.f32.xlu0 %v6050
    %v6056 = vpop.xlane.xlu0 %6055
    %v6057 = vmul.f32 %v6054, %v5710
    %v6058 = vmul.f32 %v6056, %v5710
    %v6059 = vsub.f32 %v6049, %v6057
    %v6060 = vsub.f32 %v6050, %v6058
    %v6061 = vmul.f32 %v6059, %v6059
    %v6062 = vmul.f32 %v6060, %v6060
    %6063 = vadd.xlane.f32.xlu0 %v6061
    %v6064 = vpop.xlane.xlu0 %6063
    %6065 = vadd.xlane.f32.xlu0 %v6062
    %v6066 = vpop.xlane.xlu0 %6065
    %v6067 = vmul.f32 %v6064, %v5710
    %v6068 = vmul.f32 %v6066, %v5710
    %v6069 = vadd.f32 %v6067, 1e-05
    %v6070 = vadd.f32 %v6068, 1e-05
    %v6071 = vrsqrt.pop %v6069
    %v6072 = vmul.f32 %v6071, %v6069
    %v6073 = vmul.f32 %v6072, %v6071
    %v6074 = vmul.f32 0.5, %v6073
    %v6075 = vsub.f32 1.5, %v6074
    %v6076 = vmul.f32 %v6071, %v6075
    %vm6077 = vweird.f32 %v6069
    %vm6078 = vweird.f32 %v6071
    %vm6079 = vmor %vm6077, %vm6078
    %v6080 = vsel %vm6079, %v6071, %v6076
    %v6081 = vrsqrt.pop %v6070
    %v6082 = vmul.f32 %v6081, %v6070
    %v6083 = vmul.f32 %v6082, %v6081
    %v6084 = vmul.f32 0.5, %v6083
    %v6085 = vsub.f32 1.5, %v6084
    %v6086 = vmul.f32 %v6081, %v6085
    %vm6087 = vweird.f32 %v6070
    %vm6088 = vweird.f32 %v6081
    %vm6089 = vmor %vm6087, %vm6088
    %v6090 = vsel %vm6089, %v6081, %v6086
    %v6091 = vmul.f32 %v6059, %v6080
    %v6092 = vmul.f32 %v6060, %v6090
    %v6093 = vperm.slane %v6051, 0
    %v6094 = vmul.f32 %v6091, %v6093
    %v6095 = vmul.f32 %v6092, %v6093
    %v6096 = vperm.slane %v6052, 0
    %v6097 = vadd.f32 %v6094, %v6096
    %v6098 = vadd.f32 %v6095, %v6096
    %s6099 = scalar_lea.vmem [#allocation2], 192
    %v6100 = vld [vmem:[%s6099] sm:$0xff]
    %v6101 = vld [vmem:[%s6099 + $0x8] sm:$0xf]
    %v6102 = vld [vmem:[%s6099 + $0xc] sm:$0xff]
    %v6103 = vld [vmem:[%s6099 + $0x14] sm:$0xf]
    %v6104 = vld [vmem:[%s6099 + $0x18] sm:$0xff]
    %v6105 = vld [vmem:[%s6099 + $0x20] sm:$0xf]
    %v6106 = vld [vmem:[%s6099 + $0x24] sm:$0xff]
    %v6107 = vld [vmem:[%s6099 + $0x2c] sm:$0xf]
    %v6108 = vld [vmem:[%s6099 + $0x30] sm:$0xff]
    %v6109 = vld [vmem:[%s6099 + $0x38] sm:$0xf]
    %v6110 = vld [vmem:[%s6099 + $0x3c] sm:$0xff]
    %v6111 = vld [vmem:[%s6099 + $0x44] sm:$0xf]
    %v6112 = vld [vmem:[%s6099 + $0x48] sm:$0xff]
    %v6113 = vld [vmem:[%s6099 + $0x50] sm:$0xf]
    %v6114 = vld [vmem:[%s6099 + $0x54] sm:$0xff]
    %v6115 = vld [vmem:[%s6099 + $0x5c] sm:$0xf]
    %v6116 = vld [vmem:[%s6099 + $0x60] sm:$0xff]
    %v6117 = vld [vmem:[%s6099 + $0x68] sm:$0xf]
    %v6118 = vld [vmem:[%s6099 + $0x6c] sm:$0xff]
    %v6119 = vld [vmem:[%s6099 + $0x74] sm:$0xf]
    %v6120 = vld [vmem:[%s6099 + $0x78] sm:$0xff]
    %v6121 = vld [vmem:[%s6099 + $0x80] sm:$0xf]
    %v6122 = vld [vmem:[%s6099 + $0x84] sm:$0xff]
    %v6123 = vld [vmem:[%s6099 + $0x8c] sm:$0xf]
    %v6124 = vld [vmem:[%s6099 + $0x90] sm:$0xff]
    %v6125 = vld [vmem:[%s6099 + $0x98] sm:$0xf]
    %v6126 = vld [vmem:[%s6099 + $0x9c] sm:$0xff]
    %v6127 = vld [vmem:[%s6099 + $0xa4] sm:$0xf]
    %v6128 = vld [vmem:[%s6099 + $0xa8] sm:$0xff]
    %v6129 = vld [vmem:[%s6099 + $0xb0] sm:$0xf]
    %v6130 = vld [vmem:[%s6099 + $0xb4] sm:$0xff]
    %v6131 = vld [vmem:[%s6099 + $0xbc] sm:$0xf]
    %v6132 = vpack.c.bf16 %v6098, %v6097
    %s6133 = scalar_lea.vmem %s1, 1
    %v6134 = vld [vmem:[%s6133] ss:$2 sm:$0x7]
    %v6136 = vperm.slane %v6134, 0
    %v6137 = vperm.slane %v6134, 1
    %v6138 = vperm.slane %v6134, 2
    %v6174 = vunpack.c.l.b16 %v6100
    %v6175 = vunpack.c.h.b16 %v6100
    %v6176 = vunpack.c.l.b16 %v6101
    %v6177 = vunpack.c.l.b16 %v6102
    %v6178 = vunpack.c.h.b16 %v6102
    %v6179 = vunpack.c.l.b16 %v6103
    %v6180 = vunpack.c.l.b16 %v6104
    %v6181 = vunpack.c.h.b16 %v6104
    %v6182 = vunpack.c.l.b16 %v6105
    %v6183 = vunpack.c.l.b16 %v6106
    %v6184 = vunpack.c.h.b16 %v6106
    %v6185 = vunpack.c.l.b16 %v6107
    %v6186 = vunpack.c.l.b16 %v6108
    %v6187 = vunpack.c.h.b16 %v6108
    %v6188 = vunpack.c.l.b16 %v6109
    %v6189 = vunpack.c.l.b16 %v6110
    %v6190 = vunpack.c.h.b16 %v6110
    %v6191 = vunpack.c.l.b16 %v6111
    %v6192 = vunpack.c.l.b16 %v6112
    %v6193 = vunpack.c.h.b16 %v6112
    %v6194 = vunpack.c.l.b16 %v6113
    %v6195 = vunpack.c.l.b16 %v6114
    %v6196 = vunpack.c.h.b16 %v6114
    %v6197 = vunpack.c.l.b16 %v6115
    %v6198 = vunpack.c.l.b16 %v6116
    %v6199 = vunpack.c.h.b16 %v6116
    %v6200 = vunpack.c.l.b16 %v6117
    %v6201 = vunpack.c.l.b16 %v6118
    %v6202 = vunpack.c.h.b16 %v6118
    %v6203 = vunpack.c.l.b16 %v6119
    %v6204 = vunpack.c.l.b16 %v6120
    %v6205 = vunpack.c.h.b16 %v6120
    %v6206 = vunpack.c.l.b16 %v6121
    %v6207 = vunpack.c.l.b16 %v6122
    %v6208 = vunpack.c.h.b16 %v6122
    %v6209 = vunpack.c.l.b16 %v6123
    %v6210 = vunpack.c.l.b16 %v6124
    %v6211 = vunpack.c.h.b16 %v6124
    %v6212 = vunpack.c.l.b16 %v6125
    %v6213 = vunpack.c.l.b16 %v6126
    %v6214 = vunpack.c.h.b16 %v6126
    %v6215 = vunpack.c.l.b16 %v6127
    %v6216 = vunpack.c.l.b16 %v6128
    %v6217 = vunpack.c.h.b16 %v6128
    %v6218 = vunpack.c.l.b16 %v6129
    %v6219 = vunpack.c.l.b16 %v6130
    %v6220 = vunpack.c.h.b16 %v6130
    %v6221 = vunpack.c.l.b16 %v6131
    %v6222 = vpack.c.b16 %v6177, %v6174
    %v6223 = vpack.c.b16 %v6178, %v6175
    %v6224 = vpack.c.b16 %v6179, %v6176
    %v6225 = vpack.c.b16 %v6183, %v6180
    %v6226 = vpack.c.b16 %v6184, %v6181
    %v6227 = vpack.c.b16 %v6185, %v6182
    %v6228 = vpack.c.b16 %v6189, %v6186
    %v6229 = vpack.c.b16 %v6190, %v6187
    %v6230 = vpack.c.b16 %v6191, %v6188
    %v6231 = vpack.c.b16 %v6195, %v6192
    %v6232 = vpack.c.b16 %v6196, %v6193
    %v6233 = vpack.c.b16 %v6197, %v6194
    %v6234 = vpack.c.b16 %v6201, %v6198
    %v6235 = vpack.c.b16 %v6202, %v6199
    %v6236 = vpack.c.b16 %v6203, %v6200
    %v6237 = vpack.c.b16 %v6207, %v6204
    %v6238 = vpack.c.b16 %v6208, %v6205
    %v6239 = vpack.c.b16 %v6209, %v6206
    %v6240 = vpack.c.b16 %v6213, %v6210
    %v6241 = vpack.c.b16 %v6214, %v6211
    %v6242 = vpack.c.b16 %v6215, %v6212
    %v6243 = vpack.c.b16 %v6219, %v6216
    %v6244 = vpack.c.b16 %v6220, %v6217
    %v6245 = vpack.c.b16 %v6221, %v6218
    %6270 = vmatpush.bf16.msra.mxu0 %v6243
    %6271 = vmatpush.bf16.msra.mxu0 %v6240
    %6272 = vmatpush.bf16.msra.mxu0 %v6237
    %6273 = vmatpush.bf16.msra.mxu0 %v6234
    %6274 = vmatpush.bf16.msra.mxu0 %v6231
    %6275 = vmatpush.bf16.msra.mxu0 %v6228
    %6276 = vmatpush.bf16.msra.mxu0 %v6225
    %6277 = vmatpush.bf16.msra.mxu0 %v6222
    %6278 = vmatmul.bf16.gmra.mxu0 %v6132
    %v6279 = vpop.f32.mrf.mxu0
    %v6280 = vadd.f32 %v6136, %v6279
    %v6281 = vpop.f32.mrf.mxu0
    %v6282 = vadd.f32 %v6136, %v6281
    %6283 = vdwg.mxu0
    %6284 = vmatpush.bf16.msra.mxu0 %v6244
    %6285 = vmatpush.bf16.msra.mxu0 %v6241
    %6286 = vmatpush.bf16.msra.mxu0 %v6238
    %6287 = vmatpush.bf16.msra.mxu0 %v6235
    %6288 = vmatpush.bf16.msra.mxu0 %v6232
    %6289 = vmatpush.bf16.msra.mxu0 %v6229
    %6290 = vmatpush.bf16.msra.mxu0 %v6226
    %6291 = vmatpush.bf16.msra.mxu0 %v6223
    %6292 = vmatmul.bf16.gmra.mxu0 %v6132
    %v6293 = vpop.f32.mrf.mxu0
    %v6294 = vadd.f32 %v6137, %v6293
    %v6295 = vpop.f32.mrf.mxu0
    %v6296 = vadd.f32 %v6137, %v6295
    %6297 = vdwg.mxu0
    %6298 = vmatpush.bf16.msra.mxu0 %v6245
    %6299 = vmatpush.bf16.msra.mxu0 %v6242
    %6300 = vmatpush.bf16.msra.mxu0 %v6239
    %6301 = vmatpush.bf16.msra.mxu0 %v6236
    %6302 = vmatpush.bf16.msra.mxu0 %v6233
    %6303 = vmatpush.bf16.msra.mxu0 %v6230
    %6304 = vmatpush.bf16.msra.mxu0 %v6227
    %6305 = vmatpush.bf16.msra.mxu0 %v6224
    %6306 = vmatmul.bf16.gmra.mxu0 %v6132
    %v6307 = vpop.f32.mrf.mxu0
    %v6308 = vadd.f32 %v6138, %v6307
    %v6309 = vpop.f32.mrf.mxu0
    %v6310 = vadd.f32 %v6138, %v6309
    %6311 = vdwg.mxu0
    %v6312 = vmul.f32 %v6280, 0.25
    %v6313 = vmul.f32 %v6282, 0.25
    %v6314 = vpack.c.bf16 %v6312, %v6312
    %v6315 = vpack.c.bf16 %v6313, %v6313
    %v6318 = vrot.slane %v6314, 3
    %v6319 = vrot.slane %v6315, 3
    %v6322 = vsel %vm299, %v6314, %v6318
    %v6323 = vsel %vm303, %v6314, %v6318
    %v6325 = vrot.slane %v6323, 1
    %v6326 = vsel %vm307, %v6314, %v6318
    %v6328 = vrot.slane %v6326, 2
    %v6329 = vsel %vm311, %v6314, %v6318
    %v6331 = vrot.slane %v6329, 3
    %v6334 = vsel %vm299, %v6315, %v6319
    %v6335 = vsel %vm303, %v6315, %v6319
    %v6337 = vrot.slane %v6335, 1
    %v6338 = vsel %vm307, %v6315, %v6319
    %v6340 = vrot.slane %v6338, 2
    %v6341 = vsel %vm311, %v6315, %v6319
    %v6343 = vrot.slane %v6341, 3
    %v6344 = vpack.c.bf16 %v6294, %v6294
    %v6345 = vpack.c.bf16 %v6296, %v6296
    %v6348 = vrot.slane %v6344, 3
    %v6349 = vrot.slane %v6345, 3
    %v6352 = vsel %vm299, %v6344, %v6348
    %v6353 = vsel %vm303, %v6344, %v6348
    %v6355 = vrot.slane %v6353, 1
    %v6356 = vsel %vm307, %v6344, %v6348
    %v6358 = vrot.slane %v6356, 2
    %v6359 = vsel %vm311, %v6344, %v6348
    %v6361 = vrot.slane %v6359, 3
    %v6364 = vsel %vm299, %v6345, %v6349
    %v6365 = vsel %vm303, %v6345, %v6349
    %v6367 = vrot.slane %v6365, 1
    %v6368 = vsel %vm307, %v6345, %v6349
    %v6370 = vrot.slane %v6368, 2
    %v6371 = vsel %vm311, %v6345, %v6349
    %v6373 = vrot.slane %v6371, 3
    %v6374 = vpack.c.bf16 %v6308, %v6308
    %v6375 = vpack.c.bf16 %v6310, %v6310
    %v6378 = vrot.slane %v6374, 3
    %v6379 = vrot.slane %v6375, 3
    %v6382 = vsel %vm299, %v6374, %v6378
    %v6383 = vsel %vm303, %v6374, %v6378
    %v6385 = vrot.slane %v6383, 1
    %v6386 = vsel %vm307, %v6374, %v6378
    %v6388 = vrot.slane %v6386, 2
    %v6389 = vsel %vm311, %v6374, %v6378
    %v6391 = vrot.slane %v6389, 3
    %v6394 = vsel %vm299, %v6375, %v6379
    %v6395 = vsel %vm303, %v6375, %v6379
    %v6397 = vrot.slane %v6395, 1
    %v6398 = vsel %vm307, %v6375, %v6379
    %v6400 = vrot.slane %v6398, 2
    %v6401 = vsel %vm311, %v6375, %v6379
    %v6403 = vrot.slane %v6401, 3
    %v6404 = vsel %vm387, %v6322, 0
    %v6406 = vsel %vm387, %v6352, 0
    %6408 = vmatpush.bf16.xpose.msra.mxu0 0
    %6409 = vmatpush.bf16.xpose.msra.mxu0 0
    %6410 = vmatpush.bf16.xpose.msra.mxu0 0
    %6411 = vmatpush.bf16.xpose.msra.mxu0 0
    %6412 = vmatpush.bf16.xpose.msra.mxu0 0
    %6413 = vmatpush.bf16.xpose.msra.mxu0 0
    %6414 = vmatpush.bf16.xpose.msra.mxu0 0
    %6415 = vmatpush.bf16.xpose.msra.mxu0 %v6406
    %6416 = vmatmul.bf16.gmra.mxu0 %v6404
    %v6417 = vpop.f32.mrf.mxu0
    %v6418 = vadd.f32 0.0, %v6417
    %v6419 = vpop.f32.mrf.mxu0
    %6420 = vdwg.mxu0
    %v6422 = vsel %vm387, %v6325, 0
    %v6425 = vsel %vm387, %v6355, 0
    %6427 = vmatpush.bf16.xpose.msra.mxu0 0
    %6428 = vmatpush.bf16.xpose.msra.mxu0 0
    %6429 = vmatpush.bf16.xpose.msra.mxu0 0
    %6430 = vmatpush.bf16.xpose.msra.mxu0 0
    %6431 = vmatpush.bf16.xpose.msra.mxu0 0
    %6432 = vmatpush.bf16.xpose.msra.mxu0 0
    %6433 = vmatpush.bf16.xpose.msra.mxu0 0
    %6434 = vmatpush.bf16.xpose.msra.mxu0 %v6425
    %6435 = vmatmul.bf16.gmra.mxu0 %v6422
    %v6436 = vpop.f32.mrf.mxu0
    %v6437 = vadd.f32 0.0, %v6436
    %v6438 = vpop.f32.mrf.mxu0
    %6439 = vdwg.mxu0
    %v6441 = vsel %vm387, %v6328, 0
    %v6444 = vsel %vm387, %v6358, 0
    %6446 = vmatpush.bf16.xpose.msra.mxu0 0
    %6447 = vmatpush.bf16.xpose.msra.mxu0 0
    %6448 = vmatpush.bf16.xpose.msra.mxu0 0
    %6449 = vmatpush.bf16.xpose.msra.mxu0 0
    %6450 = vmatpush.bf16.xpose.msra.mxu0 0
    %6451 = vmatpush.bf16.xpose.msra.mxu0 0
    %6452 = vmatpush.bf16.xpose.msra.mxu0 0
    %6453 = vmatpush.bf16.xpose.msra.mxu0 %v6444
    %6454 = vmatmul.bf16.gmra.mxu0 %v6441
    %v6455 = vpop.f32.mrf.mxu0
    %v6456 = vadd.f32 0.0, %v6455
    %v6457 = vpop.f32.mrf.mxu0
    %6458 = vdwg.mxu0
    %v6460 = vsel %vm387, %v6331, 0
    %v6463 = vsel %vm387, %v6361, 0
    %6465 = vmatpush.bf16.xpose.msra.mxu0 0
    %6466 = vmatpush.bf16.xpose.msra.mxu0 0
    %6467 = vmatpush.bf16.xpose.msra.mxu0 0
    %6468 = vmatpush.bf16.xpose.msra.mxu0 0
    %6469 = vmatpush.bf16.xpose.msra.mxu0 0
    %6470 = vmatpush.bf16.xpose.msra.mxu0 0
    %6471 = vmatpush.bf16.xpose.msra.mxu0 0
    %6472 = vmatpush.bf16.xpose.msra.mxu0 %v6463
    %6473 = vmatmul.bf16.gmra.mxu0 %v6460
    %v6474 = vpop.f32.mrf.mxu0
    %v6475 = vadd.f32 0.0, %v6474
    %v6476 = vpop.f32.mrf.mxu0
    %6477 = vdwg.mxu0
    %v6478 = vsel %vm387, %v6334, 0
    %v6480 = vsel %vm387, %v6364, 0
    %6482 = vmatpush.bf16.xpose.msra.mxu0 0
    %6483 = vmatpush.bf16.xpose.msra.mxu0 0
    %6484 = vmatpush.bf16.xpose.msra.mxu0 0
    %6485 = vmatpush.bf16.xpose.msra.mxu0 0
    %6486 = vmatpush.bf16.xpose.msra.mxu0 0
    %6487 = vmatpush.bf16.xpose.msra.mxu0 0
    %6488 = vmatpush.bf16.xpose.msra.mxu0 0
    %6489 = vmatpush.bf16.xpose.msra.mxu0 %v6480
    %6490 = vmatmul.bf16.gmra.mxu0 %v6478
    %v6491 = vpop.f32.mrf.mxu0
    %v6492 = vadd.f32 0.0, %v6491
    %v6493 = vpop.f32.mrf.mxu0
    %6494 = vdwg.mxu0
    %v6496 = vsel %vm387, %v6337, 0
    %v6499 = vsel %vm387, %v6367, 0
    %6501 = vmatpush.bf16.xpose.msra.mxu0 0
    %6502 = vmatpush.bf16.xpose.msra.mxu0 0
    %6503 = vmatpush.bf16.xpose.msra.mxu0 0
    %6504 = vmatpush.bf16.xpose.msra.mxu0 0
    %6505 = vmatpush.bf16.xpose.msra.mxu0 0
    %6506 = vmatpush.bf16.xpose.msra.mxu0 0
    %6507 = vmatpush.bf16.xpose.msra.mxu0 0
    %6508 = vmatpush.bf16.xpose.msra.mxu0 %v6499
    %6509 = vmatmul.bf16.gmra.mxu0 %v6496
    %v6510 = vpop.f32.mrf.mxu0
    %v6511 = vadd.f32 0.0, %v6510
    %v6512 = vpop.f32.mrf.mxu0
    %6513 = vdwg.mxu0
    %v6515 = vsel %vm387, %v6340, 0
    %v6518 = vsel %vm387, %v6370, 0
    %6520 = vmatpush.bf16.xpose.msra.mxu0 0
    %6521 = vmatpush.bf16.xpose.msra.mxu0 0
    %6522 = vmatpush.bf16.xpose.msra.mxu0 0
    %6523 = vmatpush.bf16.xpose.msra.mxu0 0
    %6524 = vmatpush.bf16.xpose.msra.mxu0 0
    %6525 = vmatpush.bf16.xpose.msra.mxu0 0
    %6526 = vmatpush.bf16.xpose.msra.mxu0 0
    %6527 = vmatpush.bf16.xpose.msra.mxu0 %v6518
    %6528 = vmatmul.bf16.gmra.mxu0 %v6515
    %v6529 = vpop.f32.mrf.mxu0
    %v6530 = vadd.f32 0.0, %v6529
    %v6531 = vpop.f32.mrf.mxu0
    %6532 = vdwg.mxu0
    %v6534 = vsel %vm387, %v6343, 0
    %v6537 = vsel %vm387, %v6373, 0
    %6539 = vmatpush.bf16.xpose.msra.mxu0 0
    %6540 = vmatpush.bf16.xpose.msra.mxu0 0
    %6541 = vmatpush.bf16.xpose.msra.mxu0 0
    %6542 = vmatpush.bf16.xpose.msra.mxu0 0
    %6543 = vmatpush.bf16.xpose.msra.mxu0 0
    %6544 = vmatpush.bf16.xpose.msra.mxu0 0
    %6545 = vmatpush.bf16.xpose.msra.mxu0 0
    %6546 = vmatpush.bf16.xpose.msra.mxu0 %v6537
    %6547 = vmatmul.bf16.gmra.mxu0 %v6534
    %v6548 = vpop.f32.mrf.mxu0
    %v6549 = vadd.f32 0.0, %v6548
    %v6550 = vpop.f32.mrf.mxu0
    %6551 = vdwg.mxu0
    %v6552 = vsel %vm536, %v6418, -inf
    %6553 = vmax.xlane.f32.xlu0 %v6552
    %v6554 = vpop.xlane.xlu0 %6553
    %v6555 = vsel %vm536, %v6437, -inf
    %6556 = vmax.xlane.f32.xlu0 %v6555
    %v6557 = vpop.xlane.xlu0 %6556
    %v6558 = vsel %vm536, %v6456, -inf
    %6559 = vmax.xlane.f32.xlu0 %v6558
    %v6560 = vpop.xlane.xlu0 %6559
    %v6561 = vsel %vm536, %v6475, -inf
    %6562 = vmax.xlane.f32.xlu0 %v6561
    %v6563 = vpop.xlane.xlu0 %6562
    %v6564 = vsel %vm536, %v6492, -inf
    %6565 = vmax.xlane.f32.xlu0 %v6564
    %v6566 = vpop.xlane.xlu0 %6565
    %v6567 = vsel %vm536, %v6511, -inf
    %6568 = vmax.xlane.f32.xlu0 %v6567
    %v6569 = vpop.xlane.xlu0 %6568
    %v6570 = vsel %vm536, %v6530, -inf
    %6571 = vmax.xlane.f32.xlu0 %v6570
    %v6572 = vpop.xlane.xlu0 %6571
    %v6573 = vsel %vm536, %v6549, -inf
    %6574 = vmax.xlane.f32.xlu0 %v6573
    %v6575 = vpop.xlane.xlu0 %6574
    %v6576 = vsub.f32 %v6418, %v6554
    %v6577 = vsub.f32 %v6437, %v6557
    %v6578 = vsub.f32 %v6456, %v6560
    %v6579 = vsub.f32 %v6475, %v6563
    %v6580 = vsub.f32 %v6492, %v6566
    %v6581 = vsub.f32 %v6511, %v6569
    %v6582 = vsub.f32 %v6530, %v6572
    %v6583 = vsub.f32 %v6549, %v6575
    %v6584 = vmul.f32 %v6576, 1.442695
    %v6585 = vpow.pop %v6584
    %v6586 = vmul.f32 %v6577, 1.442695
    %v6587 = vpow.pop %v6586
    %v6588 = vmul.f32 %v6578, 1.442695
    %v6589 = vpow.pop %v6588
    %v6590 = vmul.f32 %v6579, 1.442695
    %v6591 = vpow.pop %v6590
    %v6592 = vmul.f32 %v6580, 1.442695
    %v6593 = vpow.pop %v6592
    %v6594 = vmul.f32 %v6581, 1.442695
    %v6595 = vpow.pop %v6594
    %v6596 = vmul.f32 %v6582, 1.442695
    %v6597 = vpow.pop %v6596
    %v6598 = vmul.f32 %v6583, 1.442695
    %v6599 = vpow.pop %v6598
    %v6600 = vsel %vm536, %v6585, 0.0
    %6601 = vadd.xlane.f32.xlu0 %v6600
    %v6602 = vpop.xlane.xlu0 %6601
    %v6603 = vsel %vm536, %v6587, 0.0
    %6604 = vadd.xlane.f32.xlu0 %v6603
    %v6605 = vpop.xlane.xlu0 %6604
    %v6606 = vsel %vm536, %v6589, 0.0
    %6607 = vadd.xlane.f32.xlu0 %v6606
    %v6608 = vpop.xlane.xlu0 %6607
    %v6609 = vsel %vm536, %v6591, 0.0
    %6610 = vadd.xlane.f32.xlu0 %v6609
    %v6611 = vpop.xlane.xlu0 %6610
    %v6612 = vsel %vm536, %v6593, 0.0
    %6613 = vadd.xlane.f32.xlu0 %v6612
    %v6614 = vpop.xlane.xlu0 %6613
    %v6615 = vsel %vm536, %v6595, 0.0
    %6616 = vadd.xlane.f32.xlu0 %v6615
    %v6617 = vpop.xlane.xlu0 %6616
    %v6618 = vsel %vm536, %v6597, 0.0
    %6619 = vadd.xlane.f32.xlu0 %v6618
    %v6620 = vpop.xlane.xlu0 %6619
    %v6621 = vsel %vm536, %v6599, 0.0
    %6622 = vadd.xlane.f32.xlu0 %v6621
    %v6623 = vpop.xlane.xlu0 %6622
    %v6624 = vrcp.pop %v6602
    %v6625 = vmul.f32 %v6602, %v6624
    %v6626 = vsub.f32 1.0, %v6625
    %v6627 = vmul.f32 %v6624, %v6626
    %v6628 = vadd.f32 %v6624, %v6627
    %vm6629 = vweird.f32 %v6602
    %vm6630 = vweird.f32 %v6624
    %vm6631 = vmor %vm6629, %vm6630
    %v6632 = vsel %vm6631, %v6624, %v6628
    %v6633 = vand.u32 2147483647, %v6602
    %vm6634 = vcmp.eq.f32.partialorder %v6633, 8.507059e+37
    %v6635 = vand.u32 %v6602, 2147483648
    %v6636 = vor.u32 1.1754944e-38, %v6635
    %v6637 = vsel %vm6634, %v6636, %v6632
    %v6638 = vmul.f32 %v6585, %v6637
    %v6639 = vrcp.pop %v6605
    %v6640 = vmul.f32 %v6605, %v6639
    %v6641 = vsub.f32 1.0, %v6640
    %v6642 = vmul.f32 %v6639, %v6641
    %v6643 = vadd.f32 %v6639, %v6642
    %vm6644 = vweird.f32 %v6605
    %vm6645 = vweird.f32 %v6639
    %vm6646 = vmor %vm6644, %vm6645
    %v6647 = vsel %vm6646, %v6639, %v6643
    %v6648 = vand.u32 2147483647, %v6605
    %vm6649 = vcmp.eq.f32.partialorder %v6648, 8.507059e+37
    %v6650 = vand.u32 %v6605, 2147483648
    %v6651 = vor.u32 1.1754944e-38, %v6650
    %v6652 = vsel %vm6649, %v6651, %v6647
    %v6653 = vmul.f32 %v6587, %v6652
    %v6654 = vrcp.pop %v6608
    %v6655 = vmul.f32 %v6608, %v6654
    %v6656 = vsub.f32 1.0, %v6655
    %v6657 = vmul.f32 %v6654, %v6656
    %v6658 = vadd.f32 %v6654, %v6657
    %vm6659 = vweird.f32 %v6608
    %vm6660 = vweird.f32 %v6654
    %vm6661 = vmor %vm6659, %vm6660
    %v6662 = vsel %vm6661, %v6654, %v6658
    %v6663 = vand.u32 2147483647, %v6608
    %vm6664 = vcmp.eq.f32.partialorder %v6663, 8.507059e+37
    %v6665 = vand.u32 %v6608, 2147483648
    %v6666 = vor.u32 1.1754944e-38, %v6665
    %v6667 = vsel %vm6664, %v6666, %v6662
    %v6668 = vmul.f32 %v6589, %v6667
    %v6669 = vrcp.pop %v6611
    %v6670 = vmul.f32 %v6611, %v6669
    %v6671 = vsub.f32 1.0, %v6670
    %v6672 = vmul.f32 %v6669, %v6671
    %v6673 = vadd.f32 %v6669, %v6672
    %vm6674 = vweird.f32 %v6611
    %vm6675 = vweird.f32 %v6669
    %vm6676 = vmor %vm6674, %vm6675
    %v6677 = vsel %vm6676, %v6669, %v6673
    %v6678 = vand.u32 2147483647, %v6611
    %vm6679 = vcmp.eq.f32.partialorder %v6678, 8.507059e+37
    %v6680 = vand.u32 %v6611, 2147483648
    %v6681 = vor.u32 1.1754944e-38, %v6680
    %v6682 = vsel %vm6679, %v6681, %v6677
    %v6683 = vmul.f32 %v6591, %v6682
    %v6684 = vrcp.pop %v6614
    %v6685 = vmul.f32 %v6614, %v6684
    %v6686 = vsub.f32 1.0, %v6685
    %v6687 = vmul.f32 %v6684, %v6686
    %v6688 = vadd.f32 %v6684, %v6687
    %vm6689 = vweird.f32 %v6614
    %vm6690 = vweird.f32 %v6684
    %vm6691 = vmor %vm6689, %vm6690
    %v6692 = vsel %vm6691, %v6684, %v6688
    %v6693 = vand.u32 2147483647, %v6614
    %vm6694 = vcmp.eq.f32.partialorder %v6693, 8.507059e+37
    %v6695 = vand.u32 %v6614, 2147483648
    %v6696 = vor.u32 1.1754944e-38, %v6695
    %v6697 = vsel %vm6694, %v6696, %v6692
    %v6698 = vmul.f32 %v6593, %v6697
    %v6699 = vrcp.pop %v6617
    %v6700 = vmul.f32 %v6617, %v6699
    %v6701 = vsub.f32 1.0, %v6700
    %v6702 = vmul.f32 %v6699, %v6701
    %v6703 = vadd.f32 %v6699, %v6702
    %vm6704 = vweird.f32 %v6617
    %vm6705 = vweird.f32 %v6699
    %vm6706 = vmor %vm6704, %vm6705
    %v6707 = vsel %vm6706, %v6699, %v6703
    %v6708 = vand.u32 2147483647, %v6617
    %vm6709 = vcmp.eq.f32.partialorder %v6708, 8.507059e+37
    %v6710 = vand.u32 %v6617, 2147483648
    %v6711 = vor.u32 1.1754944e-38, %v6710
    %v6712 = vsel %vm6709, %v6711, %v6707
    %v6713 = vmul.f32 %v6595, %v6712
    %v6714 = vrcp.pop %v6620
    %v6715 = vmul.f32 %v6620, %v6714
    %v6716 = vsub.f32 1.0, %v6715
    %v6717 = vmul.f32 %v6714, %v6716
    %v6718 = vadd.f32 %v6714, %v6717
    %vm6719 = vweird.f32 %v6620
    %vm6720 = vweird.f32 %v6714
    %vm6721 = vmor %vm6719, %vm6720
    %v6722 = vsel %vm6721, %v6714, %v6718
    %v6723 = vand.u32 2147483647, %v6620
    %vm6724 = vcmp.eq.f32.partialorder %v6723, 8.507059e+37
    %v6725 = vand.u32 %v6620, 2147483648
    %v6726 = vor.u32 1.1754944e-38, %v6725
    %v6727 = vsel %vm6724, %v6726, %v6722
    %v6728 = vmul.f32 %v6597, %v6727
    %v6729 = vrcp.pop %v6623
    %v6730 = vmul.f32 %v6623, %v6729
    %v6731 = vsub.f32 1.0, %v6730
    %v6732 = vmul.f32 %v6729, %v6731
    %v6733 = vadd.f32 %v6729, %v6732
    %vm6734 = vweird.f32 %v6623
    %vm6735 = vweird.f32 %v6729
    %vm6736 = vmor %vm6734, %vm6735
    %v6737 = vsel %vm6736, %v6729, %v6733
    %v6738 = vand.u32 2147483647, %v6623
    %vm6739 = vcmp.eq.f32.partialorder %v6738, 8.507059e+37
    %v6740 = vand.u32 %v6623, 2147483648
    %v6741 = vor.u32 1.1754944e-38, %v6740
    %v6742 = vsel %vm6739, %v6741, %v6737
    %v6743 = vmul.f32 %v6599, %v6742
    %v6744 = vpack.c.bf16 %v6638, %v6638
    %v6745 = vpack.c.bf16 %v6653, %v6653
    %v6746 = vpack.c.bf16 %v6668, %v6668
    %v6747 = vpack.c.bf16 %v6683, %v6683
    %v6748 = vpack.c.bf16 %v6698, %v6698
    %v6749 = vpack.c.bf16 %v6713, %v6713
    %v6750 = vpack.c.bf16 %v6728, %v6728
    %v6751 = vpack.c.bf16 %v6743, %v6743
    %v6753 = vsel %vm737, %v6744, 0
    %v6755 = vsel %vm299, %v6382, 0
    %6757 = vmatpush.bf16.msra.mxu0 0
    %6758 = vmatpush.bf16.msra.mxu0 0
    %6759 = vmatpush.bf16.msra.mxu0 0
    %6760 = vmatpush.bf16.msra.mxu0 0
    %6761 = vmatpush.bf16.msra.mxu0 0
    %6762 = vmatpush.bf16.msra.mxu0 0
    %6763 = vmatpush.bf16.msra.mxu0 0
    %6764 = vmatpush.bf16.msra.mxu0 %v6755
    %6765 = vmatmul.bf16.gmra.mxu0 %v6753
    %v6766 = vpop.f32.mrf.mxu0
    %v6767 = vadd.f32 0.0, %v6766
    %v6768 = vpop.f32.mrf.mxu0
    %6769 = vdwg.mxu0
    %v6771 = vsel %vm737, %v6745, 0
    %v6774 = vsel %vm299, %v6385, 0
    %6776 = vmatpush.bf16.msra.mxu0 0
    %6777 = vmatpush.bf16.msra.mxu0 0
    %6778 = vmatpush.bf16.msra.mxu0 0
    %6779 = vmatpush.bf16.msra.mxu0 0
    %6780 = vmatpush.bf16.msra.mxu0 0
    %6781 = vmatpush.bf16.msra.mxu0 0
    %6782 = vmatpush.bf16.msra.mxu0 0
    %6783 = vmatpush.bf16.msra.mxu0 %v6774
    %6784 = vmatmul.bf16.gmra.mxu0 %v6771
    %v6785 = vpop.f32.mrf.mxu0
    %v6786 = vadd.f32 0.0, %v6785
    %v6787 = vpop.f32.mrf.mxu0
    %6788 = vdwg.mxu0
    %v6790 = vsel %vm737, %v6746, 0
    %v6793 = vsel %vm299, %v6388, 0
    %6795 = vmatpush.bf16.msra.mxu0 0
    %6796 = vmatpush.bf16.msra.mxu0 0
    %6797 = vmatpush.bf16.msra.mxu0 0
    %6798 = vmatpush.bf16.msra.mxu0 0
    %6799 = vmatpush.bf16.msra.mxu0 0
    %6800 = vmatpush.bf16.msra.mxu0 0
    %6801 = vmatpush.bf16.msra.mxu0 0
    %6802 = vmatpush.bf16.msra.mxu0 %v6793
    %6803 = vmatmul.bf16.gmra.mxu0 %v6790
    %v6804 = vpop.f32.mrf.mxu0
    %v6805 = vadd.f32 0.0, %v6804
    %v6806 = vpop.f32.mrf.mxu0
    %6807 = vdwg.mxu0
    %v6809 = vsel %vm737, %v6747, 0
    %v6812 = vsel %vm299, %v6391, 0
    %6814 = vmatpush.bf16.msra.mxu0 0
    %6815 = vmatpush.bf16.msra.mxu0 0
    %6816 = vmatpush.bf16.msra.mxu0 0
    %6817 = vmatpush.bf16.msra.mxu0 0
    %6818 = vmatpush.bf16.msra.mxu0 0
    %6819 = vmatpush.bf16.msra.mxu0 0
    %6820 = vmatpush.bf16.msra.mxu0 0
    %6821 = vmatpush.bf16.msra.mxu0 %v6812
    %6822 = vmatmul.bf16.gmra.mxu0 %v6809
    %v6823 = vpop.f32.mrf.mxu0
    %v6824 = vadd.f32 0.0, %v6823
    %v6825 = vpop.f32.mrf.mxu0
    %6826 = vdwg.mxu0
    %v6828 = vsel %vm737, %v6748, 0
    %v6830 = vsel %vm299, %v6394, 0
    %6832 = vmatpush.bf16.msra.mxu0 0
    %6833 = vmatpush.bf16.msra.mxu0 0
    %6834 = vmatpush.bf16.msra.mxu0 0
    %6835 = vmatpush.bf16.msra.mxu0 0
    %6836 = vmatpush.bf16.msra.mxu0 0
    %6837 = vmatpush.bf16.msra.mxu0 0
    %6838 = vmatpush.bf16.msra.mxu0 0
    %6839 = vmatpush.bf16.msra.mxu0 %v6830
    %6840 = vmatmul.bf16.gmra.mxu0 %v6828
    %v6841 = vpop.f32.mrf.mxu0
    %v6842 = vadd.f32 0.0, %v6841
    %v6843 = vpop.f32.mrf.mxu0
    %6844 = vdwg.mxu0
    %v6846 = vsel %vm737, %v6749, 0
    %v6849 = vsel %vm299, %v6397, 0
    %6851 = vmatpush.bf16.msra.mxu0 0
    %6852 = vmatpush.bf16.msra.mxu0 0
    %6853 = vmatpush.bf16.msra.mxu0 0
    %6854 = vmatpush.bf16.msra.mxu0 0
    %6855 = vmatpush.bf16.msra.mxu0 0
    %6856 = vmatpush.bf16.msra.mxu0 0
    %6857 = vmatpush.bf16.msra.mxu0 0
    %6858 = vmatpush.bf16.msra.mxu0 %v6849
    %6859 = vmatmul.bf16.gmra.mxu0 %v6846
    %v6860 = vpop.f32.mrf.mxu0
    %v6861 = vadd.f32 0.0, %v6860
    %v6862 = vpop.f32.mrf.mxu0
    %6863 = vdwg.mxu0
    %v6865 = vsel %vm737, %v6750, 0
    %v6868 = vsel %vm299, %v6400, 0
    %6870 = vmatpush.bf16.msra.mxu0 0
    %6871 = vmatpush.bf16.msra.mxu0 0
    %6872 = vmatpush.bf16.msra.mxu0 0
    %6873 = vmatpush.bf16.msra.mxu0 0
    %6874 = vmatpush.bf16.msra.mxu0 0
    %6875 = vmatpush.bf16.msra.mxu0 0
    %6876 = vmatpush.bf16.msra.mxu0 0
    %6877 = vmatpush.bf16.msra.mxu0 %v6868
    %6878 = vmatmul.bf16.gmra.mxu0 %v6865
    %v6879 = vpop.f32.mrf.mxu0
    %v6880 = vadd.f32 0.0, %v6879
    %v6881 = vpop.f32.mrf.mxu0
    %6882 = vdwg.mxu0
    %v6884 = vsel %vm737, %v6751, 0
    %v6887 = vsel %vm299, %v6403, 0
    %6889 = vmatpush.bf16.msra.mxu0 0
    %6890 = vmatpush.bf16.msra.mxu0 0
    %6891 = vmatpush.bf16.msra.mxu0 0
    %6892 = vmatpush.bf16.msra.mxu0 0
    %6893 = vmatpush.bf16.msra.mxu0 0
    %6894 = vmatpush.bf16.msra.mxu0 0
    %6895 = vmatpush.bf16.msra.mxu0 0
    %6896 = vmatpush.bf16.msra.mxu0 %v6887
    %6897 = vmatmul.bf16.gmra.mxu0 %v6884
    %v6898 = vpop.f32.mrf.mxu0
    %v6899 = vadd.f32 0.0, %v6898
    %v6900 = vpop.f32.mrf.mxu0
    %6901 = vdwg.mxu0
    %s6902 = scalar_lea.vmem %s3, 64
    %v6903 = vld [vmem:[%s6902] sm:$0xf]
    %v6904 = vld [vmem:[%s6902 + $0x4] sm:$0xf]
    %6913 = vst [vmem:[#allocation1] ss:$4 sm:$0xff] %v6767
    %s6914 = scalar_lea.vmem [#allocation1], 1
    %6915 = vst [vmem:[%s6914] ss:$4 sm:$0xff] %v6786
    %s6916 = scalar_lea.vmem [#allocation1], 2
    %6917 = vst [vmem:[%s6916] ss:$4 sm:$0xff] %v6805
    %s6918 = scalar_lea.vmem [#allocation1], 3
    %6919 = vst [vmem:[%s6918] ss:$4 sm:$0xff] %v6824
    %s6920 = scalar_lea.vmem [#allocation1], 32
    %6921 = vst [vmem:[%s6920] ss:$4 sm:$0xff] %v6842
    %s6922 = scalar_lea.vmem [#allocation1], 33
    %6923 = vst [vmem:[%s6922] ss:$4 sm:$0xff] %v6861
    %s6924 = scalar_lea.vmem [#allocation1], 34
    %6925 = vst [vmem:[%s6924] ss:$4 sm:$0xff] %v6880
    %s6926 = scalar_lea.vmem [#allocation1], 35
    %6927 = vst [vmem:[%s6926] ss:$4 sm:$0xff] %v6899
    %v6928 = vld.sshfl [vmem:[#allocation1] sm:$0xff pattern:$0x73625140]
    %v6929 = vld.sshfl [vmem:[#allocation1 + $0x20] sm:$0xff pattern:$0x73625140]
    %v6932 = vpack.c.bf16 %v6929, %v6928
    %6933 = vst [vmem:[#allocation1] ss:$9 sm:$0xff] %v6322
    %v6934 = vld [vmem:[#allocation1] sm:$0xff]
    %6936 = vrot.lane.b32.xlu0 %v6934, 112
    %v6937 = vpop.permute.xlu0 %6936
    %6938 = vst [vmem:[#allocation1] ss:$9 sm:$0xff] %v6352
    %v6939 = vld [vmem:[#allocation1] sm:$0xff]
    %6941 = vrot.lane.b32.xlu0 %v6939, 112
    %v6942 = vpop.permute.xlu0 %6941
    %v6944 = vsel %vm387, %v6937, 0
    %v6947 = vsel %vm387, %v6942, 0
    %6949 = vmatpush.bf16.xpose.msra.mxu0 0
    %6950 = vmatpush.bf16.xpose.msra.mxu0 0
    %6951 = vmatpush.bf16.xpose.msra.mxu0 0
    %6952 = vmatpush.bf16.xpose.msra.mxu0 0
    %6953 = vmatpush.bf16.xpose.msra.mxu0 0
    %6954 = vmatpush.bf16.xpose.msra.mxu0 0
    %6955 = vmatpush.bf16.xpose.msra.mxu0 0
    %6956 = vmatpush.bf16.xpose.msra.mxu0 %v6947
    %6957 = vmatmul.bf16.gmra.mxu0 %v6944
    %v6958 = vpop.f32.mrf.mxu0
    %v6959 = vadd.f32 0.0, %v6958
    %v6960 = vpop.f32.mrf.mxu0
    %6961 = vdwg.mxu0
    %6962 = vst [vmem:[#allocation1] ss:$9 sm:$0xff] %v6325
    %v6963 = vld [vmem:[#allocation1] sm:$0xff]
    %6965 = vrot.lane.b32.xlu0 %v6963, 112
    %v6966 = vpop.permute.xlu0 %6965
    %6967 = vst [vmem:[#allocation1] ss:$9 sm:$0xff] %v6355
    %v6968 = vld [vmem:[#allocation1] sm:$0xff]
    %6970 = vrot.lane.b32.xlu0 %v6968, 112
    %v6971 = vpop.permute.xlu0 %6970
    %v6973 = vsel %vm387, %v6966, 0
    %v6976 = vsel %vm387, %v6971, 0
    %6978 = vmatpush.bf16.xpose.msra.mxu0 0
    %6979 = vmatpush.bf16.xpose.msra.mxu0 0
    %6980 = vmatpush.bf16.xpose.msra.mxu0 0
    %6981 = vmatpush.bf16.xpose.msra.mxu0 0
    %6982 = vmatpush.bf16.xpose.msra.mxu0 0
    %6983 = vmatpush.bf16.xpose.msra.mxu0 0
    %6984 = vmatpush.bf16.xpose.msra.mxu0 0
    %6985 = vmatpush.bf16.xpose.msra.mxu0 %v6976
    %6986 = vmatmul.bf16.gmra.mxu0 %v6973
    %v6987 = vpop.f32.mrf.mxu0
    %v6988 = vadd.f32 0.0, %v6987
    %v6989 = vpop.f32.mrf.mxu0
    %6990 = vdwg.mxu0
    %6991 = vst [vmem:[#allocation1] ss:$9 sm:$0xff] %v6328
    %v6992 = vld [vmem:[#allocation1] sm:$0xff]
    %6994 = vrot.lane.b32.xlu0 %v6992, 112
    %v6995 = vpop.permute.xlu0 %6994
    %6996 = vst [vmem:[#allocation1] ss:$9 sm:$0xff] %v6358
    %v6997 = vld [vmem:[#allocation1] sm:$0xff]
    %6999 = vrot.lane.b32.xlu0 %v6997, 112
    %v7000 = vpop.permute.xlu0 %6999
    %v7002 = vsel %vm387, %v6995, 0
    %v7005 = vsel %vm387, %v7000, 0
    %7007 = vmatpush.bf16.xpose.msra.mxu0 0
    %7008 = vmatpush.bf16.xpose.msra.mxu0 0
    %7009 = vmatpush.bf16.xpose.msra.mxu0 0
    %7010 = vmatpush.bf16.xpose.msra.mxu0 0
    %7011 = vmatpush.bf16.xpose.msra.mxu0 0
    %7012 = vmatpush.bf16.xpose.msra.mxu0 0
    %7013 = vmatpush.bf16.xpose.msra.mxu0 0
    %7014 = vmatpush.bf16.xpose.msra.mxu0 %v7005
    %7015 = vmatmul.bf16.gmra.mxu0 %v7002
    %v7016 = vpop.f32.mrf.mxu0
    %v7017 = vadd.f32 0.0, %v7016
    %v7018 = vpop.f32.mrf.mxu0
    %7019 = vdwg.mxu0
    %7020 = vst [vmem:[#allocation1] ss:$9 sm:$0xff] %v6331
    %v7021 = vld [vmem:[#allocation1] sm:$0xff]
    %7023 = vrot.lane.b32.xlu0 %v7021, 112
    %v7024 = vpop.permute.xlu0 %7023
    %7025 = vst [vmem:[#allocation1] ss:$9 sm:$0xff] %v6361
    %v7026 = vld [vmem:[#allocation1] sm:$0xff]
    %7028 = vrot.lane.b32.xlu0 %v7026, 112
    %v7029 = vpop.permute.xlu0 %7028
    %v7031 = vsel %vm387, %v7024, 0
    %v7034 = vsel %vm387, %v7029, 0
    %7036 = vmatpush.bf16.xpose.msra.mxu0 0
    %7037 = vmatpush.bf16.xpose.msra.mxu0 0
    %7038 = vmatpush.bf16.xpose.msra.mxu0 0
    %7039 = vmatpush.bf16.xpose.msra.mxu0 0
    %7040 = vmatpush.bf16.xpose.msra.mxu0 0
    %7041 = vmatpush.bf16.xpose.msra.mxu0 0
    %7042 = vmatpush.bf16.xpose.msra.mxu0 0
    %7043 = vmatpush.bf16.xpose.msra.mxu0 %v7034
    %7044 = vmatmul.bf16.gmra.mxu0 %v7031
    %v7045 = vpop.f32.mrf.mxu0
    %v7046 = vadd.f32 0.0, %v7045
    %v7047 = vpop.f32.mrf.mxu0
    %7048 = vdwg.mxu0
    %7049 = vst [vmem:[#allocation1] ss:$9 sm:$0xff] %v6334
    %v7050 = vld [vmem:[#allocation1] sm:$0xff]
    %7052 = vrot.lane.b32.xlu0 %v7050, 112
    %v7053 = vpop.permute.xlu0 %7052
    %7054 = vst [vmem:[#allocation1] ss:$9 sm:$0xff] %v6364
    %v7055 = vld [vmem:[#allocation1] sm:$0xff]
    %7057 = vrot.lane.b32.xlu0 %v7055, 112
    %v7058 = vpop.permute.xlu0 %7057
    %v7060 = vsel %vm387, %v7053, 0
    %v7063 = vsel %vm387, %v7058, 0
    %7065 = vmatpush.bf16.xpose.msra.mxu0 0
    %7066 = vmatpush.bf16.xpose.msra.mxu0 0
    %7067 = vmatpush.bf16.xpose.msra.mxu0 0
    %7068 = vmatpush.bf16.xpose.msra.mxu0 0
    %7069 = vmatpush.bf16.xpose.msra.mxu0 0
    %7070 = vmatpush.bf16.xpose.msra.mxu0 0
    %7071 = vmatpush.bf16.xpose.msra.mxu0 0
    %7072 = vmatpush.bf16.xpose.msra.mxu0 %v7063
    %7073 = vmatmul.bf16.gmra.mxu0 %v7060
    %v7074 = vpop.f32.mrf.mxu0
    %v7075 = vadd.f32 0.0, %v7074
    %v7076 = vpop.f32.mrf.mxu0
    %7077 = vdwg.mxu0
    %7078 = vst [vmem:[#allocation1] ss:$9 sm:$0xff] %v6337
    %v7079 = vld [vmem:[#allocation1] sm:$0xff]
    %7081 = vrot.lane.b32.xlu0 %v7079, 112
    %v7082 = vpop.permute.xlu0 %7081
    %7083 = vst [vmem:[#allocation1] ss:$9 sm:$0xff] %v6367
    %v7084 = vld [vmem:[#allocation1] sm:$0xff]
    %7086 = vrot.lane.b32.xlu0 %v7084, 112
    %v7087 = vpop.permute.xlu0 %7086
    %v7089 = vsel %vm387, %v7082, 0
    %v7092 = vsel %vm387, %v7087, 0
    %7094 = vmatpush.bf16.xpose.msra.mxu0 0
    %7095 = vmatpush.bf16.xpose.msra.mxu0 0
    %7096 = vmatpush.bf16.xpose.msra.mxu0 0
    %7097 = vmatpush.bf16.xpose.msra.mxu0 0
    %7098 = vmatpush.bf16.xpose.msra.mxu0 0
    %7099 = vmatpush.bf16.xpose.msra.mxu0 0
    %7100 = vmatpush.bf16.xpose.msra.mxu0 0
    %7101 = vmatpush.bf16.xpose.msra.mxu0 %v7092
    %7102 = vmatmul.bf16.gmra.mxu0 %v7089
    %v7103 = vpop.f32.mrf.mxu0
    %v7104 = vadd.f32 0.0, %v7103
    %v7105 = vpop.f32.mrf.mxu0
    %7106 = vdwg.mxu0
    %7107 = vst [vmem:[#allocation1] ss:$9 sm:$0xff] %v6340
    %v7108 = vld [vmem:[#allocation1] sm:$0xff]
    %7110 = vrot.lane.b32.xlu0 %v7108, 112
    %v7111 = vpop.permute.xlu0 %7110
    %7112 = vst [vmem:[#allocation1] ss:$9 sm:$0xff] %v6370
    %v7113 = vld [vmem:[#allocation1] sm:$0xff]
    %7115 = vrot.lane.b32.xlu0 %v7113, 112
    %v7116 = vpop.permute.xlu0 %7115
    %v7118 = vsel %vm387, %v7111, 0
    %v7121 = vsel %vm387, %v7116, 0
    %7123 = vmatpush.bf16.xpose.msra.mxu0 0
    %7124 = vmatpush.bf16.xpose.msra.mxu0 0
    %7125 = vmatpush.bf16.xpose.msra.mxu0 0
    %7126 = vmatpush.bf16.xpose.msra.mxu0 0
    %7127 = vmatpush.bf16.xpose.msra.mxu0 0
    %7128 = vmatpush.bf16.xpose.msra.mxu0 0
    %7129 = vmatpush.bf16.xpose.msra.mxu0 0
    %7130 = vmatpush.bf16.xpose.msra.mxu0 %v7121
    %7131 = vmatmul.bf16.gmra.mxu0 %v7118
    %v7132 = vpop.f32.mrf.mxu0
    %v7133 = vadd.f32 0.0, %v7132
    %v7134 = vpop.f32.mrf.mxu0
    %7135 = vdwg.mxu0
    %7136 = vst [vmem:[#allocation1] ss:$9 sm:$0xff] %v6343
    %v7137 = vld [vmem:[#allocation1] sm:$0xff]
    %7139 = vrot.lane.b32.xlu0 %v7137, 112
    %v7140 = vpop.permute.xlu0 %7139
    %7141 = vst [vmem:[#allocation1] ss:$9 sm:$0xff] %v6373
    %v7142 = vld [vmem:[#allocation1] sm:$0xff]
    %7144 = vrot.lane.b32.xlu0 %v7142, 112
    %v7145 = vpop.permute.xlu0 %7144
    %v7147 = vsel %vm387, %v7140, 0
    %v7150 = vsel %vm387, %v7145, 0
    %7152 = vmatpush.bf16.xpose.msra.mxu0 0
    %7153 = vmatpush.bf16.xpose.msra.mxu0 0
    %7154 = vmatpush.bf16.xpose.msra.mxu0 0
    %7155 = vmatpush.bf16.xpose.msra.mxu0 0
    %7156 = vmatpush.bf16.xpose.msra.mxu0 0
    %7157 = vmatpush.bf16.xpose.msra.mxu0 0
    %7158 = vmatpush.bf16.xpose.msra.mxu0 0
    %7159 = vmatpush.bf16.xpose.msra.mxu0 %v7150
    %7160 = vmatmul.bf16.gmra.mxu0 %v7147
    %v7161 = vpop.f32.mrf.mxu0
    %v7162 = vadd.f32 0.0, %v7161
    %v7163 = vpop.f32.mrf.mxu0
    %7164 = vdwg.mxu0
    %v7165 = vsel %vm536, %v6959, -inf
    %7166 = vmax.xlane.f32.xlu0 %v7165
    %v7167 = vpop.xlane.xlu0 %7166
    %v7168 = vsel %vm536, %v6988, -inf
    %7169 = vmax.xlane.f32.xlu0 %v7168
    %v7170 = vpop.xlane.xlu0 %7169
    %v7171 = vsel %vm536, %v7017, -inf
    %7172 = vmax.xlane.f32.xlu0 %v7171
    %v7173 = vpop.xlane.xlu0 %7172
    %v7174 = vsel %vm536, %v7046, -inf
    %7175 = vmax.xlane.f32.xlu0 %v7174
    %v7176 = vpop.xlane.xlu0 %7175
    %v7177 = vsel %vm536, %v7075, -inf
    %7178 = vmax.xlane.f32.xlu0 %v7177
    %v7179 = vpop.xlane.xlu0 %7178
    %v7180 = vsel %vm536, %v7104, -inf
    %7181 = vmax.xlane.f32.xlu0 %v7180
    %v7182 = vpop.xlane.xlu0 %7181
    %v7183 = vsel %vm536, %v7133, -inf
    %7184 = vmax.xlane.f32.xlu0 %v7183
    %v7185 = vpop.xlane.xlu0 %7184
    %v7186 = vsel %vm536, %v7162, -inf
    %7187 = vmax.xlane.f32.xlu0 %v7186
    %v7188 = vpop.xlane.xlu0 %7187
    %v7189 = vsub.f32 %v6959, %v7167
    %v7190 = vsub.f32 %v6988, %v7170
    %v7191 = vsub.f32 %v7017, %v7173
    %v7192 = vsub.f32 %v7046, %v7176
    %v7193 = vsub.f32 %v7075, %v7179
    %v7194 = vsub.f32 %v7104, %v7182
    %v7195 = vsub.f32 %v7133, %v7185
    %v7196 = vsub.f32 %v7162, %v7188
    %v7197 = vmul.f32 %v7189, 1.442695
    %v7198 = vpow.pop %v7197
    %v7199 = vmul.f32 %v7190, 1.442695
    %v7200 = vpow.pop %v7199
    %v7201 = vmul.f32 %v7191, 1.442695
    %v7202 = vpow.pop %v7201
    %v7203 = vmul.f32 %v7192, 1.442695
    %v7204 = vpow.pop %v7203
    %v7205 = vmul.f32 %v7193, 1.442695
    %v7206 = vpow.pop %v7205
    %v7207 = vmul.f32 %v7194, 1.442695
    %v7208 = vpow.pop %v7207
    %v7209 = vmul.f32 %v7195, 1.442695
    %v7210 = vpow.pop %v7209
    %v7211 = vmul.f32 %v7196, 1.442695
    %v7212 = vpow.pop %v7211
    %v7213 = vsel %vm536, %v7198, 0.0
    %7214 = vadd.xlane.f32.xlu0 %v7213
    %v7215 = vpop.xlane.xlu0 %7214
    %v7216 = vsel %vm536, %v7200, 0.0
    %7217 = vadd.xlane.f32.xlu0 %v7216
    %v7218 = vpop.xlane.xlu0 %7217
    %v7219 = vsel %vm536, %v7202, 0.0
    %7220 = vadd.xlane.f32.xlu0 %v7219
    %v7221 = vpop.xlane.xlu0 %7220
    %v7222 = vsel %vm536, %v7204, 0.0
    %7223 = vadd.xlane.f32.xlu0 %v7222
    %v7224 = vpop.xlane.xlu0 %7223
    %v7225 = vsel %vm536, %v7206, 0.0
    %7226 = vadd.xlane.f32.xlu0 %v7225
    %v7227 = vpop.xlane.xlu0 %7226
    %v7228 = vsel %vm536, %v7208, 0.0
    %7229 = vadd.xlane.f32.xlu0 %v7228
    %v7230 = vpop.xlane.xlu0 %7229
    %v7231 = vsel %vm536, %v7210, 0.0
    %7232 = vadd.xlane.f32.xlu0 %v7231
    %v7233 = vpop.xlane.xlu0 %7232
    %v7234 = vsel %vm536, %v7212, 0.0
    %7235 = vadd.xlane.f32.xlu0 %v7234
    %v7236 = vpop.xlane.xlu0 %7235
    %v7237 = vrcp.pop %v7215
    %v7238 = vmul.f32 %v7215, %v7237
    %v7239 = vsub.f32 1.0, %v7238
    %v7240 = vmul.f32 %v7237, %v7239
    %v7241 = vadd.f32 %v7237, %v7240
    %vm7242 = vweird.f32 %v7215
    %vm7243 = vweird.f32 %v7237
    %vm7244 = vmor %vm7242, %vm7243
    %v7245 = vsel %vm7244, %v7237, %v7241
    %v7246 = vand.u32 2147483647, %v7215
    %vm7247 = vcmp.eq.f32.partialorder %v7246, 8.507059e+37
    %v7248 = vand.u32 %v7215, 2147483648
    %v7249 = vor.u32 1.1754944e-38, %v7248
    %v7250 = vsel %vm7247, %v7249, %v7245
    %v7251 = vmul.f32 %v7198, %v7250
    %v7252 = vrcp.pop %v7218
    %v7253 = vmul.f32 %v7218, %v7252
    %v7254 = vsub.f32 1.0, %v7253
    %v7255 = vmul.f32 %v7252, %v7254
    %v7256 = vadd.f32 %v7252, %v7255
    %vm7257 = vweird.f32 %v7218
    %vm7258 = vweird.f32 %v7252
    %vm7259 = vmor %vm7257, %vm7258
    %v7260 = vsel %vm7259, %v7252, %v7256
    %v7261 = vand.u32 2147483647, %v7218
    %vm7262 = vcmp.eq.f32.partialorder %v7261, 8.507059e+37
    %v7263 = vand.u32 %v7218, 2147483648
    %v7264 = vor.u32 1.1754944e-38, %v7263
    %v7265 = vsel %vm7262, %v7264, %v7260
    %v7266 = vmul.f32 %v7200, %v7265
    %v7267 = vrcp.pop %v7221
    %v7268 = vmul.f32 %v7221, %v7267
    %v7269 = vsub.f32 1.0, %v7268
    %v7270 = vmul.f32 %v7267, %v7269
    %v7271 = vadd.f32 %v7267, %v7270
    %vm7272 = vweird.f32 %v7221
    %vm7273 = vweird.f32 %v7267
    %vm7274 = vmor %vm7272, %vm7273
    %v7275 = vsel %vm7274, %v7267, %v7271
    %v7276 = vand.u32 2147483647, %v7221
    %vm7277 = vcmp.eq.f32.partialorder %v7276, 8.507059e+37
    %v7278 = vand.u32 %v7221, 2147483648
    %v7279 = vor.u32 1.1754944e-38, %v7278
    %v7280 = vsel %vm7277, %v7279, %v7275
    %v7281 = vmul.f32 %v7202, %v7280
    %v7282 = vrcp.pop %v7224
    %v7283 = vmul.f32 %v7224, %v7282
    %v7284 = vsub.f32 1.0, %v7283
    %v7285 = vmul.f32 %v7282, %v7284
    %v7286 = vadd.f32 %v7282, %v7285
    %vm7287 = vweird.f32 %v7224
    %vm7288 = vweird.f32 %v7282
    %vm7289 = vmor %vm7287, %vm7288
    %v7290 = vsel %vm7289, %v7282, %v7286
    %v7291 = vand.u32 2147483647, %v7224
    %vm7292 = vcmp.eq.f32.partialorder %v7291, 8.507059e+37
    %v7293 = vand.u32 %v7224, 2147483648
    %v7294 = vor.u32 1.1754944e-38, %v7293
    %v7295 = vsel %vm7292, %v7294, %v7290
    %v7296 = vmul.f32 %v7204, %v7295
    %v7297 = vrcp.pop %v7227
    %v7298 = vmul.f32 %v7227, %v7297
    %v7299 = vsub.f32 1.0, %v7298
    %v7300 = vmul.f32 %v7297, %v7299
    %v7301 = vadd.f32 %v7297, %v7300
    %vm7302 = vweird.f32 %v7227
    %vm7303 = vweird.f32 %v7297
    %vm7304 = vmor %vm7302, %vm7303
    %v7305 = vsel %vm7304, %v7297, %v7301
    %v7306 = vand.u32 2147483647, %v7227
    %vm7307 = vcmp.eq.f32.partialorder %v7306, 8.507059e+37
    %v7308 = vand.u32 %v7227, 2147483648
    %v7309 = vor.u32 1.1754944e-38, %v7308
    %v7310 = vsel %vm7307, %v7309, %v7305
    %v7311 = vmul.f32 %v7206, %v7310
    %v7312 = vrcp.pop %v7230
    %v7313 = vmul.f32 %v7230, %v7312
    %v7314 = vsub.f32 1.0, %v7313
    %v7315 = vmul.f32 %v7312, %v7314
    %v7316 = vadd.f32 %v7312, %v7315
    %vm7317 = vweird.f32 %v7230
    %vm7318 = vweird.f32 %v7312
    %vm7319 = vmor %vm7317, %vm7318
    %v7320 = vsel %vm7319, %v7312, %v7316
    %v7321 = vand.u32 2147483647, %v7230
    %vm7322 = vcmp.eq.f32.partialorder %v7321, 8.507059e+37
    %v7323 = vand.u32 %v7230, 2147483648
    %v7324 = vor.u32 1.1754944e-38, %v7323
    %v7325 = vsel %vm7322, %v7324, %v7320
    %v7326 = vmul.f32 %v7208, %v7325
    %v7327 = vrcp.pop %v7233
    %v7328 = vmul.f32 %v7233, %v7327
    %v7329 = vsub.f32 1.0, %v7328
    %v7330 = vmul.f32 %v7327, %v7329
    %v7331 = vadd.f32 %v7327, %v7330
    %vm7332 = vweird.f32 %v7233
    %vm7333 = vweird.f32 %v7327
    %vm7334 = vmor %vm7332, %vm7333
    %v7335 = vsel %vm7334, %v7327, %v7331
    %v7336 = vand.u32 2147483647, %v7233
    %vm7337 = vcmp.eq.f32.partialorder %v7336, 8.507059e+37
    %v7338 = vand.u32 %v7233, 2147483648
    %v7339 = vor.u32 1.1754944e-38, %v7338
    %v7340 = vsel %vm7337, %v7339, %v7335
    %v7341 = vmul.f32 %v7210, %v7340
    %v7342 = vrcp.pop %v7236
    %v7343 = vmul.f32 %v7236, %v7342
    %v7344 = vsub.f32 1.0, %v7343
    %v7345 = vmul.f32 %v7342, %v7344
    %v7346 = vadd.f32 %v7342, %v7345
    %vm7347 = vweird.f32 %v7236
    %vm7348 = vweird.f32 %v7342
    %vm7349 = vmor %vm7347, %vm7348
    %v7350 = vsel %vm7349, %v7342, %v7346
    %v7351 = vand.u32 2147483647, %v7236
    %vm7352 = vcmp.eq.f32.partialorder %v7351, 8.507059e+37
    %v7353 = vand.u32 %v7236, 2147483648
    %v7354 = vor.u32 1.1754944e-38, %v7353
    %v7355 = vsel %vm7352, %v7354, %v7350
    %v7356 = vmul.f32 %v7212, %v7355
    %v7357 = vpack.c.bf16 %v7251, %v7251
    %v7358 = vpack.c.bf16 %v7266, %v7266
    %v7359 = vpack.c.bf16 %v7281, %v7281
    %v7360 = vpack.c.bf16 %v7296, %v7296
    %v7361 = vpack.c.bf16 %v7311, %v7311
    %v7362 = vpack.c.bf16 %v7326, %v7326
    %v7363 = vpack.c.bf16 %v7341, %v7341
    %v7364 = vpack.c.bf16 %v7356, %v7356
    %7365 = vst [vmem:[#allocation1] ss:$9 sm:$0xff] %v6382
    %v7366 = vld [vmem:[#allocation1] sm:$0xff]
    %7368 = vrot.lane.b32.xlu0 %v7366, 112
    %v7369 = vpop.permute.xlu0 %7368
    %v7371 = vsel %vm737, %v7357, 0
    %v7374 = vsel %vm299, %v7369, 0
    %7376 = vmatpush.bf16.msra.mxu0 0
    %7377 = vmatpush.bf16.msra.mxu0 0
    %7378 = vmatpush.bf16.msra.mxu0 0
    %7379 = vmatpush.bf16.msra.mxu0 0
    %7380 = vmatpush.bf16.msra.mxu0 0
    %7381 = vmatpush.bf16.msra.mxu0 0
    %7382 = vmatpush.bf16.msra.mxu0 0
    %7383 = vmatpush.bf16.msra.mxu0 %v7374
    %7384 = vmatmul.bf16.gmra.mxu0 %v7371
    %v7385 = vpop.f32.mrf.mxu0
    %v7386 = vadd.f32 0.0, %v7385
    %v7387 = vpop.f32.mrf.mxu0
    %7388 = vdwg.mxu0
    %7389 = vst [vmem:[#allocation1] ss:$9 sm:$0xff] %v6385
    %v7390 = vld [vmem:[#allocation1] sm:$0xff]
    %7392 = vrot.lane.b32.xlu0 %v7390, 112
    %v7393 = vpop.permute.xlu0 %7392
    %v7395 = vsel %vm737, %v7358, 0
    %v7398 = vsel %vm299, %v7393, 0
    %7400 = vmatpush.bf16.msra.mxu0 0
    %7401 = vmatpush.bf16.msra.mxu0 0
    %7402 = vmatpush.bf16.msra.mxu0 0
    %7403 = vmatpush.bf16.msra.mxu0 0
    %7404 = vmatpush.bf16.msra.mxu0 0
    %7405 = vmatpush.bf16.msra.mxu0 0
    %7406 = vmatpush.bf16.msra.mxu0 0
    %7407 = vmatpush.bf16.msra.mxu0 %v7398
    %7408 = vmatmul.bf16.gmra.mxu0 %v7395
    %v7409 = vpop.f32.mrf.mxu0
    %v7410 = vadd.f32 0.0, %v7409
    %v7411 = vpop.f32.mrf.mxu0
    %7412 = vdwg.mxu0
    %7413 = vst [vmem:[#allocation1] ss:$9 sm:$0xff] %v6388
    %v7414 = vld [vmem:[#allocation1] sm:$0xff]
    %7416 = vrot.lane.b32.xlu0 %v7414, 112
    %v7417 = vpop.permute.xlu0 %7416
    %v7419 = vsel %vm737, %v7359, 0
    %v7422 = vsel %vm299, %v7417, 0
    %7424 = vmatpush.bf16.msra.mxu0 0
    %7425 = vmatpush.bf16.msra.mxu0 0
    %7426 = vmatpush.bf16.msra.mxu0 0
    %7427 = vmatpush.bf16.msra.mxu0 0
    %7428 = vmatpush.bf16.msra.mxu0 0
    %7429 = vmatpush.bf16.msra.mxu0 0
    %7430 = vmatpush.bf16.msra.mxu0 0
    %7431 = vmatpush.bf16.msra.mxu0 %v7422
    %7432 = vmatmul.bf16.gmra.mxu0 %v7419
    %v7433 = vpop.f32.mrf.mxu0
    %v7434 = vadd.f32 0.0, %v7433
    %v7435 = vpop.f32.mrf.mxu0
    %7436 = vdwg.mxu0
    %7437 = vst [vmem:[#allocation1] ss:$9 sm:$0xff] %v6391
    %v7438 = vld [vmem:[#allocation1] sm:$0xff]
    %7440 = vrot.lane.b32.xlu0 %v7438, 112
    %v7441 = vpop.permute.xlu0 %7440
    %v7443 = vsel %vm737, %v7360, 0
    %v7446 = vsel %vm299, %v7441, 0
    %7448 = vmatpush.bf16.msra.mxu0 0
    %7449 = vmatpush.bf16.msra.mxu0 0
    %7450 = vmatpush.bf16.msra.mxu0 0
    %7451 = vmatpush.bf16.msra.mxu0 0
    %7452 = vmatpush.bf16.msra.mxu0 0
    %7453 = vmatpush.bf16.msra.mxu0 0
    %7454 = vmatpush.bf16.msra.mxu0 0
    %7455 = vmatpush.bf16.msra.mxu0 %v7446
    %7456 = vmatmul.bf16.gmra.mxu0 %v7443
    %v7457 = vpop.f32.mrf.mxu0
    %v7458 = vadd.f32 0.0, %v7457
    %v7459 = vpop.f32.mrf.mxu0
    %7460 = vdwg.mxu0
    %7461 = vst [vmem:[#allocation1] ss:$9 sm:$0xff] %v6394
    %v7462 = vld [vmem:[#allocation1] sm:$0xff]
    %7464 = vrot.lane.b32.xlu0 %v7462, 112
    %v7465 = vpop.permute.xlu0 %7464
    %v7467 = vsel %vm737, %v7361, 0
    %v7470 = vsel %vm299, %v7465, 0
    %7472 = vmatpush.bf16.msra.mxu0 0
    %7473 = vmatpush.bf16.msra.mxu0 0
    %7474 = vmatpush.bf16.msra.mxu0 0
    %7475 = vmatpush.bf16.msra.mxu0 0
    %7476 = vmatpush.bf16.msra.mxu0 0
    %7477 = vmatpush.bf16.msra.mxu0 0
    %7478 = vmatpush.bf16.msra.mxu0 0
    %7479 = vmatpush.bf16.msra.mxu0 %v7470
    %7480 = vmatmul.bf16.gmra.mxu0 %v7467
    %v7481 = vpop.f32.mrf.mxu0
    %v7482 = vadd.f32 0.0, %v7481
    %v7483 = vpop.f32.mrf.mxu0
    %7484 = vdwg.mxu0
    %7485 = vst [vmem:[#allocation1] ss:$9 sm:$0xff] %v6397
    %v7486 = vld [vmem:[#allocation1] sm:$0xff]
    %7488 = vrot.lane.b32.xlu0 %v7486, 112
    %v7489 = vpop.permute.xlu0 %7488
    %v7491 = vsel %vm737, %v7362, 0
    %v7494 = vsel %vm299, %v7489, 0
    %7496 = vmatpush.bf16.msra.mxu0 0
    %7497 = vmatpush.bf16.msra.mxu0 0
    %7498 = vmatpush.bf16.msra.mxu0 0
    %7499 = vmatpush.bf16.msra.mxu0 0
    %7500 = vmatpush.bf16.msra.mxu0 0
    %7501 = vmatpush.bf16.msra.mxu0 0
    %7502 = vmatpush.bf16.msra.mxu0 0
    %7503 = vmatpush.bf16.msra.mxu0 %v7494
    %7504 = vmatmul.bf16.gmra.mxu0 %v7491
    %v7505 = vpop.f32.mrf.mxu0
    %v7506 = vadd.f32 0.0, %v7505
    %v7507 = vpop.f32.mrf.mxu0
    %7508 = vdwg.mxu0
    %7509 = vst [vmem:[#allocation1] ss:$9 sm:$0xff] %v6400
    %v7510 = vld [vmem:[#allocation1] sm:$0xff]
    %7512 = vrot.lane.b32.xlu0 %v7510, 112
    %v7513 = vpop.permute.xlu0 %7512
    %v7515 = vsel %vm737, %v7363, 0
    %v7518 = vsel %vm299, %v7513, 0
    %7520 = vmatpush.bf16.msra.mxu0 0
    %7521 = vmatpush.bf16.msra.mxu0 0
    %7522 = vmatpush.bf16.msra.mxu0 0
    %7523 = vmatpush.bf16.msra.mxu0 0
    %7524 = vmatpush.bf16.msra.mxu0 0
    %7525 = vmatpush.bf16.msra.mxu0 0
    %7526 = vmatpush.bf16.msra.mxu0 0
    %7527 = vmatpush.bf16.msra.mxu0 %v7518
    %7528 = vmatmul.bf16.gmra.mxu0 %v7515
    %v7529 = vpop.f32.mrf.mxu0
    %v7530 = vadd.f32 0.0, %v7529
    %v7531 = vpop.f32.mrf.mxu0
    %7532 = vdwg.mxu0
    %7533 = vst [vmem:[#allocation1] ss:$9 sm:$0xff] %v6403
    %v7534 = vld [vmem:[#allocation1] sm:$0xff]
    %7536 = vrot.lane.b32.xlu0 %v7534, 112
    %v7537 = vpop.permute.xlu0 %7536
    %v7539 = vsel %vm737, %v7364, 0
    %v7542 = vsel %vm299, %v7537, 0
    %7544 = vmatpush.bf16.msra.mxu0 0
    %7545 = vmatpush.bf16.msra.mxu0 0
    %7546 = vmatpush.bf16.msra.mxu0 0
    %7547 = vmatpush.bf16.msra.mxu0 0
    %7548 = vmatpush.bf16.msra.mxu0 0
    %7549 = vmatpush.bf16.msra.mxu0 0
    %7550 = vmatpush.bf16.msra.mxu0 0
    %7551 = vmatpush.bf16.msra.mxu0 %v7542
    %7552 = vmatmul.bf16.gmra.mxu0 %v7539
    %v7553 = vpop.f32.mrf.mxu0
    %v7554 = vadd.f32 0.0, %v7553
    %v7555 = vpop.f32.mrf.mxu0
    %7556 = vdwg.mxu0
    %v7557 = vld [vmem:[%s6902 + $0x8] sm:$0xf]
    %v7558 = vld [vmem:[%s6902 + $0xc] sm:$0xf]
    %7567 = vst [vmem:[#allocation1] ss:$4 sm:$0xff] %v7386
    %s7568 = scalar_lea.vmem [#allocation1], 1
    %7569 = vst [vmem:[%s7568] ss:$4 sm:$0xff] %v7410
    %s7570 = scalar_lea.vmem [#allocation1], 2
    %7571 = vst [vmem:[%s7570] ss:$4 sm:$0xff] %v7434
    %s7572 = scalar_lea.vmem [#allocation1], 3
    %7573 = vst [vmem:[%s7572] ss:$4 sm:$0xff] %v7458
    %s7574 = scalar_lea.vmem [#allocation1], 32
    %7575 = vst [vmem:[%s7574] ss:$4 sm:$0xff] %v7482
    %s7576 = scalar_lea.vmem [#allocation1], 33
    %7577 = vst [vmem:[%s7576] ss:$4 sm:$0xff] %v7506
    %s7578 = scalar_lea.vmem [#allocation1], 34
    %7579 = vst [vmem:[%s7578] ss:$4 sm:$0xff] %v7530
    %s7580 = scalar_lea.vmem [#allocation1], 35
    %7581 = vst [vmem:[%s7580] ss:$4 sm:$0xff] %v7554
    %v7582 = vld.sshfl [vmem:[#allocation1] sm:$0xff pattern:$0x73625140]
    %v7583 = vld.sshfl [vmem:[#allocation1 + $0x20] sm:$0xff pattern:$0x73625140]
    %v7586 = vpack.c.bf16 %v7583, %v7582
    %v7589 = vunpack.c.l.b16 %v7557
    %v7590 = vunpack.c.l.b16 %v7558
    %v7591 = vpack.c.b16 %v7590, %v7589
    %v7594 = vsel %vm387, %v7586, 0
    %7596 = vmatpush.bf16.msra.mxu0 0
    %7597 = vmatpush.bf16.msra.mxu0 0
    %7598 = vmatpush.bf16.msra.mxu0 0
    %7599 = vmatpush.bf16.msra.mxu0 0
    %7600 = vmatpush.bf16.msra.mxu0 0
    %7601 = vmatpush.bf16.msra.mxu0 0
    %7602 = vmatpush.bf16.msra.mxu0 0
    %7603 = vmatpush.bf16.msra.mxu0 %v7591
    %7604 = vmatmul.bf16.gmra.mxu0 %v7594
    %v7605 = vpop.f32.mrf.mxu0
    %v7606 = vadd.f32 0.0, %v7605
    %v7607 = vpop.f32.mrf.mxu0
    %v7608 = vadd.f32 0.0, %v7607
    %7609 = vdwg.mxu0
    %v7612 = vunpack.c.l.b16 %v6903
    %v7613 = vunpack.c.l.b16 %v6904
    %v7614 = vpack.c.b16 %v7613, %v7612
    %v7617 = vsel %vm387, %v6932, 0
    %7619 = vmatpush.bf16.msra.mxu0 0
    %7620 = vmatpush.bf16.msra.mxu0 0
    %7621 = vmatpush.bf16.msra.mxu0 0
    %7622 = vmatpush.bf16.msra.mxu0 0
    %7623 = vmatpush.bf16.msra.mxu0 0
    %7624 = vmatpush.bf16.msra.mxu0 0
    %7625 = vmatpush.bf16.msra.mxu0 0
    %7626 = vmatpush.bf16.msra.mxu0 %v7614
    %7627 = vmatmul.bf16.gmra.mxu0 %v7617
    %v7628 = vpop.f32.mrf.mxu0
    %v7629 = vadd.f32 %v7606, %v7628
    %v7630 = vpop.f32.mrf.mxu0
    %v7631 = vadd.f32 %v7608, %v7630
    %7632 = vdwg.mxu0
    %7633 = vst [vmem:[#allocation1] ss:$9 sm:$0xff] %v6322
    %v7634 = vld [vmem:[#allocation1] sm:$0xff]
    %7636 = vrot.lane.b32.xlu0 %v7634, 96
    %v7637 = vpop.permute.xlu0 %7636
    %7638 = vst [vmem:[#allocation1] ss:$9 sm:$0xff] %v6352
    %v7639 = vld [vmem:[#allocation1] sm:$0xff]
    %7641 = vrot.lane.b32.xlu0 %v7639, 96
    %v7642 = vpop.permute.xlu0 %7641
    %v7644 = vsel %vm387, %v7637, 0
    %v7647 = vsel %vm387, %v7642, 0
    %7649 = vmatpush.bf16.xpose.msra.mxu0 0
    %7650 = vmatpush.bf16.xpose.msra.mxu0 0
    %7651 = vmatpush.bf16.xpose.msra.mxu0 0
    %7652 = vmatpush.bf16.xpose.msra.mxu0 0
    %7653 = vmatpush.bf16.xpose.msra.mxu0 0
    %7654 = vmatpush.bf16.xpose.msra.mxu0 0
    %7655 = vmatpush.bf16.xpose.msra.mxu0 0
    %7656 = vmatpush.bf16.xpose.msra.mxu0 %v7647
    %7657 = vmatmul.bf16.gmra.mxu0 %v7644
    %v7658 = vpop.f32.mrf.mxu0
    %v7659 = vadd.f32 0.0, %v7658
    %v7660 = vpop.f32.mrf.mxu0
    %7661 = vdwg.mxu0
    %7662 = vst [vmem:[#allocation1] ss:$9 sm:$0xff] %v6325
    %v7663 = vld [vmem:[#allocation1] sm:$0xff]
    %7665 = vrot.lane.b32.xlu0 %v7663, 96
    %v7666 = vpop.permute.xlu0 %7665
    %7667 = vst [vmem:[#allocation1] ss:$9 sm:$0xff] %v6355
    %v7668 = vld [vmem:[#allocation1] sm:$0xff]
    %7670 = vrot.lane.b32.xlu0 %v7668, 96
    %v7671 = vpop.permute.xlu0 %7670
    %v7673 = vsel %vm387, %v7666, 0
    %v7676 = vsel %vm387, %v7671, 0
    %7678 = vmatpush.bf16.xpose.msra.mxu0 0
    %7679 = vmatpush.bf16.xpose.msra.mxu0 0
    %7680 = vmatpush.bf16.xpose.msra.mxu0 0
    %7681 = vmatpush.bf16.xpose.msra.mxu0 0
    %7682 = vmatpush.bf16.xpose.msra.mxu0 0
    %7683 = vmatpush.bf16.xpose.msra.mxu0 0
    %7684 = vmatpush.bf16.xpose.msra.mxu0 0
    %7685 = vmatpush.bf16.xpose.msra.mxu0 %v7676
    %7686 = vmatmul.bf16.gmra.mxu0 %v7673
    %v7687 = vpop.f32.mrf.mxu0
    %v7688 = vadd.f32 0.0, %v7687
    %v7689 = vpop.f32.mrf.mxu0
    %7690 = vdwg.mxu0
    %7691 = vst [vmem:[#allocation1] ss:$9 sm:$0xff] %v6328
    %v7692 = vld [vmem:[#allocation1] sm:$0xff]
    %7694 = vrot.lane.b32.xlu0 %v7692, 96
    %v7695 = vpop.permute.xlu0 %7694
    %7696 = vst [vmem:[#allocation1] ss:$9 sm:$0xff] %v6358
    %v7697 = vld [vmem:[#allocation1] sm:$0xff]
    %7699 = vrot.lane.b32.xlu0 %v7697, 96
    %v7700 = vpop.permute.xlu0 %7699
    %v7702 = vsel %vm387, %v7695, 0
    %v7705 = vsel %vm387, %v7700, 0
    %7707 = vmatpush.bf16.xpose.msra.mxu0 0
    %7708 = vmatpush.bf16.xpose.msra.mxu0 0
    %7709 = vmatpush.bf16.xpose.msra.mxu0 0
    %7710 = vmatpush.bf16.xpose.msra.mxu0 0
    %7711 = vmatpush.bf16.xpose.msra.mxu0 0
    %7712 = vmatpush.bf16.xpose.msra.mxu0 0
    %7713 = vmatpush.bf16.xpose.msra.mxu0 0
    %7714 = vmatpush.bf16.xpose.msra.mxu0 %v7705
    %7715 = vmatmul.bf16.gmra.mxu0 %v7702
    %v7716 = vpop.f32.mrf.mxu0
    %v7717 = vadd.f32 0.0, %v7716
    %v7718 = vpop.f32.mrf.mxu0
    %7719 = vdwg.mxu0
    %7720 = vst [vmem:[#allocation1] ss:$9 sm:$0xff] %v6331
    %v7721 = vld [vmem:[#allocation1] sm:$0xff]
    %7723 = vrot.lane.b32.xlu0 %v7721, 96
    %v7724 = vpop.permute.xlu0 %7723
    %7725 = vst [vmem:[#allocation1] ss:$9 sm:$0xff] %v6361
    %v7726 = vld [vmem:[#allocation1] sm:$0xff]
    %7728 = vrot.lane.b32.xlu0 %v7726, 96
    %v7729 = vpop.permute.xlu0 %7728
    %v7731 = vsel %vm387, %v7724, 0
    %v7734 = vsel %vm387, %v7729, 0
    %7736 = vmatpush.bf16.xpose.msra.mxu0 0
    %7737 = vmatpush.bf16.xpose.msra.mxu0 0
    %7738 = vmatpush.bf16.xpose.msra.mxu0 0
    %7739 = vmatpush.bf16.xpose.msra.mxu0 0
    %7740 = vmatpush.bf16.xpose.msra.mxu0 0
    %7741 = vmatpush.bf16.xpose.msra.mxu0 0
    %7742 = vmatpush.bf16.xpose.msra.mxu0 0
    %7743 = vmatpush.bf16.xpose.msra.mxu0 %v7734
    %7744 = vmatmul.bf16.gmra.mxu0 %v7731
    %v7745 = vpop.f32.mrf.mxu0
    %v7746 = vadd.f32 0.0, %v7745
    %v7747 = vpop.f32.mrf.mxu0
    %7748 = vdwg.mxu0
    %7749 = vst [vmem:[#allocation1] ss:$9 sm:$0xff] %v6334
    %v7750 = vld [vmem:[#allocation1] sm:$0xff]
    %7752 = vrot.lane.b32.xlu0 %v7750, 96
    %v7753 = vpop.permute.xlu0 %7752
    %7754 = vst [vmem:[#allocation1] ss:$9 sm:$0xff] %v6364
    %v7755 = vld [vmem:[#allocation1] sm:$0xff]
    %7757 = vrot.lane.b32.xlu0 %v7755, 96
    %v7758 = vpop.permute.xlu0 %7757
    %v7760 = vsel %vm387, %v7753, 0
    %v7763 = vsel %vm387, %v7758, 0
    %7765 = vmatpush.bf16.xpose.msra.mxu0 0
    %7766 = vmatpush.bf16.xpose.msra.mxu0 0
    %7767 = vmatpush.bf16.xpose.msra.mxu0 0
    %7768 = vmatpush.bf16.xpose.msra.mxu0 0
    %7769 = vmatpush.bf16.xpose.msra.mxu0 0
    %7770 = vmatpush.bf16.xpose.msra.mxu0 0
    %7771 = vmatpush.bf16.xpose.msra.mxu0 0
    %7772 = vmatpush.bf16.xpose.msra.mxu0 %v7763
    %7773 = vmatmul.bf16.gmra.mxu0 %v7760
    %v7774 = vpop.f32.mrf.mxu0
    %v7775 = vadd.f32 0.0, %v7774
    %v7776 = vpop.f32.mrf.mxu0
    %7777 = vdwg.mxu0
    %7778 = vst [vmem:[#allocation1] ss:$9 sm:$0xff] %v6337
    %v7779 = vld [vmem:[#allocation1] sm:$0xff]
    %7781 = vrot.lane.b32.xlu0 %v7779, 96
    %v7782 = vpop.permute.xlu0 %7781
    %7783 = vst [vmem:[#allocation1] ss:$9 sm:$0xff] %v6367
    %v7784 = vld [vmem:[#allocation1] sm:$0xff]
    %7786 = vrot.lane.b32.xlu0 %v7784, 96
    %v7787 = vpop.permute.xlu0 %7786
    %v7789 = vsel %vm387, %v7782, 0
    %v7792 = vsel %vm387, %v7787, 0
    %7794 = vmatpush.bf16.xpose.msra.mxu0 0
    %7795 = vmatpush.bf16.xpose.msra.mxu0 0
    %7796 = vmatpush.bf16.xpose.msra.mxu0 0
    %7797 = vmatpush.bf16.xpose.msra.mxu0 0
    %7798 = vmatpush.bf16.xpose.msra.mxu0 0
    %7799 = vmatpush.bf16.xpose.msra.mxu0 0
    %7800 = vmatpush.bf16.xpose.msra.mxu0 0
    %7801 = vmatpush.bf16.xpose.msra.mxu0 %v7792
    %7802 = vmatmul.bf16.gmra.mxu0 %v7789
    %v7803 = vpop.f32.mrf.mxu0
    %v7804 = vadd.f32 0.0, %v7803
    %v7805 = vpop.f32.mrf.mxu0
    %7806 = vdwg.mxu0
    %7807 = vst [vmem:[#allocation1] ss:$9 sm:$0xff] %v6340
    %v7808 = vld [vmem:[#allocation1] sm:$0xff]
    %7810 = vrot.lane.b32.xlu0 %v7808, 96
    %v7811 = vpop.permute.xlu0 %7810
    %7812 = vst [vmem:[#allocation1] ss:$9 sm:$0xff] %v6370
    %v7813 = vld [vmem:[#allocation1] sm:$0xff]
    %7815 = vrot.lane.b32.xlu0 %v7813, 96
    %v7816 = vpop.permute.xlu0 %7815
    %v7818 = vsel %vm387, %v7811, 0
    %v7821 = vsel %vm387, %v7816, 0
    %7823 = vmatpush.bf16.xpose.msra.mxu0 0
    %7824 = vmatpush.bf16.xpose.msra.mxu0 0
    %7825 = vmatpush.bf16.xpose.msra.mxu0 0
    %7826 = vmatpush.bf16.xpose.msra.mxu0 0
    %7827 = vmatpush.bf16.xpose.msra.mxu0 0
    %7828 = vmatpush.bf16.xpose.msra.mxu0 0
    %7829 = vmatpush.bf16.xpose.msra.mxu0 0
    %7830 = vmatpush.bf16.xpose.msra.mxu0 %v7821
    %7831 = vmatmul.bf16.gmra.mxu0 %v7818
    %v7832 = vpop.f32.mrf.mxu0
    %v7833 = vadd.f32 0.0, %v7832
    %v7834 = vpop.f32.mrf.mxu0
    %7835 = vdwg.mxu0
    %7836 = vst [vmem:[#allocation1] ss:$9 sm:$0xff] %v6343
    %v7837 = vld [vmem:[#allocation1] sm:$0xff]
    %7839 = vrot.lane.b32.xlu0 %v7837, 96
    %v7840 = vpop.permute.xlu0 %7839
    %7841 = vst [vmem:[#allocation1] ss:$9 sm:$0xff] %v6373
    %v7842 = vld [vmem:[#allocation1] sm:$0xff]
    %7844 = vrot.lane.b32.xlu0 %v7842, 96
    %v7845 = vpop.permute.xlu0 %7844
    %v7847 = vsel %vm387, %v7840, 0
    %v7850 = vsel %vm387, %v7845, 0
    %7852 = vmatpush.bf16.xpose.msra.mxu0 0
    %7853 = vmatpush.bf16.xpose.msra.mxu0 0
    %7854 = vmatpush.bf16.xpose.msra.mxu0 0
    %7855 = vmatpush.bf16.xpose.msra.mxu0 0
    %7856 = vmatpush.bf16.xpose.msra.mxu0 0
    %7857 = vmatpush.bf16.xpose.msra.mxu0 0
    %7858 = vmatpush.bf16.xpose.msra.mxu0 0
    %7859 = vmatpush.bf16.xpose.msra.mxu0 %v7850
    %7860 = vmatmul.bf16.gmra.mxu0 %v7847
    %v7861 = vpop.f32.mrf.mxu0
    %v7862 = vadd.f32 0.0, %v7861
    %v7863 = vpop.f32.mrf.mxu0
    %7864 = vdwg.mxu0
    %v7865 = vsel %vm536, %v7659, -inf
    %7866 = vmax.xlane.f32.xlu0 %v7865
    %v7867 = vpop.xlane.xlu0 %7866
    %v7868 = vsel %vm536, %v7688, -inf
    %7869 = vmax.xlane.f32.xlu0 %v7868
    %v7870 = vpop.xlane.xlu0 %7869
    %v7871 = vsel %vm536, %v7717, -inf
    %7872 = vmax.xlane.f32.xlu0 %v7871
    %v7873 = vpop.xlane.xlu0 %7872
    %v7874 = vsel %vm536, %v7746, -inf
    %7875 = vmax.xlane.f32.xlu0 %v7874
    %v7876 = vpop.xlane.xlu0 %7875
    %v7877 = vsel %vm536, %v7775, -inf
    %7878 = vmax.xlane.f32.xlu0 %v7877
    %v7879 = vpop.xlane.xlu0 %7878
    %v7880 = vsel %vm536, %v7804, -inf
    %7881 = vmax.xlane.f32.xlu0 %v7880
    %v7882 = vpop.xlane.xlu0 %7881
    %v7883 = vsel %vm536, %v7833, -inf
    %7884 = vmax.xlane.f32.xlu0 %v7883
    %v7885 = vpop.xlane.xlu0 %7884
    %v7886 = vsel %vm536, %v7862, -inf
    %7887 = vmax.xlane.f32.xlu0 %v7886
    %v7888 = vpop.xlane.xlu0 %7887
    %v7889 = vsub.f32 %v7659, %v7867
    %v7890 = vsub.f32 %v7688, %v7870
    %v7891 = vsub.f32 %v7717, %v7873
    %v7892 = vsub.f32 %v7746, %v7876
    %v7893 = vsub.f32 %v7775, %v7879
    %v7894 = vsub.f32 %v7804, %v7882
    %v7895 = vsub.f32 %v7833, %v7885
    %v7896 = vsub.f32 %v7862, %v7888
    %v7897 = vmul.f32 %v7889, 1.442695
    %v7898 = vpow.pop %v7897
    %v7899 = vmul.f32 %v7890, 1.442695
    %v7900 = vpow.pop %v7899
    %v7901 = vmul.f32 %v7891, 1.442695
    %v7902 = vpow.pop %v7901
    %v7903 = vmul.f32 %v7892, 1.442695
    %v7904 = vpow.pop %v7903
    %v7905 = vmul.f32 %v7893, 1.442695
    %v7906 = vpow.pop %v7905
    %v7907 = vmul.f32 %v7894, 1.442695
    %v7908 = vpow.pop %v7907
    %v7909 = vmul.f32 %v7895, 1.442695
    %v7910 = vpow.pop %v7909
    %v7911 = vmul.f32 %v7896, 1.442695
    %v7912 = vpow.pop %v7911
    %v7913 = vsel %vm536, %v7898, 0.0
    %7914 = vadd.xlane.f32.xlu0 %v7913
    %v7915 = vpop.xlane.xlu0 %7914
    %v7916 = vsel %vm536, %v7900, 0.0
    %7917 = vadd.xlane.f32.xlu0 %v7916
    %v7918 = vpop.xlane.xlu0 %7917
    %v7919 = vsel %vm536, %v7902, 0.0
    %7920 = vadd.xlane.f32.xlu0 %v7919
    %v7921 = vpop.xlane.xlu0 %7920
    %v7922 = vsel %vm536, %v7904, 0.0
    %7923 = vadd.xlane.f32.xlu0 %v7922
    %v7924 = vpop.xlane.xlu0 %7923
    %v7925 = vsel %vm536, %v7906, 0.0
    %7926 = vadd.xlane.f32.xlu0 %v7925
    %v7927 = vpop.xlane.xlu0 %7926
    %v7928 = vsel %vm536, %v7908, 0.0
    %7929 = vadd.xlane.f32.xlu0 %v7928
    %v7930 = vpop.xlane.xlu0 %7929
    %v7931 = vsel %vm536, %v7910, 0.0
    %7932 = vadd.xlane.f32.xlu0 %v7931
    %v7933 = vpop.xlane.xlu0 %7932
    %v7934 = vsel %vm536, %v7912, 0.0
    %7935 = vadd.xlane.f32.xlu0 %v7934
    %v7936 = vpop.xlane.xlu0 %7935
    %v7937 = vrcp.pop %v7915
    %v7938 = vmul.f32 %v7915, %v7937
    %v7939 = vsub.f32 1.0, %v7938
    %v7940 = vmul.f32 %v7937, %v7939
    %v7941 = vadd.f32 %v7937, %v7940
    %vm7942 = vweird.f32 %v7915
    %vm7943 = vweird.f32 %v7937
    %vm7944 = vmor %vm7942, %vm7943
    %v7945 = vsel %vm7944, %v7937, %v7941
    %v7946 = vand.u32 2147483647, %v7915
    %vm7947 = vcmp.eq.f32.partialorder %v7946, 8.507059e+37
    %v7948 = vand.u32 %v7915, 2147483648
    %v7949 = vor.u32 1.1754944e-38, %v7948
    %v7950 = vsel %vm7947, %v7949, %v7945
    %v7951 = vmul.f32 %v7898, %v7950
    %v7952 = vrcp.pop %v7918
    %v7953 = vmul.f32 %v7918, %v7952
    %v7954 = vsub.f32 1.0, %v7953
    %v7955 = vmul.f32 %v7952, %v7954
    %v7956 = vadd.f32 %v7952, %v7955
    %vm7957 = vweird.f32 %v7918
    %vm7958 = vweird.f32 %v7952
    %vm7959 = vmor %vm7957, %vm7958
    %v7960 = vsel %vm7959, %v7952, %v7956
    %v7961 = vand.u32 2147483647, %v7918
    %vm7962 = vcmp.eq.f32.partialorder %v7961, 8.507059e+37
    %v7963 = vand.u32 %v7918, 2147483648
    %v7964 = vor.u32 1.1754944e-38, %v7963
    %v7965 = vsel %vm7962, %v7964, %v7960
    %v7966 = vmul.f32 %v7900, %v7965
    %v7967 = vrcp.pop %v7921
    %v7968 = vmul.f32 %v7921, %v7967
    %v7969 = vsub.f32 1.0, %v7968
    %v7970 = vmul.f32 %v7967, %v7969
    %v7971 = vadd.f32 %v7967, %v7970
    %vm7972 = vweird.f32 %v7921
    %vm7973 = vweird.f32 %v7967
    %vm7974 = vmor %vm7972, %vm7973
    %v7975 = vsel %vm7974, %v7967, %v7971
    %v7976 = vand.u32 2147483647, %v7921
    %vm7977 = vcmp.eq.f32.partialorder %v7976, 8.507059e+37
    %v7978 = vand.u32 %v7921, 2147483648
    %v7979 = vor.u32 1.1754944e-38, %v7978
    %v7980 = vsel %vm7977, %v7979, %v7975
    %v7981 = vmul.f32 %v7902, %v7980
    %v7982 = vrcp.pop %v7924
    %v7983 = vmul.f32 %v7924, %v7982
    %v7984 = vsub.f32 1.0, %v7983
    %v7985 = vmul.f32 %v7982, %v7984
    %v7986 = vadd.f32 %v7982, %v7985
    %vm7987 = vweird.f32 %v7924
    %vm7988 = vweird.f32 %v7982
    %vm7989 = vmor %vm7987, %vm7988
    %v7990 = vsel %vm7989, %v7982, %v7986
    %v7991 = vand.u32 2147483647, %v7924
    %vm7992 = vcmp.eq.f32.partialorder %v7991, 8.507059e+37
    %v7993 = vand.u32 %v7924, 2147483648
    %v7994 = vor.u32 1.1754944e-38, %v7993
    %v7995 = vsel %vm7992, %v7994, %v7990
    %v7996 = vmul.f32 %v7904, %v7995
    %v7997 = vrcp.pop %v7927
    %v7998 = vmul.f32 %v7927, %v7997
    %v7999 = vsub.f32 1.0, %v7998
    %v8000 = vmul.f32 %v7997, %v7999
    %v8001 = vadd.f32 %v7997, %v8000
    %vm8002 = vweird.f32 %v7927
    %vm8003 = vweird.f32 %v7997
    %vm8004 = vmor %vm8002, %vm8003
    %v8005 = vsel %vm8004, %v7997, %v8001
    %v8006 = vand.u32 2147483647, %v7927
    %vm8007 = vcmp.eq.f32.partialorder %v8006, 8.507059e+37
    %v8008 = vand.u32 %v7927, 2147483648
    %v8009 = vor.u32 1.1754944e-38, %v8008
    %v8010 = vsel %vm8007, %v8009, %v8005
    %v8011 = vmul.f32 %v7906, %v8010
    %v8012 = vrcp.pop %v7930
    %v8013 = vmul.f32 %v7930, %v8012
    %v8014 = vsub.f32 1.0, %v8013
    %v8015 = vmul.f32 %v8012, %v8014
    %v8016 = vadd.f32 %v8012, %v8015
    %vm8017 = vweird.f32 %v7930
    %vm8018 = vweird.f32 %v8012
    %vm8019 = vmor %vm8017, %vm8018
    %v8020 = vsel %vm8019, %v8012, %v8016
    %v8021 = vand.u32 2147483647, %v7930
    %vm8022 = vcmp.eq.f32.partialorder %v8021, 8.507059e+37
    %v8023 = vand.u32 %v7930, 2147483648
    %v8024 = vor.u32 1.1754944e-38, %v8023
    %v8025 = vsel %vm8022, %v8024, %v8020
    %v8026 = vmul.f32 %v7908, %v8025
    %v8027 = vrcp.pop %v7933
    %v8028 = vmul.f32 %v7933, %v8027
    %v8029 = vsub.f32 1.0, %v8028
    %v8030 = vmul.f32 %v8027, %v8029
    %v8031 = vadd.f32 %v8027, %v8030
    %vm8032 = vweird.f32 %v7933
    %vm8033 = vweird.f32 %v8027
    %vm8034 = vmor %vm8032, %vm8033
    %v8035 = vsel %vm8034, %v8027, %v8031
    %v8036 = vand.u32 2147483647, %v7933
    %vm8037 = vcmp.eq.f32.partialorder %v8036, 8.507059e+37
    %v8038 = vand.u32 %v7933, 2147483648
    %v8039 = vor.u32 1.1754944e-38, %v8038
    %v8040 = vsel %vm8037, %v8039, %v8035
    %v8041 = vmul.f32 %v7910, %v8040
    %v8042 = vrcp.pop %v7936
    %v8043 = vmul.f32 %v7936, %v8042
    %v8044 = vsub.f32 1.0, %v8043
    %v8045 = vmul.f32 %v8042, %v8044
    %v8046 = vadd.f32 %v8042, %v8045
    %vm8047 = vweird.f32 %v7936
    %vm8048 = vweird.f32 %v8042
    %vm8049 = vmor %vm8047, %vm8048
    %v8050 = vsel %vm8049, %v8042, %v8046
    %v8051 = vand.u32 2147483647, %v7936
    %vm8052 = vcmp.eq.f32.partialorder %v8051, 8.507059e+37
    %v8053 = vand.u32 %v7936, 2147483648
    %v8054 = vor.u32 1.1754944e-38, %v8053
    %v8055 = vsel %vm8052, %v8054, %v8050
    %v8056 = vmul.f32 %v7912, %v8055
    %v8057 = vpack.c.bf16 %v7951, %v7951
    %v8058 = vpack.c.bf16 %v7966, %v7966
    %v8059 = vpack.c.bf16 %v7981, %v7981
    %v8060 = vpack.c.bf16 %v7996, %v7996
    %v8061 = vpack.c.bf16 %v8011, %v8011
    %v8062 = vpack.c.bf16 %v8026, %v8026
    %v8063 = vpack.c.bf16 %v8041, %v8041
    %v8064 = vpack.c.bf16 %v8056, %v8056
    %8065 = vst [vmem:[#allocation1] ss:$9 sm:$0xff] %v6382
    %v8066 = vld [vmem:[#allocation1] sm:$0xff]
    %8068 = vrot.lane.b32.xlu0 %v8066, 96
    %v8069 = vpop.permute.xlu0 %8068
    %v8071 = vsel %vm737, %v8057, 0
    %v8074 = vsel %vm299, %v8069, 0
    %8076 = vmatpush.bf16.msra.mxu0 0
    %8077 = vmatpush.bf16.msra.mxu0 0
    %8078 = vmatpush.bf16.msra.mxu0 0
    %8079 = vmatpush.bf16.msra.mxu0 0
    %8080 = vmatpush.bf16.msra.mxu0 0
    %8081 = vmatpush.bf16.msra.mxu0 0
    %8082 = vmatpush.bf16.msra.mxu0 0
    %8083 = vmatpush.bf16.msra.mxu0 %v8074
    %8084 = vmatmul.bf16.gmra.mxu0 %v8071
    %v8085 = vpop.f32.mrf.mxu0
    %v8086 = vadd.f32 0.0, %v8085
    %v8087 = vpop.f32.mrf.mxu0
    %8088 = vdwg.mxu0
    %8089 = vst [vmem:[#allocation1] ss:$9 sm:$0xff] %v6385
    %v8090 = vld [vmem:[#allocation1] sm:$0xff]
    %8092 = vrot.lane.b32.xlu0 %v8090, 96
    %v8093 = vpop.permute.xlu0 %8092
    %v8095 = vsel %vm737, %v8058, 0
    %v8098 = vsel %vm299, %v8093, 0
    %8100 = vmatpush.bf16.msra.mxu0 0
    %8101 = vmatpush.bf16.msra.mxu0 0
    %8102 = vmatpush.bf16.msra.mxu0 0
    %8103 = vmatpush.bf16.msra.mxu0 0
    %8104 = vmatpush.bf16.msra.mxu0 0
    %8105 = vmatpush.bf16.msra.mxu0 0
    %8106 = vmatpush.bf16.msra.mxu0 0
    %8107 = vmatpush.bf16.msra.mxu0 %v8098
    %8108 = vmatmul.bf16.gmra.mxu0 %v8095
    %v8109 = vpop.f32.mrf.mxu0
    %v8110 = vadd.f32 0.0, %v8109
    %v8111 = vpop.f32.mrf.mxu0
    %8112 = vdwg.mxu0
    %8113 = vst [vmem:[#allocation1] ss:$9 sm:$0xff] %v6388
    %v8114 = vld [vmem:[#allocation1] sm:$0xff]
    %8116 = vrot.lane.b32.xlu0 %v8114, 96
    %v8117 = vpop.permute.xlu0 %8116
    %v8119 = vsel %vm737, %v8059, 0
    %v8122 = vsel %vm299, %v8117, 0
    %8124 = vmatpush.bf16.msra.mxu0 0
    %8125 = vmatpush.bf16.msra.mxu0 0
    %8126 = vmatpush.bf16.msra.mxu0 0
    %8127 = vmatpush.bf16.msra.mxu0 0
    %8128 = vmatpush.bf16.msra.mxu0 0
    %8129 = vmatpush.bf16.msra.mxu0 0
    %8130 = vmatpush.bf16.msra.mxu0 0
    %8131 = vmatpush.bf16.msra.mxu0 %v8122
    %8132 = vmatmul.bf16.gmra.mxu0 %v8119
    %v8133 = vpop.f32.mrf.mxu0
    %v8134 = vadd.f32 0.0, %v8133
    %v8135 = vpop.f32.mrf.mxu0
    %8136 = vdwg.mxu0
    %8137 = vst [vmem:[#allocation1] ss:$9 sm:$0xff] %v6391
    %v8138 = vld [vmem:[#allocation1] sm:$0xff]
    %8140 = vrot.lane.b32.xlu0 %v8138, 96
    %v8141 = vpop.permute.xlu0 %8140
    %v8143 = vsel %vm737, %v8060, 0
    %v8146 = vsel %vm299, %v8141, 0
    %8148 = vmatpush.bf16.msra.mxu0 0
    %8149 = vmatpush.bf16.msra.mxu0 0
    %8150 = vmatpush.bf16.msra.mxu0 0
    %8151 = vmatpush.bf16.msra.mxu0 0
    %8152 = vmatpush.bf16.msra.mxu0 0
    %8153 = vmatpush.bf16.msra.mxu0 0
    %8154 = vmatpush.bf16.msra.mxu0 0
    %8155 = vmatpush.bf16.msra.mxu0 %v8146
    %8156 = vmatmul.bf16.gmra.mxu0 %v8143
    %v8157 = vpop.f32.mrf.mxu0
    %v8158 = vadd.f32 0.0, %v8157
    %v8159 = vpop.f32.mrf.mxu0
    %8160 = vdwg.mxu0
    %8161 = vst [vmem:[#allocation1] ss:$9 sm:$0xff] %v6394
    %v8162 = vld [vmem:[#allocation1] sm:$0xff]
    %8164 = vrot.lane.b32.xlu0 %v8162, 96
    %v8165 = vpop.permute.xlu0 %8164
    %v8167 = vsel %vm737, %v8061, 0
    %v8170 = vsel %vm299, %v8165, 0
    %8172 = vmatpush.bf16.msra.mxu0 0
    %8173 = vmatpush.bf16.msra.mxu0 0
    %8174 = vmatpush.bf16.msra.mxu0 0
    %8175 = vmatpush.bf16.msra.mxu0 0
    %8176 = vmatpush.bf16.msra.mxu0 0
    %8177 = vmatpush.bf16.msra.mxu0 0
    %8178 = vmatpush.bf16.msra.mxu0 0
    %8179 = vmatpush.bf16.msra.mxu0 %v8170
    %8180 = vmatmul.bf16.gmra.mxu0 %v8167
    %v8181 = vpop.f32.mrf.mxu0
    %v8182 = vadd.f32 0.0, %v8181
    %v8183 = vpop.f32.mrf.mxu0
    %8184 = vdwg.mxu0
    %8185 = vst [vmem:[#allocation1] ss:$9 sm:$0xff] %v6397
    %v8186 = vld [vmem:[#allocation1] sm:$0xff]
    %8188 = vrot.lane.b32.xlu0 %v8186, 96
    %v8189 = vpop.permute.xlu0 %8188
    %v8191 = vsel %vm737, %v8062, 0
    %v8194 = vsel %vm299, %v8189, 0
    %8196 = vmatpush.bf16.msra.mxu0 0
    %8197 = vmatpush.bf16.msra.mxu0 0
    %8198 = vmatpush.bf16.msra.mxu0 0
    %8199 = vmatpush.bf16.msra.mxu0 0
    %8200 = vmatpush.bf16.msra.mxu0 0
    %8201 = vmatpush.bf16.msra.mxu0 0
    %8202 = vmatpush.bf16.msra.mxu0 0
    %8203 = vmatpush.bf16.msra.mxu0 %v8194
    %8204 = vmatmul.bf16.gmra.mxu0 %v8191
    %v8205 = vpop.f32.mrf.mxu0
    %v8206 = vadd.f32 0.0, %v8205
    %v8207 = vpop.f32.mrf.mxu0
    %8208 = vdwg.mxu0
    %8209 = vst [vmem:[#allocation1] ss:$9 sm:$0xff] %v6400
    %v8210 = vld [vmem:[#allocation1] sm:$0xff]
    %8212 = vrot.lane.b32.xlu0 %v8210, 96
    %v8213 = vpop.permute.xlu0 %8212
    %v8215 = vsel %vm737, %v8063, 0
    %v8218 = vsel %vm299, %v8213, 0
    %8220 = vmatpush.bf16.msra.mxu0 0
    %8221 = vmatpush.bf16.msra.mxu0 0
    %8222 = vmatpush.bf16.msra.mxu0 0
    %8223 = vmatpush.bf16.msra.mxu0 0
    %8224 = vmatpush.bf16.msra.mxu0 0
    %8225 = vmatpush.bf16.msra.mxu0 0
    %8226 = vmatpush.bf16.msra.mxu0 0
    %8227 = vmatpush.bf16.msra.mxu0 %v8218
    %8228 = vmatmul.bf16.gmra.mxu0 %v8215
    %v8229 = vpop.f32.mrf.mxu0
    %v8230 = vadd.f32 0.0, %v8229
    %v8231 = vpop.f32.mrf.mxu0
    %8232 = vdwg.mxu0
    %8233 = vst [vmem:[#allocation1] ss:$9 sm:$0xff] %v6403
    %v8234 = vld [vmem:[#allocation1] sm:$0xff]
    %8236 = vrot.lane.b32.xlu0 %v8234, 96
    %v8237 = vpop.permute.xlu0 %8236
    %v8239 = vsel %vm737, %v8064, 0
    %v8242 = vsel %vm299, %v8237, 0
    %8244 = vmatpush.bf16.msra.mxu0 0
    %8245 = vmatpush.bf16.msra.mxu0 0
    %8246 = vmatpush.bf16.msra.mxu0 0
    %8247 = vmatpush.bf16.msra.mxu0 0
    %8248 = vmatpush.bf16.msra.mxu0 0
    %8249 = vmatpush.bf16.msra.mxu0 0
    %8250 = vmatpush.bf16.msra.mxu0 0
    %8251 = vmatpush.bf16.msra.mxu0 %v8242
    %8252 = vmatmul.bf16.gmra.mxu0 %v8239
    %v8253 = vpop.f32.mrf.mxu0
    %v8254 = vadd.f32 0.0, %v8253
    %v8255 = vpop.f32.mrf.mxu0
    %8256 = vdwg.mxu0
    %v8257 = vld [vmem:[%s6902 + $0x10] sm:$0xf]
    %v8258 = vld [vmem:[%s6902 + $0x14] sm:$0xf]
    %8267 = vst [vmem:[#allocation1] ss:$4 sm:$0xff] %v8086
    %s8268 = scalar_lea.vmem [#allocation1], 1
    %8269 = vst [vmem:[%s8268] ss:$4 sm:$0xff] %v8110
    %s8270 = scalar_lea.vmem [#allocation1], 2
    %8271 = vst [vmem:[%s8270] ss:$4 sm:$0xff] %v8134
    %s8272 = scalar_lea.vmem [#allocation1], 3
    %8273 = vst [vmem:[%s8272] ss:$4 sm:$0xff] %v8158
    %s8274 = scalar_lea.vmem [#allocation1], 32
    %8275 = vst [vmem:[%s8274] ss:$4 sm:$0xff] %v8182
    %s8276 = scalar_lea.vmem [#allocation1], 33
    %8277 = vst [vmem:[%s8276] ss:$4 sm:$0xff] %v8206
    %s8278 = scalar_lea.vmem [#allocation1], 34
    %8279 = vst [vmem:[%s8278] ss:$4 sm:$0xff] %v8230
    %s8280 = scalar_lea.vmem [#allocation1], 35
    %8281 = vst [vmem:[%s8280] ss:$4 sm:$0xff] %v8254
    %v8282 = vld.sshfl [vmem:[#allocation1] sm:$0xff pattern:$0x73625140]
    %v8283 = vld.sshfl [vmem:[#allocation1 + $0x20] sm:$0xff pattern:$0x73625140]
    %v8286 = vpack.c.bf16 %v8283, %v8282
    %v8289 = vunpack.c.l.b16 %v8257
    %v8290 = vunpack.c.l.b16 %v8258
    %v8291 = vpack.c.b16 %v8290, %v8289
    %v8294 = vsel %vm387, %v8286, 0
    %8296 = vmatpush.bf16.msra.mxu0 0
    %8297 = vmatpush.bf16.msra.mxu0 0
    %8298 = vmatpush.bf16.msra.mxu0 0
    %8299 = vmatpush.bf16.msra.mxu0 0
    %8300 = vmatpush.bf16.msra.mxu0 0
    %8301 = vmatpush.bf16.msra.mxu0 0
    %8302 = vmatpush.bf16.msra.mxu0 0
    %8303 = vmatpush.bf16.msra.mxu0 %v8291
    %8304 = vmatmul.bf16.gmra.mxu0 %v8294
    %v8305 = vpop.f32.mrf.mxu0
    %v8306 = vadd.f32 0.0, %v8305
    %v8307 = vpop.f32.mrf.mxu0
    %v8308 = vadd.f32 0.0, %v8307
    %8309 = vdwg.mxu0
    %v8310 = vadd.f32 %v7629, %v8306
    %v8311 = vadd.f32 %v7631, %v8308
    %8312 = vst [vmem:[#allocation1] ss:$9 sm:$0xff] %v6322
    %v8313 = vld [vmem:[#allocation1] sm:$0xff]
    %8315 = vrot.lane.b32.xlu0 %v8313, 80
    %v8316 = vpop.permute.xlu0 %8315
    %8317 = vst [vmem:[#allocation1] ss:$9 sm:$0xff] %v6352
    %v8318 = vld [vmem:[#allocation1] sm:$0xff]
    %8320 = vrot.lane.b32.xlu0 %v8318, 80
    %v8321 = vpop.permute.xlu0 %8320
    %v8323 = vsel %vm387, %v8316, 0
    %v8326 = vsel %vm387, %v8321, 0
    %8328 = vmatpush.bf16.xpose.msra.mxu0 0
    %8329 = vmatpush.bf16.xpose.msra.mxu0 0
    %8330 = vmatpush.bf16.xpose.msra.mxu0 0
    %8331 = vmatpush.bf16.xpose.msra.mxu0 0
    %8332 = vmatpush.bf16.xpose.msra.mxu0 0
    %8333 = vmatpush.bf16.xpose.msra.mxu0 0
    %8334 = vmatpush.bf16.xpose.msra.mxu0 0
    %8335 = vmatpush.bf16.xpose.msra.mxu0 %v8326
    %8336 = vmatmul.bf16.gmra.mxu0 %v8323
    %v8337 = vpop.f32.mrf.mxu0
    %v8338 = vadd.f32 0.0, %v8337
    %v8339 = vpop.f32.mrf.mxu0
    %8340 = vdwg.mxu0
    %8341 = vst [vmem:[#allocation1] ss:$9 sm:$0xff] %v6325
    %v8342 = vld [vmem:[#allocation1] sm:$0xff]
    %8344 = vrot.lane.b32.xlu0 %v8342, 80
    %v8345 = vpop.permute.xlu0 %8344
    %8346 = vst [vmem:[#allocation1] ss:$9 sm:$0xff] %v6355
    %v8347 = vld [vmem:[#allocation1] sm:$0xff]
    %8349 = vrot.lane.b32.xlu0 %v8347, 80
    %v8350 = vpop.permute.xlu0 %8349
    %v8352 = vsel %vm387, %v8345, 0
    %v8355 = vsel %vm387, %v8350, 0
    %8357 = vmatpush.bf16.xpose.msra.mxu0 0
    %8358 = vmatpush.bf16.xpose.msra.mxu0 0
    %8359 = vmatpush.bf16.xpose.msra.mxu0 0
    %8360 = vmatpush.bf16.xpose.msra.mxu0 0
    %8361 = vmatpush.bf16.xpose.msra.mxu0 0
    %8362 = vmatpush.bf16.xpose.msra.mxu0 0
    %8363 = vmatpush.bf16.xpose.msra.mxu0 0
    %8364 = vmatpush.bf16.xpose.msra.mxu0 %v8355
    %8365 = vmatmul.bf16.gmra.mxu0 %v8352
    %v8366 = vpop.f32.mrf.mxu0
    %v8367 = vadd.f32 0.0, %v8366
    %v8368 = vpop.f32.mrf.mxu0
    %8369 = vdwg.mxu0
    %8370 = vst [vmem:[#allocation1] ss:$9 sm:$0xff] %v6328
    %v8371 = vld [vmem:[#allocation1] sm:$0xff]
    %8373 = vrot.lane.b32.xlu0 %v8371, 80
    %v8374 = vpop.permute.xlu0 %8373
    %8375 = vst [vmem:[#allocation1] ss:$9 sm:$0xff] %v6358
    %v8376 = vld [vmem:[#allocation1] sm:$0xff]
    %8378 = vrot.lane.b32.xlu0 %v8376, 80
    %v8379 = vpop.permute.xlu0 %8378
    %v8381 = vsel %vm387, %v8374, 0
    %v8384 = vsel %vm387, %v8379, 0
    %8386 = vmatpush.bf16.xpose.msra.mxu0 0
    %8387 = vmatpush.bf16.xpose.msra.mxu0 0
    %8388 = vmatpush.bf16.xpose.msra.mxu0 0
    %8389 = vmatpush.bf16.xpose.msra.mxu0 0
    %8390 = vmatpush.bf16.xpose.msra.mxu0 0
    %8391 = vmatpush.bf16.xpose.msra.mxu0 0
    %8392 = vmatpush.bf16.xpose.msra.mxu0 0
    %8393 = vmatpush.bf16.xpose.msra.mxu0 %v8384
    %8394 = vmatmul.bf16.gmra.mxu0 %v8381
    %v8395 = vpop.f32.mrf.mxu0
    %v8396 = vadd.f32 0.0, %v8395
    %v8397 = vpop.f32.mrf.mxu0
    %8398 = vdwg.mxu0
    %8399 = vst [vmem:[#allocation1] ss:$9 sm:$0xff] %v6331
    %v8400 = vld [vmem:[#allocation1] sm:$0xff]
    %8402 = vrot.lane.b32.xlu0 %v8400, 80
    %v8403 = vpop.permute.xlu0 %8402
    %8404 = vst [vmem:[#allocation1] ss:$9 sm:$0xff] %v6361
    %v8405 = vld [vmem:[#allocation1] sm:$0xff]
    %8407 = vrot.lane.b32.xlu0 %v8405, 80
    %v8408 = vpop.permute.xlu0 %8407
    %v8410 = vsel %vm387, %v8403, 0
    %v8413 = vsel %vm387, %v8408, 0
    %8415 = vmatpush.bf16.xpose.msra.mxu0 0
    %8416 = vmatpush.bf16.xpose.msra.mxu0 0
    %8417 = vmatpush.bf16.xpose.msra.mxu0 0
    %8418 = vmatpush.bf16.xpose.msra.mxu0 0
    %8419 = vmatpush.bf16.xpose.msra.mxu0 0
    %8420 = vmatpush.bf16.xpose.msra.mxu0 0
    %8421 = vmatpush.bf16.xpose.msra.mxu0 0
    %8422 = vmatpush.bf16.xpose.msra.mxu0 %v8413
    %8423 = vmatmul.bf16.gmra.mxu0 %v8410
    %v8424 = vpop.f32.mrf.mxu0
    %v8425 = vadd.f32 0.0, %v8424
    %v8426 = vpop.f32.mrf.mxu0
    %8427 = vdwg.mxu0
    %8428 = vst [vmem:[#allocation1] ss:$9 sm:$0xff] %v6334
    %v8429 = vld [vmem:[#allocation1] sm:$0xff]
    %8431 = vrot.lane.b32.xlu0 %v8429, 80
    %v8432 = vpop.permute.xlu0 %8431
    %8433 = vst [vmem:[#allocation1] ss:$9 sm:$0xff] %v6364
    %v8434 = vld [vmem:[#allocation1] sm:$0xff]
    %8436 = vrot.lane.b32.xlu0 %v8434, 80
    %v8437 = vpop.permute.xlu0 %8436
    %v8439 = vsel %vm387, %v8432, 0
    %v8442 = vsel %vm387, %v8437, 0
    %8444 = vmatpush.bf16.xpose.msra.mxu0 0
    %8445 = vmatpush.bf16.xpose.msra.mxu0 0
    %8446 = vmatpush.bf16.xpose.msra.mxu0 0
    %8447 = vmatpush.bf16.xpose.msra.mxu0 0
    %8448 = vmatpush.bf16.xpose.msra.mxu0 0
    %8449 = vmatpush.bf16.xpose.msra.mxu0 0
    %8450 = vmatpush.bf16.xpose.msra.mxu0 0
    %8451 = vmatpush.bf16.xpose.msra.mxu0 %v8442
    %8452 = vmatmul.bf16.gmra.mxu0 %v8439
    %v8453 = vpop.f32.mrf.mxu0
    %v8454 = vadd.f32 0.0, %v8453
    %v8455 = vpop.f32.mrf.mxu0
    %8456 = vdwg.mxu0
    %8457 = vst [vmem:[#allocation1] ss:$9 sm:$0xff] %v6337
    %v8458 = vld [vmem:[#allocation1] sm:$0xff]
    %8460 = vrot.lane.b32.xlu0 %v8458, 80
    %v8461 = vpop.permute.xlu0 %8460
    %8462 = vst [vmem:[#allocation1] ss:$9 sm:$0xff] %v6367
    %v8463 = vld [vmem:[#allocation1] sm:$0xff]
    %8465 = vrot.lane.b32.xlu0 %v8463, 80
    %v8466 = vpop.permute.xlu0 %8465
    %v8468 = vsel %vm387, %v8461, 0
    %v8471 = vsel %vm387, %v8466, 0
    %8473 = vmatpush.bf16.xpose.msra.mxu0 0
    %8474 = vmatpush.bf16.xpose.msra.mxu0 0
    %8475 = vmatpush.bf16.xpose.msra.mxu0 0
    %8476 = vmatpush.bf16.xpose.msra.mxu0 0
    %8477 = vmatpush.bf16.xpose.msra.mxu0 0
    %8478 = vmatpush.bf16.xpose.msra.mxu0 0
    %8479 = vmatpush.bf16.xpose.msra.mxu0 0
    %8480 = vmatpush.bf16.xpose.msra.mxu0 %v8471
    %8481 = vmatmul.bf16.gmra.mxu0 %v8468
    %v8482 = vpop.f32.mrf.mxu0
    %v8483 = vadd.f32 0.0, %v8482
    %v8484 = vpop.f32.mrf.mxu0
    %8485 = vdwg.mxu0
    %8486 = vst [vmem:[#allocation1] ss:$9 sm:$0xff] %v6340
    %v8487 = vld [vmem:[#allocation1] sm:$0xff]
    %8489 = vrot.lane.b32.xlu0 %v8487, 80
    %v8490 = vpop.permute.xlu0 %8489
    %8491 = vst [vmem:[#allocation1] ss:$9 sm:$0xff] %v6370
    %v8492 = vld [vmem:[#allocation1] sm:$0xff]
    %8494 = vrot.lane.b32.xlu0 %v8492, 80
    %v8495 = vpop.permute.xlu0 %8494
    %v8497 = vsel %vm387, %v8490, 0
    %v8500 = vsel %vm387, %v8495, 0
    %8502 = vmatpush.bf16.xpose.msra.mxu0 0
    %8503 = vmatpush.bf16.xpose.msra.mxu0 0
    %8504 = vmatpush.bf16.xpose.msra.mxu0 0
    %8505 = vmatpush.bf16.xpose.msra.mxu0 0
    %8506 = vmatpush.bf16.xpose.msra.mxu0 0
    %8507 = vmatpush.bf16.xpose.msra.mxu0 0
    %8508 = vmatpush.bf16.xpose.msra.mxu0 0
    %8509 = vmatpush.bf16.xpose.msra.mxu0 %v8500
    %8510 = vmatmul.bf16.gmra.mxu0 %v8497
    %v8511 = vpop.f32.mrf.mxu0
    %v8512 = vadd.f32 0.0, %v8511
    %v8513 = vpop.f32.mrf.mxu0
    %8514 = vdwg.mxu0
    %8515 = vst [vmem:[#allocation1] ss:$9 sm:$0xff] %v6343
    %v8516 = vld [vmem:[#allocation1] sm:$0xff]
    %8518 = vrot.lane.b32.xlu0 %v8516, 80
    %v8519 = vpop.permute.xlu0 %8518
    %8520 = vst [vmem:[#allocation1] ss:$9 sm:$0xff] %v6373
    %v8521 = vld [vmem:[#allocation1] sm:$0xff]
    %8523 = vrot.lane.b32.xlu0 %v8521, 80
    %v8524 = vpop.permute.xlu0 %8523
    %v8526 = vsel %vm387, %v8519, 0
    %v8529 = vsel %vm387, %v8524, 0
    %8531 = vmatpush.bf16.xpose.msra.mxu0 0
    %8532 = vmatpush.bf16.xpose.msra.mxu0 0
    %8533 = vmatpush.bf16.xpose.msra.mxu0 0
    %8534 = vmatpush.bf16.xpose.msra.mxu0 0
    %8535 = vmatpush.bf16.xpose.msra.mxu0 0
    %8536 = vmatpush.bf16.xpose.msra.mxu0 0
    %8537 = vmatpush.bf16.xpose.msra.mxu0 0
    %8538 = vmatpush.bf16.xpose.msra.mxu0 %v8529
    %8539 = vmatmul.bf16.gmra.mxu0 %v8526
    %v8540 = vpop.f32.mrf.mxu0
    %v8541 = vadd.f32 0.0, %v8540
    %v8542 = vpop.f32.mrf.mxu0
    %8543 = vdwg.mxu0
    %v8544 = vsel %vm536, %v8338, -inf
    %8545 = vmax.xlane.f32.xlu0 %v8544
    %v8546 = vpop.xlane.xlu0 %8545
    %v8547 = vsel %vm536, %v8367, -inf
    %8548 = vmax.xlane.f32.xlu0 %v8547
    %v8549 = vpop.xlane.xlu0 %8548
    %v8550 = vsel %vm536, %v8396, -inf
    %8551 = vmax.xlane.f32.xlu0 %v8550
    %v8552 = vpop.xlane.xlu0 %8551
    %v8553 = vsel %vm536, %v8425, -inf
    %8554 = vmax.xlane.f32.xlu0 %v8553
    %v8555 = vpop.xlane.xlu0 %8554
    %v8556 = vsel %vm536, %v8454, -inf
    %8557 = vmax.xlane.f32.xlu0 %v8556
    %v8558 = vpop.xlane.xlu0 %8557
    %v8559 = vsel %vm536, %v8483, -inf
    %8560 = vmax.xlane.f32.xlu0 %v8559
    %v8561 = vpop.xlane.xlu0 %8560
    %v8562 = vsel %vm536, %v8512, -inf
    %8563 = vmax.xlane.f32.xlu0 %v8562
    %v8564 = vpop.xlane.xlu0 %8563
    %v8565 = vsel %vm536, %v8541, -inf
    %8566 = vmax.xlane.f32.xlu0 %v8565
    %v8567 = vpop.xlane.xlu0 %8566
    %v8568 = vsub.f32 %v8338, %v8546
    %v8569 = vsub.f32 %v8367, %v8549
    %v8570 = vsub.f32 %v8396, %v8552
    %v8571 = vsub.f32 %v8425, %v8555
    %v8572 = vsub.f32 %v8454, %v8558
    %v8573 = vsub.f32 %v8483, %v8561
    %v8574 = vsub.f32 %v8512, %v8564
    %v8575 = vsub.f32 %v8541, %v8567
    %v8576 = vmul.f32 %v8568, 1.442695
    %v8577 = vpow.pop %v8576
    %v8578 = vmul.f32 %v8569, 1.442695
    %v8579 = vpow.pop %v8578
    %v8580 = vmul.f32 %v8570, 1.442695
    %v8581 = vpow.pop %v8580
    %v8582 = vmul.f32 %v8571, 1.442695
    %v8583 = vpow.pop %v8582
    %v8584 = vmul.f32 %v8572, 1.442695
    %v8585 = vpow.pop %v8584
    %v8586 = vmul.f32 %v8573, 1.442695
    %v8587 = vpow.pop %v8586
    %v8588 = vmul.f32 %v8574, 1.442695
    %v8589 = vpow.pop %v8588
    %v8590 = vmul.f32 %v8575, 1.442695
    %v8591 = vpow.pop %v8590
    %v8592 = vsel %vm536, %v8577, 0.0
    %8593 = vadd.xlane.f32.xlu0 %v8592
    %v8594 = vpop.xlane.xlu0 %8593
    %v8595 = vsel %vm536, %v8579, 0.0
    %8596 = vadd.xlane.f32.xlu0 %v8595
    %v8597 = vpop.xlane.xlu0 %8596
    %v8598 = vsel %vm536, %v8581, 0.0
    %8599 = vadd.xlane.f32.xlu0 %v8598
    %v8600 = vpop.xlane.xlu0 %8599
    %v8601 = vsel %vm536, %v8583, 0.0
    %8602 = vadd.xlane.f32.xlu0 %v8601
    %v8603 = vpop.xlane.xlu0 %8602
    %v8604 = vsel %vm536, %v8585, 0.0
    %8605 = vadd.xlane.f32.xlu0 %v8604
    %v8606 = vpop.xlane.xlu0 %8605
    %v8607 = vsel %vm536, %v8587, 0.0
    %8608 = vadd.xlane.f32.xlu0 %v8607
    %v8609 = vpop.xlane.xlu0 %8608
    %v8610 = vsel %vm536, %v8589, 0.0
    %8611 = vadd.xlane.f32.xlu0 %v8610
    %v8612 = vpop.xlane.xlu0 %8611
    %v8613 = vsel %vm536, %v8591, 0.0
    %8614 = vadd.xlane.f32.xlu0 %v8613
    %v8615 = vpop.xlane.xlu0 %8614
    %v8616 = vrcp.pop %v8594
    %v8617 = vmul.f32 %v8594, %v8616
    %v8618 = vsub.f32 1.0, %v8617
    %v8619 = vmul.f32 %v8616, %v8618
    %v8620 = vadd.f32 %v8616, %v8619
    %vm8621 = vweird.f32 %v8594
    %vm8622 = vweird.f32 %v8616
    %vm8623 = vmor %vm8621, %vm8622
    %v8624 = vsel %vm8623, %v8616, %v8620
    %v8625 = vand.u32 2147483647, %v8594
    %vm8626 = vcmp.eq.f32.partialorder %v8625, 8.507059e+37
    %v8627 = vand.u32 %v8594, 2147483648
    %v8628 = vor.u32 1.1754944e-38, %v8627
    %v8629 = vsel %vm8626, %v8628, %v8624
    %v8630 = vmul.f32 %v8577, %v8629
    %v8631 = vrcp.pop %v8597
    %v8632 = vmul.f32 %v8597, %v8631
    %v8633 = vsub.f32 1.0, %v8632
    %v8634 = vmul.f32 %v8631, %v8633
    %v8635 = vadd.f32 %v8631, %v8634
    %vm8636 = vweird.f32 %v8597
    %vm8637 = vweird.f32 %v8631
    %vm8638 = vmor %vm8636, %vm8637
    %v8639 = vsel %vm8638, %v8631, %v8635
    %v8640 = vand.u32 2147483647, %v8597
    %vm8641 = vcmp.eq.f32.partialorder %v8640, 8.507059e+37
    %v8642 = vand.u32 %v8597, 2147483648
    %v8643 = vor.u32 1.1754944e-38, %v8642
    %v8644 = vsel %vm8641, %v8643, %v8639
    %v8645 = vmul.f32 %v8579, %v8644
    %v8646 = vrcp.pop %v8600
    %v8647 = vmul.f32 %v8600, %v8646
    %v8648 = vsub.f32 1.0, %v8647
    %v8649 = vmul.f32 %v8646, %v8648
    %v8650 = vadd.f32 %v8646, %v8649
    %vm8651 = vweird.f32 %v8600
    %vm8652 = vweird.f32 %v8646
    %vm8653 = vmor %vm8651, %vm8652
    %v8654 = vsel %vm8653, %v8646, %v8650
    %v8655 = vand.u32 2147483647, %v8600
    %vm8656 = vcmp.eq.f32.partialorder %v8655, 8.507059e+37
    %v8657 = vand.u32 %v8600, 2147483648
    %v8658 = vor.u32 1.1754944e-38, %v8657
    %v8659 = vsel %vm8656, %v8658, %v8654
    %v8660 = vmul.f32 %v8581, %v8659
    %v8661 = vrcp.pop %v8603
    %v8662 = vmul.f32 %v8603, %v8661
    %v8663 = vsub.f32 1.0, %v8662
    %v8664 = vmul.f32 %v8661, %v8663
    %v8665 = vadd.f32 %v8661, %v8664
    %vm8666 = vweird.f32 %v8603
    %vm8667 = vweird.f32 %v8661
    %vm8668 = vmor %vm8666, %vm8667
    %v8669 = vsel %vm8668, %v8661, %v8665
    %v8670 = vand.u32 2147483647, %v8603
    %vm8671 = vcmp.eq.f32.partialorder %v8670, 8.507059e+37
    %v8672 = vand.u32 %v8603, 2147483648
    %v8673 = vor.u32 1.1754944e-38, %v8672
    %v8674 = vsel %vm8671, %v8673, %v8669
    %v8675 = vmul.f32 %v8583, %v8674
    %v8676 = vrcp.pop %v8606
    %v8677 = vmul.f32 %v8606, %v8676
    %v8678 = vsub.f32 1.0, %v8677
    %v8679 = vmul.f32 %v8676, %v8678
    %v8680 = vadd.f32 %v8676, %v8679
    %vm8681 = vweird.f32 %v8606
    %vm8682 = vweird.f32 %v8676
    %vm8683 = vmor %vm8681, %vm8682
    %v8684 = vsel %vm8683, %v8676, %v8680
    %v8685 = vand.u32 2147483647, %v8606
    %vm8686 = vcmp.eq.f32.partialorder %v8685, 8.507059e+37
    %v8687 = vand.u32 %v8606, 2147483648
    %v8688 = vor.u32 1.1754944e-38, %v8687
    %v8689 = vsel %vm8686, %v8688, %v8684
    %v8690 = vmul.f32 %v8585, %v8689
    %v8691 = vrcp.pop %v8609
    %v8692 = vmul.f32 %v8609, %v8691
    %v8693 = vsub.f32 1.0, %v8692
    %v8694 = vmul.f32 %v8691, %v8693
    %v8695 = vadd.f32 %v8691, %v8694
    %vm8696 = vweird.f32 %v8609
    %vm8697 = vweird.f32 %v8691
    %vm8698 = vmor %vm8696, %vm8697
    %v8699 = vsel %vm8698, %v8691, %v8695
    %v8700 = vand.u32 2147483647, %v8609
    %vm8701 = vcmp.eq.f32.partialorder %v8700, 8.507059e+37
    %v8702 = vand.u32 %v8609, 2147483648
    %v8703 = vor.u32 1.1754944e-38, %v8702
    %v8704 = vsel %vm8701, %v8703, %v8699
    %v8705 = vmul.f32 %v8587, %v8704
    %v8706 = vrcp.pop %v8612
    %v8707 = vmul.f32 %v8612, %v8706
    %v8708 = vsub.f32 1.0, %v8707
    %v8709 = vmul.f32 %v8706, %v8708
    %v8710 = vadd.f32 %v8706, %v8709
    %vm8711 = vweird.f32 %v8612
    %vm8712 = vweird.f32 %v8706
    %vm8713 = vmor %vm8711, %vm8712
    %v8714 = vsel %vm8713, %v8706, %v8710
    %v8715 = vand.u32 2147483647, %v8612
    %vm8716 = vcmp.eq.f32.partialorder %v8715, 8.507059e+37
    %v8717 = vand.u32 %v8612, 2147483648
    %v8718 = vor.u32 1.1754944e-38, %v8717
    %v8719 = vsel %vm8716, %v8718, %v8714
    %v8720 = vmul.f32 %v8589, %v8719
    %v8721 = vrcp.pop %v8615
    %v8722 = vmul.f32 %v8615, %v8721
    %v8723 = vsub.f32 1.0, %v8722
    %v8724 = vmul.f32 %v8721, %v8723
    %v8725 = vadd.f32 %v8721, %v8724
    %vm8726 = vweird.f32 %v8615
    %vm8727 = vweird.f32 %v8721
    %vm8728 = vmor %vm8726, %vm8727
    %v8729 = vsel %vm8728, %v8721, %v8725
    %v8730 = vand.u32 2147483647, %v8615
    %vm8731 = vcmp.eq.f32.partialorder %v8730, 8.507059e+37
    %v8732 = vand.u32 %v8615, 2147483648
    %v8733 = vor.u32 1.1754944e-38, %v8732
    %v8734 = vsel %vm8731, %v8733, %v8729
    %v8735 = vmul.f32 %v8591, %v8734
    %v8736 = vpack.c.bf16 %v8630, %v8630
    %v8737 = vpack.c.bf16 %v8645, %v8645
    %v8738 = vpack.c.bf16 %v8660, %v8660
    %v8739 = vpack.c.bf16 %v8675, %v8675
    %v8740 = vpack.c.bf16 %v8690, %v8690
    %v8741 = vpack.c.bf16 %v8705, %v8705
    %v8742 = vpack.c.bf16 %v8720, %v8720
    %v8743 = vpack.c.bf16 %v8735, %v8735
    %8744 = vst [vmem:[#allocation1] ss:$9 sm:$0xff] %v6382
    %v8745 = vld [vmem:[#allocation1] sm:$0xff]
    %8747 = vrot.lane.b32.xlu0 %v8745, 80
    %v8748 = vpop.permute.xlu0 %8747
    %v8750 = vsel %vm737, %v8736, 0
    %v8753 = vsel %vm299, %v8748, 0
    %8755 = vmatpush.bf16.msra.mxu0 0
    %8756 = vmatpush.bf16.msra.mxu0 0
    %8757 = vmatpush.bf16.msra.mxu0 0
    %8758 = vmatpush.bf16.msra.mxu0 0
    %8759 = vmatpush.bf16.msra.mxu0 0
    %8760 = vmatpush.bf16.msra.mxu0 0
    %8761 = vmatpush.bf16.msra.mxu0 0
    %8762 = vmatpush.bf16.msra.mxu0 %v8753
    %8763 = vmatmul.bf16.gmra.mxu0 %v8750
    %v8764 = vpop.f32.mrf.mxu0
    %v8765 = vadd.f32 0.0, %v8764
    %v8766 = vpop.f32.mrf.mxu0
    %8767 = vdwg.mxu0
    %8768 = vst [vmem:[#allocation1] ss:$9 sm:$0xff] %v6385
    %v8769 = vld [vmem:[#allocation1] sm:$0xff]
    %8771 = vrot.lane.b32.xlu0 %v8769, 80
    %v8772 = vpop.permute.xlu0 %8771
    %v8774 = vsel %vm737, %v8737, 0
    %v8777 = vsel %vm299, %v8772, 0
    %8779 = vmatpush.bf16.msra.mxu0 0
    %8780 = vmatpush.bf16.msra.mxu0 0
    %8781 = vmatpush.bf16.msra.mxu0 0
    %8782 = vmatpush.bf16.msra.mxu0 0
    %8783 = vmatpush.bf16.msra.mxu0 0
    %8784 = vmatpush.bf16.msra.mxu0 0
    %8785 = vmatpush.bf16.msra.mxu0 0
    %8786 = vmatpush.bf16.msra.mxu0 %v8777
    %8787 = vmatmul.bf16.gmra.mxu0 %v8774
    %v8788 = vpop.f32.mrf.mxu0
    %v8789 = vadd.f32 0.0, %v8788
    %v8790 = vpop.f32.mrf.mxu0
    %8791 = vdwg.mxu0
    %8792 = vst [vmem:[#allocation1] ss:$9 sm:$0xff] %v6388
    %v8793 = vld [vmem:[#allocation1] sm:$0xff]
    %8795 = vrot.lane.b32.xlu0 %v8793, 80
    %v8796 = vpop.permute.xlu0 %8795
    %v8798 = vsel %vm737, %v8738, 0
    %v8801 = vsel %vm299, %v8796, 0
    %8803 = vmatpush.bf16.msra.mxu0 0
    %8804 = vmatpush.bf16.msra.mxu0 0
    %8805 = vmatpush.bf16.msra.mxu0 0
    %8806 = vmatpush.bf16.msra.mxu0 0
    %8807 = vmatpush.bf16.msra.mxu0 0
    %8808 = vmatpush.bf16.msra.mxu0 0
    %8809 = vmatpush.bf16.msra.mxu0 0
    %8810 = vmatpush.bf16.msra.mxu0 %v8801
    %8811 = vmatmul.bf16.gmra.mxu0 %v8798
    %v8812 = vpop.f32.mrf.mxu0
    %v8813 = vadd.f32 0.0, %v8812
    %v8814 = vpop.f32.mrf.mxu0
    %8815 = vdwg.mxu0
    %8816 = vst [vmem:[#allocation1] ss:$9 sm:$0xff] %v6391
    %v8817 = vld [vmem:[#allocation1] sm:$0xff]
    %8819 = vrot.lane.b32.xlu0 %v8817, 80
    %v8820 = vpop.permute.xlu0 %8819
    %v8822 = vsel %vm737, %v8739, 0
    %v8825 = vsel %vm299, %v8820, 0
    %8827 = vmatpush.bf16.msra.mxu0 0
    %8828 = vmatpush.bf16.msra.mxu0 0
    %8829 = vmatpush.bf16.msra.mxu0 0
    %8830 = vmatpush.bf16.msra.mxu0 0
    %8831 = vmatpush.bf16.msra.mxu0 0
    %8832 = vmatpush.bf16.msra.mxu0 0
    %8833 = vmatpush.bf16.msra.mxu0 0
    %8834 = vmatpush.bf16.msra.mxu0 %v8825
    %8835 = vmatmul.bf16.gmra.mxu0 %v8822
    %v8836 = vpop.f32.mrf.mxu0
    %v8837 = vadd.f32 0.0, %v8836
    %v8838 = vpop.f32.mrf.mxu0
    %8839 = vdwg.mxu0
    %8840 = vst [vmem:[#allocation1] ss:$9 sm:$0xff] %v6394
    %v8841 = vld [vmem:[#allocation1] sm:$0xff]
    %8843 = vrot.lane.b32.xlu0 %v8841, 80
    %v8844 = vpop.permute.xlu0 %8843
    %v8846 = vsel %vm737, %v8740, 0
    %v8849 = vsel %vm299, %v8844, 0
    %8851 = vmatpush.bf16.msra.mxu0 0
    %8852 = vmatpush.bf16.msra.mxu0 0
    %8853 = vmatpush.bf16.msra.mxu0 0
    %8854 = vmatpush.bf16.msra.mxu0 0
    %8855 = vmatpush.bf16.msra.mxu0 0
    %8856 = vmatpush.bf16.msra.mxu0 0
    %8857 = vmatpush.bf16.msra.mxu0 0
    %8858 = vmatpush.bf16.msra.mxu0 %v8849
    %8859 = vmatmul.bf16.gmra.mxu0 %v8846
    %v8860 = vpop.f32.mrf.mxu0
    %v8861 = vadd.f32 0.0, %v8860
    %v8862 = vpop.f32.mrf.mxu0
    %8863 = vdwg.mxu0
    %8864 = vst [vmem:[#allocation1] ss:$9 sm:$0xff] %v6397
    %v8865 = vld [vmem:[#allocation1] sm:$0xff]
    %8867 = vrot.lane.b32.xlu0 %v8865, 80
    %v8868 = vpop.permute.xlu0 %8867
    %v8870 = vsel %vm737, %v8741, 0
    %v8873 = vsel %vm299, %v8868, 0
    %8875 = vmatpush.bf16.msra.mxu0 0
    %8876 = vmatpush.bf16.msra.mxu0 0
    %8877 = vmatpush.bf16.msra.mxu0 0
    %8878 = vmatpush.bf16.msra.mxu0 0
    %8879 = vmatpush.bf16.msra.mxu0 0
    %8880 = vmatpush.bf16.msra.mxu0 0
    %8881 = vmatpush.bf16.msra.mxu0 0
    %8882 = vmatpush.bf16.msra.mxu0 %v8873
    %8883 = vmatmul.bf16.gmra.mxu0 %v8870
    %v8884 = vpop.f32.mrf.mxu0
    %v8885 = vadd.f32 0.0, %v8884
    %v8886 = vpop.f32.mrf.mxu0
    %8887 = vdwg.mxu0
    %8888 = vst [vmem:[#allocation1] ss:$9 sm:$0xff] %v6400
    %v8889 = vld [vmem:[#allocation1] sm:$0xff]
    %8891 = vrot.lane.b32.xlu0 %v8889, 80
    %v8892 = vpop.permute.xlu0 %8891
    %v8894 = vsel %vm737, %v8742, 0
    %v8897 = vsel %vm299, %v8892, 0
    %8899 = vmatpush.bf16.msra.mxu0 0
    %8900 = vmatpush.bf16.msra.mxu0 0
    %8901 = vmatpush.bf16.msra.mxu0 0
    %8902 = vmatpush.bf16.msra.mxu0 0
    %8903 = vmatpush.bf16.msra.mxu0 0
    %8904 = vmatpush.bf16.msra.mxu0 0
    %8905 = vmatpush.bf16.msra.mxu0 0
    %8906 = vmatpush.bf16.msra.mxu0 %v8897
    %8907 = vmatmul.bf16.gmra.mxu0 %v8894
    %v8908 = vpop.f32.mrf.mxu0
    %v8909 = vadd.f32 0.0, %v8908
    %v8910 = vpop.f32.mrf.mxu0
    %8911 = vdwg.mxu0
    %8912 = vst [vmem:[#allocation1] ss:$9 sm:$0xff] %v6403
    %v8913 = vld [vmem:[#allocation1] sm:$0xff]
    %8915 = vrot.lane.b32.xlu0 %v8913, 80
    %v8916 = vpop.permute.xlu0 %8915
    %v8918 = vsel %vm737, %v8743, 0
    %v8921 = vsel %vm299, %v8916, 0
    %8923 = vmatpush.bf16.msra.mxu0 0
    %8924 = vmatpush.bf16.msra.mxu0 0
    %8925 = vmatpush.bf16.msra.mxu0 0
    %8926 = vmatpush.bf16.msra.mxu0 0
    %8927 = vmatpush.bf16.msra.mxu0 0
    %8928 = vmatpush.bf16.msra.mxu0 0
    %8929 = vmatpush.bf16.msra.mxu0 0
    %8930 = vmatpush.bf16.msra.mxu0 %v8921
    %8931 = vmatmul.bf16.gmra.mxu0 %v8918
    %v8932 = vpop.f32.mrf.mxu0
    %v8933 = vadd.f32 0.0, %v8932
    %v8934 = vpop.f32.mrf.mxu0
    %8935 = vdwg.mxu0
    %v8936 = vld [vmem:[%s6902 + $0x18] sm:$0xf]
    %v8937 = vld [vmem:[%s6902 + $0x1c] sm:$0xf]
    %8946 = vst [vmem:[#allocation1] ss:$4 sm:$0xff] %v8765
    %s8947 = scalar_lea.vmem [#allocation1], 1
    %8948 = vst [vmem:[%s8947] ss:$4 sm:$0xff] %v8789
    %s8949 = scalar_lea.vmem [#allocation1], 2
    %8950 = vst [vmem:[%s8949] ss:$4 sm:$0xff] %v8813
    %s8951 = scalar_lea.vmem [#allocation1], 3
    %8952 = vst [vmem:[%s8951] ss:$4 sm:$0xff] %v8837
    %s8953 = scalar_lea.vmem [#allocation1], 32
    %8954 = vst [vmem:[%s8953] ss:$4 sm:$0xff] %v8861
    %s8955 = scalar_lea.vmem [#allocation1], 33
    %8956 = vst [vmem:[%s8955] ss:$4 sm:$0xff] %v8885
    %s8957 = scalar_lea.vmem [#allocation1], 34
    %8958 = vst [vmem:[%s8957] ss:$4 sm:$0xff] %v8909
    %s8959 = scalar_lea.vmem [#allocation1], 35
    %8960 = vst [vmem:[%s8959] ss:$4 sm:$0xff] %v8933
    %v8961 = vld.sshfl [vmem:[#allocation1] sm:$0xff pattern:$0x73625140]
    %v8962 = vld.sshfl [vmem:[#allocation1 + $0x20] sm:$0xff pattern:$0x73625140]
    %v8965 = vpack.c.bf16 %v8962, %v8961
    %v8968 = vunpack.c.l.b16 %v8936
    %v8969 = vunpack.c.l.b16 %v8937
    %v8970 = vpack.c.b16 %v8969, %v8968
    %v8973 = vsel %vm387, %v8965, 0
    %8975 = vmatpush.bf16.msra.mxu0 0
    %8976 = vmatpush.bf16.msra.mxu0 0
    %8977 = vmatpush.bf16.msra.mxu0 0
    %8978 = vmatpush.bf16.msra.mxu0 0
    %8979 = vmatpush.bf16.msra.mxu0 0
    %8980 = vmatpush.bf16.msra.mxu0 0
    %8981 = vmatpush.bf16.msra.mxu0 0
    %8982 = vmatpush.bf16.msra.mxu0 %v8970
    %8983 = vmatmul.bf16.gmra.mxu0 %v8973
    %v8984 = vpop.f32.mrf.mxu0
    %v8985 = vadd.f32 0.0, %v8984
    %v8986 = vpop.f32.mrf.mxu0
    %v8987 = vadd.f32 0.0, %v8986
    %8988 = vdwg.mxu0
    %v8989 = vadd.f32 %v8310, %v8985
    %v8990 = vadd.f32 %v8311, %v8987
    %8991 = vst [vmem:[#allocation1] ss:$9 sm:$0xff] %v6322
    %v8992 = vld [vmem:[#allocation1] sm:$0xff]
    %8994 = vrot.lane.b32.xlu0 %v8992, 64
    %v8995 = vpop.permute.xlu0 %8994
    %8996 = vst [vmem:[#allocation1] ss:$9 sm:$0xff] %v6352
    %v8997 = vld [vmem:[#allocation1] sm:$0xff]
    %8999 = vrot.lane.b32.xlu0 %v8997, 64
    %v9000 = vpop.permute.xlu0 %8999
    %v9002 = vsel %vm387, %v8995, 0
    %v9005 = vsel %vm387, %v9000, 0
    %9007 = vmatpush.bf16.xpose.msra.mxu0 0
    %9008 = vmatpush.bf16.xpose.msra.mxu0 0
    %9009 = vmatpush.bf16.xpose.msra.mxu0 0
    %9010 = vmatpush.bf16.xpose.msra.mxu0 0
    %9011 = vmatpush.bf16.xpose.msra.mxu0 0
    %9012 = vmatpush.bf16.xpose.msra.mxu0 0
    %9013 = vmatpush.bf16.xpose.msra.mxu0 0
    %9014 = vmatpush.bf16.xpose.msra.mxu0 %v9005
    %9015 = vmatmul.bf16.gmra.mxu0 %v9002
    %v9016 = vpop.f32.mrf.mxu0
    %v9017 = vadd.f32 0.0, %v9016
    %v9018 = vpop.f32.mrf.mxu0
    %9019 = vdwg.mxu0
    %9020 = vst [vmem:[#allocation1] ss:$9 sm:$0xff] %v6325
    %v9021 = vld [vmem:[#allocation1] sm:$0xff]
    %9023 = vrot.lane.b32.xlu0 %v9021, 64
    %v9024 = vpop.permute.xlu0 %9023
    %9025 = vst [vmem:[#allocation1] ss:$9 sm:$0xff] %v6355
    %v9026 = vld [vmem:[#allocation1] sm:$0xff]
    %9028 = vrot.lane.b32.xlu0 %v9026, 64
    %v9029 = vpop.permute.xlu0 %9028
    %v9031 = vsel %vm387, %v9024, 0
    %v9034 = vsel %vm387, %v9029, 0
    %9036 = vmatpush.bf16.xpose.msra.mxu0 0
    %9037 = vmatpush.bf16.xpose.msra.mxu0 0
    %9038 = vmatpush.bf16.xpose.msra.mxu0 0
    %9039 = vmatpush.bf16.xpose.msra.mxu0 0
    %9040 = vmatpush.bf16.xpose.msra.mxu0 0
    %9041 = vmatpush.bf16.xpose.msra.mxu0 0
    %9042 = vmatpush.bf16.xpose.msra.mxu0 0
    %9043 = vmatpush.bf16.xpose.msra.mxu0 %v9034
    %9044 = vmatmul.bf16.gmra.mxu0 %v9031
    %v9045 = vpop.f32.mrf.mxu0
    %v9046 = vadd.f32 0.0, %v9045
    %v9047 = vpop.f32.mrf.mxu0
    %9048 = vdwg.mxu0
    %9049 = vst [vmem:[#allocation1] ss:$9 sm:$0xff] %v6328
    %v9050 = vld [vmem:[#allocation1] sm:$0xff]
    %9052 = vrot.lane.b32.xlu0 %v9050, 64
    %v9053 = vpop.permute.xlu0 %9052
    %9054 = vst [vmem:[#allocation1] ss:$9 sm:$0xff] %v6358
    %v9055 = vld [vmem:[#allocation1] sm:$0xff]
    %9057 = vrot.lane.b32.xlu0 %v9055, 64
    %v9058 = vpop.permute.xlu0 %9057
    %v9060 = vsel %vm387, %v9053, 0
    %v9063 = vsel %vm387, %v9058, 0
    %9065 = vmatpush.bf16.xpose.msra.mxu0 0
    %9066 = vmatpush.bf16.xpose.msra.mxu0 0
    %9067 = vmatpush.bf16.xpose.msra.mxu0 0
    %9068 = vmatpush.bf16.xpose.msra.mxu0 0
    %9069 = vmatpush.bf16.xpose.msra.mxu0 0
    %9070 = vmatpush.bf16.xpose.msra.mxu0 0
    %9071 = vmatpush.bf16.xpose.msra.mxu0 0
    %9072 = vmatpush.bf16.xpose.msra.mxu0 %v9063
    %9073 = vmatmul.bf16.gmra.mxu0 %v9060
    %v9074 = vpop.f32.mrf.mxu0
    %v9075 = vadd.f32 0.0, %v9074
    %v9076 = vpop.f32.mrf.mxu0
    %9077 = vdwg.mxu0
    %9078 = vst [vmem:[#allocation1] ss:$9 sm:$0xff] %v6331
    %v9079 = vld [vmem:[#allocation1] sm:$0xff]
    %9081 = vrot.lane.b32.xlu0 %v9079, 64
    %v9082 = vpop.permute.xlu0 %9081
    %9083 = vst [vmem:[#allocation1] ss:$9 sm:$0xff] %v6361
    %v9084 = vld [vmem:[#allocation1] sm:$0xff]
    %9086 = vrot.lane.b32.xlu0 %v9084, 64
    %v9087 = vpop.permute.xlu0 %9086
    %v9089 = vsel %vm387, %v9082, 0
    %v9092 = vsel %vm387, %v9087, 0
    %9094 = vmatpush.bf16.xpose.msra.mxu0 0
    %9095 = vmatpush.bf16.xpose.msra.mxu0 0
    %9096 = vmatpush.bf16.xpose.msra.mxu0 0
    %9097 = vmatpush.bf16.xpose.msra.mxu0 0
    %9098 = vmatpush.bf16.xpose.msra.mxu0 0
    %9099 = vmatpush.bf16.xpose.msra.mxu0 0
    %9100 = vmatpush.bf16.xpose.msra.mxu0 0
    %9101 = vmatpush.bf16.xpose.msra.mxu0 %v9092
    %9102 = vmatmul.bf16.gmra.mxu0 %v9089
    %v9103 = vpop.f32.mrf.mxu0
    %v9104 = vadd.f32 0.0, %v9103
    %v9105 = vpop.f32.mrf.mxu0
    %9106 = vdwg.mxu0
    %9107 = vst [vmem:[#allocation1] ss:$9 sm:$0xff] %v6334
    %v9108 = vld [vmem:[#allocation1] sm:$0xff]
    %9110 = vrot.lane.b32.xlu0 %v9108, 64
    %v9111 = vpop.permute.xlu0 %9110
    %9112 = vst [vmem:[#allocation1] ss:$9 sm:$0xff] %v6364
    %v9113 = vld [vmem:[#allocation1] sm:$0xff]
    %9115 = vrot.lane.b32.xlu0 %v9113, 64
    %v9116 = vpop.permute.xlu0 %9115
    %v9118 = vsel %vm387, %v9111, 0
    %v9121 = vsel %vm387, %v9116, 0
    %9123 = vmatpush.bf16.xpose.msra.mxu0 0
    %9124 = vmatpush.bf16.xpose.msra.mxu0 0
    %9125 = vmatpush.bf16.xpose.msra.mxu0 0
    %9126 = vmatpush.bf16.xpose.msra.mxu0 0
    %9127 = vmatpush.bf16.xpose.msra.mxu0 0
    %9128 = vmatpush.bf16.xpose.msra.mxu0 0
    %9129 = vmatpush.bf16.xpose.msra.mxu0 0
    %9130 = vmatpush.bf16.xpose.msra.mxu0 %v9121
    %9131 = vmatmul.bf16.gmra.mxu0 %v9118
    %v9132 = vpop.f32.mrf.mxu0
    %v9133 = vadd.f32 0.0, %v9132
    %v9134 = vpop.f32.mrf.mxu0
    %9135 = vdwg.mxu0
    %9136 = vst [vmem:[#allocation1] ss:$9 sm:$0xff] %v6337
    %v9137 = vld [vmem:[#allocation1] sm:$0xff]
    %9139 = vrot.lane.b32.xlu0 %v9137, 64
    %v9140 = vpop.permute.xlu0 %9139
    %9141 = vst [vmem:[#allocation1] ss:$9 sm:$0xff] %v6367
    %v9142 = vld [vmem:[#allocation1] sm:$0xff]
    %9144 = vrot.lane.b32.xlu0 %v9142, 64
    %v9145 = vpop.permute.xlu0 %9144
    %v9147 = vsel %vm387, %v9140, 0
    %v9150 = vsel %vm387, %v9145, 0
    %9152 = vmatpush.bf16.xpose.msra.mxu0 0
    %9153 = vmatpush.bf16.xpose.msra.mxu0 0
    %9154 = vmatpush.bf16.xpose.msra.mxu0 0
    %9155 = vmatpush.bf16.xpose.msra.mxu0 0
    %9156 = vmatpush.bf16.xpose.msra.mxu0 0
    %9157 = vmatpush.bf16.xpose.msra.mxu0 0
    %9158 = vmatpush.bf16.xpose.msra.mxu0 0
    %9159 = vmatpush.bf16.xpose.msra.mxu0 %v9150
    %9160 = vmatmul.bf16.gmra.mxu0 %v9147
    %v9161 = vpop.f32.mrf.mxu0
    %v9162 = vadd.f32 0.0, %v9161
    %v9163 = vpop.f32.mrf.mxu0
    %9164 = vdwg.mxu0
    %9165 = vst [vmem:[#allocation1] ss:$9 sm:$0xff] %v6340
    %v9166 = vld [vmem:[#allocation1] sm:$0xff]
    %9168 = vrot.lane.b32.xlu0 %v9166, 64
    %v9169 = vpop.permute.xlu0 %9168
    %9170 = vst [vmem:[#allocation1] ss:$9 sm:$0xff] %v6370
    %v9171 = vld [vmem:[#allocation1] sm:$0xff]
    %9173 = vrot.lane.b32.xlu0 %v9171, 64
    %v9174 = vpop.permute.xlu0 %9173
    %v9176 = vsel %vm387, %v9169, 0
    %v9179 = vsel %vm387, %v9174, 0
    %9181 = vmatpush.bf16.xpose.msra.mxu0 0
    %9182 = vmatpush.bf16.xpose.msra.mxu0 0
    %9183 = vmatpush.bf16.xpose.msra.mxu0 0
    %9184 = vmatpush.bf16.xpose.msra.mxu0 0
    %9185 = vmatpush.bf16.xpose.msra.mxu0 0
    %9186 = vmatpush.bf16.xpose.msra.mxu0 0
    %9187 = vmatpush.bf16.xpose.msra.mxu0 0
    %9188 = vmatpush.bf16.xpose.msra.mxu0 %v9179
    %9189 = vmatmul.bf16.gmra.mxu0 %v9176
    %v9190 = vpop.f32.mrf.mxu0
    %v9191 = vadd.f32 0.0, %v9190
    %v9192 = vpop.f32.mrf.mxu0
    %9193 = vdwg.mxu0
    %9194 = vst [vmem:[#allocation1] ss:$9 sm:$0xff] %v6343
    %v9195 = vld [vmem:[#allocation1] sm:$0xff]
    %9197 = vrot.lane.b32.xlu0 %v9195, 64
    %v9198 = vpop.permute.xlu0 %9197
    %9199 = vst [vmem:[#allocation1] ss:$9 sm:$0xff] %v6373
    %v9200 = vld [vmem:[#allocation1] sm:$0xff]
    %9202 = vrot.lane.b32.xlu0 %v9200, 64
    %v9203 = vpop.permute.xlu0 %9202
    %v9205 = vsel %vm387, %v9198, 0
    %v9208 = vsel %vm387, %v9203, 0
    %9210 = vmatpush.bf16.xpose.msra.mxu0 0
    %9211 = vmatpush.bf16.xpose.msra.mxu0 0
    %9212 = vmatpush.bf16.xpose.msra.mxu0 0
    %9213 = vmatpush.bf16.xpose.msra.mxu0 0
    %9214 = vmatpush.bf16.xpose.msra.mxu0 0
    %9215 = vmatpush.bf16.xpose.msra.mxu0 0
    %9216 = vmatpush.bf16.xpose.msra.mxu0 0
    %9217 = vmatpush.bf16.xpose.msra.mxu0 %v9208
    %9218 = vmatmul.bf16.gmra.mxu0 %v9205
    %v9219 = vpop.f32.mrf.mxu0
    %v9220 = vadd.f32 0.0, %v9219
    %v9221 = vpop.f32.mrf.mxu0
    %9222 = vdwg.mxu0
    %v9223 = vsel %vm536, %v9017, -inf
    %9224 = vmax.xlane.f32.xlu0 %v9223
    %v9225 = vpop.xlane.xlu0 %9224
    %v9226 = vsel %vm536, %v9046, -inf
    %9227 = vmax.xlane.f32.xlu0 %v9226
    %v9228 = vpop.xlane.xlu0 %9227
    %v9229 = vsel %vm536, %v9075, -inf
    %9230 = vmax.xlane.f32.xlu0 %v9229
    %v9231 = vpop.xlane.xlu0 %9230
    %v9232 = vsel %vm536, %v9104, -inf
    %9233 = vmax.xlane.f32.xlu0 %v9232
    %v9234 = vpop.xlane.xlu0 %9233
    %v9235 = vsel %vm536, %v9133, -inf
    %9236 = vmax.xlane.f32.xlu0 %v9235
    %v9237 = vpop.xlane.xlu0 %9236
    %v9238 = vsel %vm536, %v9162, -inf
    %9239 = vmax.xlane.f32.xlu0 %v9238
    %v9240 = vpop.xlane.xlu0 %9239
    %v9241 = vsel %vm536, %v9191, -inf
    %9242 = vmax.xlane.f32.xlu0 %v9241
    %v9243 = vpop.xlane.xlu0 %9242
    %v9244 = vsel %vm536, %v9220, -inf
    %9245 = vmax.xlane.f32.xlu0 %v9244
    %v9246 = vpop.xlane.xlu0 %9245
    %v9247 = vsub.f32 %v9017, %v9225
    %v9248 = vsub.f32 %v9046, %v9228
    %v9249 = vsub.f32 %v9075, %v9231
    %v9250 = vsub.f32 %v9104, %v9234
    %v9251 = vsub.f32 %v9133, %v9237
    %v9252 = vsub.f32 %v9162, %v9240
    %v9253 = vsub.f32 %v9191, %v9243
    %v9254 = vsub.f32 %v9220, %v9246
    %v9255 = vmul.f32 %v9247, 1.442695
    %v9256 = vpow.pop %v9255
    %v9257 = vmul.f32 %v9248, 1.442695
    %v9258 = vpow.pop %v9257
    %v9259 = vmul.f32 %v9249, 1.442695
    %v9260 = vpow.pop %v9259
    %v9261 = vmul.f32 %v9250, 1.442695
    %v9262 = vpow.pop %v9261
    %v9263 = vmul.f32 %v9251, 1.442695
    %v9264 = vpow.pop %v9263
    %v9265 = vmul.f32 %v9252, 1.442695
    %v9266 = vpow.pop %v9265
    %v9267 = vmul.f32 %v9253, 1.442695
    %v9268 = vpow.pop %v9267
    %v9269 = vmul.f32 %v9254, 1.442695
    %v9270 = vpow.pop %v9269
    %v9271 = vsel %vm536, %v9256, 0.0
    %9272 = vadd.xlane.f32.xlu0 %v9271
    %v9273 = vpop.xlane.xlu0 %9272
    %v9274 = vsel %vm536, %v9258, 0.0
    %9275 = vadd.xlane.f32.xlu0 %v9274
    %v9276 = vpop.xlane.xlu0 %9275
    %v9277 = vsel %vm536, %v9260, 0.0
    %9278 = vadd.xlane.f32.xlu0 %v9277
    %v9279 = vpop.xlane.xlu0 %9278
    %v9280 = vsel %vm536, %v9262, 0.0
    %9281 = vadd.xlane.f32.xlu0 %v9280
    %v9282 = vpop.xlane.xlu0 %9281
    %v9283 = vsel %vm536, %v9264, 0.0
    %9284 = vadd.xlane.f32.xlu0 %v9283
    %v9285 = vpop.xlane.xlu0 %9284
    %v9286 = vsel %vm536, %v9266, 0.0
    %9287 = vadd.xlane.f32.xlu0 %v9286
    %v9288 = vpop.xlane.xlu0 %9287
    %v9289 = vsel %vm536, %v9268, 0.0
    %9290 = vadd.xlane.f32.xlu0 %v9289
    %v9291 = vpop.xlane.xlu0 %9290
    %v9292 = vsel %vm536, %v9270, 0.0
    %9293 = vadd.xlane.f32.xlu0 %v9292
    %v9294 = vpop.xlane.xlu0 %9293
    %v9295 = vrcp.pop %v9273
    %v9296 = vmul.f32 %v9273, %v9295
    %v9297 = vsub.f32 1.0, %v9296
    %v9298 = vmul.f32 %v9295, %v9297
    %v9299 = vadd.f32 %v9295, %v9298
    %vm9300 = vweird.f32 %v9273
    %vm9301 = vweird.f32 %v9295
    %vm9302 = vmor %vm9300, %vm9301
    %v9303 = vsel %vm9302, %v9295, %v9299
    %v9304 = vand.u32 2147483647, %v9273
    %vm9305 = vcmp.eq.f32.partialorder %v9304, 8.507059e+37
    %v9306 = vand.u32 %v9273, 2147483648
    %v9307 = vor.u32 1.1754944e-38, %v9306
    %v9308 = vsel %vm9305, %v9307, %v9303
    %v9309 = vmul.f32 %v9256, %v9308
    %v9310 = vrcp.pop %v9276
    %v9311 = vmul.f32 %v9276, %v9310
    %v9312 = vsub.f32 1.0, %v9311
    %v9313 = vmul.f32 %v9310, %v9312
    %v9314 = vadd.f32 %v9310, %v9313
    %vm9315 = vweird.f32 %v9276
    %vm9316 = vweird.f32 %v9310
    %vm9317 = vmor %vm9315, %vm9316
    %v9318 = vsel %vm9317, %v9310, %v9314
    %v9319 = vand.u32 2147483647, %v9276
    %vm9320 = vcmp.eq.f32.partialorder %v9319, 8.507059e+37
    %v9321 = vand.u32 %v9276, 2147483648
    %v9322 = vor.u32 1.1754944e-38, %v9321
    %v9323 = vsel %vm9320, %v9322, %v9318
    %v9324 = vmul.f32 %v9258, %v9323
    %v9325 = vrcp.pop %v9279
    %v9326 = vmul.f32 %v9279, %v9325
    %v9327 = vsub.f32 1.0, %v9326
    %v9328 = vmul.f32 %v9325, %v9327
    %v9329 = vadd.f32 %v9325, %v9328
    %vm9330 = vweird.f32 %v9279
    %vm9331 = vweird.f32 %v9325
    %vm9332 = vmor %vm9330, %vm9331
    %v9333 = vsel %vm9332, %v9325, %v9329
    %v9334 = vand.u32 2147483647, %v9279
    %vm9335 = vcmp.eq.f32.partialorder %v9334, 8.507059e+37
    %v9336 = vand.u32 %v9279, 2147483648
    %v9337 = vor.u32 1.1754944e-38, %v9336
    %v9338 = vsel %vm9335, %v9337, %v9333
    %v9339 = vmul.f32 %v9260, %v9338
    %v9340 = vrcp.pop %v9282
    %v9341 = vmul.f32 %v9282, %v9340
    %v9342 = vsub.f32 1.0, %v9341
    %v9343 = vmul.f32 %v9340, %v9342
    %v9344 = vadd.f32 %v9340, %v9343
    %vm9345 = vweird.f32 %v9282
    %vm9346 = vweird.f32 %v9340
    %vm9347 = vmor %vm9345, %vm9346
    %v9348 = vsel %vm9347, %v9340, %v9344
    %v9349 = vand.u32 2147483647, %v9282
    %vm9350 = vcmp.eq.f32.partialorder %v9349, 8.507059e+37
    %v9351 = vand.u32 %v9282, 2147483648
    %v9352 = vor.u32 1.1754944e-38, %v9351
    %v9353 = vsel %vm9350, %v9352, %v9348
    %v9354 = vmul.f32 %v9262, %v9353
    %v9355 = vrcp.pop %v9285
    %v9356 = vmul.f32 %v9285, %v9355
    %v9357 = vsub.f32 1.0, %v9356
    %v9358 = vmul.f32 %v9355, %v9357
    %v9359 = vadd.f32 %v9355, %v9358
    %vm9360 = vweird.f32 %v9285
    %vm9361 = vweird.f32 %v9355
    %vm9362 = vmor %vm9360, %vm9361
    %v9363 = vsel %vm9362, %v9355, %v9359
    %v9364 = vand.u32 2147483647, %v9285
    %vm9365 = vcmp.eq.f32.partialorder %v9364, 8.507059e+37
    %v9366 = vand.u32 %v9285, 2147483648
    %v9367 = vor.u32 1.1754944e-38, %v9366
    %v9368 = vsel %vm9365, %v9367, %v9363
    %v9369 = vmul.f32 %v9264, %v9368
    %v9370 = vrcp.pop %v9288
    %v9371 = vmul.f32 %v9288, %v9370
    %v9372 = vsub.f32 1.0, %v9371
    %v9373 = vmul.f32 %v9370, %v9372
    %v9374 = vadd.f32 %v9370, %v9373
    %vm9375 = vweird.f32 %v9288
    %vm9376 = vweird.f32 %v9370
    %vm9377 = vmor %vm9375, %vm9376
    %v9378 = vsel %vm9377, %v9370, %v9374
    %v9379 = vand.u32 2147483647, %v9288
    %vm9380 = vcmp.eq.f32.partialorder %v9379, 8.507059e+37
    %v9381 = vand.u32 %v9288, 2147483648
    %v9382 = vor.u32 1.1754944e-38, %v9381
    %v9383 = vsel %vm9380, %v9382, %v9378
    %v9384 = vmul.f32 %v9266, %v9383
    %v9385 = vrcp.pop %v9291
    %v9386 = vmul.f32 %v9291, %v9385
    %v9387 = vsub.f32 1.0, %v9386
    %v9388 = vmul.f32 %v9385, %v9387
    %v9389 = vadd.f32 %v9385, %v9388
    %vm9390 = vweird.f32 %v9291
    %vm9391 = vweird.f32 %v9385
    %vm9392 = vmor %vm9390, %vm9391
    %v9393 = vsel %vm9392, %v9385, %v9389
    %v9394 = vand.u32 2147483647, %v9291
    %vm9395 = vcmp.eq.f32.partialorder %v9394, 8.507059e+37
    %v9396 = vand.u32 %v9291, 2147483648
    %v9397 = vor.u32 1.1754944e-38, %v9396
    %v9398 = vsel %vm9395, %v9397, %v9393
    %v9399 = vmul.f32 %v9268, %v9398
    %v9400 = vrcp.pop %v9294
    %v9401 = vmul.f32 %v9294, %v9400
    %v9402 = vsub.f32 1.0, %v9401
    %v9403 = vmul.f32 %v9400, %v9402
    %v9404 = vadd.f32 %v9400, %v9403
    %vm9405 = vweird.f32 %v9294
    %vm9406 = vweird.f32 %v9400
    %vm9407 = vmor %vm9405, %vm9406
    %v9408 = vsel %vm9407, %v9400, %v9404
    %v9409 = vand.u32 2147483647, %v9294
    %vm9410 = vcmp.eq.f32.partialorder %v9409, 8.507059e+37
    %v9411 = vand.u32 %v9294, 2147483648
    %v9412 = vor.u32 1.1754944e-38, %v9411
    %v9413 = vsel %vm9410, %v9412, %v9408
    %v9414 = vmul.f32 %v9270, %v9413
    %v9415 = vpack.c.bf16 %v9309, %v9309
    %v9416 = vpack.c.bf16 %v9324, %v9324
    %v9417 = vpack.c.bf16 %v9339, %v9339
    %v9418 = vpack.c.bf16 %v9354, %v9354
    %v9419 = vpack.c.bf16 %v9369, %v9369
    %v9420 = vpack.c.bf16 %v9384, %v9384
    %v9421 = vpack.c.bf16 %v9399, %v9399
    %v9422 = vpack.c.bf16 %v9414, %v9414
    %9423 = vst [vmem:[#allocation1] ss:$9 sm:$0xff] %v6382
    %v9424 = vld [vmem:[#allocation1] sm:$0xff]
    %9426 = vrot.lane.b32.xlu0 %v9424, 64
    %v9427 = vpop.permute.xlu0 %9426
    %v9429 = vsel %vm737, %v9415, 0
    %v9432 = vsel %vm299, %v9427, 0
    %9434 = vmatpush.bf16.msra.mxu0 0
    %9435 = vmatpush.bf16.msra.mxu0 0
    %9436 = vmatpush.bf16.msra.mxu0 0
    %9437 = vmatpush.bf16.msra.mxu0 0
    %9438 = vmatpush.bf16.msra.mxu0 0
    %9439 = vmatpush.bf16.msra.mxu0 0
    %9440 = vmatpush.bf16.msra.mxu0 0
    %9441 = vmatpush.bf16.msra.mxu0 %v9432
    %9442 = vmatmul.bf16.gmra.mxu0 %v9429
    %v9443 = vpop.f32.mrf.mxu0
    %v9444 = vadd.f32 0.0, %v9443
    %v9445 = vpop.f32.mrf.mxu0
    %9446 = vdwg.mxu0
    %9447 = vst [vmem:[#allocation1] ss:$9 sm:$0xff] %v6385
    %v9448 = vld [vmem:[#allocation1] sm:$0xff]
    %9450 = vrot.lane.b32.xlu0 %v9448, 64
    %v9451 = vpop.permute.xlu0 %9450
    %v9453 = vsel %vm737, %v9416, 0
    %v9456 = vsel %vm299, %v9451, 0
    %9458 = vmatpush.bf16.msra.mxu0 0
    %9459 = vmatpush.bf16.msra.mxu0 0
    %9460 = vmatpush.bf16.msra.mxu0 0
    %9461 = vmatpush.bf16.msra.mxu0 0
    %9462 = vmatpush.bf16.msra.mxu0 0
    %9463 = vmatpush.bf16.msra.mxu0 0
    %9464 = vmatpush.bf16.msra.mxu0 0
    %9465 = vmatpush.bf16.msra.mxu0 %v9456
    %9466 = vmatmul.bf16.gmra.mxu0 %v9453
    %v9467 = vpop.f32.mrf.mxu0
    %v9468 = vadd.f32 0.0, %v9467
    %v9469 = vpop.f32.mrf.mxu0
    %9470 = vdwg.mxu0
    %9471 = vst [vmem:[#allocation1] ss:$9 sm:$0xff] %v6388
    %v9472 = vld [vmem:[#allocation1] sm:$0xff]
    %9474 = vrot.lane.b32.xlu0 %v9472, 64
    %v9475 = vpop.permute.xlu0 %9474
    %v9477 = vsel %vm737, %v9417, 0
    %v9480 = vsel %vm299, %v9475, 0
    %9482 = vmatpush.bf16.msra.mxu0 0
    %9483 = vmatpush.bf16.msra.mxu0 0
    %9484 = vmatpush.bf16.msra.mxu0 0
    %9485 = vmatpush.bf16.msra.mxu0 0
    %9486 = vmatpush.bf16.msra.mxu0 0
    %9487 = vmatpush.bf16.msra.mxu0 0
    %9488 = vmatpush.bf16.msra.mxu0 0
    %9489 = vmatpush.bf16.msra.mxu0 %v9480
    %9490 = vmatmul.bf16.gmra.mxu0 %v9477
    %v9491 = vpop.f32.mrf.mxu0
    %v9492 = vadd.f32 0.0, %v9491
    %v9493 = vpop.f32.mrf.mxu0
    %9494 = vdwg.mxu0
    %9495 = vst [vmem:[#allocation1] ss:$9 sm:$0xff] %v6391
    %v9496 = vld [vmem:[#allocation1] sm:$0xff]
    %9498 = vrot.lane.b32.xlu0 %v9496, 64
    %v9499 = vpop.permute.xlu0 %9498
    %v9501 = vsel %vm737, %v9418, 0
    %v9504 = vsel %vm299, %v9499, 0
    %9506 = vmatpush.bf16.msra.mxu0 0
    %9507 = vmatpush.bf16.msra.mxu0 0
    %9508 = vmatpush.bf16.msra.mxu0 0
    %9509 = vmatpush.bf16.msra.mxu0 0
    %9510 = vmatpush.bf16.msra.mxu0 0
    %9511 = vmatpush.bf16.msra.mxu0 0
    %9512 = vmatpush.bf16.msra.mxu0 0
    %9513 = vmatpush.bf16.msra.mxu0 %v9504
    %9514 = vmatmul.bf16.gmra.mxu0 %v9501
    %v9515 = vpop.f32.mrf.mxu0
    %v9516 = vadd.f32 0.0, %v9515
    %v9517 = vpop.f32.mrf.mxu0
    %9518 = vdwg.mxu0
    %9519 = vst [vmem:[#allocation1] ss:$9 sm:$0xff] %v6394
    %v9520 = vld [vmem:[#allocation1] sm:$0xff]
    %9522 = vrot.lane.b32.xlu0 %v9520, 64
    %v9523 = vpop.permute.xlu0 %9522
    %v9525 = vsel %vm737, %v9419, 0
    %v9528 = vsel %vm299, %v9523, 0
    %9530 = vmatpush.bf16.msra.mxu0 0
    %9531 = vmatpush.bf16.msra.mxu0 0
    %9532 = vmatpush.bf16.msra.mxu0 0
    %9533 = vmatpush.bf16.msra.mxu0 0
    %9534 = vmatpush.bf16.msra.mxu0 0
    %9535 = vmatpush.bf16.msra.mxu0 0
    %9536 = vmatpush.bf16.msra.mxu0 0
    %9537 = vmatpush.bf16.msra.mxu0 %v9528
    %9538 = vmatmul.bf16.gmra.mxu0 %v9525
    %v9539 = vpop.f32.mrf.mxu0
    %v9540 = vadd.f32 0.0, %v9539
    %v9541 = vpop.f32.mrf.mxu0
    %9542 = vdwg.mxu0
    %9543 = vst [vmem:[#allocation1] ss:$9 sm:$0xff] %v6397
    %v9544 = vld [vmem:[#allocation1] sm:$0xff]
    %9546 = vrot.lane.b32.xlu0 %v9544, 64
    %v9547 = vpop.permute.xlu0 %9546
    %v9549 = vsel %vm737, %v9420, 0
    %v9552 = vsel %vm299, %v9547, 0
    %9554 = vmatpush.bf16.msra.mxu0 0
    %9555 = vmatpush.bf16.msra.mxu0 0
    %9556 = vmatpush.bf16.msra.mxu0 0
    %9557 = vmatpush.bf16.msra.mxu0 0
    %9558 = vmatpush.bf16.msra.mxu0 0
    %9559 = vmatpush.bf16.msra.mxu0 0
    %9560 = vmatpush.bf16.msra.mxu0 0
    %9561 = vmatpush.bf16.msra.mxu0 %v9552
    %9562 = vmatmul.bf16.gmra.mxu0 %v9549
    %v9563 = vpop.f32.mrf.mxu0
    %v9564 = vadd.f32 0.0, %v9563
    %v9565 = vpop.f32.mrf.mxu0
    %9566 = vdwg.mxu0
    %9567 = vst [vmem:[#allocation1] ss:$9 sm:$0xff] %v6400
    %v9568 = vld [vmem:[#allocation1] sm:$0xff]
    %9570 = vrot.lane.b32.xlu0 %v9568, 64
    %v9571 = vpop.permute.xlu0 %9570
    %v9573 = vsel %vm737, %v9421, 0
    %v9576 = vsel %vm299, %v9571, 0
    %9578 = vmatpush.bf16.msra.mxu0 0
    %9579 = vmatpush.bf16.msra.mxu0 0
    %9580 = vmatpush.bf16.msra.mxu0 0
    %9581 = vmatpush.bf16.msra.mxu0 0
    %9582 = vmatpush.bf16.msra.mxu0 0
    %9583 = vmatpush.bf16.msra.mxu0 0
    %9584 = vmatpush.bf16.msra.mxu0 0
    %9585 = vmatpush.bf16.msra.mxu0 %v9576
    %9586 = vmatmul.bf16.gmra.mxu0 %v9573
    %v9587 = vpop.f32.mrf.mxu0
    %v9588 = vadd.f32 0.0, %v9587
    %v9589 = vpop.f32.mrf.mxu0
    %9590 = vdwg.mxu0
    %9591 = vst [vmem:[#allocation1] ss:$9 sm:$0xff] %v6403
    %v9592 = vld [vmem:[#allocation1] sm:$0xff]
    %9594 = vrot.lane.b32.xlu0 %v9592, 64
    %v9595 = vpop.permute.xlu0 %9594
    %v9597 = vsel %vm737, %v9422, 0
    %v9600 = vsel %vm299, %v9595, 0
    %9602 = vmatpush.bf16.msra.mxu0 0
    %9603 = vmatpush.bf16.msra.mxu0 0
    %9604 = vmatpush.bf16.msra.mxu0 0
    %9605 = vmatpush.bf16.msra.mxu0 0
    %9606 = vmatpush.bf16.msra.mxu0 0
    %9607 = vmatpush.bf16.msra.mxu0 0
    %9608 = vmatpush.bf16.msra.mxu0 0
    %9609 = vmatpush.bf16.msra.mxu0 %v9600
    %9610 = vmatmul.bf16.gmra.mxu0 %v9597
    %v9611 = vpop.f32.mrf.mxu0
    %v9612 = vadd.f32 0.0, %v9611
    %v9613 = vpop.f32.mrf.mxu0
    %9614 = vdwg.mxu0
    %v9615 = vld [vmem:[%s6902 + $0x20] sm:$0xf]
    %v9616 = vld [vmem:[%s6902 + $0x24] sm:$0xf]
    %9625 = vst [vmem:[#allocation1] ss:$4 sm:$0xff] %v9444
    %s9626 = scalar_lea.vmem [#allocation1], 1
    %9627 = vst [vmem:[%s9626] ss:$4 sm:$0xff] %v9468
    %s9628 = scalar_lea.vmem [#allocation1], 2
    %9629 = vst [vmem:[%s9628] ss:$4 sm:$0xff] %v9492
    %s9630 = scalar_lea.vmem [#allocation1], 3
    %9631 = vst [vmem:[%s9630] ss:$4 sm:$0xff] %v9516
    %s9632 = scalar_lea.vmem [#allocation1], 32
    %9633 = vst [vmem:[%s9632] ss:$4 sm:$0xff] %v9540
    %s9634 = scalar_lea.vmem [#allocation1], 33
    %9635 = vst [vmem:[%s9634] ss:$4 sm:$0xff] %v9564
    %s9636 = scalar_lea.vmem [#allocation1], 34
    %9637 = vst [vmem:[%s9636] ss:$4 sm:$0xff] %v9588
    %s9638 = scalar_lea.vmem [#allocation1], 35
    %9639 = vst [vmem:[%s9638] ss:$4 sm:$0xff] %v9612
    %v9640 = vld.sshfl [vmem:[#allocation1] sm:$0xff pattern:$0x73625140]
    %v9641 = vld.sshfl [vmem:[#allocation1 + $0x20] sm:$0xff pattern:$0x73625140]
    %v9644 = vpack.c.bf16 %v9641, %v9640
    %v9647 = vunpack.c.l.b16 %v9615
    %v9648 = vunpack.c.l.b16 %v9616
    %v9649 = vpack.c.b16 %v9648, %v9647
    %v9652 = vsel %vm387, %v9644, 0
    %9654 = vmatpush.bf16.msra.mxu0 0
    %9655 = vmatpush.bf16.msra.mxu0 0
    %9656 = vmatpush.bf16.msra.mxu0 0
    %9657 = vmatpush.bf16.msra.mxu0 0
    %9658 = vmatpush.bf16.msra.mxu0 0
    %9659 = vmatpush.bf16.msra.mxu0 0
    %9660 = vmatpush.bf16.msra.mxu0 0
    %9661 = vmatpush.bf16.msra.mxu0 %v9649
    %9662 = vmatmul.bf16.gmra.mxu0 %v9652
    %v9663 = vpop.f32.mrf.mxu0
    %v9664 = vadd.f32 0.0, %v9663
    %v9665 = vpop.f32.mrf.mxu0
    %v9666 = vadd.f32 0.0, %v9665
    %9667 = vdwg.mxu0
    %v9668 = vadd.f32 %v8989, %v9664
    %v9669 = vadd.f32 %v8990, %v9666
    %9670 = vst [vmem:[#allocation1] ss:$9 sm:$0xff] %v6322
    %v9671 = vld [vmem:[#allocation1] sm:$0xff]
    %9673 = vrot.lane.b32.xlu0 %v9671, 48
    %v9674 = vpop.permute.xlu0 %9673
    %9675 = vst [vmem:[#allocation1] ss:$9 sm:$0xff] %v6352
    %v9676 = vld [vmem:[#allocation1] sm:$0xff]
    %9678 = vrot.lane.b32.xlu0 %v9676, 48
    %v9679 = vpop.permute.xlu0 %9678
    %v9681 = vsel %vm387, %v9674, 0
    %v9684 = vsel %vm387, %v9679, 0
    %9686 = vmatpush.bf16.xpose.msra.mxu0 0
    %9687 = vmatpush.bf16.xpose.msra.mxu0 0
    %9688 = vmatpush.bf16.xpose.msra.mxu0 0
    %9689 = vmatpush.bf16.xpose.msra.mxu0 0
    %9690 = vmatpush.bf16.xpose.msra.mxu0 0
    %9691 = vmatpush.bf16.xpose.msra.mxu0 0
    %9692 = vmatpush.bf16.xpose.msra.mxu0 0
    %9693 = vmatpush.bf16.xpose.msra.mxu0 %v9684
    %9694 = vmatmul.bf16.gmra.mxu0 %v9681
    %v9695 = vpop.f32.mrf.mxu0
    %v9696 = vadd.f32 0.0, %v9695
    %v9697 = vpop.f32.mrf.mxu0
    %9698 = vdwg.mxu0
    %9699 = vst [vmem:[#allocation1] ss:$9 sm:$0xff] %v6325
    %v9700 = vld [vmem:[#allocation1] sm:$0xff]
    %9702 = vrot.lane.b32.xlu0 %v9700, 48
    %v9703 = vpop.permute.xlu0 %9702
    %9704 = vst [vmem:[#allocation1] ss:$9 sm:$0xff] %v6355
    %v9705 = vld [vmem:[#allocation1] sm:$0xff]
    %9707 = vrot.lane.b32.xlu0 %v9705, 48
    %v9708 = vpop.permute.xlu0 %9707
    %v9710 = vsel %vm387, %v9703, 0
    %v9713 = vsel %vm387, %v9708, 0
    %9715 = vmatpush.bf16.xpose.msra.mxu0 0
    %9716 = vmatpush.bf16.xpose.msra.mxu0 0
    %9717 = vmatpush.bf16.xpose.msra.mxu0 0
    %9718 = vmatpush.bf16.xpose.msra.mxu0 0
    %9719 = vmatpush.bf16.xpose.msra.mxu0 0
    %9720 = vmatpush.bf16.xpose.msra.mxu0 0
    %9721 = vmatpush.bf16.xpose.msra.mxu0 0
    %9722 = vmatpush.bf16.xpose.msra.mxu0 %v9713
    %9723 = vmatmul.bf16.gmra.mxu0 %v9710
    %v9724 = vpop.f32.mrf.mxu0
    %v9725 = vadd.f32 0.0, %v9724
    %v9726 = vpop.f32.mrf.mxu0
    %9727 = vdwg.mxu0
    %9728 = vst [vmem:[#allocation1] ss:$9 sm:$0xff] %v6328
    %v9729 = vld [vmem:[#allocation1] sm:$0xff]
    %9731 = vrot.lane.b32.xlu0 %v9729, 48
    %v9732 = vpop.permute.xlu0 %9731
    %9733 = vst [vmem:[#allocation1] ss:$9 sm:$0xff] %v6358
    %v9734 = vld [vmem:[#allocation1] sm:$0xff]
    %9736 = vrot.lane.b32.xlu0 %v9734, 48
    %v9737 = vpop.permute.xlu0 %9736
    %v9739 = vsel %vm387, %v9732, 0
    %v9742 = vsel %vm387, %v9737, 0
    %9744 = vmatpush.bf16.xpose.msra.mxu0 0
    %9745 = vmatpush.bf16.xpose.msra.mxu0 0
    %9746 = vmatpush.bf16.xpose.msra.mxu0 0
    %9747 = vmatpush.bf16.xpose.msra.mxu0 0
    %9748 = vmatpush.bf16.xpose.msra.mxu0 0
    %9749 = vmatpush.bf16.xpose.msra.mxu0 0
    %9750 = vmatpush.bf16.xpose.msra.mxu0 0
    %9751 = vmatpush.bf16.xpose.msra.mxu0 %v9742
    %9752 = vmatmul.bf16.gmra.mxu0 %v9739
    %v9753 = vpop.f32.mrf.mxu0
    %v9754 = vadd.f32 0.0, %v9753
    %v9755 = vpop.f32.mrf.mxu0
    %9756 = vdwg.mxu0
    %9757 = vst [vmem:[#allocation1] ss:$9 sm:$0xff] %v6331
    %v9758 = vld [vmem:[#allocation1] sm:$0xff]
    %9760 = vrot.lane.b32.xlu0 %v9758, 48
    %v9761 = vpop.permute.xlu0 %9760
    %9762 = vst [vmem:[#allocation1] ss:$9 sm:$0xff] %v6361
    %v9763 = vld [vmem:[#allocation1] sm:$0xff]
    %9765 = vrot.lane.b32.xlu0 %v9763, 48
    %v9766 = vpop.permute.xlu0 %9765
    %v9768 = vsel %vm387, %v9761, 0
    %v9771 = vsel %vm387, %v9766, 0
    %9773 = vmatpush.bf16.xpose.msra.mxu0 0
    %9774 = vmatpush.bf16.xpose.msra.mxu0 0
    %9775 = vmatpush.bf16.xpose.msra.mxu0 0
    %9776 = vmatpush.bf16.xpose.msra.mxu0 0
    %9777 = vmatpush.bf16.xpose.msra.mxu0 0
    %9778 = vmatpush.bf16.xpose.msra.mxu0 0
    %9779 = vmatpush.bf16.xpose.msra.mxu0 0
    %9780 = vmatpush.bf16.xpose.msra.mxu0 %v9771
    %9781 = vmatmul.bf16.gmra.mxu0 %v9768
    %v9782 = vpop.f32.mrf.mxu0
    %v9783 = vadd.f32 0.0, %v9782
    %v9784 = vpop.f32.mrf.mxu0
    %9785 = vdwg.mxu0
    %9786 = vst [vmem:[#allocation1] ss:$9 sm:$0xff] %v6334
    %v9787 = vld [vmem:[#allocation1] sm:$0xff]
    %9789 = vrot.lane.b32.xlu0 %v9787, 48
    %v9790 = vpop.permute.xlu0 %9789
    %9791 = vst [vmem:[#allocation1] ss:$9 sm:$0xff] %v6364
    %v9792 = vld [vmem:[#allocation1] sm:$0xff]
    %9794 = vrot.lane.b32.xlu0 %v9792, 48
    %v9795 = vpop.permute.xlu0 %9794
    %v9797 = vsel %vm387, %v9790, 0
    %v9800 = vsel %vm387, %v9795, 0
    %9802 = vmatpush.bf16.xpose.msra.mxu0 0
    %9803 = vmatpush.bf16.xpose.msra.mxu0 0
    %9804 = vmatpush.bf16.xpose.msra.mxu0 0
    %9805 = vmatpush.bf16.xpose.msra.mxu0 0
    %9806 = vmatpush.bf16.xpose.msra.mxu0 0
    %9807 = vmatpush.bf16.xpose.msra.mxu0 0
    %9808 = vmatpush.bf16.xpose.msra.mxu0 0
    %9809 = vmatpush.bf16.xpose.msra.mxu0 %v9800
    %9810 = vmatmul.bf16.gmra.mxu0 %v9797
    %v9811 = vpop.f32.mrf.mxu0
    %v9812 = vadd.f32 0.0, %v9811
    %v9813 = vpop.f32.mrf.mxu0
    %9814 = vdwg.mxu0
    %9815 = vst [vmem:[#allocation1] ss:$9 sm:$0xff] %v6337
    %v9816 = vld [vmem:[#allocation1] sm:$0xff]
    %9818 = vrot.lane.b32.xlu0 %v9816, 48
    %v9819 = vpop.permute.xlu0 %9818
    %9820 = vst [vmem:[#allocation1] ss:$9 sm:$0xff] %v6367
    %v9821 = vld [vmem:[#allocation1] sm:$0xff]
    %9823 = vrot.lane.b32.xlu0 %v9821, 48
    %v9824 = vpop.permute.xlu0 %9823
    %v9826 = vsel %vm387, %v9819, 0
    %v9829 = vsel %vm387, %v9824, 0
    %9831 = vmatpush.bf16.xpose.msra.mxu0 0
    %9832 = vmatpush.bf16.xpose.msra.mxu0 0
    %9833 = vmatpush.bf16.xpose.msra.mxu0 0
    %9834 = vmatpush.bf16.xpose.msra.mxu0 0
    %9835 = vmatpush.bf16.xpose.msra.mxu0 0
    %9836 = vmatpush.bf16.xpose.msra.mxu0 0
    %9837 = vmatpush.bf16.xpose.msra.mxu0 0
    %9838 = vmatpush.bf16.xpose.msra.mxu0 %v9829
    %9839 = vmatmul.bf16.gmra.mxu0 %v9826
    %v9840 = vpop.f32.mrf.mxu0
    %v9841 = vadd.f32 0.0, %v9840
    %v9842 = vpop.f32.mrf.mxu0
    %9843 = vdwg.mxu0
    %9844 = vst [vmem:[#allocation1] ss:$9 sm:$0xff] %v6340
    %v9845 = vld [vmem:[#allocation1] sm:$0xff]
    %9847 = vrot.lane.b32.xlu0 %v9845, 48
    %v9848 = vpop.permute.xlu0 %9847
    %9849 = vst [vmem:[#allocation1] ss:$9 sm:$0xff] %v6370
    %v9850 = vld [vmem:[#allocation1] sm:$0xff]
    %9852 = vrot.lane.b32.xlu0 %v9850, 48
    %v9853 = vpop.permute.xlu0 %9852
    %v9855 = vsel %vm387, %v9848, 0
    %v9858 = vsel %vm387, %v9853, 0
    %9860 = vmatpush.bf16.xpose.msra.mxu0 0
    %9861 = vmatpush.bf16.xpose.msra.mxu0 0
    %9862 = vmatpush.bf16.xpose.msra.mxu0 0
    %9863 = vmatpush.bf16.xpose.msra.mxu0 0
    %9864 = vmatpush.bf16.xpose.msra.mxu0 0
    %9865 = vmatpush.bf16.xpose.msra.mxu0 0
    %9866 = vmatpush.bf16.xpose.msra.mxu0 0
    %9867 = vmatpush.bf16.xpose.msra.mxu0 %v9858
    %9868 = vmatmul.bf16.gmra.mxu0 %v9855
    %v9869 = vpop.f32.mrf.mxu0
    %v9870 = vadd.f32 0.0, %v9869
    %v9871 = vpop.f32.mrf.mxu0
    %9872 = vdwg.mxu0
    %9873 = vst [vmem:[#allocation1] ss:$9 sm:$0xff] %v6343
    %v9874 = vld [vmem:[#allocation1] sm:$0xff]
    %9876 = vrot.lane.b32.xlu0 %v9874, 48
    %v9877 = vpop.permute.xlu0 %9876
    %9878 = vst [vmem:[#allocation1] ss:$9 sm:$0xff] %v6373
    %v9879 = vld [vmem:[#allocation1] sm:$0xff]
    %9881 = vrot.lane.b32.xlu0 %v9879, 48
    %v9882 = vpop.permute.xlu0 %9881
    %v9884 = vsel %vm387, %v9877, 0
    %v9887 = vsel %vm387, %v9882, 0
    %9889 = vmatpush.bf16.xpose.msra.mxu0 0
    %9890 = vmatpush.bf16.xpose.msra.mxu0 0
    %9891 = vmatpush.bf16.xpose.msra.mxu0 0
    %9892 = vmatpush.bf16.xpose.msra.mxu0 0
    %9893 = vmatpush.bf16.xpose.msra.mxu0 0
    %9894 = vmatpush.bf16.xpose.msra.mxu0 0
    %9895 = vmatpush.bf16.xpose.msra.mxu0 0
    %9896 = vmatpush.bf16.xpose.msra.mxu0 %v9887
    %9897 = vmatmul.bf16.gmra.mxu0 %v9884
    %v9898 = vpop.f32.mrf.mxu0
    %v9899 = vadd.f32 0.0, %v9898
    %v9900 = vpop.f32.mrf.mxu0
    %9901 = vdwg.mxu0
    %v9902 = vsel %vm536, %v9696, -inf
    %9903 = vmax.xlane.f32.xlu0 %v9902
    %v9904 = vpop.xlane.xlu0 %9903
    %v9905 = vsel %vm536, %v9725, -inf
    %9906 = vmax.xlane.f32.xlu0 %v9905
    %v9907 = vpop.xlane.xlu0 %9906
    %v9908 = vsel %vm536, %v9754, -inf
    %9909 = vmax.xlane.f32.xlu0 %v9908
    %v9910 = vpop.xlane.xlu0 %9909
    %v9911 = vsel %vm536, %v9783, -inf
    %9912 = vmax.xlane.f32.xlu0 %v9911
    %v9913 = vpop.xlane.xlu0 %9912
    %v9914 = vsel %vm536, %v9812, -inf
    %9915 = vmax.xlane.f32.xlu0 %v9914
    %v9916 = vpop.xlane.xlu0 %9915
    %v9917 = vsel %vm536, %v9841, -inf
    %9918 = vmax.xlane.f32.xlu0 %v9917
    %v9919 = vpop.xlane.xlu0 %9918
    %v9920 = vsel %vm536, %v9870, -inf
    %9921 = vmax.xlane.f32.xlu0 %v9920
    %v9922 = vpop.xlane.xlu0 %9921
    %v9923 = vsel %vm536, %v9899, -inf
    %9924 = vmax.xlane.f32.xlu0 %v9923
    %v9925 = vpop.xlane.xlu0 %9924
    %v9926 = vsub.f32 %v9696, %v9904
    %v9927 = vsub.f32 %v9725, %v9907
    %v9928 = vsub.f32 %v9754, %v9910
    %v9929 = vsub.f32 %v9783, %v9913
    %v9930 = vsub.f32 %v9812, %v9916
    %v9931 = vsub.f32 %v9841, %v9919
    %v9932 = vsub.f32 %v9870, %v9922
    %v9933 = vsub.f32 %v9899, %v9925
    %v9934 = vmul.f32 %v9926, 1.442695
    %v9935 = vpow.pop %v9934
    %v9936 = vmul.f32 %v9927, 1.442695
    %v9937 = vpow.pop %v9936
    %v9938 = vmul.f32 %v9928, 1.442695
    %v9939 = vpow.pop %v9938
    %v9940 = vmul.f32 %v9929, 1.442695
    %v9941 = vpow.pop %v9940
    %v9942 = vmul.f32 %v9930, 1.442695
    %v9943 = vpow.pop %v9942
    %v9944 = vmul.f32 %v9931, 1.442695
    %v9945 = vpow.pop %v9944
    %v9946 = vmul.f32 %v9932, 1.442695
    %v9947 = vpow.pop %v9946
    %v9948 = vmul.f32 %v9933, 1.442695
    %v9949 = vpow.pop %v9948
    %v9950 = vsel %vm536, %v9935, 0.0
    %9951 = vadd.xlane.f32.xlu0 %v9950
    %v9952 = vpop.xlane.xlu0 %9951
    %v9953 = vsel %vm536, %v9937, 0.0
    %9954 = vadd.xlane.f32.xlu0 %v9953
    %v9955 = vpop.xlane.xlu0 %9954
    %v9956 = vsel %vm536, %v9939, 0.0
    %9957 = vadd.xlane.f32.xlu0 %v9956
    %v9958 = vpop.xlane.xlu0 %9957
    %v9959 = vsel %vm536, %v9941, 0.0
    %9960 = vadd.xlane.f32.xlu0 %v9959
    %v9961 = vpop.xlane.xlu0 %9960
    %v9962 = vsel %vm536, %v9943, 0.0
    %9963 = vadd.xlane.f32.xlu0 %v9962
    %v9964 = vpop.xlane.xlu0 %9963
    %v9965 = vsel %vm536, %v9945, 0.0
    %9966 = vadd.xlane.f32.xlu0 %v9965
    %v9967 = vpop.xlane.xlu0 %9966
    %v9968 = vsel %vm536, %v9947, 0.0
    %9969 = vadd.xlane.f32.xlu0 %v9968
    %v9970 = vpop.xlane.xlu0 %9969
    %v9971 = vsel %vm536, %v9949, 0.0
    %9972 = vadd.xlane.f32.xlu0 %v9971
    %v9973 = vpop.xlane.xlu0 %9972
    %v9974 = vrcp.pop %v9952
    %v9975 = vmul.f32 %v9952, %v9974
    %v9976 = vsub.f32 1.0, %v9975
    %v9977 = vmul.f32 %v9974, %v9976
    %v9978 = vadd.f32 %v9974, %v9977
    %vm9979 = vweird.f32 %v9952
    %vm9980 = vweird.f32 %v9974
    %vm9981 = vmor %vm9979, %vm9980
    %v9982 = vsel %vm9981, %v9974, %v9978
    %v9983 = vand.u32 2147483647, %v9952
    %vm9984 = vcmp.eq.f32.partialorder %v9983, 8.507059e+37
    %v9985 = vand.u32 %v9952, 2147483648
    %v9986 = vor.u32 1.1754944e-38, %v9985
    %v9987 = vsel %vm9984, %v9986, %v9982
    %v9988 = vmul.f32 %v9935, %v9987
    %v9989 = vrcp.pop %v9955
    %v9990 = vmul.f32 %v9955, %v9989
    %v9991 = vsub.f32 1.0, %v9990
    %v9992 = vmul.f32 %v9989, %v9991
    %v9993 = vadd.f32 %v9989, %v9992
    %vm9994 = vweird.f32 %v9955
    %vm9995 = vweird.f32 %v9989
    %vm9996 = vmor %vm9994, %vm9995
    %v9997 = vsel %vm9996, %v9989, %v9993
    %v9998 = vand.u32 2147483647, %v9955
    %vm9999 = vcmp.eq.f32.partialorder %v9998, 8.507059e+37
    %v10000 = vand.u32 %v9955, 2147483648
    %v10001 = vor.u32 1.1754944e-38, %v10000
    %v10002 = vsel %vm9999, %v10001, %v9997
    %v10003 = vmul.f32 %v9937, %v10002
    %v10004 = vrcp.pop %v9958
    %v10005 = vmul.f32 %v9958, %v10004
    %v10006 = vsub.f32 1.0, %v10005
    %v10007 = vmul.f32 %v10004, %v10006
    %v10008 = vadd.f32 %v10004, %v10007
    %vm10009 = vweird.f32 %v9958
    %vm10010 = vweird.f32 %v10004
    %vm10011 = vmor %vm10009, %vm10010
    %v10012 = vsel %vm10011, %v10004, %v10008
    %v10013 = vand.u32 2147483647, %v9958
    %vm10014 = vcmp.eq.f32.partialorder %v10013, 8.507059e+37
    %v10015 = vand.u32 %v9958, 2147483648
    %v10016 = vor.u32 1.1754944e-38, %v10015
    %v10017 = vsel %vm10014, %v10016, %v10012
    %v10018 = vmul.f32 %v9939, %v10017
    %v10019 = vrcp.pop %v9961
    %v10020 = vmul.f32 %v9961, %v10019
    %v10021 = vsub.f32 1.0, %v10020
    %v10022 = vmul.f32 %v10019, %v10021
    %v10023 = vadd.f32 %v10019, %v10022
    %vm10024 = vweird.f32 %v9961
    %vm10025 = vweird.f32 %v10019
    %vm10026 = vmor %vm10024, %vm10025
    %v10027 = vsel %vm10026, %v10019, %v10023
    %v10028 = vand.u32 2147483647, %v9961
    %vm10029 = vcmp.eq.f32.partialorder %v10028, 8.507059e+37
    %v10030 = vand.u32 %v9961, 2147483648
    %v10031 = vor.u32 1.1754944e-38, %v10030
    %v10032 = vsel %vm10029, %v10031, %v10027
    %v10033 = vmul.f32 %v9941, %v10032
    %v10034 = vrcp.pop %v9964
    %v10035 = vmul.f32 %v9964, %v10034
    %v10036 = vsub.f32 1.0, %v10035
    %v10037 = vmul.f32 %v10034, %v10036
    %v10038 = vadd.f32 %v10034, %v10037
    %vm10039 = vweird.f32 %v9964
    %vm10040 = vweird.f32 %v10034
    %vm10041 = vmor %vm10039, %vm10040
    %v10042 = vsel %vm10041, %v10034, %v10038
    %v10043 = vand.u32 2147483647, %v9964
    %vm10044 = vcmp.eq.f32.partialorder %v10043, 8.507059e+37
    %v10045 = vand.u32 %v9964, 2147483648
    %v10046 = vor.u32 1.1754944e-38, %v10045
    %v10047 = vsel %vm10044, %v10046, %v10042
    %v10048 = vmul.f32 %v9943, %v10047
    %v10049 = vrcp.pop %v9967
    %v10050 = vmul.f32 %v9967, %v10049
    %v10051 = vsub.f32 1.0, %v10050
    %v10052 = vmul.f32 %v10049, %v10051
    %v10053 = vadd.f32 %v10049, %v10052
    %vm10054 = vweird.f32 %v9967
    %vm10055 = vweird.f32 %v10049
    %vm10056 = vmor %vm10054, %vm10055
    %v10057 = vsel %vm10056, %v10049, %v10053
    %v10058 = vand.u32 2147483647, %v9967
    %vm10059 = vcmp.eq.f32.partialorder %v10058, 8.507059e+37
    %v10060 = vand.u32 %v9967, 2147483648
    %v10061 = vor.u32 1.1754944e-38, %v10060
    %v10062 = vsel %vm10059, %v10061, %v10057
    %v10063 = vmul.f32 %v9945, %v10062
    %v10064 = vrcp.pop %v9970
    %v10065 = vmul.f32 %v9970, %v10064
    %v10066 = vsub.f32 1.0, %v10065
    %v10067 = vmul.f32 %v10064, %v10066
    %v10068 = vadd.f32 %v10064, %v10067
    %vm10069 = vweird.f32 %v9970
    %vm10070 = vweird.f32 %v10064
    %vm10071 = vmor %vm10069, %vm10070
    %v10072 = vsel %vm10071, %v10064, %v10068
    %v10073 = vand.u32 2147483647, %v9970
    %vm10074 = vcmp.eq.f32.partialorder %v10073, 8.507059e+37
    %v10075 = vand.u32 %v9970, 2147483648
    %v10076 = vor.u32 1.1754944e-38, %v10075
    %v10077 = vsel %vm10074, %v10076, %v10072
    %v10078 = vmul.f32 %v9947, %v10077
    %v10079 = vrcp.pop %v9973
    %v10080 = vmul.f32 %v9973, %v10079
    %v10081 = vsub.f32 1.0, %v10080
    %v10082 = vmul.f32 %v10079, %v10081
    %v10083 = vadd.f32 %v10079, %v10082
    %vm10084 = vweird.f32 %v9973
    %vm10085 = vweird.f32 %v10079
    %vm10086 = vmor %vm10084, %vm10085
    %v10087 = vsel %vm10086, %v10079, %v10083
    %v10088 = vand.u32 2147483647, %v9973
    %vm10089 = vcmp.eq.f32.partialorder %v10088, 8.507059e+37
    %v10090 = vand.u32 %v9973, 2147483648
    %v10091 = vor.u32 1.1754944e-38, %v10090
    %v10092 = vsel %vm10089, %v10091, %v10087
    %v10093 = vmul.f32 %v9949, %v10092
    %v10094 = vpack.c.bf16 %v9988, %v9988
    %v10095 = vpack.c.bf16 %v10003, %v10003
    %v10096 = vpack.c.bf16 %v10018, %v10018
    %v10097 = vpack.c.bf16 %v10033, %v10033
    %v10098 = vpack.c.bf16 %v10048, %v10048
    %v10099 = vpack.c.bf16 %v10063, %v10063
    %v10100 = vpack.c.bf16 %v10078, %v10078
    %v10101 = vpack.c.bf16 %v10093, %v10093
    %10102 = vst [vmem:[#allocation1] ss:$9 sm:$0xff] %v6382
    %v10103 = vld [vmem:[#allocation1] sm:$0xff]
    %10105 = vrot.lane.b32.xlu0 %v10103, 48
    %v10106 = vpop.permute.xlu0 %10105
    %v10108 = vsel %vm737, %v10094, 0
    %v10111 = vsel %vm299, %v10106, 0
    %10113 = vmatpush.bf16.msra.mxu0 0
    %10114 = vmatpush.bf16.msra.mxu0 0
    %10115 = vmatpush.bf16.msra.mxu0 0
    %10116 = vmatpush.bf16.msra.mxu0 0
    %10117 = vmatpush.bf16.msra.mxu0 0
    %10118 = vmatpush.bf16.msra.mxu0 0
    %10119 = vmatpush.bf16.msra.mxu0 0
    %10120 = vmatpush.bf16.msra.mxu0 %v10111
    %10121 = vmatmul.bf16.gmra.mxu0 %v10108
    %v10122 = vpop.f32.mrf.mxu0
    %v10123 = vadd.f32 0.0, %v10122
    %v10124 = vpop.f32.mrf.mxu0
    %10125 = vdwg.mxu0
    %10126 = vst [vmem:[#allocation1] ss:$9 sm:$0xff] %v6385
    %v10127 = vld [vmem:[#allocation1] sm:$0xff]
    %10129 = vrot.lane.b32.xlu0 %v10127, 48
    %v10130 = vpop.permute.xlu0 %10129
    %v10132 = vsel %vm737, %v10095, 0
    %v10135 = vsel %vm299, %v10130, 0
    %10137 = vmatpush.bf16.msra.mxu0 0
    %10138 = vmatpush.bf16.msra.mxu0 0
    %10139 = vmatpush.bf16.msra.mxu0 0
    %10140 = vmatpush.bf16.msra.mxu0 0
    %10141 = vmatpush.bf16.msra.mxu0 0
    %10142 = vmatpush.bf16.msra.mxu0 0
    %10143 = vmatpush.bf16.msra.mxu0 0
    %10144 = vmatpush.bf16.msra.mxu0 %v10135
    %10145 = vmatmul.bf16.gmra.mxu0 %v10132
    %v10146 = vpop.f32.mrf.mxu0
    %v10147 = vadd.f32 0.0, %v10146
    %v10148 = vpop.f32.mrf.mxu0
    %10149 = vdwg.mxu0
    %10150 = vst [vmem:[#allocation1] ss:$9 sm:$0xff] %v6388
    %v10151 = vld [vmem:[#allocation1] sm:$0xff]
    %10153 = vrot.lane.b32.xlu0 %v10151, 48
    %v10154 = vpop.permute.xlu0 %10153
    %v10156 = vsel %vm737, %v10096, 0
    %v10159 = vsel %vm299, %v10154, 0
    %10161 = vmatpush.bf16.msra.mxu0 0
    %10162 = vmatpush.bf16.msra.mxu0 0
    %10163 = vmatpush.bf16.msra.mxu0 0
    %10164 = vmatpush.bf16.msra.mxu0 0
    %10165 = vmatpush.bf16.msra.mxu0 0
    %10166 = vmatpush.bf16.msra.mxu0 0
    %10167 = vmatpush.bf16.msra.mxu0 0
    %10168 = vmatpush.bf16.msra.mxu0 %v10159
    %10169 = vmatmul.bf16.gmra.mxu0 %v10156
    %v10170 = vpop.f32.mrf.mxu0
    %v10171 = vadd.f32 0.0, %v10170
    %v10172 = vpop.f32.mrf.mxu0
    %10173 = vdwg.mxu0
    %10174 = vst [vmem:[#allocation1] ss:$9 sm:$0xff] %v6391
    %v10175 = vld [vmem:[#allocation1] sm:$0xff]
    %10177 = vrot.lane.b32.xlu0 %v10175, 48
    %v10178 = vpop.permute.xlu0 %10177
    %v10180 = vsel %vm737, %v10097, 0
    %v10183 = vsel %vm299, %v10178, 0
    %10185 = vmatpush.bf16.msra.mxu0 0
    %10186 = vmatpush.bf16.msra.mxu0 0
    %10187 = vmatpush.bf16.msra.mxu0 0
    %10188 = vmatpush.bf16.msra.mxu0 0
    %10189 = vmatpush.bf16.msra.mxu0 0
    %10190 = vmatpush.bf16.msra.mxu0 0
    %10191 = vmatpush.bf16.msra.mxu0 0
    %10192 = vmatpush.bf16.msra.mxu0 %v10183
    %10193 = vmatmul.bf16.gmra.mxu0 %v10180
    %v10194 = vpop.f32.mrf.mxu0
    %v10195 = vadd.f32 0.0, %v10194
    %v10196 = vpop.f32.mrf.mxu0
    %10197 = vdwg.mxu0
    %10198 = vst [vmem:[#allocation1] ss:$9 sm:$0xff] %v6394
    %v10199 = vld [vmem:[#allocation1] sm:$0xff]
    %10201 = vrot.lane.b32.xlu0 %v10199, 48
    %v10202 = vpop.permute.xlu0 %10201
    %v10204 = vsel %vm737, %v10098, 0
    %v10207 = vsel %vm299, %v10202, 0
    %10209 = vmatpush.bf16.msra.mxu0 0
    %10210 = vmatpush.bf16.msra.mxu0 0
    %10211 = vmatpush.bf16.msra.mxu0 0
    %10212 = vmatpush.bf16.msra.mxu0 0
    %10213 = vmatpush.bf16.msra.mxu0 0
    %10214 = vmatpush.bf16.msra.mxu0 0
    %10215 = vmatpush.bf16.msra.mxu0 0
    %10216 = vmatpush.bf16.msra.mxu0 %v10207
    %10217 = vmatmul.bf16.gmra.mxu0 %v10204
    %v10218 = vpop.f32.mrf.mxu0
    %v10219 = vadd.f32 0.0, %v10218
    %v10220 = vpop.f32.mrf.mxu0
    %10221 = vdwg.mxu0
    %10222 = vst [vmem:[#allocation1] ss:$9 sm:$0xff] %v6397
    %v10223 = vld [vmem:[#allocation1] sm:$0xff]
    %10225 = vrot.lane.b32.xlu0 %v10223, 48
    %v10226 = vpop.permute.xlu0 %10225
    %v10228 = vsel %vm737, %v10099, 0
    %v10231 = vsel %vm299, %v10226, 0
    %10233 = vmatpush.bf16.msra.mxu0 0
    %10234 = vmatpush.bf16.msra.mxu0 0
    %10235 = vmatpush.bf16.msra.mxu0 0
    %10236 = vmatpush.bf16.msra.mxu0 0
    %10237 = vmatpush.bf16.msra.mxu0 0
    %10238 = vmatpush.bf16.msra.mxu0 0
    %10239 = vmatpush.bf16.msra.mxu0 0
    %10240 = vmatpush.bf16.msra.mxu0 %v10231
    %10241 = vmatmul.bf16.gmra.mxu0 %v10228
    %v10242 = vpop.f32.mrf.mxu0
    %v10243 = vadd.f32 0.0, %v10242
    %v10244 = vpop.f32.mrf.mxu0
    %10245 = vdwg.mxu0
    %10246 = vst [vmem:[#allocation1] ss:$9 sm:$0xff] %v6400
    %v10247 = vld [vmem:[#allocation1] sm:$0xff]
    %10249 = vrot.lane.b32.xlu0 %v10247, 48
    %v10250 = vpop.permute.xlu0 %10249
    %v10252 = vsel %vm737, %v10100, 0
    %v10255 = vsel %vm299, %v10250, 0
    %10257 = vmatpush.bf16.msra.mxu0 0
    %10258 = vmatpush.bf16.msra.mxu0 0
    %10259 = vmatpush.bf16.msra.mxu0 0
    %10260 = vmatpush.bf16.msra.mxu0 0
    %10261 = vmatpush.bf16.msra.mxu0 0
    %10262 = vmatpush.bf16.msra.mxu0 0
    %10263 = vmatpush.bf16.msra.mxu0 0
    %10264 = vmatpush.bf16.msra.mxu0 %v10255
    %10265 = vmatmul.bf16.gmra.mxu0 %v10252
    %v10266 = vpop.f32.mrf.mxu0
    %v10267 = vadd.f32 0.0, %v10266
    %v10268 = vpop.f32.mrf.mxu0
    %10269 = vdwg.mxu0
    %10270 = vst [vmem:[#allocation1] ss:$9 sm:$0xff] %v6403
    %v10271 = vld [vmem:[#allocation1] sm:$0xff]
    %10273 = vrot.lane.b32.xlu0 %v10271, 48
    %v10274 = vpop.permute.xlu0 %10273
    %v10276 = vsel %vm737, %v10101, 0
    %v10279 = vsel %vm299, %v10274, 0
    %10281 = vmatpush.bf16.msra.mxu0 0
    %10282 = vmatpush.bf16.msra.mxu0 0
    %10283 = vmatpush.bf16.msra.mxu0 0
    %10284 = vmatpush.bf16.msra.mxu0 0
    %10285 = vmatpush.bf16.msra.mxu0 0
    %10286 = vmatpush.bf16.msra.mxu0 0
    %10287 = vmatpush.bf16.msra.mxu0 0
    %10288 = vmatpush.bf16.msra.mxu0 %v10279
    %10289 = vmatmul.bf16.gmra.mxu0 %v10276
    %v10290 = vpop.f32.mrf.mxu0
    %v10291 = vadd.f32 0.0, %v10290
    %v10292 = vpop.f32.mrf.mxu0
    %10293 = vdwg.mxu0
    %v10294 = vld [vmem:[%s6902 + $0x28] sm:$0xf]
    %v10295 = vld [vmem:[%s6902 + $0x2c] sm:$0xf]
    %10304 = vst [vmem:[#allocation1] ss:$4 sm:$0xff] %v10123
    %s10305 = scalar_lea.vmem [#allocation1], 1
    %10306 = vst [vmem:[%s10305] ss:$4 sm:$0xff] %v10147
    %s10307 = scalar_lea.vmem [#allocation1], 2
    %10308 = vst [vmem:[%s10307] ss:$4 sm:$0xff] %v10171
    %s10309 = scalar_lea.vmem [#allocation1], 3
    %10310 = vst [vmem:[%s10309] ss:$4 sm:$0xff] %v10195
    %s10311 = scalar_lea.vmem [#allocation1], 32
    %10312 = vst [vmem:[%s10311] ss:$4 sm:$0xff] %v10219
    %s10313 = scalar_lea.vmem [#allocation1], 33
    %10314 = vst [vmem:[%s10313] ss:$4 sm:$0xff] %v10243
    %s10315 = scalar_lea.vmem [#allocation1], 34
    %10316 = vst [vmem:[%s10315] ss:$4 sm:$0xff] %v10267
    %s10317 = scalar_lea.vmem [#allocation1], 35
    %10318 = vst [vmem:[%s10317] ss:$4 sm:$0xff] %v10291
    %v10319 = vld.sshfl [vmem:[#allocation1] sm:$0xff pattern:$0x73625140]
    %v10320 = vld.sshfl [vmem:[#allocation1 + $0x20] sm:$0xff pattern:$0x73625140]
    %v10323 = vpack.c.bf16 %v10320, %v10319
    %v10326 = vunpack.c.l.b16 %v10294
    %v10327 = vunpack.c.l.b16 %v10295
    %v10328 = vpack.c.b16 %v10327, %v10326
    %v10331 = vsel %vm387, %v10323, 0
    %10333 = vmatpush.bf16.msra.mxu0 0
    %10334 = vmatpush.bf16.msra.mxu0 0
    %10335 = vmatpush.bf16.msra.mxu0 0
    %10336 = vmatpush.bf16.msra.mxu0 0
    %10337 = vmatpush.bf16.msra.mxu0 0
    %10338 = vmatpush.bf16.msra.mxu0 0
    %10339 = vmatpush.bf16.msra.mxu0 0
    %10340 = vmatpush.bf16.msra.mxu0 %v10328
    %10341 = vmatmul.bf16.gmra.mxu0 %v10331
    %v10342 = vpop.f32.mrf.mxu0
    %v10343 = vadd.f32 0.0, %v10342
    %v10344 = vpop.f32.mrf.mxu0
    %v10345 = vadd.f32 0.0, %v10344
    %10346 = vdwg.mxu0
    %v10347 = vadd.f32 %v9668, %v10343
    %v10348 = vadd.f32 %v9669, %v10345
    %10349 = vst [vmem:[#allocation1] ss:$9 sm:$0xff] %v6322
    %v10350 = vld [vmem:[#allocation1] sm:$0xff]
    %10352 = vrot.lane.b32.xlu0 %v10350, 32
    %v10353 = vpop.permute.xlu0 %10352
    %10354 = vst [vmem:[#allocation1] ss:$9 sm:$0xff] %v6352
    %v10355 = vld [vmem:[#allocation1] sm:$0xff]
    %10357 = vrot.lane.b32.xlu0 %v10355, 32
    %v10358 = vpop.permute.xlu0 %10357
    %v10360 = vsel %vm387, %v10353, 0
    %v10363 = vsel %vm387, %v10358, 0
    %10365 = vmatpush.bf16.xpose.msra.mxu0 0
    %10366 = vmatpush.bf16.xpose.msra.mxu0 0
    %10367 = vmatpush.bf16.xpose.msra.mxu0 0
    %10368 = vmatpush.bf16.xpose.msra.mxu0 0
    %10369 = vmatpush.bf16.xpose.msra.mxu0 0
    %10370 = vmatpush.bf16.xpose.msra.mxu0 0
    %10371 = vmatpush.bf16.xpose.msra.mxu0 0
    %10372 = vmatpush.bf16.xpose.msra.mxu0 %v10363
    %10373 = vmatmul.bf16.gmra.mxu0 %v10360
    %v10374 = vpop.f32.mrf.mxu0
    %v10375 = vadd.f32 0.0, %v10374
    %v10376 = vpop.f32.mrf.mxu0
    %10377 = vdwg.mxu0
    %10378 = vst [vmem:[#allocation1] ss:$9 sm:$0xff] %v6325
    %v10379 = vld [vmem:[#allocation1] sm:$0xff]
    %10381 = vrot.lane.b32.xlu0 %v10379, 32
    %v10382 = vpop.permute.xlu0 %10381
    %10383 = vst [vmem:[#allocation1] ss:$9 sm:$0xff] %v6355
    %v10384 = vld [vmem:[#allocation1] sm:$0xff]
    %10386 = vrot.lane.b32.xlu0 %v10384, 32
    %v10387 = vpop.permute.xlu0 %10386
    %v10389 = vsel %vm387, %v10382, 0
    %v10392 = vsel %vm387, %v10387, 0
    %10394 = vmatpush.bf16.xpose.msra.mxu0 0
    %10395 = vmatpush.bf16.xpose.msra.mxu0 0
    %10396 = vmatpush.bf16.xpose.msra.mxu0 0
    %10397 = vmatpush.bf16.xpose.msra.mxu0 0
    %10398 = vmatpush.bf16.xpose.msra.mxu0 0
    %10399 = vmatpush.bf16.xpose.msra.mxu0 0
    %10400 = vmatpush.bf16.xpose.msra.mxu0 0
    %10401 = vmatpush.bf16.xpose.msra.mxu0 %v10392
    %10402 = vmatmul.bf16.gmra.mxu0 %v10389
    %v10403 = vpop.f32.mrf.mxu0
    %v10404 = vadd.f32 0.0, %v10403
    %v10405 = vpop.f32.mrf.mxu0
    %10406 = vdwg.mxu0
    %10407 = vst [vmem:[#allocation1] ss:$9 sm:$0xff] %v6328
    %v10408 = vld [vmem:[#allocation1] sm:$0xff]
    %10410 = vrot.lane.b32.xlu0 %v10408, 32
    %v10411 = vpop.permute.xlu0 %10410
    %10412 = vst [vmem:[#allocation1] ss:$9 sm:$0xff] %v6358
    %v10413 = vld [vmem:[#allocation1] sm:$0xff]
    %10415 = vrot.lane.b32.xlu0 %v10413, 32
    %v10416 = vpop.permute.xlu0 %10415
    %v10418 = vsel %vm387, %v10411, 0
    %v10421 = vsel %vm387, %v10416, 0
    %10423 = vmatpush.bf16.xpose.msra.mxu0 0
    %10424 = vmatpush.bf16.xpose.msra.mxu0 0
    %10425 = vmatpush.bf16.xpose.msra.mxu0 0
    %10426 = vmatpush.bf16.xpose.msra.mxu0 0
    %10427 = vmatpush.bf16.xpose.msra.mxu0 0
    %10428 = vmatpush.bf16.xpose.msra.mxu0 0
    %10429 = vmatpush.bf16.xpose.msra.mxu0 0
    %10430 = vmatpush.bf16.xpose.msra.mxu0 %v10421
    %10431 = vmatmul.bf16.gmra.mxu0 %v10418
    %v10432 = vpop.f32.mrf.mxu0
    %v10433 = vadd.f32 0.0, %v10432
    %v10434 = vpop.f32.mrf.mxu0
    %10435 = vdwg.mxu0
    %10436 = vst [vmem:[#allocation1] ss:$9 sm:$0xff] %v6331
    %v10437 = vld [vmem:[#allocation1] sm:$0xff]
    %10439 = vrot.lane.b32.xlu0 %v10437, 32
    %v10440 = vpop.permute.xlu0 %10439
    %10441 = vst [vmem:[#allocation1] ss:$9 sm:$0xff] %v6361
    %v10442 = vld [vmem:[#allocation1] sm:$0xff]
    %10444 = vrot.lane.b32.xlu0 %v10442, 32
    %v10445 = vpop.permute.xlu0 %10444
    %v10447 = vsel %vm387, %v10440, 0
    %v10450 = vsel %vm387, %v10445, 0
    %10452 = vmatpush.bf16.xpose.msra.mxu0 0
    %10453 = vmatpush.bf16.xpose.msra.mxu0 0
    %10454 = vmatpush.bf16.xpose.msra.mxu0 0
    %10455 = vmatpush.bf16.xpose.msra.mxu0 0
    %10456 = vmatpush.bf16.xpose.msra.mxu0 0
    %10457 = vmatpush.bf16.xpose.msra.mxu0 0
    %10458 = vmatpush.bf16.xpose.msra.mxu0 0
    %10459 = vmatpush.bf16.xpose.msra.mxu0 %v10450
    %10460 = vmatmul.bf16.gmra.mxu0 %v10447
    %v10461 = vpop.f32.mrf.mxu0
    %v10462 = vadd.f32 0.0, %v10461
    %v10463 = vpop.f32.mrf.mxu0
    %10464 = vdwg.mxu0
    %10465 = vst [vmem:[#allocation1] ss:$9 sm:$0xff] %v6334
    %v10466 = vld [vmem:[#allocation1] sm:$0xff]
    %10468 = vrot.lane.b32.xlu0 %v10466, 32
    %v10469 = vpop.permute.xlu0 %10468
    %10470 = vst [vmem:[#allocation1] ss:$9 sm:$0xff] %v6364
    %v10471 = vld [vmem:[#allocation1] sm:$0xff]
    %10473 = vrot.lane.b32.xlu0 %v10471, 32
    %v10474 = vpop.permute.xlu0 %10473
    %v10476 = vsel %vm387, %v10469, 0
    %v10479 = vsel %vm387, %v10474, 0
    %10481 = vmatpush.bf16.xpose.msra.mxu0 0
    %10482 = vmatpush.bf16.xpose.msra.mxu0 0
    %10483 = vmatpush.bf16.xpose.msra.mxu0 0
    %10484 = vmatpush.bf16.xpose.msra.mxu0 0
    %10485 = vmatpush.bf16.xpose.msra.mxu0 0
    %10486 = vmatpush.bf16.xpose.msra.mxu0 0
    %10487 = vmatpush.bf16.xpose.msra.mxu0 0
    %10488 = vmatpush.bf16.xpose.msra.mxu0 %v10479
    %10489 = vmatmul.bf16.gmra.mxu0 %v10476
    %v10490 = vpop.f32.mrf.mxu0
    %v10491 = vadd.f32 0.0, %v10490
    %v10492 = vpop.f32.mrf.mxu0
    %10493 = vdwg.mxu0
    %10494 = vst [vmem:[#allocation1] ss:$9 sm:$0xff] %v6337
    %v10495 = vld [vmem:[#allocation1] sm:$0xff]
    %10497 = vrot.lane.b32.xlu0 %v10495, 32
    %v10498 = vpop.permute.xlu0 %10497
    %10499 = vst [vmem:[#allocation1] ss:$9 sm:$0xff] %v6367
    %v10500 = vld [vmem:[#allocation1] sm:$0xff]
    %10502 = vrot.lane.b32.xlu0 %v10500, 32
    %v10503 = vpop.permute.xlu0 %10502
    %v10505 = vsel %vm387, %v10498, 0
    %v10508 = vsel %vm387, %v10503, 0
    %10510 = vmatpush.bf16.xpose.msra.mxu0 0
    %10511 = vmatpush.bf16.xpose.msra.mxu0 0
    %10512 = vmatpush.bf16.xpose.msra.mxu0 0
    %10513 = vmatpush.bf16.xpose.msra.mxu0 0
    %10514 = vmatpush.bf16.xpose.msra.mxu0 0
    %10515 = vmatpush.bf16.xpose.msra.mxu0 0
    %10516 = vmatpush.bf16.xpose.msra.mxu0 0
    %10517 = vmatpush.bf16.xpose.msra.mxu0 %v10508
    %10518 = vmatmul.bf16.gmra.mxu0 %v10505
    %v10519 = vpop.f32.mrf.mxu0
    %v10520 = vadd.f32 0.0, %v10519
    %v10521 = vpop.f32.mrf.mxu0
    %10522 = vdwg.mxu0
    %10523 = vst [vmem:[#allocation1] ss:$9 sm:$0xff] %v6340
    %v10524 = vld [vmem:[#allocation1] sm:$0xff]
    %10526 = vrot.lane.b32.xlu0 %v10524, 32
    %v10527 = vpop.permute.xlu0 %10526
    %10528 = vst [vmem:[#allocation1] ss:$9 sm:$0xff] %v6370
    %v10529 = vld [vmem:[#allocation1] sm:$0xff]
    %10531 = vrot.lane.b32.xlu0 %v10529, 32
    %v10532 = vpop.permute.xlu0 %10531
    %v10534 = vsel %vm387, %v10527, 0
    %v10537 = vsel %vm387, %v10532, 0
    %10539 = vmatpush.bf16.xpose.msra.mxu0 0
    %10540 = vmatpush.bf16.xpose.msra.mxu0 0
    %10541 = vmatpush.bf16.xpose.msra.mxu0 0
    %10542 = vmatpush.bf16.xpose.msra.mxu0 0
    %10543 = vmatpush.bf16.xpose.msra.mxu0 0
    %10544 = vmatpush.bf16.xpose.msra.mxu0 0
    %10545 = vmatpush.bf16.xpose.msra.mxu0 0
    %10546 = vmatpush.bf16.xpose.msra.mxu0 %v10537
    %10547 = vmatmul.bf16.gmra.mxu0 %v10534
    %v10548 = vpop.f32.mrf.mxu0
    %v10549 = vadd.f32 0.0, %v10548
    %v10550 = vpop.f32.mrf.mxu0
    %10551 = vdwg.mxu0
    %10552 = vst [vmem:[#allocation1] ss:$9 sm:$0xff] %v6343
    %v10553 = vld [vmem:[#allocation1] sm:$0xff]
    %10555 = vrot.lane.b32.xlu0 %v10553, 32
    %v10556 = vpop.permute.xlu0 %10555
    %10557 = vst [vmem:[#allocation1] ss:$9 sm:$0xff] %v6373
    %v10558 = vld [vmem:[#allocation1] sm:$0xff]
    %10560 = vrot.lane.b32.xlu0 %v10558, 32
    %v10561 = vpop.permute.xlu0 %10560
    %v10563 = vsel %vm387, %v10556, 0
    %v10566 = vsel %vm387, %v10561, 0
    %10568 = vmatpush.bf16.xpose.msra.mxu0 0
    %10569 = vmatpush.bf16.xpose.msra.mxu0 0
    %10570 = vmatpush.bf16.xpose.msra.mxu0 0
    %10571 = vmatpush.bf16.xpose.msra.mxu0 0
    %10572 = vmatpush.bf16.xpose.msra.mxu0 0
    %10573 = vmatpush.bf16.xpose.msra.mxu0 0
    %10574 = vmatpush.bf16.xpose.msra.mxu0 0
    %10575 = vmatpush.bf16.xpose.msra.mxu0 %v10566
    %10576 = vmatmul.bf16.gmra.mxu0 %v10563
    %v10577 = vpop.f32.mrf.mxu0
    %v10578 = vadd.f32 0.0, %v10577
    %v10579 = vpop.f32.mrf.mxu0
    %10580 = vdwg.mxu0
    %v10581 = vsel %vm536, %v10375, -inf
    %10582 = vmax.xlane.f32.xlu0 %v10581
    %v10583 = vpop.xlane.xlu0 %10582
    %v10584 = vsel %vm536, %v10404, -inf
    %10585 = vmax.xlane.f32.xlu0 %v10584
    %v10586 = vpop.xlane.xlu0 %10585
    %v10587 = vsel %vm536, %v10433, -inf
    %10588 = vmax.xlane.f32.xlu0 %v10587
    %v10589 = vpop.xlane.xlu0 %10588
    %v10590 = vsel %vm536, %v10462, -inf
    %10591 = vmax.xlane.f32.xlu0 %v10590
    %v10592 = vpop.xlane.xlu0 %10591
    %v10593 = vsel %vm536, %v10491, -inf
    %10594 = vmax.xlane.f32.xlu0 %v10593
    %v10595 = vpop.xlane.xlu0 %10594
    %v10596 = vsel %vm536, %v10520, -inf
    %10597 = vmax.xlane.f32.xlu0 %v10596
    %v10598 = vpop.xlane.xlu0 %10597
    %v10599 = vsel %vm536, %v10549, -inf
    %10600 = vmax.xlane.f32.xlu0 %v10599
    %v10601 = vpop.xlane.xlu0 %10600
    %v10602 = vsel %vm536, %v10578, -inf
    %10603 = vmax.xlane.f32.xlu0 %v10602
    %v10604 = vpop.xlane.xlu0 %10603
    %v10605 = vsub.f32 %v10375, %v10583
    %v10606 = vsub.f32 %v10404, %v10586
    %v10607 = vsub.f32 %v10433, %v10589
    %v10608 = vsub.f32 %v10462, %v10592
    %v10609 = vsub.f32 %v10491, %v10595
    %v10610 = vsub.f32 %v10520, %v10598
    %v10611 = vsub.f32 %v10549, %v10601
    %v10612 = vsub.f32 %v10578, %v10604
    %v10613 = vmul.f32 %v10605, 1.442695
    %v10614 = vpow.pop %v10613
    %v10615 = vmul.f32 %v10606, 1.442695
    %v10616 = vpow.pop %v10615
    %v10617 = vmul.f32 %v10607, 1.442695
    %v10618 = vpow.pop %v10617
    %v10619 = vmul.f32 %v10608, 1.442695
    %v10620 = vpow.pop %v10619
    %v10621 = vmul.f32 %v10609, 1.442695
    %v10622 = vpow.pop %v10621
    %v10623 = vmul.f32 %v10610, 1.442695
    %v10624 = vpow.pop %v10623
    %v10625 = vmul.f32 %v10611, 1.442695
    %v10626 = vpow.pop %v10625
    %v10627 = vmul.f32 %v10612, 1.442695
    %v10628 = vpow.pop %v10627
    %v10629 = vsel %vm536, %v10614, 0.0
    %10630 = vadd.xlane.f32.xlu0 %v10629
    %v10631 = vpop.xlane.xlu0 %10630
    %v10632 = vsel %vm536, %v10616, 0.0
    %10633 = vadd.xlane.f32.xlu0 %v10632
    %v10634 = vpop.xlane.xlu0 %10633
    %v10635 = vsel %vm536, %v10618, 0.0
    %10636 = vadd.xlane.f32.xlu0 %v10635
    %v10637 = vpop.xlane.xlu0 %10636
    %v10638 = vsel %vm536, %v10620, 0.0
    %10639 = vadd.xlane.f32.xlu0 %v10638
    %v10640 = vpop.xlane.xlu0 %10639
    %v10641 = vsel %vm536, %v10622, 0.0
    %10642 = vadd.xlane.f32.xlu0 %v10641
    %v10643 = vpop.xlane.xlu0 %10642
    %v10644 = vsel %vm536, %v10624, 0.0
    %10645 = vadd.xlane.f32.xlu0 %v10644
    %v10646 = vpop.xlane.xlu0 %10645
    %v10647 = vsel %vm536, %v10626, 0.0
    %10648 = vadd.xlane.f32.xlu0 %v10647
    %v10649 = vpop.xlane.xlu0 %10648
    %v10650 = vsel %vm536, %v10628, 0.0
    %10651 = vadd.xlane.f32.xlu0 %v10650
    %v10652 = vpop.xlane.xlu0 %10651
    %v10653 = vrcp.pop %v10631
    %v10654 = vmul.f32 %v10631, %v10653
    %v10655 = vsub.f32 1.0, %v10654
    %v10656 = vmul.f32 %v10653, %v10655
    %v10657 = vadd.f32 %v10653, %v10656
    %vm10658 = vweird.f32 %v10631
    %vm10659 = vweird.f32 %v10653
    %vm10660 = vmor %vm10658, %vm10659
    %v10661 = vsel %vm10660, %v10653, %v10657
    %v10662 = vand.u32 2147483647, %v10631
    %vm10663 = vcmp.eq.f32.partialorder %v10662, 8.507059e+37
    %v10664 = vand.u32 %v10631, 2147483648
    %v10665 = vor.u32 1.1754944e-38, %v10664
    %v10666 = vsel %vm10663, %v10665, %v10661
    %v10667 = vmul.f32 %v10614, %v10666
    %v10668 = vrcp.pop %v10634
    %v10669 = vmul.f32 %v10634, %v10668
    %v10670 = vsub.f32 1.0, %v10669
    %v10671 = vmul.f32 %v10668, %v10670
    %v10672 = vadd.f32 %v10668, %v10671
    %vm10673 = vweird.f32 %v10634
    %vm10674 = vweird.f32 %v10668
    %vm10675 = vmor %vm10673, %vm10674
    %v10676 = vsel %vm10675, %v10668, %v10672
    %v10677 = vand.u32 2147483647, %v10634
    %vm10678 = vcmp.eq.f32.partialorder %v10677, 8.507059e+37
    %v10679 = vand.u32 %v10634, 2147483648
    %v10680 = vor.u32 1.1754944e-38, %v10679
    %v10681 = vsel %vm10678, %v10680, %v10676
    %v10682 = vmul.f32 %v10616, %v10681
    %v10683 = vrcp.pop %v10637
    %v10684 = vmul.f32 %v10637, %v10683
    %v10685 = vsub.f32 1.0, %v10684
    %v10686 = vmul.f32 %v10683, %v10685
    %v10687 = vadd.f32 %v10683, %v10686
    %vm10688 = vweird.f32 %v10637
    %vm10689 = vweird.f32 %v10683
    %vm10690 = vmor %vm10688, %vm10689
    %v10691 = vsel %vm10690, %v10683, %v10687
    %v10692 = vand.u32 2147483647, %v10637
    %vm10693 = vcmp.eq.f32.partialorder %v10692, 8.507059e+37
    %v10694 = vand.u32 %v10637, 2147483648
    %v10695 = vor.u32 1.1754944e-38, %v10694
    %v10696 = vsel %vm10693, %v10695, %v10691
    %v10697 = vmul.f32 %v10618, %v10696
    %v10698 = vrcp.pop %v10640
    %v10699 = vmul.f32 %v10640, %v10698
    %v10700 = vsub.f32 1.0, %v10699
    %v10701 = vmul.f32 %v10698, %v10700
    %v10702 = vadd.f32 %v10698, %v10701
    %vm10703 = vweird.f32 %v10640
    %vm10704 = vweird.f32 %v10698
    %vm10705 = vmor %vm10703, %vm10704
    %v10706 = vsel %vm10705, %v10698, %v10702
    %v10707 = vand.u32 2147483647, %v10640
    %vm10708 = vcmp.eq.f32.partialorder %v10707, 8.507059e+37
    %v10709 = vand.u32 %v10640, 2147483648
    %v10710 = vor.u32 1.1754944e-38, %v10709
    %v10711 = vsel %vm10708, %v10710, %v10706
    %v10712 = vmul.f32 %v10620, %v10711
    %v10713 = vrcp.pop %v10643
    %v10714 = vmul.f32 %v10643, %v10713
    %v10715 = vsub.f32 1.0, %v10714
    %v10716 = vmul.f32 %v10713, %v10715
    %v10717 = vadd.f32 %v10713, %v10716
    %vm10718 = vweird.f32 %v10643
    %vm10719 = vweird.f32 %v10713
    %vm10720 = vmor %vm10718, %vm10719
    %v10721 = vsel %vm10720, %v10713, %v10717
    %v10722 = vand.u32 2147483647, %v10643
    %vm10723 = vcmp.eq.f32.partialorder %v10722, 8.507059e+37
    %v10724 = vand.u32 %v10643, 2147483648
    %v10725 = vor.u32 1.1754944e-38, %v10724
    %v10726 = vsel %vm10723, %v10725, %v10721
    %v10727 = vmul.f32 %v10622, %v10726
    %v10728 = vrcp.pop %v10646
    %v10729 = vmul.f32 %v10646, %v10728
    %v10730 = vsub.f32 1.0, %v10729
    %v10731 = vmul.f32 %v10728, %v10730
    %v10732 = vadd.f32 %v10728, %v10731
    %vm10733 = vweird.f32 %v10646
    %vm10734 = vweird.f32 %v10728
    %vm10735 = vmor %vm10733, %vm10734
    %v10736 = vsel %vm10735, %v10728, %v10732
    %v10737 = vand.u32 2147483647, %v10646
    %vm10738 = vcmp.eq.f32.partialorder %v10737, 8.507059e+37
    %v10739 = vand.u32 %v10646, 2147483648
    %v10740 = vor.u32 1.1754944e-38, %v10739
    %v10741 = vsel %vm10738, %v10740, %v10736
    %v10742 = vmul.f32 %v10624, %v10741
    %v10743 = vrcp.pop %v10649
    %v10744 = vmul.f32 %v10649, %v10743
    %v10745 = vsub.f32 1.0, %v10744
    %v10746 = vmul.f32 %v10743, %v10745
    %v10747 = vadd.f32 %v10743, %v10746
    %vm10748 = vweird.f32 %v10649
    %vm10749 = vweird.f32 %v10743
    %vm10750 = vmor %vm10748, %vm10749
    %v10751 = vsel %vm10750, %v10743, %v10747
    %v10752 = vand.u32 2147483647, %v10649
    %vm10753 = vcmp.eq.f32.partialorder %v10752, 8.507059e+37
    %v10754 = vand.u32 %v10649, 2147483648
    %v10755 = vor.u32 1.1754944e-38, %v10754
    %v10756 = vsel %vm10753, %v10755, %v10751
    %v10757 = vmul.f32 %v10626, %v10756
    %v10758 = vrcp.pop %v10652
    %v10759 = vmul.f32 %v10652, %v10758
    %v10760 = vsub.f32 1.0, %v10759
    %v10761 = vmul.f32 %v10758, %v10760
    %v10762 = vadd.f32 %v10758, %v10761
    %vm10763 = vweird.f32 %v10652
    %vm10764 = vweird.f32 %v10758
    %vm10765 = vmor %vm10763, %vm10764
    %v10766 = vsel %vm10765, %v10758, %v10762
    %v10767 = vand.u32 2147483647, %v10652
    %vm10768 = vcmp.eq.f32.partialorder %v10767, 8.507059e+37
    %v10769 = vand.u32 %v10652, 2147483648
    %v10770 = vor.u32 1.1754944e-38, %v10769
    %v10771 = vsel %vm10768, %v10770, %v10766
    %v10772 = vmul.f32 %v10628, %v10771
    %v10773 = vpack.c.bf16 %v10667, %v10667
    %v10774 = vpack.c.bf16 %v10682, %v10682
    %v10775 = vpack.c.bf16 %v10697, %v10697
    %v10776 = vpack.c.bf16 %v10712, %v10712
    %v10777 = vpack.c.bf16 %v10727, %v10727
    %v10778 = vpack.c.bf16 %v10742, %v10742
    %v10779 = vpack.c.bf16 %v10757, %v10757
    %v10780 = vpack.c.bf16 %v10772, %v10772
    %10781 = vst [vmem:[#allocation1] ss:$9 sm:$0xff] %v6382
    %v10782 = vld [vmem:[#allocation1] sm:$0xff]
    %10784 = vrot.lane.b32.xlu0 %v10782, 32
    %v10785 = vpop.permute.xlu0 %10784
    %v10787 = vsel %vm737, %v10773, 0
    %v10790 = vsel %vm299, %v10785, 0
    %10792 = vmatpush.bf16.msra.mxu0 0
    %10793 = vmatpush.bf16.msra.mxu0 0
    %10794 = vmatpush.bf16.msra.mxu0 0
    %10795 = vmatpush.bf16.msra.mxu0 0
    %10796 = vmatpush.bf16.msra.mxu0 0
    %10797 = vmatpush.bf16.msra.mxu0 0
    %10798 = vmatpush.bf16.msra.mxu0 0
    %10799 = vmatpush.bf16.msra.mxu0 %v10790
    %10800 = vmatmul.bf16.gmra.mxu0 %v10787
    %v10801 = vpop.f32.mrf.mxu0
    %v10802 = vadd.f32 0.0, %v10801
    %v10803 = vpop.f32.mrf.mxu0
    %10804 = vdwg.mxu0
    %10805 = vst [vmem:[#allocation1] ss:$9 sm:$0xff] %v6385
    %v10806 = vld [vmem:[#allocation1] sm:$0xff]
    %10808 = vrot.lane.b32.xlu0 %v10806, 32
    %v10809 = vpop.permute.xlu0 %10808
    %v10811 = vsel %vm737, %v10774, 0
    %v10814 = vsel %vm299, %v10809, 0
    %10816 = vmatpush.bf16.msra.mxu0 0
    %10817 = vmatpush.bf16.msra.mxu0 0
    %10818 = vmatpush.bf16.msra.mxu0 0
    %10819 = vmatpush.bf16.msra.mxu0 0
    %10820 = vmatpush.bf16.msra.mxu0 0
    %10821 = vmatpush.bf16.msra.mxu0 0
    %10822 = vmatpush.bf16.msra.mxu0 0
    %10823 = vmatpush.bf16.msra.mxu0 %v10814
    %10824 = vmatmul.bf16.gmra.mxu0 %v10811
    %v10825 = vpop.f32.mrf.mxu0
    %v10826 = vadd.f32 0.0, %v10825
    %v10827 = vpop.f32.mrf.mxu0
    %10828 = vdwg.mxu0
    %10829 = vst [vmem:[#allocation1] ss:$9 sm:$0xff] %v6388
    %v10830 = vld [vmem:[#allocation1] sm:$0xff]
    %10832 = vrot.lane.b32.xlu0 %v10830, 32
    %v10833 = vpop.permute.xlu0 %10832
    %v10835 = vsel %vm737, %v10775, 0
    %v10838 = vsel %vm299, %v10833, 0
    %10840 = vmatpush.bf16.msra.mxu0 0
    %10841 = vmatpush.bf16.msra.mxu0 0
    %10842 = vmatpush.bf16.msra.mxu0 0
    %10843 = vmatpush.bf16.msra.mxu0 0
    %10844 = vmatpush.bf16.msra.mxu0 0
    %10845 = vmatpush.bf16.msra.mxu0 0
    %10846 = vmatpush.bf16.msra.mxu0 0
    %10847 = vmatpush.bf16.msra.mxu0 %v10838
    %10848 = vmatmul.bf16.gmra.mxu0 %v10835
    %v10849 = vpop.f32.mrf.mxu0
    %v10850 = vadd.f32 0.0, %v10849
    %v10851 = vpop.f32.mrf.mxu0
    %10852 = vdwg.mxu0
    %10853 = vst [vmem:[#allocation1] ss:$9 sm:$0xff] %v6391
    %v10854 = vld [vmem:[#allocation1] sm:$0xff]
    %10856 = vrot.lane.b32.xlu0 %v10854, 32
    %v10857 = vpop.permute.xlu0 %10856
    %v10859 = vsel %vm737, %v10776, 0
    %v10862 = vsel %vm299, %v10857, 0
    %10864 = vmatpush.bf16.msra.mxu0 0
    %10865 = vmatpush.bf16.msra.mxu0 0
    %10866 = vmatpush.bf16.msra.mxu0 0
    %10867 = vmatpush.bf16.msra.mxu0 0
    %10868 = vmatpush.bf16.msra.mxu0 0
    %10869 = vmatpush.bf16.msra.mxu0 0
    %10870 = vmatpush.bf16.msra.mxu0 0
    %10871 = vmatpush.bf16.msra.mxu0 %v10862
    %10872 = vmatmul.bf16.gmra.mxu0 %v10859
    %v10873 = vpop.f32.mrf.mxu0
    %v10874 = vadd.f32 0.0, %v10873
    %v10875 = vpop.f32.mrf.mxu0
    %10876 = vdwg.mxu0
    %10877 = vst [vmem:[#allocation1] ss:$9 sm:$0xff] %v6394
    %v10878 = vld [vmem:[#allocation1] sm:$0xff]
    %10880 = vrot.lane.b32.xlu0 %v10878, 32
    %v10881 = vpop.permute.xlu0 %10880
    %v10883 = vsel %vm737, %v10777, 0
    %v10886 = vsel %vm299, %v10881, 0
    %10888 = vmatpush.bf16.msra.mxu0 0
    %10889 = vmatpush.bf16.msra.mxu0 0
    %10890 = vmatpush.bf16.msra.mxu0 0
    %10891 = vmatpush.bf16.msra.mxu0 0
    %10892 = vmatpush.bf16.msra.mxu0 0
    %10893 = vmatpush.bf16.msra.mxu0 0
    %10894 = vmatpush.bf16.msra.mxu0 0
    %10895 = vmatpush.bf16.msra.mxu0 %v10886
    %10896 = vmatmul.bf16.gmra.mxu0 %v10883
    %v10897 = vpop.f32.mrf.mxu0
    %v10898 = vadd.f32 0.0, %v10897
    %v10899 = vpop.f32.mrf.mxu0
    %10900 = vdwg.mxu0
    %10901 = vst [vmem:[#allocation1] ss:$9 sm:$0xff] %v6397
    %v10902 = vld [vmem:[#allocation1] sm:$0xff]
    %10904 = vrot.lane.b32.xlu0 %v10902, 32
    %v10905 = vpop.permute.xlu0 %10904
    %v10907 = vsel %vm737, %v10778, 0
    %v10910 = vsel %vm299, %v10905, 0
    %10912 = vmatpush.bf16.msra.mxu0 0
    %10913 = vmatpush.bf16.msra.mxu0 0
    %10914 = vmatpush.bf16.msra.mxu0 0
    %10915 = vmatpush.bf16.msra.mxu0 0
    %10916 = vmatpush.bf16.msra.mxu0 0
    %10917 = vmatpush.bf16.msra.mxu0 0
    %10918 = vmatpush.bf16.msra.mxu0 0
    %10919 = vmatpush.bf16.msra.mxu0 %v10910
    %10920 = vmatmul.bf16.gmra.mxu0 %v10907
    %v10921 = vpop.f32.mrf.mxu0
    %v10922 = vadd.f32 0.0, %v10921
    %v10923 = vpop.f32.mrf.mxu0
    %10924 = vdwg.mxu0
    %10925 = vst [vmem:[#allocation1] ss:$9 sm:$0xff] %v6400
    %v10926 = vld [vmem:[#allocation1] sm:$0xff]
    %10928 = vrot.lane.b32.xlu0 %v10926, 32
    %v10929 = vpop.permute.xlu0 %10928
    %v10931 = vsel %vm737, %v10779, 0
    %v10934 = vsel %vm299, %v10929, 0
    %10936 = vmatpush.bf16.msra.mxu0 0
    %10937 = vmatpush.bf16.msra.mxu0 0
    %10938 = vmatpush.bf16.msra.mxu0 0
    %10939 = vmatpush.bf16.msra.mxu0 0
    %10940 = vmatpush.bf16.msra.mxu0 0
    %10941 = vmatpush.bf16.msra.mxu0 0
    %10942 = vmatpush.bf16.msra.mxu0 0
    %10943 = vmatpush.bf16.msra.mxu0 %v10934
    %10944 = vmatmul.bf16.gmra.mxu0 %v10931
    %v10945 = vpop.f32.mrf.mxu0
    %v10946 = vadd.f32 0.0, %v10945
    %v10947 = vpop.f32.mrf.mxu0
    %10948 = vdwg.mxu0
    %10949 = vst [vmem:[#allocation1] ss:$9 sm:$0xff] %v6403
    %v10950 = vld [vmem:[#allocation1] sm:$0xff]
    %10952 = vrot.lane.b32.xlu0 %v10950, 32
    %v10953 = vpop.permute.xlu0 %10952
    %v10955 = vsel %vm737, %v10780, 0
    %v10958 = vsel %vm299, %v10953, 0
    %10960 = vmatpush.bf16.msra.mxu0 0
    %10961 = vmatpush.bf16.msra.mxu0 0
    %10962 = vmatpush.bf16.msra.mxu0 0
    %10963 = vmatpush.bf16.msra.mxu0 0
    %10964 = vmatpush.bf16.msra.mxu0 0
    %10965 = vmatpush.bf16.msra.mxu0 0
    %10966 = vmatpush.bf16.msra.mxu0 0
    %10967 = vmatpush.bf16.msra.mxu0 %v10958
    %10968 = vmatmul.bf16.gmra.mxu0 %v10955
    %v10969 = vpop.f32.mrf.mxu0
    %v10970 = vadd.f32 0.0, %v10969
    %v10971 = vpop.f32.mrf.mxu0
    %10972 = vdwg.mxu0
    %v10973 = vld [vmem:[%s6902 + $0x30] sm:$0xf]
    %v10974 = vld [vmem:[%s6902 + $0x34] sm:$0xf]
    %10983 = vst [vmem:[#allocation1] ss:$4 sm:$0xff] %v10802
    %s10984 = scalar_lea.vmem [#allocation1], 1
    %10985 = vst [vmem:[%s10984] ss:$4 sm:$0xff] %v10826
    %s10986 = scalar_lea.vmem [#allocation1], 2
    %10987 = vst [vmem:[%s10986] ss:$4 sm:$0xff] %v10850
    %s10988 = scalar_lea.vmem [#allocation1], 3
    %10989 = vst [vmem:[%s10988] ss:$4 sm:$0xff] %v10874
    %s10990 = scalar_lea.vmem [#allocation1], 32
    %10991 = vst [vmem:[%s10990] ss:$4 sm:$0xff] %v10898
    %s10992 = scalar_lea.vmem [#allocation1], 33
    %10993 = vst [vmem:[%s10992] ss:$4 sm:$0xff] %v10922
    %s10994 = scalar_lea.vmem [#allocation1], 34
    %10995 = vst [vmem:[%s10994] ss:$4 sm:$0xff] %v10946
    %s10996 = scalar_lea.vmem [#allocation1], 35
    %10997 = vst [vmem:[%s10996] ss:$4 sm:$0xff] %v10970
    %v10998 = vld.sshfl [vmem:[#allocation1] sm:$0xff pattern:$0x73625140]
    %v10999 = vld.sshfl [vmem:[#allocation1 + $0x20] sm:$0xff pattern:$0x73625140]
    %v11002 = vpack.c.bf16 %v10999, %v10998
    %v11005 = vunpack.c.l.b16 %v10973
    %v11006 = vunpack.c.l.b16 %v10974
    %v11007 = vpack.c.b16 %v11006, %v11005
    %v11010 = vsel %vm387, %v11002, 0
    %11012 = vmatpush.bf16.msra.mxu0 0
    %11013 = vmatpush.bf16.msra.mxu0 0
    %11014 = vmatpush.bf16.msra.mxu0 0
    %11015 = vmatpush.bf16.msra.mxu0 0
    %11016 = vmatpush.bf16.msra.mxu0 0
    %11017 = vmatpush.bf16.msra.mxu0 0
    %11018 = vmatpush.bf16.msra.mxu0 0
    %11019 = vmatpush.bf16.msra.mxu0 %v11007
    %11020 = vmatmul.bf16.gmra.mxu0 %v11010
    %v11021 = vpop.f32.mrf.mxu0
    %v11022 = vadd.f32 0.0, %v11021
    %v11023 = vpop.f32.mrf.mxu0
    %v11024 = vadd.f32 0.0, %v11023
    %11025 = vdwg.mxu0
    %v11026 = vadd.f32 %v10347, %v11022
    %v11027 = vadd.f32 %v10348, %v11024
    %11028 = vst [vmem:[#allocation1] ss:$9 sm:$0xff] %v6322
    %v11029 = vld [vmem:[#allocation1] sm:$0xff]
    %11031 = vrot.lane.b32.xlu0 %v11029, 16
    %v11032 = vpop.permute.xlu0 %11031
    %11033 = vst [vmem:[#allocation1] ss:$9 sm:$0xff] %v6352
    %v11034 = vld [vmem:[#allocation1] sm:$0xff]
    %11036 = vrot.lane.b32.xlu0 %v11034, 16
    %v11037 = vpop.permute.xlu0 %11036
    %v11039 = vsel %vm387, %v11032, 0
    %v11042 = vsel %vm387, %v11037, 0
    %11044 = vmatpush.bf16.xpose.msra.mxu0 0
    %11045 = vmatpush.bf16.xpose.msra.mxu0 0
    %11046 = vmatpush.bf16.xpose.msra.mxu0 0
    %11047 = vmatpush.bf16.xpose.msra.mxu0 0
    %11048 = vmatpush.bf16.xpose.msra.mxu0 0
    %11049 = vmatpush.bf16.xpose.msra.mxu0 0
    %11050 = vmatpush.bf16.xpose.msra.mxu0 0
    %11051 = vmatpush.bf16.xpose.msra.mxu0 %v11042
    %11052 = vmatmul.bf16.gmra.mxu0 %v11039
    %v11053 = vpop.f32.mrf.mxu0
    %v11054 = vadd.f32 0.0, %v11053
    %v11055 = vpop.f32.mrf.mxu0
    %11056 = vdwg.mxu0
    %11057 = vst [vmem:[#allocation1] ss:$9 sm:$0xff] %v6325
    %v11058 = vld [vmem:[#allocation1] sm:$0xff]
    %11060 = vrot.lane.b32.xlu0 %v11058, 16
    %v11061 = vpop.permute.xlu0 %11060
    %11062 = vst [vmem:[#allocation1] ss:$9 sm:$0xff] %v6355
    %v11063 = vld [vmem:[#allocation1] sm:$0xff]
    %11065 = vrot.lane.b32.xlu0 %v11063, 16
    %v11066 = vpop.permute.xlu0 %11065
    %v11068 = vsel %vm387, %v11061, 0
    %v11071 = vsel %vm387, %v11066, 0
    %11073 = vmatpush.bf16.xpose.msra.mxu0 0
    %11074 = vmatpush.bf16.xpose.msra.mxu0 0
    %11075 = vmatpush.bf16.xpose.msra.mxu0 0
    %11076 = vmatpush.bf16.xpose.msra.mxu0 0
    %11077 = vmatpush.bf16.xpose.msra.mxu0 0
    %11078 = vmatpush.bf16.xpose.msra.mxu0 0
    %11079 = vmatpush.bf16.xpose.msra.mxu0 0
    %11080 = vmatpush.bf16.xpose.msra.mxu0 %v11071
    %11081 = vmatmul.bf16.gmra.mxu0 %v11068
    %v11082 = vpop.f32.mrf.mxu0
    %v11083 = vadd.f32 0.0, %v11082
    %v11084 = vpop.f32.mrf.mxu0
    %11085 = vdwg.mxu0
    %11086 = vst [vmem:[#allocation1] ss:$9 sm:$0xff] %v6328
    %v11087 = vld [vmem:[#allocation1] sm:$0xff]
    %11089 = vrot.lane.b32.xlu0 %v11087, 16
    %v11090 = vpop.permute.xlu0 %11089
    %11091 = vst [vmem:[#allocation1] ss:$9 sm:$0xff] %v6358
    %v11092 = vld [vmem:[#allocation1] sm:$0xff]
    %11094 = vrot.lane.b32.xlu0 %v11092, 16
    %v11095 = vpop.permute.xlu0 %11094
    %v11097 = vsel %vm387, %v11090, 0
    %v11100 = vsel %vm387, %v11095, 0
    %11102 = vmatpush.bf16.xpose.msra.mxu0 0
    %11103 = vmatpush.bf16.xpose.msra.mxu0 0
    %11104 = vmatpush.bf16.xpose.msra.mxu0 0
    %11105 = vmatpush.bf16.xpose.msra.mxu0 0
    %11106 = vmatpush.bf16.xpose.msra.mxu0 0
    %11107 = vmatpush.bf16.xpose.msra.mxu0 0
    %11108 = vmatpush.bf16.xpose.msra.mxu0 0
    %11109 = vmatpush.bf16.xpose.msra.mxu0 %v11100
    %11110 = vmatmul.bf16.gmra.mxu0 %v11097
    %v11111 = vpop.f32.mrf.mxu0
    %v11112 = vadd.f32 0.0, %v11111
    %v11113 = vpop.f32.mrf.mxu0
    %11114 = vdwg.mxu0
    %11115 = vst [vmem:[#allocation1] ss:$9 sm:$0xff] %v6331
    %v11116 = vld [vmem:[#allocation1] sm:$0xff]
    %11118 = vrot.lane.b32.xlu0 %v11116, 16
    %v11119 = vpop.permute.xlu0 %11118
    %11120 = vst [vmem:[#allocation1] ss:$9 sm:$0xff] %v6361
    %v11121 = vld [vmem:[#allocation1] sm:$0xff]
    %11123 = vrot.lane.b32.xlu0 %v11121, 16
    %v11124 = vpop.permute.xlu0 %11123
    %v11126 = vsel %vm387, %v11119, 0
    %v11129 = vsel %vm387, %v11124, 0
    %11131 = vmatpush.bf16.xpose.msra.mxu0 0
    %11132 = vmatpush.bf16.xpose.msra.mxu0 0
    %11133 = vmatpush.bf16.xpose.msra.mxu0 0
    %11134 = vmatpush.bf16.xpose.msra.mxu0 0
    %11135 = vmatpush.bf16.xpose.msra.mxu0 0
    %11136 = vmatpush.bf16.xpose.msra.mxu0 0
    %11137 = vmatpush.bf16.xpose.msra.mxu0 0
    %11138 = vmatpush.bf16.xpose.msra.mxu0 %v11129
    %11139 = vmatmul.bf16.gmra.mxu0 %v11126
    %v11140 = vpop.f32.mrf.mxu0
    %v11141 = vadd.f32 0.0, %v11140
    %v11142 = vpop.f32.mrf.mxu0
    %11143 = vdwg.mxu0
    %11144 = vst [vmem:[#allocation1] ss:$9 sm:$0xff] %v6334
    %v11145 = vld [vmem:[#allocation1] sm:$0xff]
    %11147 = vrot.lane.b32.xlu0 %v11145, 16
    %v11148 = vpop.permute.xlu0 %11147
    %11149 = vst [vmem:[#allocation1] ss:$9 sm:$0xff] %v6364
    %v11150 = vld [vmem:[#allocation1] sm:$0xff]
    %11152 = vrot.lane.b32.xlu0 %v11150, 16
    %v11153 = vpop.permute.xlu0 %11152
    %v11155 = vsel %vm387, %v11148, 0
    %v11158 = vsel %vm387, %v11153, 0
    %11160 = vmatpush.bf16.xpose.msra.mxu0 0
    %11161 = vmatpush.bf16.xpose.msra.mxu0 0
    %11162 = vmatpush.bf16.xpose.msra.mxu0 0
    %11163 = vmatpush.bf16.xpose.msra.mxu0 0
    %11164 = vmatpush.bf16.xpose.msra.mxu0 0
    %11165 = vmatpush.bf16.xpose.msra.mxu0 0
    %11166 = vmatpush.bf16.xpose.msra.mxu0 0
    %11167 = vmatpush.bf16.xpose.msra.mxu0 %v11158
    %11168 = vmatmul.bf16.gmra.mxu0 %v11155
    %v11169 = vpop.f32.mrf.mxu0
    %v11170 = vadd.f32 0.0, %v11169
    %v11171 = vpop.f32.mrf.mxu0
    %11172 = vdwg.mxu0
    %11173 = vst [vmem:[#allocation1] ss:$9 sm:$0xff] %v6337
    %v11174 = vld [vmem:[#allocation1] sm:$0xff]
    %11176 = vrot.lane.b32.xlu0 %v11174, 16
    %v11177 = vpop.permute.xlu0 %11176
    %11178 = vst [vmem:[#allocation1] ss:$9 sm:$0xff] %v6367
    %v11179 = vld [vmem:[#allocation1] sm:$0xff]
    %11181 = vrot.lane.b32.xlu0 %v11179, 16
    %v11182 = vpop.permute.xlu0 %11181
    %v11184 = vsel %vm387, %v11177, 0
    %v11187 = vsel %vm387, %v11182, 0
    %11189 = vmatpush.bf16.xpose.msra.mxu0 0
    %11190 = vmatpush.bf16.xpose.msra.mxu0 0
    %11191 = vmatpush.bf16.xpose.msra.mxu0 0
    %11192 = vmatpush.bf16.xpose.msra.mxu0 0
    %11193 = vmatpush.bf16.xpose.msra.mxu0 0
    %11194 = vmatpush.bf16.xpose.msra.mxu0 0
    %11195 = vmatpush.bf16.xpose.msra.mxu0 0
    %11196 = vmatpush.bf16.xpose.msra.mxu0 %v11187
    %11197 = vmatmul.bf16.gmra.mxu0 %v11184
    %v11198 = vpop.f32.mrf.mxu0
    %v11199 = vadd.f32 0.0, %v11198
    %v11200 = vpop.f32.mrf.mxu0
    %11201 = vdwg.mxu0
    %11202 = vst [vmem:[#allocation1] ss:$9 sm:$0xff] %v6340
    %v11203 = vld [vmem:[#allocation1] sm:$0xff]
    %11205 = vrot.lane.b32.xlu0 %v11203, 16
    %v11206 = vpop.permute.xlu0 %11205
    %11207 = vst [vmem:[#allocation1] ss:$9 sm:$0xff] %v6370
    %v11208 = vld [vmem:[#allocation1] sm:$0xff]
    %11210 = vrot.lane.b32.xlu0 %v11208, 16
    %v11211 = vpop.permute.xlu0 %11210
    %v11213 = vsel %vm387, %v11206, 0
    %v11216 = vsel %vm387, %v11211, 0
    %11218 = vmatpush.bf16.xpose.msra.mxu0 0
    %11219 = vmatpush.bf16.xpose.msra.mxu0 0
    %11220 = vmatpush.bf16.xpose.msra.mxu0 0
    %11221 = vmatpush.bf16.xpose.msra.mxu0 0
    %11222 = vmatpush.bf16.xpose.msra.mxu0 0
    %11223 = vmatpush.bf16.xpose.msra.mxu0 0
    %11224 = vmatpush.bf16.xpose.msra.mxu0 0
    %11225 = vmatpush.bf16.xpose.msra.mxu0 %v11216
    %11226 = vmatmul.bf16.gmra.mxu0 %v11213
    %v11227 = vpop.f32.mrf.mxu0
    %v11228 = vadd.f32 0.0, %v11227
    %v11229 = vpop.f32.mrf.mxu0
    %11230 = vdwg.mxu0
    %11231 = vst [vmem:[#allocation1] ss:$9 sm:$0xff] %v6343
    %v11232 = vld [vmem:[#allocation1] sm:$0xff]
    %11234 = vrot.lane.b32.xlu0 %v11232, 16
    %v11235 = vpop.permute.xlu0 %11234
    %11236 = vst [vmem:[#allocation1] ss:$9 sm:$0xff] %v6373
    %v11237 = vld [vmem:[#allocation1] sm:$0xff]
    %11239 = vrot.lane.b32.xlu0 %v11237, 16
    %v11240 = vpop.permute.xlu0 %11239
    %v11242 = vsel %vm387, %v11235, 0
    %v11245 = vsel %vm387, %v11240, 0
    %11247 = vmatpush.bf16.xpose.msra.mxu0 0
    %11248 = vmatpush.bf16.xpose.msra.mxu0 0
    %11249 = vmatpush.bf16.xpose.msra.mxu0 0
    %11250 = vmatpush.bf16.xpose.msra.mxu0 0
    %11251 = vmatpush.bf16.xpose.msra.mxu0 0
    %11252 = vmatpush.bf16.xpose.msra.mxu0 0
    %11253 = vmatpush.bf16.xpose.msra.mxu0 0
    %11254 = vmatpush.bf16.xpose.msra.mxu0 %v11245
    %11255 = vmatmul.bf16.gmra.mxu0 %v11242
    %v11256 = vpop.f32.mrf.mxu0
    %v11257 = vadd.f32 0.0, %v11256
    %v11258 = vpop.f32.mrf.mxu0
    %11259 = vdwg.mxu0
    %v11260 = vsel %vm536, %v11054, -inf
    %11261 = vmax.xlane.f32.xlu0 %v11260
    %v11262 = vpop.xlane.xlu0 %11261
    %v11263 = vsel %vm536, %v11083, -inf
    %11264 = vmax.xlane.f32.xlu0 %v11263
    %v11265 = vpop.xlane.xlu0 %11264
    %v11266 = vsel %vm536, %v11112, -inf
    %11267 = vmax.xlane.f32.xlu0 %v11266
    %v11268 = vpop.xlane.xlu0 %11267
    %v11269 = vsel %vm536, %v11141, -inf
    %11270 = vmax.xlane.f32.xlu0 %v11269
    %v11271 = vpop.xlane.xlu0 %11270
    %v11272 = vsel %vm536, %v11170, -inf
    %11273 = vmax.xlane.f32.xlu0 %v11272
    %v11274 = vpop.xlane.xlu0 %11273
    %v11275 = vsel %vm536, %v11199, -inf
    %11276 = vmax.xlane.f32.xlu0 %v11275
    %v11277 = vpop.xlane.xlu0 %11276
    %v11278 = vsel %vm536, %v11228, -inf
    %11279 = vmax.xlane.f32.xlu0 %v11278
    %v11280 = vpop.xlane.xlu0 %11279
    %v11281 = vsel %vm536, %v11257, -inf
    %11282 = vmax.xlane.f32.xlu0 %v11281
    %v11283 = vpop.xlane.xlu0 %11282
    %v11284 = vsub.f32 %v11054, %v11262
    %v11285 = vsub.f32 %v11083, %v11265
    %v11286 = vsub.f32 %v11112, %v11268
    %v11287 = vsub.f32 %v11141, %v11271
    %v11288 = vsub.f32 %v11170, %v11274
    %v11289 = vsub.f32 %v11199, %v11277
    %v11290 = vsub.f32 %v11228, %v11280
    %v11291 = vsub.f32 %v11257, %v11283
    %v11292 = vmul.f32 %v11284, 1.442695
    %v11293 = vpow.pop %v11292
    %v11294 = vmul.f32 %v11285, 1.442695
    %v11295 = vpow.pop %v11294
    %v11296 = vmul.f32 %v11286, 1.442695
    %v11297 = vpow.pop %v11296
    %v11298 = vmul.f32 %v11287, 1.442695
    %v11299 = vpow.pop %v11298
    %v11300 = vmul.f32 %v11288, 1.442695
    %v11301 = vpow.pop %v11300
    %v11302 = vmul.f32 %v11289, 1.442695
    %v11303 = vpow.pop %v11302
    %v11304 = vmul.f32 %v11290, 1.442695
    %v11305 = vpow.pop %v11304
    %v11306 = vmul.f32 %v11291, 1.442695
    %v11307 = vpow.pop %v11306
    %v11308 = vsel %vm536, %v11293, 0.0
    %11309 = vadd.xlane.f32.xlu0 %v11308
    %v11310 = vpop.xlane.xlu0 %11309
    %v11311 = vsel %vm536, %v11295, 0.0
    %11312 = vadd.xlane.f32.xlu0 %v11311
    %v11313 = vpop.xlane.xlu0 %11312
    %v11314 = vsel %vm536, %v11297, 0.0
    %11315 = vadd.xlane.f32.xlu0 %v11314
    %v11316 = vpop.xlane.xlu0 %11315
    %v11317 = vsel %vm536, %v11299, 0.0
    %11318 = vadd.xlane.f32.xlu0 %v11317
    %v11319 = vpop.xlane.xlu0 %11318
    %v11320 = vsel %vm536, %v11301, 0.0
    %11321 = vadd.xlane.f32.xlu0 %v11320
    %v11322 = vpop.xlane.xlu0 %11321
    %v11323 = vsel %vm536, %v11303, 0.0
    %11324 = vadd.xlane.f32.xlu0 %v11323
    %v11325 = vpop.xlane.xlu0 %11324
    %v11326 = vsel %vm536, %v11305, 0.0
    %11327 = vadd.xlane.f32.xlu0 %v11326
    %v11328 = vpop.xlane.xlu0 %11327
    %v11329 = vsel %vm536, %v11307, 0.0
    %11330 = vadd.xlane.f32.xlu0 %v11329
    %v11331 = vpop.xlane.xlu0 %11330
    %v11332 = vrcp.pop %v11310
    %v11333 = vmul.f32 %v11310, %v11332
    %v11334 = vsub.f32 1.0, %v11333
    %v11335 = vmul.f32 %v11332, %v11334
    %v11336 = vadd.f32 %v11332, %v11335
    %vm11337 = vweird.f32 %v11310
    %vm11338 = vweird.f32 %v11332
    %vm11339 = vmor %vm11337, %vm11338
    %v11340 = vsel %vm11339, %v11332, %v11336
    %v11341 = vand.u32 2147483647, %v11310
    %vm11342 = vcmp.eq.f32.partialorder %v11341, 8.507059e+37
    %v11343 = vand.u32 %v11310, 2147483648
    %v11344 = vor.u32 1.1754944e-38, %v11343
    %v11345 = vsel %vm11342, %v11344, %v11340
    %v11346 = vmul.f32 %v11293, %v11345
    %v11347 = vrcp.pop %v11313
    %v11348 = vmul.f32 %v11313, %v11347
    %v11349 = vsub.f32 1.0, %v11348
    %v11350 = vmul.f32 %v11347, %v11349
    %v11351 = vadd.f32 %v11347, %v11350
    %vm11352 = vweird.f32 %v11313
    %vm11353 = vweird.f32 %v11347
    %vm11354 = vmor %vm11352, %vm11353
    %v11355 = vsel %vm11354, %v11347, %v11351
    %v11356 = vand.u32 2147483647, %v11313
    %vm11357 = vcmp.eq.f32.partialorder %v11356, 8.507059e+37
    %v11358 = vand.u32 %v11313, 2147483648
    %v11359 = vor.u32 1.1754944e-38, %v11358
    %v11360 = vsel %vm11357, %v11359, %v11355
    %v11361 = vmul.f32 %v11295, %v11360
    %v11362 = vrcp.pop %v11316
    %v11363 = vmul.f32 %v11316, %v11362
    %v11364 = vsub.f32 1.0, %v11363
    %v11365 = vmul.f32 %v11362, %v11364
    %v11366 = vadd.f32 %v11362, %v11365
    %vm11367 = vweird.f32 %v11316
    %vm11368 = vweird.f32 %v11362
    %vm11369 = vmor %vm11367, %vm11368
    %v11370 = vsel %vm11369, %v11362, %v11366
    %v11371 = vand.u32 2147483647, %v11316
    %vm11372 = vcmp.eq.f32.partialorder %v11371, 8.507059e+37
    %v11373 = vand.u32 %v11316, 2147483648
    %v11374 = vor.u32 1.1754944e-38, %v11373
    %v11375 = vsel %vm11372, %v11374, %v11370
    %v11376 = vmul.f32 %v11297, %v11375
    %v11377 = vrcp.pop %v11319
    %v11378 = vmul.f32 %v11319, %v11377
    %v11379 = vsub.f32 1.0, %v11378
    %v11380 = vmul.f32 %v11377, %v11379
    %v11381 = vadd.f32 %v11377, %v11380
    %vm11382 = vweird.f32 %v11319
    %vm11383 = vweird.f32 %v11377
    %vm11384 = vmor %vm11382, %vm11383
    %v11385 = vsel %vm11384, %v11377, %v11381
    %v11386 = vand.u32 2147483647, %v11319
    %vm11387 = vcmp.eq.f32.partialorder %v11386, 8.507059e+37
    %v11388 = vand.u32 %v11319, 2147483648
    %v11389 = vor.u32 1.1754944e-38, %v11388
    %v11390 = vsel %vm11387, %v11389, %v11385
    %v11391 = vmul.f32 %v11299, %v11390
    %v11392 = vrcp.pop %v11322
    %v11393 = vmul.f32 %v11322, %v11392
    %v11394 = vsub.f32 1.0, %v11393
    %v11395 = vmul.f32 %v11392, %v11394
    %v11396 = vadd.f32 %v11392, %v11395
    %vm11397 = vweird.f32 %v11322
    %vm11398 = vweird.f32 %v11392
    %vm11399 = vmor %vm11397, %vm11398
    %v11400 = vsel %vm11399, %v11392, %v11396
    %v11401 = vand.u32 2147483647, %v11322
    %vm11402 = vcmp.eq.f32.partialorder %v11401, 8.507059e+37
    %v11403 = vand.u32 %v11322, 2147483648
    %v11404 = vor.u32 1.1754944e-38, %v11403
    %v11405 = vsel %vm11402, %v11404, %v11400
    %v11406 = vmul.f32 %v11301, %v11405
    %v11407 = vrcp.pop %v11325
    %v11408 = vmul.f32 %v11325, %v11407
    %v11409 = vsub.f32 1.0, %v11408
    %v11410 = vmul.f32 %v11407, %v11409
    %v11411 = vadd.f32 %v11407, %v11410
    %vm11412 = vweird.f32 %v11325
    %vm11413 = vweird.f32 %v11407
    %vm11414 = vmor %vm11412, %vm11413
    %v11415 = vsel %vm11414, %v11407, %v11411
    %v11416 = vand.u32 2147483647, %v11325
    %vm11417 = vcmp.eq.f32.partialorder %v11416, 8.507059e+37
    %v11418 = vand.u32 %v11325, 2147483648
    %v11419 = vor.u32 1.1754944e-38, %v11418
    %v11420 = vsel %vm11417, %v11419, %v11415
    %v11421 = vmul.f32 %v11303, %v11420
    %v11422 = vrcp.pop %v11328
    %v11423 = vmul.f32 %v11328, %v11422
    %v11424 = vsub.f32 1.0, %v11423
    %v11425 = vmul.f32 %v11422, %v11424
    %v11426 = vadd.f32 %v11422, %v11425
    %vm11427 = vweird.f32 %v11328
    %vm11428 = vweird.f32 %v11422
    %vm11429 = vmor %vm11427, %vm11428
    %v11430 = vsel %vm11429, %v11422, %v11426
    %v11431 = vand.u32 2147483647, %v11328
    %vm11432 = vcmp.eq.f32.partialorder %v11431, 8.507059e+37
    %v11433 = vand.u32 %v11328, 2147483648
    %v11434 = vor.u32 1.1754944e-38, %v11433
    %v11435 = vsel %vm11432, %v11434, %v11430
    %v11436 = vmul.f32 %v11305, %v11435
    %v11437 = vrcp.pop %v11331
    %v11438 = vmul.f32 %v11331, %v11437
    %v11439 = vsub.f32 1.0, %v11438
    %v11440 = vmul.f32 %v11437, %v11439
    %v11441 = vadd.f32 %v11437, %v11440
    %vm11442 = vweird.f32 %v11331
    %vm11443 = vweird.f32 %v11437
    %vm11444 = vmor %vm11442, %vm11443
    %v11445 = vsel %vm11444, %v11437, %v11441
    %v11446 = vand.u32 2147483647, %v11331
    %vm11447 = vcmp.eq.f32.partialorder %v11446, 8.507059e+37
    %v11448 = vand.u32 %v11331, 2147483648
    %v11449 = vor.u32 1.1754944e-38, %v11448
    %v11450 = vsel %vm11447, %v11449, %v11445
    %v11451 = vmul.f32 %v11307, %v11450
    %v11452 = vpack.c.bf16 %v11346, %v11346
    %v11453 = vpack.c.bf16 %v11361, %v11361
    %v11454 = vpack.c.bf16 %v11376, %v11376
    %v11455 = vpack.c.bf16 %v11391, %v11391
    %v11456 = vpack.c.bf16 %v11406, %v11406
    %v11457 = vpack.c.bf16 %v11421, %v11421
    %v11458 = vpack.c.bf16 %v11436, %v11436
    %v11459 = vpack.c.bf16 %v11451, %v11451
    %11460 = vst [vmem:[#allocation1] ss:$9 sm:$0xff] %v6382
    %v11461 = vld [vmem:[#allocation1] sm:$0xff]
    %11463 = vrot.lane.b32.xlu0 %v11461, 16
    %v11464 = vpop.permute.xlu0 %11463
    %v11466 = vsel %vm737, %v11452, 0
    %v11469 = vsel %vm299, %v11464, 0
    %11471 = vmatpush.bf16.msra.mxu0 0
    %11472 = vmatpush.bf16.msra.mxu0 0
    %11473 = vmatpush.bf16.msra.mxu0 0
    %11474 = vmatpush.bf16.msra.mxu0 0
    %11475 = vmatpush.bf16.msra.mxu0 0
    %11476 = vmatpush.bf16.msra.mxu0 0
    %11477 = vmatpush.bf16.msra.mxu0 0
    %11478 = vmatpush.bf16.msra.mxu0 %v11469
    %11479 = vmatmul.bf16.gmra.mxu0 %v11466
    %v11480 = vpop.f32.mrf.mxu0
    %v11481 = vadd.f32 0.0, %v11480
    %v11482 = vpop.f32.mrf.mxu0
    %11483 = vdwg.mxu0
    %11484 = vst [vmem:[#allocation1] ss:$9 sm:$0xff] %v6385
    %v11485 = vld [vmem:[#allocation1] sm:$0xff]
    %11487 = vrot.lane.b32.xlu0 %v11485, 16
    %v11488 = vpop.permute.xlu0 %11487
    %v11490 = vsel %vm737, %v11453, 0
    %v11493 = vsel %vm299, %v11488, 0
    %11495 = vmatpush.bf16.msra.mxu0 0
    %11496 = vmatpush.bf16.msra.mxu0 0
    %11497 = vmatpush.bf16.msra.mxu0 0
    %11498 = vmatpush.bf16.msra.mxu0 0
    %11499 = vmatpush.bf16.msra.mxu0 0
    %11500 = vmatpush.bf16.msra.mxu0 0
    %11501 = vmatpush.bf16.msra.mxu0 0
    %11502 = vmatpush.bf16.msra.mxu0 %v11493
    %11503 = vmatmul.bf16.gmra.mxu0 %v11490
    %v11504 = vpop.f32.mrf.mxu0
    %v11505 = vadd.f32 0.0, %v11504
    %v11506 = vpop.f32.mrf.mxu0
    %11507 = vdwg.mxu0
    %11508 = vst [vmem:[#allocation1] ss:$9 sm:$0xff] %v6388
    %v11509 = vld [vmem:[#allocation1] sm:$0xff]
    %11511 = vrot.lane.b32.xlu0 %v11509, 16
    %v11512 = vpop.permute.xlu0 %11511
    %v11514 = vsel %vm737, %v11454, 0
    %v11517 = vsel %vm299, %v11512, 0
    %11519 = vmatpush.bf16.msra.mxu0 0
    %11520 = vmatpush.bf16.msra.mxu0 0
    %11521 = vmatpush.bf16.msra.mxu0 0
    %11522 = vmatpush.bf16.msra.mxu0 0
    %11523 = vmatpush.bf16.msra.mxu0 0
    %11524 = vmatpush.bf16.msra.mxu0 0
    %11525 = vmatpush.bf16.msra.mxu0 0
    %11526 = vmatpush.bf16.msra.mxu0 %v11517
    %11527 = vmatmul.bf16.gmra.mxu0 %v11514
    %v11528 = vpop.f32.mrf.mxu0
    %v11529 = vadd.f32 0.0, %v11528
    %v11530 = vpop.f32.mrf.mxu0
    %11531 = vdwg.mxu0
    %11532 = vst [vmem:[#allocation1] ss:$9 sm:$0xff] %v6391
    %v11533 = vld [vmem:[#allocation1] sm:$0xff]
    %11535 = vrot.lane.b32.xlu0 %v11533, 16
    %v11536 = vpop.permute.xlu0 %11535
    %v11538 = vsel %vm737, %v11455, 0
    %v11541 = vsel %vm299, %v11536, 0
    %11543 = vmatpush.bf16.msra.mxu0 0
    %11544 = vmatpush.bf16.msra.mxu0 0
    %11545 = vmatpush.bf16.msra.mxu0 0
    %11546 = vmatpush.bf16.msra.mxu0 0
    %11547 = vmatpush.bf16.msra.mxu0 0
    %11548 = vmatpush.bf16.msra.mxu0 0
    %11549 = vmatpush.bf16.msra.mxu0 0
    %11550 = vmatpush.bf16.msra.mxu0 %v11541
    %11551 = vmatmul.bf16.gmra.mxu0 %v11538
    %v11552 = vpop.f32.mrf.mxu0
    %v11553 = vadd.f32 0.0, %v11552
    %v11554 = vpop.f32.mrf.mxu0
    %11555 = vdwg.mxu0
    %11556 = vst [vmem:[#allocation1] ss:$9 sm:$0xff] %v6394
    %v11557 = vld [vmem:[#allocation1] sm:$0xff]
    %11559 = vrot.lane.b32.xlu0 %v11557, 16
    %v11560 = vpop.permute.xlu0 %11559
    %v11562 = vsel %vm737, %v11456, 0
    %v11565 = vsel %vm299, %v11560, 0
    %11567 = vmatpush.bf16.msra.mxu0 0
    %11568 = vmatpush.bf16.msra.mxu0 0
    %11569 = vmatpush.bf16.msra.mxu0 0
    %11570 = vmatpush.bf16.msra.mxu0 0
    %11571 = vmatpush.bf16.msra.mxu0 0
    %11572 = vmatpush.bf16.msra.mxu0 0
    %11573 = vmatpush.bf16.msra.mxu0 0
    %11574 = vmatpush.bf16.msra.mxu0 %v11565
    %11575 = vmatmul.bf16.gmra.mxu0 %v11562
    %v11576 = vpop.f32.mrf.mxu0
    %v11577 = vadd.f32 0.0, %v11576
    %v11578 = vpop.f32.mrf.mxu0
    %11579 = vdwg.mxu0
    %11580 = vst [vmem:[#allocation1] ss:$9 sm:$0xff] %v6397
    %v11581 = vld [vmem:[#allocation1] sm:$0xff]
    %11583 = vrot.lane.b32.xlu0 %v11581, 16
    %v11584 = vpop.permute.xlu0 %11583
    %v11586 = vsel %vm737, %v11457, 0
    %v11589 = vsel %vm299, %v11584, 0
    %11591 = vmatpush.bf16.msra.mxu0 0
    %11592 = vmatpush.bf16.msra.mxu0 0
    %11593 = vmatpush.bf16.msra.mxu0 0
    %11594 = vmatpush.bf16.msra.mxu0 0
    %11595 = vmatpush.bf16.msra.mxu0 0
    %11596 = vmatpush.bf16.msra.mxu0 0
    %11597 = vmatpush.bf16.msra.mxu0 0
    %11598 = vmatpush.bf16.msra.mxu0 %v11589
    %11599 = vmatmul.bf16.gmra.mxu0 %v11586
    %v11600 = vpop.f32.mrf.mxu0
    %v11601 = vadd.f32 0.0, %v11600
    %v11602 = vpop.f32.mrf.mxu0
    %11603 = vdwg.mxu0
    %11604 = vst [vmem:[#allocation1] ss:$9 sm:$0xff] %v6400
    %v11605 = vld [vmem:[#allocation1] sm:$0xff]
    %11607 = vrot.lane.b32.xlu0 %v11605, 16
    %v11608 = vpop.permute.xlu0 %11607
    %v11610 = vsel %vm737, %v11458, 0
    %v11613 = vsel %vm299, %v11608, 0
    %11615 = vmatpush.bf16.msra.mxu0 0
    %11616 = vmatpush.bf16.msra.mxu0 0
    %11617 = vmatpush.bf16.msra.mxu0 0
    %11618 = vmatpush.bf16.msra.mxu0 0
    %11619 = vmatpush.bf16.msra.mxu0 0
    %11620 = vmatpush.bf16.msra.mxu0 0
    %11621 = vmatpush.bf16.msra.mxu0 0
    %11622 = vmatpush.bf16.msra.mxu0 %v11613
    %11623 = vmatmul.bf16.gmra.mxu0 %v11610
    %v11624 = vpop.f32.mrf.mxu0
    %v11625 = vadd.f32 0.0, %v11624
    %v11626 = vpop.f32.mrf.mxu0
    %11627 = vdwg.mxu0
    %11628 = vst [vmem:[#allocation1] ss:$9 sm:$0xff] %v6403
    %v11629 = vld [vmem:[#allocation1] sm:$0xff]
    %11631 = vrot.lane.b32.xlu0 %v11629, 16
    %v11632 = vpop.permute.xlu0 %11631
    %v11634 = vsel %vm737, %v11459, 0
    %v11637 = vsel %vm299, %v11632, 0
    %11639 = vmatpush.bf16.msra.mxu0 0
    %11640 = vmatpush.bf16.msra.mxu0 0
    %11641 = vmatpush.bf16.msra.mxu0 0
    %11642 = vmatpush.bf16.msra.mxu0 0
    %11643 = vmatpush.bf16.msra.mxu0 0
    %11644 = vmatpush.bf16.msra.mxu0 0
    %11645 = vmatpush.bf16.msra.mxu0 0
    %11646 = vmatpush.bf16.msra.mxu0 %v11637
    %11647 = vmatmul.bf16.gmra.mxu0 %v11634
    %v11648 = vpop.f32.mrf.mxu0
    %v11649 = vadd.f32 0.0, %v11648
    %v11650 = vpop.f32.mrf.mxu0
    %11651 = vdwg.mxu0
    %v11652 = vld [vmem:[%s6902 + $0x38] sm:$0xf]
    %v11653 = vld [vmem:[%s6902 + $0x3c] sm:$0xf]
    %11662 = vst [vmem:[#allocation1] ss:$4 sm:$0xff] %v11481
    %s11663 = scalar_lea.vmem [#allocation1], 1
    %11664 = vst [vmem:[%s11663] ss:$4 sm:$0xff] %v11505
    %s11665 = scalar_lea.vmem [#allocation1], 2
    %11666 = vst [vmem:[%s11665] ss:$4 sm:$0xff] %v11529
    %s11667 = scalar_lea.vmem [#allocation1], 3
    %11668 = vst [vmem:[%s11667] ss:$4 sm:$0xff] %v11553
    %s11669 = scalar_lea.vmem [#allocation1], 32
    %11670 = vst [vmem:[%s11669] ss:$4 sm:$0xff] %v11577
    %s11671 = scalar_lea.vmem [#allocation1], 33
    %11672 = vst [vmem:[%s11671] ss:$4 sm:$0xff] %v11601
    %s11673 = scalar_lea.vmem [#allocation1], 34
    %11674 = vst [vmem:[%s11673] ss:$4 sm:$0xff] %v11625
    %s11675 = scalar_lea.vmem [#allocation1], 35
    %11676 = vst [vmem:[%s11675] ss:$4 sm:$0xff] %v11649
    %v11677 = vld.sshfl [vmem:[#allocation1] sm:$0xff pattern:$0x73625140]
    %v11678 = vld.sshfl [vmem:[#allocation1 + $0x20] sm:$0xff pattern:$0x73625140]
    %v11681 = vpack.c.bf16 %v11678, %v11677
    %v11684 = vunpack.c.l.b16 %v11652
    %v11685 = vunpack.c.l.b16 %v11653
    %v11686 = vpack.c.b16 %v11685, %v11684
    %v11689 = vsel %vm387, %v11681, 0
    %11691 = vmatpush.bf16.msra.mxu0 0
    %11692 = vmatpush.bf16.msra.mxu0 0
    %11693 = vmatpush.bf16.msra.mxu0 0
    %11694 = vmatpush.bf16.msra.mxu0 0
    %11695 = vmatpush.bf16.msra.mxu0 0
    %11696 = vmatpush.bf16.msra.mxu0 0
    %11697 = vmatpush.bf16.msra.mxu0 0
    %11698 = vmatpush.bf16.msra.mxu0 %v11686
    %11699 = vmatmul.bf16.gmra.mxu0 %v11689
    %v11700 = vpop.f32.mrf.mxu0
    %v11701 = vadd.f32 0.0, %v11700
    %v11702 = vpop.f32.mrf.mxu0
    %v11703 = vadd.f32 0.0, %v11702
    %11704 = vdwg.mxu0
    %v11705 = vadd.f32 %v11026, %v11701
    %v11706 = vadd.f32 %v11027, %v11703
    %v11707 = vld [vmem:[%s1 + $0x7] sm:$0x1]
    %v11708 = vperm.slane %v11707, 0
    %v11709 = vadd.f32 %v11705, %v11708
    %v11710 = vadd.f32 %v11706, %v11708
    %v11711 = vadd.f32 %v6097, %v11709
    %v11712 = vadd.f32 %v6098, %v11710
    %v11713 = vld [vmem:[%s1 + $0xf] sm:$0x1]
    %v11714 = vld [vmem:[%s1 + $0x11] sm:$0x1]
    %11715 = vadd.xlane.f32.xlu0 %v11711
    %v11716 = vpop.xlane.xlu0 %11715
    %11717 = vadd.xlane.f32.xlu0 %v11712
    %v11718 = vpop.xlane.xlu0 %11717
    %v11719 = vmul.f32 %v11716, %v5710
    %v11720 = vmul.f32 %v11718, %v5710
    %v11721 = vsub.f32 %v11711, %v11719
    %v11722 = vsub.f32 %v11712, %v11720
    %v11723 = vmul.f32 %v11721, %v11721
    %v11724 = vmul.f32 %v11722, %v11722
    %11725 = vadd.xlane.f32.xlu0 %v11723
    %v11726 = vpop.xlane.xlu0 %11725
    %11727 = vadd.xlane.f32.xlu0 %v11724
    %v11728 = vpop.xlane.xlu0 %11727
    %v11729 = vmul.f32 %v11726, %v5710
    %v11730 = vmul.f32 %v11728, %v5710
    %v11731 = vadd.f32 %v11729, 1e-05
    %v11732 = vadd.f32 %v11730, 1e-05
    %v11733 = vrsqrt.pop %v11731
    %v11734 = vmul.f32 %v11733, %v11731
    %v11735 = vmul.f32 %v11734, %v11733
    %v11736 = vmul.f32 0.5, %v11735
    %v11737 = vsub.f32 1.5, %v11736
    %v11738 = vmul.f32 %v11733, %v11737
    %vm11739 = vweird.f32 %v11731
    %vm11740 = vweird.f32 %v11733
    %vm11741 = vmor %vm11739, %vm11740
    %v11742 = vsel %vm11741, %v11733, %v11738
    %v11743 = vrsqrt.pop %v11732
    %v11744 = vmul.f32 %v11743, %v11732
    %v11745 = vmul.f32 %v11744, %v11743
    %v11746 = vmul.f32 0.5, %v11745
    %v11747 = vsub.f32 1.5, %v11746
    %v11748 = vmul.f32 %v11743, %v11747
    %vm11749 = vweird.f32 %v11732
    %vm11750 = vweird.f32 %v11743
    %vm11751 = vmor %vm11749, %vm11750
    %v11752 = vsel %vm11751, %v11743, %v11748
    %v11753 = vmul.f32 %v11721, %v11742
    %v11754 = vmul.f32 %v11722, %v11752
    %v11755 = vperm.slane %v11713, 0
    %v11756 = vmul.f32 %v11753, %v11755
    %v11757 = vmul.f32 %v11754, %v11755
    %v11758 = vperm.slane %v11714, 0
    %v11759 = vadd.f32 %v11756, %v11758
    %v11760 = vadd.f32 %v11757, %v11758
    %s11761 = scalar_lea.vmem [#allocation5], 128
    %v11762 = vld [vmem:[%s11761] sm:$0xff]
    %v11763 = vld [vmem:[%s11761 + $0x8] sm:$0xff]
    %v11764 = vld [vmem:[%s11761 + $0x10] sm:$0xff]
    %v11765 = vld [vmem:[%s11761 + $0x18] sm:$0xff]
    %v11766 = vld [vmem:[%s11761 + $0x20] sm:$0xff]
    %v11767 = vld [vmem:[%s11761 + $0x28] sm:$0xff]
    %v11768 = vld [vmem:[%s11761 + $0x30] sm:$0xff]
    %v11769 = vld [vmem:[%s11761 + $0x38] sm:$0xff]
    %v11770 = vld [vmem:[%s11761 + $0x40] sm:$0xff]
    %v11771 = vld [vmem:[%s11761 + $0x48] sm:$0xff]
    %v11772 = vld [vmem:[%s11761 + $0x50] sm:$0xff]
    %v11773 = vld [vmem:[%s11761 + $0x58] sm:$0xff]
    %v11774 = vld [vmem:[%s11761 + $0x60] sm:$0xff]
    %v11775 = vld [vmem:[%s11761 + $0x68] sm:$0xff]
    %v11776 = vld [vmem:[%s11761 + $0x70] sm:$0xff]
    %v11777 = vld [vmem:[%s11761 + $0x78] sm:$0xff]
    %v11778 = vpack.c.bf16 %v11760, %v11759
    %s11779 = scalar_lea.vmem %s1, 9
    %v11780 = vld [vmem:[%s11779] ss:$2 sm:$0x3]
    %v11782 = vperm.slane %v11780, 0
    %v11783 = vperm.slane %v11780, 1
    %v11802 = vunpack.c.l.b16 %v11762
    %v11803 = vunpack.c.h.b16 %v11762
    %v11804 = vunpack.c.l.b16 %v11763
    %v11805 = vunpack.c.h.b16 %v11763
    %v11806 = vunpack.c.l.b16 %v11764
    %v11807 = vunpack.c.h.b16 %v11764
    %v11808 = vunpack.c.l.b16 %v11765
    %v11809 = vunpack.c.h.b16 %v11765
    %v11810 = vunpack.c.l.b16 %v11766
    %v11811 = vunpack.c.h.b16 %v11766
    %v11812 = vunpack.c.l.b16 %v11767
    %v11813 = vunpack.c.h.b16 %v11767
    %v11814 = vunpack.c.l.b16 %v11768
    %v11815 = vunpack.c.h.b16 %v11768
    %v11816 = vunpack.c.l.b16 %v11769
    %v11817 = vunpack.c.h.b16 %v11769
    %v11818 = vunpack.c.l.b16 %v11770
    %v11819 = vunpack.c.h.b16 %v11770
    %v11820 = vunpack.c.l.b16 %v11771
    %v11821 = vunpack.c.h.b16 %v11771
    %v11822 = vunpack.c.l.b16 %v11772
    %v11823 = vunpack.c.h.b16 %v11772
    %v11824 = vunpack.c.l.b16 %v11773
    %v11825 = vunpack.c.h.b16 %v11773
    %v11826 = vunpack.c.l.b16 %v11774
    %v11827 = vunpack.c.h.b16 %v11774
    %v11828 = vunpack.c.l.b16 %v11775
    %v11829 = vunpack.c.h.b16 %v11775
    %v11830 = vunpack.c.l.b16 %v11776
    %v11831 = vunpack.c.h.b16 %v11776
    %v11832 = vunpack.c.l.b16 %v11777
    %v11833 = vunpack.c.h.b16 %v11777
    %v11834 = vpack.c.b16 %v11804, %v11802
    %v11835 = vpack.c.b16 %v11805, %v11803
    %v11836 = vpack.c.b16 %v11808, %v11806
    %v11837 = vpack.c.b16 %v11809, %v11807
    %v11838 = vpack.c.b16 %v11812, %v11810
    %v11839 = vpack.c.b16 %v11813, %v11811
    %v11840 = vpack.c.b16 %v11816, %v11814
    %v11841 = vpack.c.b16 %v11817, %v11815
    %v11842 = vpack.c.b16 %v11820, %v11818
    %v11843 = vpack.c.b16 %v11821, %v11819
    %v11844 = vpack.c.b16 %v11824, %v11822
    %v11845 = vpack.c.b16 %v11825, %v11823
    %v11846 = vpack.c.b16 %v11828, %v11826
    %v11847 = vpack.c.b16 %v11829, %v11827
    %v11848 = vpack.c.b16 %v11832, %v11830
    %v11849 = vpack.c.b16 %v11833, %v11831
    %11866 = vmatpush.bf16.msra.mxu0 %v11848
    %11867 = vmatpush.bf16.msra.mxu0 %v11846
    %11868 = vmatpush.bf16.msra.mxu0 %v11844
    %11869 = vmatpush.bf16.msra.mxu0 %v11842
    %11870 = vmatpush.bf16.msra.mxu0 %v11840
    %11871 = vmatpush.bf16.msra.mxu0 %v11838
    %11872 = vmatpush.bf16.msra.mxu0 %v11836
    %11873 = vmatpush.bf16.msra.mxu0 %v11834
    %11874 = vmatmul.bf16.gmra.mxu0 %v11778
    %v11875 = vpop.f32.mrf.mxu0
    %v11876 = vadd.f32 %v11782, %v11875
    %v11877 = vpop.f32.mrf.mxu0
    %v11878 = vadd.f32 %v11782, %v11877
    %11879 = vdwg.mxu0
    %11880 = vmatpush.bf16.msra.mxu0 %v11849
    %11881 = vmatpush.bf16.msra.mxu0 %v11847
    %11882 = vmatpush.bf16.msra.mxu0 %v11845
    %11883 = vmatpush.bf16.msra.mxu0 %v11843
    %11884 = vmatpush.bf16.msra.mxu0 %v11841
    %11885 = vmatpush.bf16.msra.mxu0 %v11839
    %11886 = vmatpush.bf16.msra.mxu0 %v11837
    %11887 = vmatpush.bf16.msra.mxu0 %v11835
    %11888 = vmatmul.bf16.gmra.mxu0 %v11778
    %v11889 = vpop.f32.mrf.mxu0
    %v11890 = vadd.f32 %v11783, %v11889
    %v11891 = vpop.f32.mrf.mxu0
    %v11892 = vadd.f32 %v11783, %v11891
    %11893 = vdwg.mxu0
    %v11894 = vmax.f32 %v11876, 0.0
    %v11895 = vmax.f32 %v11890, 0.0
    %v11896 = vmax.f32 %v11878, 0.0
    %v11897 = vmax.f32 %v11892, 0.0
    %s11898 = scalar_lea.vmem [#allocation7], 128
    %v11899 = vld [vmem:[%s11898] sm:$0xf]
    %v11900 = vld [vmem:[%s11898 + $0x4] sm:$0xf]
    %v11901 = vld [vmem:[%s11898 + $0x8] sm:$0xf]
    %v11902 = vld [vmem:[%s11898 + $0xc] sm:$0xf]
    %v11903 = vld [vmem:[%s11898 + $0x10] sm:$0xf]
    %v11904 = vld [vmem:[%s11898 + $0x14] sm:$0xf]
    %v11905 = vld [vmem:[%s11898 + $0x18] sm:$0xf]
    %v11906 = vld [vmem:[%s11898 + $0x1c] sm:$0xf]
    %v11907 = vld [vmem:[%s11898 + $0x20] sm:$0xf]
    %v11908 = vld [vmem:[%s11898 + $0x24] sm:$0xf]
    %v11909 = vld [vmem:[%s11898 + $0x28] sm:$0xf]
    %v11910 = vld [vmem:[%s11898 + $0x2c] sm:$0xf]
    %v11911 = vld [vmem:[%s11898 + $0x30] sm:$0xf]
    %v11912 = vld [vmem:[%s11898 + $0x34] sm:$0xf]
    %v11913 = vld [vmem:[%s11898 + $0x38] sm:$0xf]
    %v11914 = vld [vmem:[%s11898 + $0x3c] sm:$0xf]
    %v11915 = vld [vmem:[%s11898 + $0x40] sm:$0xf]
    %v11916 = vld [vmem:[%s11898 + $0x44] sm:$0xf]
    %v11917 = vld [vmem:[%s11898 + $0x48] sm:$0xf]
    %v11918 = vld [vmem:[%s11898 + $0x4c] sm:$0xf]
    %v11919 = vld [vmem:[%s11898 + $0x50] sm:$0xf]
    %v11920 = vld [vmem:[%s11898 + $0x54] sm:$0xf]
    %v11921 = vld [vmem:[%s11898 + $0x58] sm:$0xf]
    %v11922 = vld [vmem:[%s11898 + $0x5c] sm:$0xf]
    %v11923 = vld [vmem:[%s11898 + $0x60] sm:$0xf]
    %v11924 = vld [vmem:[%s11898 + $0x64] sm:$0xf]
    %v11925 = vld [vmem:[%s11898 + $0x68] sm:$0xf]
    %v11926 = vld [vmem:[%s11898 + $0x6c] sm:$0xf]
    %v11927 = vld [vmem:[%s11898 + $0x70] sm:$0xf]
    %v11928 = vld [vmem:[%s11898 + $0x74] sm:$0xf]
    %v11929 = vld [vmem:[%s11898 + $0x78] sm:$0xf]
    %v11930 = vld [vmem:[%s11898 + $0x7c] sm:$0xf]
    %v11931 = vpack.c.bf16 %v11896, %v11894
    %v11932 = vpack.c.bf16 %v11897, %v11895
    %v11933 = vld [vmem:[%s1 + $0xd] sm:$0x1]
    %v11934 = vperm.slane %v11933, 0
    %v11967 = vunpack.c.l.b16 %v11899
    %v11968 = vunpack.c.l.b16 %v11900
    %v11969 = vunpack.c.l.b16 %v11901
    %v11970 = vunpack.c.l.b16 %v11902
    %v11971 = vunpack.c.l.b16 %v11903
    %v11972 = vunpack.c.l.b16 %v11904
    %v11973 = vunpack.c.l.b16 %v11905
    %v11974 = vunpack.c.l.b16 %v11906
    %v11975 = vunpack.c.l.b16 %v11907
    %v11976 = vunpack.c.l.b16 %v11908
    %v11977 = vunpack.c.l.b16 %v11909
    %v11978 = vunpack.c.l.b16 %v11910
    %v11979 = vunpack.c.l.b16 %v11911
    %v11980 = vunpack.c.l.b16 %v11912
    %v11981 = vunpack.c.l.b16 %v11913
    %v11982 = vunpack.c.l.b16 %v11914
    %v11983 = vunpack.c.l.b16 %v11915
    %v11984 = vunpack.c.l.b16 %v11916
    %v11985 = vunpack.c.l.b16 %v11917
    %v11986 = vunpack.c.l.b16 %v11918
    %v11987 = vunpack.c.l.b16 %v11919
    %v11988 = vunpack.c.l.b16 %v11920
    %v11989 = vunpack.c.l.b16 %v11921
    %v11990 = vunpack.c.l.b16 %v11922
    %v11991 = vunpack.c.l.b16 %v11923
    %v11992 = vunpack.c.l.b16 %v11924
    %v11993 = vunpack.c.l.b16 %v11925
    %v11994 = vunpack.c.l.b16 %v11926
    %v11995 = vunpack.c.l.b16 %v11927
    %v11996 = vunpack.c.l.b16 %v11928
    %v11997 = vunpack.c.l.b16 %v11929
    %v11998 = vunpack.c.l.b16 %v11930
    %v11999 = vpack.c.b16 %v11968, %v11967
    %v12000 = vpack.c.b16 %v11970, %v11969
    %v12001 = vpack.c.b16 %v11972, %v11971
    %v12002 = vpack.c.b16 %v11974, %v11973
    %v12003 = vpack.c.b16 %v11976, %v11975
    %v12004 = vpack.c.b16 %v11978, %v11977
    %v12005 = vpack.c.b16 %v11980, %v11979
    %v12006 = vpack.c.b16 %v11982, %v11981
    %v12007 = vpack.c.b16 %v11984, %v11983
    %v12008 = vpack.c.b16 %v11986, %v11985
    %v12009 = vpack.c.b16 %v11988, %v11987
    %v12010 = vpack.c.b16 %v11990, %v11989
    %v12011 = vpack.c.b16 %v11992, %v11991
    %v12012 = vpack.c.b16 %v11994, %v11993
    %v12013 = vpack.c.b16 %v11996, %v11995
    %v12014 = vpack.c.b16 %v11998, %v11997
    %12031 = vmatpush.bf16.msra.mxu0 %v12006
    %12032 = vmatpush.bf16.msra.mxu0 %v12005
    %12033 = vmatpush.bf16.msra.mxu0 %v12004
    %12034 = vmatpush.bf16.msra.mxu0 %v12003
    %12035 = vmatpush.bf16.msra.mxu0 %v12002
    %12036 = vmatpush.bf16.msra.mxu0 %v12001
    %12037 = vmatpush.bf16.msra.mxu0 %v12000
    %12038 = vmatpush.bf16.msra.mxu0 %v11999
    %12039 = vmatmul.bf16.gmra.mxu0 %v11931
    %v12040 = vpop.f32.mrf.mxu0
    %v12041 = vadd.f32 %v11934, %v12040
    %v12042 = vpop.f32.mrf.mxu0
    %v12043 = vadd.f32 %v11934, %v12042
    %12044 = vdwg.mxu0
    %12045 = vmatpush.bf16.msra.mxu0 %v12014
    %12046 = vmatpush.bf16.msra.mxu0 %v12013
    %12047 = vmatpush.bf16.msra.mxu0 %v12012
    %12048 = vmatpush.bf16.msra.mxu0 %v12011
    %12049 = vmatpush.bf16.msra.mxu0 %v12010
    %12050 = vmatpush.bf16.msra.mxu0 %v12009
    %12051 = vmatpush.bf16.msra.mxu0 %v12008
    %12052 = vmatpush.bf16.msra.mxu0 %v12007
    %12053 = vmatmul.bf16.gmra.mxu0 %v11932
    %v12054 = vpop.f32.mrf.mxu0
    %v12055 = vadd.f32 %v12041, %v12054
    %v12056 = vpop.f32.mrf.mxu0
    %v12057 = vadd.f32 %v12043, %v12056
    %12058 = vdwg.mxu0
    %v12059 = vadd.f32 %v11759, %v12055
    %v12060 = vadd.f32 %v11760, %v12057
    %v12061 = vld [vmem:[%s1 + $0x13] sm:$0x1]
    %v12062 = vld [vmem:[%s1 + $0x15] sm:$0x1]
    %12063 = vadd.xlane.f32.xlu0 %v12059
    %v12064 = vpop.xlane.xlu0 %12063
    %12065 = vadd.xlane.f32.xlu0 %v12060
    %v12066 = vpop.xlane.xlu0 %12065
    %v12067 = vmul.f32 %v12064, %v5710
    %v12068 = vmul.f32 %v12066, %v5710
    %v12069 = vsub.f32 %v12059, %v12067
    %v12070 = vsub.f32 %v12060, %v12068
    %v12071 = vmul.f32 %v12069, %v12069
    %v12072 = vmul.f32 %v12070, %v12070
    %12073 = vadd.xlane.f32.xlu0 %v12071
    %v12074 = vpop.xlane.xlu0 %12073
    %12075 = vadd.xlane.f32.xlu0 %v12072
    %v12076 = vpop.xlane.xlu0 %12075
    %v12077 = vmul.f32 %v12074, %v5710
    %v12078 = vmul.f32 %v12076, %v5710
    %v12079 = vadd.f32 %v12077, 1e-05
    %v12080 = vadd.f32 %v12078, 1e-05
    %v12081 = vrsqrt.pop %v12079
    %v12082 = vmul.f32 %v12081, %v12079
    %v12083 = vmul.f32 %v12082, %v12081
    %v12084 = vmul.f32 0.5, %v12083
    %v12085 = vsub.f32 1.5, %v12084
    %v12086 = vmul.f32 %v12081, %v12085
    %vm12087 = vweird.f32 %v12079
    %vm12088 = vweird.f32 %v12081
    %vm12089 = vmor %vm12087, %vm12088
    %v12090 = vsel %vm12089, %v12081, %v12086
    %v12091 = vrsqrt.pop %v12080
    %v12092 = vmul.f32 %v12091, %v12080
    %v12093 = vmul.f32 %v12092, %v12091
    %v12094 = vmul.f32 0.5, %v12093
    %v12095 = vsub.f32 1.5, %v12094
    %v12096 = vmul.f32 %v12091, %v12095
    %vm12097 = vweird.f32 %v12080
    %vm12098 = vweird.f32 %v12091
    %vm12099 = vmor %vm12097, %vm12098
    %v12100 = vsel %vm12099, %v12091, %v12096
    %v12101 = vmul.f32 %v12069, %v12090
    %v12102 = vmul.f32 %v12070, %v12100
    %v12103 = vperm.slane %v12061, 0
    %v12104 = vmul.f32 %v12101, %v12103
    %v12105 = vmul.f32 %v12102, %v12103
    %v12106 = vperm.slane %v12062, 0
    %v12107 = vadd.f32 %v12104, %v12106
    %v12108 = vadd.f32 %v12105, %v12106
    %v12111 = vrot.slane %v12107, 2
    %v12112 = vrot.slane %v12107, 4
    %v12113 = vrot.slane %v12107, 6
    %v12114 = vrot.slane %v12108, 2
    %v12115 = vrot.slane %v12108, 4
    %v12116 = vrot.slane %v12108, 6
    %vm12123 = vcmask 1041408
    %v12124 = vsel %vm12123, %v12107, 0.0
    %v12125 = vsel %vm12123, %v12111, 0.0
    %v12126 = vadd.f32 %v12124, %v12125
    %v12127 = vsel %vm12123, %v12112, 0.0
    %v12128 = vadd.f32 %v12126, %v12127
    %v12129 = vsel %vm12123, %v12113, 0.0
    %v12130 = vadd.f32 %v12128, %v12129
    %v12131 = vsel %vm12123, %v12108, 0.0
    %v12132 = vadd.f32 %v12130, %v12131
    %v12133 = vsel %vm12123, %v12114, 0.0
    %v12134 = vadd.f32 %v12132, %v12133
    %v12135 = vsel %vm12123, %v12115, 0.0
    %v12136 = vadd.f32 %v12134, %v12135
    %v12137 = vsel %vm12123, %v12116, 0.0
    %v12138 = vadd.f32 %v12136, %v12137
    %v12139 = vrcp.pop 8.0
    %v12140 = vmul.f32 8.0, %v12139
    %v12141 = vsub.f32 1.0, %v12140
    %v12142 = vmul.f32 %v12139, %v12141
    %v12143 = vadd.f32 %v12139, %v12142
    %vm12144 = vweird.f32 %v12139
    %v12145 = vsel %vm12144, %v12139, %v12143
    %v12146 = vmul.f32 %v12138, %v12145
    %v12147 = vld [vmem:[%s6] sm:$0xf]
    %v12148 = vld [vmem:[%s6 + $0x4] sm:$0xf]
    %v12149 = vld [vmem:[%s6 + $0x8] sm:$0xf]
    %v12150 = vld [vmem:[%s6 + $0xc] sm:$0xf]
    %v12151 = vld [vmem:[%s6 + $0x10] sm:$0xf]
    %v12152 = vld [vmem:[%s6 + $0x14] sm:$0xf]
    %v12153 = vld [vmem:[%s6 + $0x18] sm:$0xf]
    %v12154 = vld [vmem:[%s6 + $0x1c] sm:$0xf]
    %v12155 = vld [vmem:[%s6 + $0x20] sm:$0xf]
    %v12156 = vld [vmem:[%s6 + $0x24] sm:$0xf]
    %v12157 = vld [vmem:[%s6 + $0x28] sm:$0xf]
    %v12158 = vld [vmem:[%s6 + $0x2c] sm:$0xf]
    %v12159 = vld [vmem:[%s6 + $0x30] sm:$0xf]
    %v12160 = vld [vmem:[%s6 + $0x34] sm:$0xf]
    %v12161 = vld [vmem:[%s6 + $0x38] sm:$0xf]
    %v12162 = vld [vmem:[%s6 + $0x3c] sm:$0xf]
    %v12163 = vpack.c.bf16 %v12146, %v12146
    %v12164 = vld [vmem:[%s7] sm:$0x1]
    %v12166 = vperm.slane %v12164, 0
    %v12184 = vunpack.c.l.b16 %v12147
    %v12185 = vunpack.c.l.b16 %v12148
    %v12186 = vunpack.c.l.b16 %v12149
    %v12187 = vunpack.c.l.b16 %v12150
    %v12188 = vunpack.c.l.b16 %v12151
    %v12189 = vunpack.c.l.b16 %v12152
    %v12190 = vunpack.c.l.b16 %v12153
    %v12191 = vunpack.c.l.b16 %v12154
    %v12192 = vunpack.c.l.b16 %v12155
    %v12193 = vunpack.c.l.b16 %v12156
    %v12194 = vunpack.c.l.b16 %v12157
    %v12195 = vunpack.c.l.b16 %v12158
    %v12196 = vunpack.c.l.b16 %v12159
    %v12197 = vunpack.c.l.b16 %v12160
    %v12198 = vunpack.c.l.b16 %v12161
    %v12199 = vunpack.c.l.b16 %v12162
    %v12200 = vpack.c.b16 %v12185, %v12184
    %v12201 = vpack.c.b16 %v12187, %v12186
    %v12202 = vpack.c.b16 %v12189, %v12188
    %v12203 = vpack.c.b16 %v12191, %v12190
    %v12204 = vpack.c.b16 %v12193, %v12192
    %v12205 = vpack.c.b16 %v12195, %v12194
    %v12206 = vpack.c.b16 %v12197, %v12196
    %v12207 = vpack.c.b16 %v12199, %v12198
    %12216 = vmatpush.bf16.msra.mxu0 %v12207
    %12217 = vmatpush.bf16.msra.mxu0 %v12206
    %12218 = vmatpush.bf16.msra.mxu0 %v12205
    %12219 = vmatpush.bf16.msra.mxu0 %v12204
    %12220 = vmatpush.bf16.msra.mxu0 %v12203
    %12221 = vmatpush.bf16.msra.mxu0 %v12202
    %12222 = vmatpush.bf16.msra.mxu0 %v12201
    %12223 = vmatpush.bf16.msra.mxu0 %v12200
    %12224 = vmatmul.bf16.gmra.mxu0 %v12163
    %v12225 = vpop.f32.mrf.mxu0
    %v12226 = vadd.f32 %v12166, %v12225
    %v12227 = vpop.f32.mrf.mxu0
    %12228 = vdwg.mxu0
    %12229 = vst [vmem:[#allocation8] sm:$0x3] %v12226
    // Predicated region
    $region46: #{forward.1} parent=1 // pred_check
      _
    $region47: #{forward.1} parent=1 // pred_check_branch
      %12231 = sbr.rel (0) target = $region49
    $region48: #{forward.1} parent=1 // pred_region
      %12233 = vsyncadd [#allocation4], 0
      %s12235 = sshll.u32 [#allocation8], 4
      %s12236 = int_to_ptr.vmem [resolvable:$true] %s12235
      %s12237 = sshll.u32 %s8, 4
      %s12238 = int_to_ptr.hbm [resolvable:$true] %s12237
      %12240 = dma.vmem_to_hbm [thread:$0]  %s12236, 32, %s12238, [#allocation4]
    $region49: #{forward.1} parent=1 // pred_fallthru
      _
    // Predicated region
    $region50: #{forward.1} parent=1 // pred_check
      _
    $region51: #{forward.1} parent=1 // pred_check_branch
      %12242 = sbr.rel (0) target = $region53
    $region52: #{forward.1} parent=1 // pred_region
      %12244 = dma.done [#allocation4], 32
    $region53: #{forward.1} parent=1 // pred_fallthru
      _
    %12245 = vsyncpa [#allocation3], 1
    %12246 = vsyncpa [#allocation6], 1
    %12247 = vsyncpa [#allocation4], 1

</llo_original>
